<compile_context>
chip_gen: v7x
topology: tpu7x:2x2x1
jax: 0.10.0
libtpu: 0.0.40
codegen_flags: <defaults>
</compile_context>

<pallas_src>
import jax
import jax.numpy as jnp
from jax import lax
from jax.experimental import pallas as pl
from jax.experimental.pallas import tpu as pltpu

LSTM_SIZE = 40
EMBED_DIM = 40
NUM_LAYERS = 3

HP = 128        # hidden / per-gate lane width after padding (one 128-lane slab per gate)
SUBLANE = 8     # batch is padded to a multiple of the 8-sublane tile


def _round_up(x, m):
    return (x + m - 1) // m * m


# ----------------------------- fused LM kernel --------------------------------
def _fused_lm_kernel(x_in_ref,            # (S*BP, HP)      padded embeddings (flattened)
                     wih_ref,             # (L, HP, 4*HP)   W_ih^T, gate-padded
                     whh_ref,             # (L, HP, 4*HP)   W_hh^T, gate-padded
                     b_ref,               # (L, 1, 4*HP)    b_ih + b_hh, gate-padded
                     h0_ref, c0_ref,      # (L, BP, HP)
                     wfc_ref,             # (HP, VP)        fc weight^T, padded
                     bfc_ref,             # (1, VP)
                     logits_ref,          # (S*BP, VP)      out
                     hN_ref, cN_ref,      # (L, BP, HP)     out
                     x_sc,                # (S*BP, HP)      layer activations
                     gates_sc,            # (S*BP, 4*HP)    hoisted input projection
                     h_sc, c_sc):         # (BP, HP)        recurrent carry
    SBP, hp = x_sc.shape
    BP = h_sc.shape[0]
    S = SBP // BP
    n_layers = h0_ref.shape[0]

    for l in range(n_layers):                       # static (unrolled) layer loop
        src = x_in_ref if l == 0 else x_sc
        # Hoisted, batched input projection for the whole sequence of this layer.
        gates_sc[...] = (jnp.dot(src[...], wih_ref[l],
                                 preferred_element_type=jnp.float32)
                         + b_ref[l])

        h_sc[...] = h0_ref[l]
        c_sc[...] = c0_ref[l]

        def step(t, _carry, l=l):
            row = pl.multiple_of(t * BP, BP)        # 8-sublane aligned slice start
            h_prev = h_sc[...]
            c_prev = c_sc[...]
            # Only the recurrent matmul stays inside the serial loop.
            g = (gates_sc[pl.ds(row, BP), :]
                 + jnp.dot(h_prev, whh_ref[l], preferred_element_type=jnp.float32))
            # Gate order [i, f, g, o]; each slice is a full 128-lane slab.
            i_g = jax.nn.sigmoid(g[:, 0 * hp:1 * hp])
            f_g = jax.nn.sigmoid(g[:, 1 * hp:2 * hp])
            g_g = jnp.tanh(g[:, 2 * hp:3 * hp])
            o_g = jax.nn.sigmoid(g[:, 3 * hp:4 * hp])
            c_new = f_g * c_prev + i_g * g_g
            h_new = o_g * jnp.tanh(c_new)
            h_sc[...] = h_new
            c_sc[...] = c_new
            x_sc[pl.ds(row, BP), :] = h_new         # lane-dense (BP,128) store
            return 0

        lax.fori_loop(0, S, step, 0, unroll=True)

        hN_ref[l] = h_sc[...]
        cN_ref[l] = c_sc[...]

    # Final Linear over all timesteps in one shot: (S*BP, HP) @ (HP, VP) + b.
    # TODO(synk): for a realistic vocab (tens of thousands) tile this matmul over
    # the vocab axis (grid over cdiv(V,128), "parallel") to respect v7x's 64 MiB VMEM.
    logits_ref[...] = (jnp.dot(x_sc[...], wfc_ref[...],
                               preferred_element_type=jnp.float32)
                       + bfc_ref[...])


def _fused_forward(x_in, wih, whh, b, h0, c0, wfc, bfc):
    SBP, hp = x_in.shape
    L, BP, _ = h0.shape
    VP = wfc.shape[-1]
    vmem = lambda: pl.BlockSpec(memory_space=pltpu.MemorySpace.VMEM)
    return pl.pallas_call(
        _fused_lm_kernel,
        out_shape=(jax.ShapeDtypeStruct((SBP, VP), jnp.float32),
                   jax.ShapeDtypeStruct((L, BP, hp), jnp.float32),
                   jax.ShapeDtypeStruct((L, BP, hp), jnp.float32)),
        in_specs=[vmem() for _ in range(8)],
        out_specs=(vmem(), vmem(), vmem()),
        scratch_shapes=[pltpu.VMEM((SBP, hp), jnp.float32),       # x_sc
                        pltpu.VMEM((SBP, 4 * hp), jnp.float32),   # gates_sc
                        pltpu.VMEM((BP, hp), jnp.float32),        # h carry
                        pltpu.VMEM((BP, hp), jnp.float32)],       # c carry
    )(x_in, wih, whh, b, h0, c0, wfc, bfc)


# ------------------------------ parameter setup --------------------------------
def init_params(key, n_vocab):
    """Raw parameters in PyTorch layout (nn.Embedding / nn.LSTM / nn.Linear)."""
    params = {}
    k = jax.random.split(key, 3 + 4 * NUM_LAYERS)
    ki = iter(k)
    params["embedding"] = 0.1 * jax.random.normal(next(ki), (n_vocab, EMBED_DIM),
                                                  dtype=jnp.float32)
    for l in range(NUM_LAYERS):
        in_dim = EMBED_DIM if l == 0 else LSTM_SIZE
        params[f"w_ih_{l}"] = 0.1 * jax.random.normal(next(ki), (4 * LSTM_SIZE, in_dim),
                                                      dtype=jnp.float32)
        params[f"w_hh_{l}"] = 0.1 * jax.random.normal(next(ki), (4 * LSTM_SIZE, LSTM_SIZE),
                                                      dtype=jnp.float32)
        params[f"b_ih_{l}"] = 0.01 * jax.random.normal(next(ki), (4 * LSTM_SIZE,),
                                                       dtype=jnp.float32)
        params[f"b_hh_{l}"] = 0.01 * jax.random.normal(next(ki), (4 * LSTM_SIZE,),
                                                       dtype=jnp.float32)
    params["fc_w"] = 0.1 * jax.random.normal(next(ki), (n_vocab, LSTM_SIZE),
                                             dtype=jnp.float32)
    params["fc_b"] = 0.01 * jax.random.normal(next(ki), (n_vocab,), dtype=jnp.float32)
    return params


def _pad_gate_weight_t(w, in_dim, H):
    """(4H, in_dim) PyTorch weight -> (HP, 4*HP) transposed, one 128-lane slab/gate."""
    wt = w.T.astype(jnp.float32)                      # (in_dim, 4H)
    out = jnp.zeros((HP, 4 * HP), jnp.float32)
    for g in range(4):
        out = out.at[:in_dim, g * HP:g * HP + H].set(wt[:, g * H:(g + 1) * H])
    return out


def _pad_gate_bias(b_ih, b_hh, H):
    b = (b_ih + b_hh).astype(jnp.float32)             # (4H,)
    out = jnp.zeros((1, 4 * HP), jnp.float32)
    for g in range(4):
        out = out.at[0, g * HP:g * HP + H].set(b[g * H:(g + 1) * H])
    return out


def prepare_params(params, n_vocab):
    """One-time pad / transpose / bias-combine; nothing layout-related per forward."""
    H, E = LSTM_SIZE, EMBED_DIM
    VP = _round_up(n_vocab, 128)
    wih, whh, b = [], [], []
    for l in range(NUM_LAYERS):
        in_dim = E if l == 0 else H
        wih.append(_pad_gate_weight_t(params[f"w_ih_{l}"], in_dim, H))
        whh.append(_pad_gate_weight_t(params[f"w_hh_{l}"], H, H))
        b.append(_pad_gate_bias(params[f"b_ih_{l}"], params[f"b_hh_{l}"], H))
    wfc = jnp.zeros((HP, VP), jnp.float32).at[:H, :n_vocab].set(
        params["fc_w"].T.astype(jnp.float32))
    bfc = jnp.zeros((1, VP), jnp.float32).at[0, :n_vocab].set(
        params["fc_b"].astype(jnp.float32))
    emb = jnp.zeros((n_vocab, HP), jnp.float32).at[:, :E].set(
        params["embedding"].astype(jnp.float32))
    return {"embedding": emb,
            "wih": jnp.stack(wih), "whh": jnp.stack(whh), "b": jnp.stack(b),
            "wfc": wfc, "bfc": bfc}


# ------------------------------- model wrapper ---------------------------------
def model_forward(prep, x_tokens, prev_state, n_vocab):
    """x_tokens: (S, B) int32; prev_state: ((L,B,H), (L,B,H)) -> logits (S,B,V), state."""
    h0, c0 = prev_state
    S, B = x_tokens.shape
    H = LSTM_SIZE
    BP = _round_up(B, SUBLANE)
    VP = prep["bfc"].shape[-1]

    # Embedding lookup (gather) on the pre-padded table — plain JAX glue.
    emb = jnp.take(prep["embedding"], x_tokens, axis=0)        # (S, B, HP)
    emb = jnp.pad(emb, ((0, 0), (0, BP - B), (0, 0)))          # (S, BP, HP)
    x_in = emb.reshape(S * BP, HP)

    h0p = jnp.pad(h0, ((0, 0), (0, BP - B), (0, HP - H)))
    c0p = jnp.pad(c0, ((0, 0), (0, BP - B), (0, HP - H)))

    logits_p, hNp, cNp = _fused_forward(x_in, prep["wih"], prep["whh"], prep["b"],
                                        h0p, c0p, prep["wfc"], prep["bfc"])

    logits = logits_p.reshape(S, BP, VP)[:, :B, :n_vocab]
    state = (hNp[:, :B, :H], cNp[:, :B, :H])
    # TODO(synk): nn.LSTM dropout=0.2 between layers is train-time only; eval-mode
    # (no dropout) semantics implemented.
    return logits, state


def init_state(batch):
    return (jnp.zeros((NUM_LAYERS, batch, LSTM_SIZE), jnp.float32),
            jnp.zeros((NUM_LAYERS, batch, LSTM_SIZE), jnp.float32))


if __name__ == "__main__":
    n_vocab = 50
    seq_len, batch = 8, 2

    key = jax.random.PRNGKey(0)
    k_params, k_tok = jax.random.split(key)
    raw_params = init_params(k_params, n_vocab)
    prep = prepare_params(raw_params, n_vocab)

    x_tokens = jax.random.randint(k_tok, (seq_len, batch), 0, n_vocab, dtype=jnp.int32)
    prev_state = init_state(batch)

    fwd = jax.jit(lambda toks, state: model_forward(prep, toks, state, n_vocab))
    logits, (hN, cN) = fwd(x_tokens, prev_state)
    jax.block_until_ready((logits, hN, cN))

    assert logits.shape == (seq_len, batch, n_vocab)
    assert hN.shape == (NUM_LAYERS, batch, LSTM_SIZE)
    assert cN.shape == (NUM_LAYERS, batch, LSTM_SIZE)
    print("KERNEL_OK")
</pallas_src>

<mosaic_0001>
module attributes {stable_mosaic.version = 11 : i64} {
  func.func @_fused_lm_kernel(%arg0: memref<64x128xf32, #tpu.memory_space<vmem>>, %arg1: memref<3x128x512xf32, #tpu.memory_space<vmem>>, %arg2: memref<3x128x512xf32, #tpu.memory_space<vmem>>, %arg3: memref<3x1x512xf32, #tpu.memory_space<vmem>>, %arg4: memref<3x8x128xf32, #tpu.memory_space<vmem>>, %arg5: memref<3x8x128xf32, #tpu.memory_space<vmem>>, %arg6: memref<128x128xf32, #tpu.memory_space<vmem>>, %arg7: memref<1x128xf32, #tpu.memory_space<vmem>>, %arg8: memref<64x128xf32, #tpu.memory_space<vmem>>, %arg9: memref<3x8x128xf32, #tpu.memory_space<vmem>>, %arg10: memref<3x8x128xf32, #tpu.memory_space<vmem>>, %arg11: memref<64x128xf32, #tpu.memory_space<vmem>>, %arg12: memref<64x512xf32, #tpu.memory_space<vmem>>, %arg13: memref<8x128xf32, #tpu.memory_space<vmem>>, %arg14: memref<8x128xf32, #tpu.memory_space<vmem>>) attributes {dimension_semantics = [], scalar_prefetch = 0 : i64, scratch_operands = 4 : i64, tpu.core_type = #tpu.core_type<tc>} {
    %c0 = arith.constant 0 : index
    %c0_0 = arith.constant 0 : index
    %0 = vector.load %arg0[%c0, %c0_0] : memref<64x128xf32, #tpu.memory_space<vmem>>, vector<64x128xf32>
    %c0_1 = arith.constant 0 : index
    %c0_2 = arith.constant 0 : index
    %c0_3 = arith.constant 0 : index
    %1 = vector.load %arg1[%c0_1, %c0_2, %c0_3] : memref<3x128x512xf32, #tpu.memory_space<vmem>>, vector<1x128x512xf32>
    %2 = vector.shape_cast %1 : vector<1x128x512xf32> to vector<128x512xf32>
    %cst = arith.constant dense<0.000000e+00> : vector<64x512xf32>
    %3 = tpu.matmul %0, %2, %cst {dimension_numbers = #tpu.dot_dimension_numbers<[1], [0], [0], [1], [0, 0, 1, 1], [], []>} : vector<64x128xf32>, vector<128x512xf32>, vector<64x512xf32> -> vector<64x512xf32>
    %c0_4 = arith.constant 0 : index
    %c0_5 = arith.constant 0 : index
    %c0_6 = arith.constant 0 : index
    %4 = vector.load %arg3[%c0_4, %c0_5, %c0_6] : memref<3x1x512xf32, #tpu.memory_space<vmem>>, vector<1x1x512xf32>
    %5 = vector.shape_cast %4 : vector<1x1x512xf32> to vector<1x512xf32>
    %6 = vector.broadcast %5 : vector<1x512xf32> to vector<64x512xf32>
    %7 = arith.addf %3, %6 : vector<64x512xf32>
    %c0_7 = arith.constant 0 : index
    %c0_8 = arith.constant 0 : index
    %8 = vector.load %arg12[%c0_7, %c0_8] : memref<64x512xf32, #tpu.memory_space<vmem>>, vector<64x512xf32>
    tpu.vector_store %arg12[%c0_7, %c0_8], %7 {strides = array<i32>} : memref<64x512xf32, #tpu.memory_space<vmem>>, vector<64x512xf32>,
    %c0_9 = arith.constant 0 : index
    %c0_10 = arith.constant 0 : index
    %c0_11 = arith.constant 0 : index
    %9 = vector.load %arg4[%c0_9, %c0_10, %c0_11] : memref<3x8x128xf32, #tpu.memory_space<vmem>>, vector<1x8x128xf32>
    %10 = vector.shape_cast %9 : vector<1x8x128xf32> to vector<8x128xf32>
    %c0_12 = arith.constant 0 : index
    %c0_13 = arith.constant 0 : index
    %11 = vector.load %arg13[%c0_12, %c0_13] : memref<8x128xf32, #tpu.memory_space<vmem>>, vector<8x128xf32>
    tpu.vector_store %arg13[%c0_12, %c0_13], %10 {strides = array<i32>} : memref<8x128xf32, #tpu.memory_space<vmem>>, vector<8x128xf32>,
    %c0_14 = arith.constant 0 : index
    %c0_15 = arith.constant 0 : index
    %c0_16 = arith.constant 0 : index
    %12 = vector.load %arg5[%c0_14, %c0_15, %c0_16] : memref<3x8x128xf32, #tpu.memory_space<vmem>>, vector<1x8x128xf32>
    %13 = vector.shape_cast %12 : vector<1x8x128xf32> to vector<8x128xf32>
    %c0_17 = arith.constant 0 : index
    %c0_18 = arith.constant 0 : index
    %14 = vector.load %arg14[%c0_17, %c0_18] : memref<8x128xf32, #tpu.memory_space<vmem>>, vector<8x128xf32>
    tpu.vector_store %arg14[%c0_17, %c0_18], %13 {strides = array<i32>} : memref<8x128xf32, #tpu.memory_space<vmem>>, vector<8x128xf32>,
    %c0_i32 = arith.constant 0 : i32
    %c8_i32 = arith.constant 8 : i32
    %15 = arith.muli %c0_i32, %c8_i32 : i32
    %16 = tpu.assume_multiple %15, 8 : i32
    %c0_19 = arith.constant 0 : index
    %c0_20 = arith.constant 0 : index
    %17 = vector.load %arg13[%c0_19, %c0_20] : memref<8x128xf32, #tpu.memory_space<vmem>>, vector<8x128xf32>
    %c0_21 = arith.constant 0 : index
    %c0_22 = arith.constant 0 : index
    %18 = vector.load %arg14[%c0_21, %c0_22] : memref<8x128xf32, #tpu.memory_space<vmem>>, vector<8x128xf32>
    %19 = arith.index_cast %16 : i32 to index
    %c0_23 = arith.constant 0 : index
    %20 = vector.load %arg12[%19, %c0_23] : memref<64x512xf32, #tpu.memory_space<vmem>>, vector<8x512xf32>
    %c0_24 = arith.constant 0 : index
    %c0_25 = arith.constant 0 : index
    %c0_26 = arith.constant 0 : index
    %21 = vector.load %arg2[%c0_24, %c0_25, %c0_26] : memref<3x128x512xf32, #tpu.memory_space<vmem>>, vector<1x128x512xf32>
    %22 = vector.shape_cast %21 : vector<1x128x512xf32> to vector<128x512xf32>
    %cst_27 = arith.constant dense<0.000000e+00> : vector<8x512xf32>
    %23 = tpu.matmul %17, %22, %cst_27 {dimension_numbers = #tpu.dot_dimension_numbers<[1], [0], [0], [1], [0, 0, 1, 1], [], []>} : vector<8x128xf32>, vector<128x512xf32>, vector<8x512xf32> -> vector<8x512xf32>
    %24 = arith.addf %20, %23 : vector<8x512xf32>
    %25 = vector.extract_strided_slice %24 {offsets = [0, 0], sizes = [8, 128], strides = [1, 1]} : vector<8x512xf32> to vector<8x128xf32>
    %26 = arith.negf %25 : vector<8x128xf32>
    %27 = math.exp %26 : vector<8x128xf32>
    %cst_28 = arith.constant 1.000000e+00 : f32
    %28 = vector.broadcast %cst_28 : f32 to vector<8x128xf32>
    %29 = arith.addf %28, %27 : vector<8x128xf32>
    %30 = arith.divf %28, %29 : vector<8x128xf32>
    %31 = vector.extract_strided_slice %24 {offsets = [0, 128], sizes = [8, 128], strides = [1, 1]} : vector<8x512xf32> to vector<8x128xf32>
    %32 = arith.negf %31 : vector<8x128xf32>
    %33 = math.exp %32 : vector<8x128xf32>
    %cst_29 = arith.constant 1.000000e+00 : f32
    %34 = vector.broadcast %cst_29 : f32 to vector<8x128xf32>
    %35 = arith.addf %34, %33 : vector<8x128xf32>
    %36 = arith.divf %34, %35 : vector<8x128xf32>
    %37 = vector.extract_strided_slice %24 {offsets = [0, 256], sizes = [8, 128], strides = [1, 1]} : vector<8x512xf32> to vector<8x128xf32>
    %38 = math.tanh %37 : vector<8x128xf32>
    %39 = vector.extract_strided_slice %24 {offsets = [0, 384], sizes = [8, 128], strides = [1, 1]} : vector<8x512xf32> to vector<8x128xf32>
    %40 = arith.negf %39 : vector<8x128xf32>
    %41 = math.exp %40 : vector<8x128xf32>
    %cst_30 = arith.constant 1.000000e+00 : f32
    %42 = vector.broadcast %cst_30 : f32 to vector<8x128xf32>
    %43 = arith.addf %42, %41 : vector<8x128xf32>
    %44 = arith.divf %42, %43 : vector<8x128xf32>
    %45 = arith.mulf %36, %18 : vector<8x128xf32>
    %46 = arith.mulf %30, %38 : vector<8x128xf32>
    %47 = arith.addf %45, %46 : vector<8x128xf32>
    %48 = math.tanh %47 : vector<8x128xf32>
    %49 = arith.mulf %44, %48 : vector<8x128xf32>
    %c0_31 = arith.constant 0 : index
    %c0_32 = arith.constant 0 : index
    %50 = vector.load %arg13[%c0_31, %c0_32] : memref<8x128xf32, #tpu.memory_space<vmem>>, vector<8x128xf32>
    tpu.vector_store %arg13[%c0_31, %c0_32], %49 {strides = array<i32>} : memref<8x128xf32, #tpu.memory_space<vmem>>, vector<8x128xf32>,
    %c0_33 = arith.constant 0 : index
    %c0_34 = arith.constant 0 : index
    %51 = vector.load %arg14[%c0_33, %c0_34] : memref<8x128xf32, #tpu.memory_space<vmem>>, vector<8x128xf32>
    tpu.vector_store %arg14[%c0_33, %c0_34], %47 {strides = array<i32>} : memref<8x128xf32, #tpu.memory_space<vmem>>, vector<8x128xf32>,
    %52 = arith.index_cast %16 : i32 to index
    %c0_35 = arith.constant 0 : index
    %53 = vector.load %arg11[%52, %c0_35] : memref<64x128xf32, #tpu.memory_space<vmem>>, vector<8x128xf32>
    tpu.vector_store %arg11[%52, %c0_35], %49 {strides = array<i32>} : memref<64x128xf32, #tpu.memory_space<vmem>>, vector<8x128xf32>,
    %c1_i32 = arith.constant 1 : i32
    %c8_i32_36 = arith.constant 8 : i32
    %54 = arith.muli %c1_i32, %c8_i32_36 : i32
    %55 = tpu.assume_multiple %54, 8 : i32
    %c0_37 = arith.constant 0 : index
    %c0_38 = arith.constant 0 : index
    %56 = vector.load %arg13[%c0_37, %c0_38] : memref<8x128xf32, #tpu.memory_space<vmem>>, vector<8x128xf32>
    %c0_39 = arith.constant 0 : index
    %c0_40 = arith.constant 0 : index
    %57 = vector.load %arg14[%c0_39, %c0_40] : memref<8x128xf32, #tpu.memory_space<vmem>>, vector<8x128xf32>
    %58 = arith.index_cast %55 : i32 to index
    %c0_41 = arith.constant 0 : index
    %59 = vector.load %arg12[%58, %c0_41] : memref<64x512xf32, #tpu.memory_space<vmem>>, vector<8x512xf32>
    %c0_42 = arith.constant 0 : index
    %c0_43 = arith.constant 0 : index
    %c0_44 = arith.constant 0 : index
    %60 = vector.load %arg2[%c0_42, %c0_43, %c0_44] : memref<3x128x512xf32, #tpu.memory_space<vmem>>, vector<1x128x512xf32>
    %61 = vector.shape_cast %60 : vector<1x128x512xf32> to vector<128x512xf32>
    %cst_45 = arith.constant dense<0.000000e+00> : vector<8x512xf32>
    %62 = tpu.matmul %56, %61, %cst_45 {dimension_numbers = #tpu.dot_dimension_numbers<[1], [0], [0], [1], [0, 0, 1, 1], [], []>} : vector<8x128xf32>, vector<128x512xf32>, vector<8x512xf32> -> vector<8x512xf32>
    %63 = arith.addf %59, %62 : vector<8x512xf32>
    %64 = vector.extract_strided_slice %63 {offsets = [0, 0], sizes = [8, 128], strides = [1, 1]} : vector<8x512xf32> to vector<8x128xf32>
    %65 = arith.negf %64 : vector<8x128xf32>
    %66 = math.exp %65 : vector<8x128xf32>
    %cst_46 = arith.constant 1.000000e+00 : f32
    %67 = vector.broadcast %cst_46 : f32 to vector<8x128xf32>
    %68 = arith.addf %67, %66 : vector<8x128xf32>
    %69 = arith.divf %67, %68 : vector<8x128xf32>
    %70 = vector.extract_strided_slice %63 {offsets = [0, 128], sizes = [8, 128], strides = [1, 1]} : vector<8x512xf32> to vector<8x128xf32>
    %71 = arith.negf %70 : vector<8x128xf32>
    %72 = math.exp %71 : vector<8x128xf32>
    %cst_47 = arith.constant 1.000000e+00 : f32
    %73 = vector.broadcast %cst_47 : f32 to vector<8x128xf32>
    %74 = arith.addf %73, %72 : vector<8x128xf32>
    %75 = arith.divf %73, %74 : vector<8x128xf32>
    %76 = vector.extract_strided_slice %63 {offsets = [0, 256], sizes = [8, 128], strides = [1, 1]} : vector<8x512xf32> to vector<8x128xf32>
    %77 = math.tanh %76 : vector<8x128xf32>
    %78 = vector.extract_strided_slice %63 {offsets = [0, 384], sizes = [8, 128], strides = [1, 1]} : vector<8x512xf32> to vector<8x128xf32>
    %79 = arith.negf %78 : vector<8x128xf32>
    %80 = math.exp %79 : vector<8x128xf32>
    %cst_48 = arith.constant 1.000000e+00 : f32
    %81 = vector.broadcast %cst_48 : f32 to vector<8x128xf32>
    %82 = arith.addf %81, %80 : vector<8x128xf32>
    %83 = arith.divf %81, %82 : vector<8x128xf32>
    %84 = arith.mulf %75, %57 : vector<8x128xf32>
    %85 = arith.mulf %69, %77 : vector<8x128xf32>
    %86 = arith.addf %84, %85 : vector<8x128xf32>
    %87 = math.tanh %86 : vector<8x128xf32>
    %88 = arith.mulf %83, %87 : vector<8x128xf32>
    %c0_49 = arith.constant 0 : index
    %c0_50 = arith.constant 0 : index
    %89 = vector.load %arg13[%c0_49, %c0_50] : memref<8x128xf32, #tpu.memory_space<vmem>>, vector<8x128xf32>
    tpu.vector_store %arg13[%c0_49, %c0_50], %88 {strides = array<i32>} : memref<8x128xf32, #tpu.memory_space<vmem>>, vector<8x128xf32>,
    %c0_51 = arith.constant 0 : index
    %c0_52 = arith.constant 0 : index
    %90 = vector.load %arg14[%c0_51, %c0_52] : memref<8x128xf32, #tpu.memory_space<vmem>>, vector<8x128xf32>
    tpu.vector_store %arg14[%c0_51, %c0_52], %86 {strides = array<i32>} : memref<8x128xf32, #tpu.memory_space<vmem>>, vector<8x128xf32>,
    %91 = arith.index_cast %55 : i32 to index
    %c0_53 = arith.constant 0 : index
    %92 = vector.load %arg11[%91, %c0_53] : memref<64x128xf32, #tpu.memory_space<vmem>>, vector<8x128xf32>
    tpu.vector_store %arg11[%91, %c0_53], %88 {strides = array<i32>} : memref<64x128xf32, #tpu.memory_space<vmem>>, vector<8x128xf32>,
    %c2_i32 = arith.constant 2 : i32
    %c8_i32_54 = arith.constant 8 : i32
    %93 = arith.muli %c2_i32, %c8_i32_54 : i32
    %94 = tpu.assume_multiple %93, 8 : i32
    %c0_55 = arith.constant 0 : index
    %c0_56 = arith.constant 0 : index
    %95 = vector.load %arg13[%c0_55, %c0_56] : memref<8x128xf32, #tpu.memory_space<vmem>>, vector<8x128xf32>
    %c0_57 = arith.constant 0 : index
    %c0_58 = arith.constant 0 : index
    %96 = vector.load %arg14[%c0_57, %c0_58] : memref<8x128xf32, #tpu.memory_space<vmem>>, vector<8x128xf32>
    %97 = arith.index_cast %94 : i32 to index
    %c0_59 = arith.constant 0 : index
    %98 = vector.load %arg12[%97, %c0_59] : memref<64x512xf32, #tpu.memory_space<vmem>>, vector<8x512xf32>
    %c0_60 = arith.constant 0 : index
    %c0_61 = arith.constant 0 : index
    %c0_62 = arith.constant 0 : index
    %99 = vector.load %arg2[%c0_60, %c0_61, %c0_62] : memref<3x128x512xf32, #tpu.memory_space<vmem>>, vector<1x128x512xf32>
    %100 = vector.shape_cast %99 : vector<1x128x512xf32> to vector<128x512xf32>
    %cst_63 = arith.constant dense<0.000000e+00> : vector<8x512xf32>
    %101 = tpu.matmul %95, %100, %cst_63 {dimension_numbers = #tpu.dot_dimension_numbers<[1], [0], [0], [1], [0, 0, 1, 1], [], []>} : vector<8x128xf32>, vector<128x512xf32>, vector<8x512xf32> -> vector<8x512xf32>
    %102 = arith.addf %98, %101 : vector<8x512xf32>
    %103 = vector.extract_strided_slice %102 {offsets = [0, 0], sizes = [8, 128], strides = [1, 1]} : vector<8x512xf32> to vector<8x128xf32>
    %104 = arith.negf %103 : vector<8x128xf32>
    %105 = math.exp %104 : vector<8x128xf32>
    %cst_64 = arith.constant 1.000000e+00 : f32
    %106 = vector.broadcast %cst_64 : f32 to vector<8x128xf32>
    %107 = arith.addf %106, %105 : vector<8x128xf32>
    %108 = arith.divf %106, %107 : vector<8x128xf32>
    %109 = vector.extract_strided_slice %102 {offsets = [0, 128], sizes = [8, 128], strides = [1, 1]} : vector<8x512xf32> to vector<8x128xf32>
    %110 = arith.negf %109 : vector<8x128xf32>
    %111 = math.exp %110 : vector<8x128xf32>
    %cst_65 = arith.constant 1.000000e+00 : f32
    %112 = vector.broadcast %cst_65 : f32 to vector<8x128xf32>
    %113 = arith.addf %112, %111 : vector<8x128xf32>
    %114 = arith.divf %112, %113 : vector<8x128xf32>
    %115 = vector.extract_strided_slice %102 {offsets = [0, 256], sizes = [8, 128], strides = [1, 1]} : vector<8x512xf32> to vector<8x128xf32>
    %116 = math.tanh %115 : vector<8x128xf32>
    %117 = vector.extract_strided_slice %102 {offsets = [0, 384], sizes = [8, 128], strides = [1, 1]} : vector<8x512xf32> to vector<8x128xf32>
    %118 = arith.negf %117 : vector<8x128xf32>
    %119 = math.exp %118 : vector<8x128xf32>
    %cst_66 = arith.constant 1.000000e+00 : f32
    %120 = vector.broadcast %cst_66 : f32 to vector<8x128xf32>
    %121 = arith.addf %120, %119 : vector<8x128xf32>
    %122 = arith.divf %120, %121 : vector<8x128xf32>
    %123 = arith.mulf %114, %96 : vector<8x128xf32>
    %124 = arith.mulf %108, %116 : vector<8x128xf32>
    %125 = arith.addf %123, %124 : vector<8x128xf32>
    %126 = math.tanh %125 : vector<8x128xf32>
    %127 = arith.mulf %122, %126 : vector<8x128xf32>
    %c0_67 = arith.constant 0 : index
    %c0_68 = arith.constant 0 : index
    %128 = vector.load %arg13[%c0_67, %c0_68] : memref<8x128xf32, #tpu.memory_space<vmem>>, vector<8x128xf32>
    tpu.vector_store %arg13[%c0_67, %c0_68], %127 {strides = array<i32>} : memref<8x128xf32, #tpu.memory_space<vmem>>, vector<8x128xf32>,
    %c0_69 = arith.constant 0 : index
    %c0_70 = arith.constant 0 : index
    %129 = vector.load %arg14[%c0_69, %c0_70] : memref<8x128xf32, #tpu.memory_space<vmem>>, vector<8x128xf32>
    tpu.vector_store %arg14[%c0_69, %c0_70], %125 {strides = array<i32>} : memref<8x128xf32, #tpu.memory_space<vmem>>, vector<8x128xf32>,
    %130 = arith.index_cast %94 : i32 to index
    %c0_71 = arith.constant 0 : index
    %131 = vector.load %arg11[%130, %c0_71] : memref<64x128xf32, #tpu.memory_space<vmem>>, vector<8x128xf32>
    tpu.vector_store %arg11[%130, %c0_71], %127 {strides = array<i32>} : memref<64x128xf32, #tpu.memory_space<vmem>>, vector<8x128xf32>,
    %c3_i32 = arith.constant 3 : i32
    %c8_i32_72 = arith.constant 8 : i32
    %132 = arith.muli %c3_i32, %c8_i32_72 : i32
    %133 = tpu.assume_multiple %132, 8 : i32
    %c0_73 = arith.constant 0 : index
    %c0_74 = arith.constant 0 : index
    %134 = vector.load %arg13[%c0_73, %c0_74] : memref<8x128xf32, #tpu.memory_space<vmem>>, vector<8x128xf32>
    %c0_75 = arith.constant 0 : index
    %c0_76 = arith.constant 0 : index
    %135 = vector.load %arg14[%c0_75, %c0_76] : memref<8x128xf32, #tpu.memory_space<vmem>>, vector<8x128xf32>
    %136 = arith.index_cast %133 : i32 to index
    %c0_77 = arith.constant 0 : index
    %137 = vector.load %arg12[%136, %c0_77] : memref<64x512xf32, #tpu.memory_space<vmem>>, vector<8x512xf32>
    %c0_78 = arith.constant 0 : index
    %c0_79 = arith.constant 0 : index
    %c0_80 = arith.constant 0 : index
    %138 = vector.load %arg2[%c0_78, %c0_79, %c0_80] : memref<3x128x512xf32, #tpu.memory_space<vmem>>, vector<1x128x512xf32>
    %139 = vector.shape_cast %138 : vector<1x128x512xf32> to vector<128x512xf32>
    %cst_81 = arith.constant dense<0.000000e+00> : vector<8x512xf32>
    %140 = tpu.matmul %134, %139, %cst_81 {dimension_numbers = #tpu.dot_dimension_numbers<[1], [0], [0], [1], [0, 0, 1, 1], [], []>} : vector<8x128xf32>, vector<128x512xf32>, vector<8x512xf32> -> vector<8x512xf32>
    %141 = arith.addf %137, %140 : vector<8x512xf32>
    %142 = vector.extract_strided_slice %141 {offsets = [0, 0], sizes = [8, 128], strides = [1, 1]} : vector<8x512xf32> to vector<8x128xf32>
    %143 = arith.negf %142 : vector<8x128xf32>
    %144 = math.exp %143 : vector<8x128xf32>
    %cst_82 = arith.constant 1.000000e+00 : f32
    %145 = vector.broadcast %cst_82 : f32 to vector<8x128xf32>
    %146 = arith.addf %145, %144 : vector<8x128xf32>
    %147 = arith.divf %145, %146 : vector<8x128xf32>
    %148 = vector.extract_strided_slice %141 {offsets = [0, 128], sizes = [8, 128], strides = [1, 1]} : vector<8x512xf32> to vector<8x128xf32>
    %149 = arith.negf %148 : vector<8x128xf32>
    %150 = math.exp %149 : vector<8x128xf32>
    %cst_83 = arith.constant 1.000000e+00 : f32
    %151 = vector.broadcast %cst_83 : f32 to vector<8x128xf32>
    %152 = arith.addf %151, %150 : vector<8x128xf32>
    %153 = arith.divf %151, %152 : vector<8x128xf32>
    %154 = vector.extract_strided_slice %141 {offsets = [0, 256], sizes = [8, 128], strides = [1, 1]} : vector<8x512xf32> to vector<8x128xf32>
    %155 = math.tanh %154 : vector<8x128xf32>
    %156 = vector.extract_strided_slice %141 {offsets = [0, 384], sizes = [8, 128], strides = [1, 1]} : vector<8x512xf32> to vector<8x128xf32>
    %157 = arith.negf %156 : vector<8x128xf32>
    %158 = math.exp %157 : vector<8x128xf32>
    %cst_84 = arith.constant 1.000000e+00 : f32
    %159 = vector.broadcast %cst_84 : f32 to vector<8x128xf32>
    %160 = arith.addf %159, %158 : vector<8x128xf32>
    %161 = arith.divf %159, %160 : vector<8x128xf32>
    %162 = arith.mulf %153, %135 : vector<8x128xf32>
    %163 = arith.mulf %147, %155 : vector<8x128xf32>
    %164 = arith.addf %162, %163 : vector<8x128xf32>
    %165 = math.tanh %164 : vector<8x128xf32>
    %166 = arith.mulf %161, %165 : vector<8x128xf32>
    %c0_85 = arith.constant 0 : index
    %c0_86 = arith.constant 0 : index
    %167 = vector.load %arg13[%c0_85, %c0_86] : memref<8x128xf32, #tpu.memory_space<vmem>>, vector<8x128xf32>
    tpu.vector_store %arg13[%c0_85, %c0_86], %166 {strides = array<i32>} : memref<8x128xf32, #tpu.memory_space<vmem>>, vector<8x128xf32>,
    %c0_87 = arith.constant 0 : index
    %c0_88 = arith.constant 0 : index
    %168 = vector.load %arg14[%c0_87, %c0_88] : memref<8x128xf32, #tpu.memory_space<vmem>>, vector<8x128xf32>
    tpu.vector_store %arg14[%c0_87, %c0_88], %164 {strides = array<i32>} : memref<8x128xf32, #tpu.memory_space<vmem>>, vector<8x128xf32>,
    %169 = arith.index_cast %133 : i32 to index
    %c0_89 = arith.constant 0 : index
    %170 = vector.load %arg11[%169, %c0_89] : memref<64x128xf32, #tpu.memory_space<vmem>>, vector<8x128xf32>
    tpu.vector_store %arg11[%169, %c0_89], %166 {strides = array<i32>} : memref<64x128xf32, #tpu.memory_space<vmem>>, vector<8x128xf32>,
    %c4_i32 = arith.constant 4 : i32
    %c8_i32_90 = arith.constant 8 : i32
    %171 = arith.muli %c4_i32, %c8_i32_90 : i32
    %172 = tpu.assume_multiple %171, 8 : i32
    %c0_91 = arith.constant 0 : index
    %c0_92 = arith.constant 0 : index
    %173 = vector.load %arg13[%c0_91, %c0_92] : memref<8x128xf32, #tpu.memory_space<vmem>>, vector<8x128xf32>
    %c0_93 = arith.constant 0 : index
    %c0_94 = arith.constant 0 : index
    %174 = vector.load %arg14[%c0_93, %c0_94] : memref<8x128xf32, #tpu.memory_space<vmem>>, vector<8x128xf32>
    %175 = arith.index_cast %172 : i32 to index
    %c0_95 = arith.constant 0 : index
    %176 = vector.load %arg12[%175, %c0_95] : memref<64x512xf32, #tpu.memory_space<vmem>>, vector<8x512xf32>
    %c0_96 = arith.constant 0 : index
    %c0_97 = arith.constant 0 : index
    %c0_98 = arith.constant 0 : index
    %177 = vector.load %arg2[%c0_96, %c0_97, %c0_98] : memref<3x128x512xf32, #tpu.memory_space<vmem>>, vector<1x128x512xf32>
    %178 = vector.shape_cast %177 : vector<1x128x512xf32> to vector<128x512xf32>
    %cst_99 = arith.constant dense<0.000000e+00> : vector<8x512xf32>
    %179 = tpu.matmul %173, %178, %cst_99 {dimension_numbers = #tpu.dot_dimension_numbers<[1], [0], [0], [1], [0, 0, 1, 1], [], []>} : vector<8x128xf32>, vector<128x512xf32>, vector<8x512xf32> -> vector<8x512xf32>
    %180 = arith.addf %176, %179 : vector<8x512xf32>
    %181 = vector.extract_strided_slice %180 {offsets = [0, 0], sizes = [8, 128], strides = [1, 1]} : vector<8x512xf32> to vector<8x128xf32>
    %182 = arith.negf %181 : vector<8x128xf32>
    %183 = math.exp %182 : vector<8x128xf32>
    %cst_100 = arith.constant 1.000000e+00 : f32
    %184 = vector.broadcast %cst_100 : f32 to vector<8x128xf32>
    %185 = arith.addf %184, %183 : vector<8x128xf32>
    %186 = arith.divf %184, %185 : vector<8x128xf32>
    %187 = vector.extract_strided_slice %180 {offsets = [0, 128], sizes = [8, 128], strides = [1, 1]} : vector<8x512xf32> to vector<8x128xf32>
    %188 = arith.negf %187 : vector<8x128xf32>
    %189 = math.exp %188 : vector<8x128xf32>
    %cst_101 = arith.constant 1.000000e+00 : f32
    %190 = vector.broadcast %cst_101 : f32 to vector<8x128xf32>
    %191 = arith.addf %190, %189 : vector<8x128xf32>
    %192 = arith.divf %190, %191 : vector<8x128xf32>
    %193 = vector.extract_strided_slice %180 {offsets = [0, 256], sizes = [8, 128], strides = [1, 1]} : vector<8x512xf32> to vector<8x128xf32>
    %194 = math.tanh %193 : vector<8x128xf32>
    %195 = vector.extract_strided_slice %180 {offsets = [0, 384], sizes = [8, 128], strides = [1, 1]} : vector<8x512xf32> to vector<8x128xf32>
    %196 = arith.negf %195 : vector<8x128xf32>
    %197 = math.exp %196 : vector<8x128xf32>
    %cst_102 = arith.constant 1.000000e+00 : f32
    %198 = vector.broadcast %cst_102 : f32 to vector<8x128xf32>
    %199 = arith.addf %198, %197 : vector<8x128xf32>
    %200 = arith.divf %198, %199 : vector<8x128xf32>
    %201 = arith.mulf %192, %174 : vector<8x128xf32>
    %202 = arith.mulf %186, %194 : vector<8x128xf32>
    %203 = arith.addf %201, %202 : vector<8x128xf32>
    %204 = math.tanh %203 : vector<8x128xf32>
    %205 = arith.mulf %200, %204 : vector<8x128xf32>
    %c0_103 = arith.constant 0 : index
    %c0_104 = arith.constant 0 : index
    %206 = vector.load %arg13[%c0_103, %c0_104] : memref<8x128xf32, #tpu.memory_space<vmem>>, vector<8x128xf32>
    tpu.vector_store %arg13[%c0_103, %c0_104], %205 {strides = array<i32>} : memref<8x128xf32, #tpu.memory_space<vmem>>, vector<8x128xf32>,
    %c0_105 = arith.constant 0 : index
    %c0_106 = arith.constant 0 : index
    %207 = vector.load %arg14[%c0_105, %c0_106] : memref<8x128xf32, #tpu.memory_space<vmem>>, vector<8x128xf32>
    tpu.vector_store %arg14[%c0_105, %c0_106], %203 {strides = array<i32>} : memref<8x128xf32, #tpu.memory_space<vmem>>, vector<8x128xf32>,
    %208 = arith.index_cast %172 : i32 to index
    %c0_107 = arith.constant 0 : index
    %209 = vector.load %arg11[%208, %c0_107] : memref<64x128xf32, #tpu.memory_space<vmem>>, vector<8x128xf32>
    tpu.vector_store %arg11[%208, %c0_107], %205 {strides = array<i32>} : memref<64x128xf32, #tpu.memory_space<vmem>>, vector<8x128xf32>,
    %c5_i32 = arith.constant 5 : i32
    %c8_i32_108 = arith.constant 8 : i32
    %210 = arith.muli %c5_i32, %c8_i32_108 : i32
    %211 = tpu.assume_multiple %210, 8 : i32
    %c0_109 = arith.constant 0 : index
    %c0_110 = arith.constant 0 : index
    %212 = vector.load %arg13[%c0_109, %c0_110] : memref<8x128xf32, #tpu.memory_space<vmem>>, vector<8x128xf32>
    %c0_111 = arith.constant 0 : index
    %c0_112 = arith.constant 0 : index
    %213 = vector.load %arg14[%c0_111, %c0_112] : memref<8x128xf32, #tpu.memory_space<vmem>>, vector<8x128xf32>
    %214 = arith.index_cast %211 : i32 to index
    %c0_113 = arith.constant 0 : index
    %215 = vector.load %arg12[%214, %c0_113] : memref<64x512xf32, #tpu.memory_space<vmem>>, vector<8x512xf32>
    %c0_114 = arith.constant 0 : index
    %c0_115 = arith.constant 0 : index
    %c0_116 = arith.constant 0 : index
    %216 = vector.load %arg2[%c0_114, %c0_115, %c0_116] : memref<3x128x512xf32, #tpu.memory_space<vmem>>, vector<1x128x512xf32>
    %217 = vector.shape_cast %216 : vector<1x128x512xf32> to vector<128x512xf32>
    %cst_117 = arith.constant dense<0.000000e+00> : vector<8x512xf32>
    %218 = tpu.matmul %212, %217, %cst_117 {dimension_numbers = #tpu.dot_dimension_numbers<[1], [0], [0], [1], [0, 0, 1, 1], [], []>} : vector<8x128xf32>, vector<128x512xf32>, vector<8x512xf32> -> vector<8x512xf32>
    %219 = arith.addf %215, %218 : vector<8x512xf32>
    %220 = vector.extract_strided_slice %219 {offsets = [0, 0], sizes = [8, 128], strides = [1, 1]} : vector<8x512xf32> to vector<8x128xf32>
    %221 = arith.negf %220 : vector<8x128xf32>
    %222 = math.exp %221 : vector<8x128xf32>
    %cst_118 = arith.constant 1.000000e+00 : f32
    %223 = vector.broadcast %cst_118 : f32 to vector<8x128xf32>
    %224 = arith.addf %223, %222 : vector<8x128xf32>
    %225 = arith.divf %223, %224 : vector<8x128xf32>
    %226 = vector.extract_strided_slice %219 {offsets = [0, 128], sizes = [8, 128], strides = [1, 1]} : vector<8x512xf32> to vector<8x128xf32>
    %227 = arith.negf %226 : vector<8x128xf32>
    %228 = math.exp %227 : vector<8x128xf32>
    %cst_119 = arith.constant 1.000000e+00 : f32
    %229 = vector.broadcast %cst_119 : f32 to vector<8x128xf32>
    %230 = arith.addf %229, %228 : vector<8x128xf32>
    %231 = arith.divf %229, %230 : vector<8x128xf32>
    %232 = vector.extract_strided_slice %219 {offsets = [0, 256], sizes = [8, 128], strides = [1, 1]} : vector<8x512xf32> to vector<8x128xf32>
    %233 = math.tanh %232 : vector<8x128xf32>
    %234 = vector.extract_strided_slice %219 {offsets = [0, 384], sizes = [8, 128], strides = [1, 1]} : vector<8x512xf32> to vector<8x128xf32>
    %235 = arith.negf %234 : vector<8x128xf32>
    %236 = math.exp %235 : vector<8x128xf32>
    %cst_120 = arith.constant 1.000000e+00 : f32
    %237 = vector.broadcast %cst_120 : f32 to vector<8x128xf32>
    %238 = arith.addf %237, %236 : vector<8x128xf32>
    %239 = arith.divf %237, %238 : vector<8x128xf32>
    %240 = arith.mulf %231, %213 : vector<8x128xf32>
    %241 = arith.mulf %225, %233 : vector<8x128xf32>
    %242 = arith.addf %240, %241 : vector<8x128xf32>
    %243 = math.tanh %242 : vector<8x128xf32>
    %244 = arith.mulf %239, %243 : vector<8x128xf32>
    %c0_121 = arith.constant 0 : index
    %c0_122 = arith.constant 0 : index
    %245 = vector.load %arg13[%c0_121, %c0_122] : memref<8x128xf32, #tpu.memory_space<vmem>>, vector<8x128xf32>
    tpu.vector_store %arg13[%c0_121, %c0_122], %244 {strides = array<i32>} : memref<8x128xf32, #tpu.memory_space<vmem>>, vector<8x128xf32>,
    %c0_123 = arith.constant 0 : index
    %c0_124 = arith.constant 0 : index
    %246 = vector.load %arg14[%c0_123, %c0_124] : memref<8x128xf32, #tpu.memory_space<vmem>>, vector<8x128xf32>
    tpu.vector_store %arg14[%c0_123, %c0_124], %242 {strides = array<i32>} : memref<8x128xf32, #tpu.memory_space<vmem>>, vector<8x128xf32>,
    %247 = arith.index_cast %211 : i32 to index
    %c0_125 = arith.constant 0 : index
    %248 = vector.load %arg11[%247, %c0_125] : memref<64x128xf32, #tpu.memory_space<vmem>>, vector<8x128xf32>
    tpu.vector_store %arg11[%247, %c0_125], %244 {strides = array<i32>} : memref<64x128xf32, #tpu.memory_space<vmem>>, vector<8x128xf32>,
    %c6_i32 = arith.constant 6 : i32
    %c8_i32_126 = arith.constant 8 : i32
    %249 = arith.muli %c6_i32, %c8_i32_126 : i32
    %250 = tpu.assume_multiple %249, 8 : i32
    %c0_127 = arith.constant 0 : index
    %c0_128 = arith.constant 0 : index
    %251 = vector.load %arg13[%c0_127, %c0_128] : memref<8x128xf32, #tpu.memory_space<vmem>>, vector<8x128xf32>
    %c0_129 = arith.constant 0 : index
    %c0_130 = arith.constant 0 : index
    %252 = vector.load %arg14[%c0_129, %c0_130] : memref<8x128xf32, #tpu.memory_space<vmem>>, vector<8x128xf32>
    %253 = arith.index_cast %250 : i32 to index
    %c0_131 = arith.constant 0 : index
    %254 = vector.load %arg12[%253, %c0_131] : memref<64x512xf32, #tpu.memory_space<vmem>>, vector<8x512xf32>
    %c0_132 = arith.constant 0 : index
    %c0_133 = arith.constant 0 : index
    %c0_134 = arith.constant 0 : index
    %255 = vector.load %arg2[%c0_132, %c0_133, %c0_134] : memref<3x128x512xf32, #tpu.memory_space<vmem>>, vector<1x128x512xf32>
    %256 = vector.shape_cast %255 : vector<1x128x512xf32> to vector<128x512xf32>
    %cst_135 = arith.constant dense<0.000000e+00> : vector<8x512xf32>
    %257 = tpu.matmul %251, %256, %cst_135 {dimension_numbers = #tpu.dot_dimension_numbers<[1], [0], [0], [1], [0, 0, 1, 1], [], []>} : vector<8x128xf32>, vector<128x512xf32>, vector<8x512xf32> -> vector<8x512xf32>
    %258 = arith.addf %254, %257 : vector<8x512xf32>
    %259 = vector.extract_strided_slice %258 {offsets = [0, 0], sizes = [8, 128], strides = [1, 1]} : vector<8x512xf32> to vector<8x128xf32>
    %260 = arith.negf %259 : vector<8x128xf32>
    %261 = math.exp %260 : vector<8x128xf32>
    %cst_136 = arith.constant 1.000000e+00 : f32
    %262 = vector.broadcast %cst_136 : f32 to vector<8x128xf32>
    %263 = arith.addf %262, %261 : vector<8x128xf32>
    %264 = arith.divf %262, %263 : vector<8x128xf32>
    %265 = vector.extract_strided_slice %258 {offsets = [0, 128], sizes = [8, 128], strides = [1, 1]} : vector<8x512xf32> to vector<8x128xf32>
    %266 = arith.negf %265 : vector<8x128xf32>
    %267 = math.exp %266 : vector<8x128xf32>
    %cst_137 = arith.constant 1.000000e+00 : f32
    %268 = vector.broadcast %cst_137 : f32 to vector<8x128xf32>
    %269 = arith.addf %268, %267 : vector<8x128xf32>
    %270 = arith.divf %268, %269 : vector<8x128xf32>
    %271 = vector.extract_strided_slice %258 {offsets = [0, 256], sizes = [8, 128], strides = [1, 1]} : vector<8x512xf32> to vector<8x128xf32>
    %272 = math.tanh %271 : vector<8x128xf32>
    %273 = vector.extract_strided_slice %258 {offsets = [0, 384], sizes = [8, 128], strides = [1, 1]} : vector<8x512xf32> to vector<8x128xf32>
    %274 = arith.negf %273 : vector<8x128xf32>
    %275 = math.exp %274 : vector<8x128xf32>
    %cst_138 = arith.constant 1.000000e+00 : f32
    %276 = vector.broadcast %cst_138 : f32 to vector<8x128xf32>
    %277 = arith.addf %276, %275 : vector<8x128xf32>
    %278 = arith.divf %276, %277 : vector<8x128xf32>
    %279 = arith.mulf %270, %252 : vector<8x128xf32>
    %280 = arith.mulf %264, %272 : vector<8x128xf32>
    %281 = arith.addf %279, %280 : vector<8x128xf32>
    %282 = math.tanh %281 : vector<8x128xf32>
    %283 = arith.mulf %278, %282 : vector<8x128xf32>
    %c0_139 = arith.constant 0 : index
    %c0_140 = arith.constant 0 : index
    %284 = vector.load %arg13[%c0_139, %c0_140] : memref<8x128xf32, #tpu.memory_space<vmem>>, vector<8x128xf32>
    tpu.vector_store %arg13[%c0_139, %c0_140], %283 {strides = array<i32>} : memref<8x128xf32, #tpu.memory_space<vmem>>, vector<8x128xf32>,
    %c0_141 = arith.constant 0 : index
    %c0_142 = arith.constant 0 : index
    %285 = vector.load %arg14[%c0_141, %c0_142] : memref<8x128xf32, #tpu.memory_space<vmem>>, vector<8x128xf32>
    tpu.vector_store %arg14[%c0_141, %c0_142], %281 {strides = array<i32>} : memref<8x128xf32, #tpu.memory_space<vmem>>, vector<8x128xf32>,
    %286 = arith.index_cast %250 : i32 to index
    %c0_143 = arith.constant 0 : index
    %287 = vector.load %arg11[%286, %c0_143] : memref<64x128xf32, #tpu.memory_space<vmem>>, vector<8x128xf32>
    tpu.vector_store %arg11[%286, %c0_143], %283 {strides = array<i32>} : memref<64x128xf32, #tpu.memory_space<vmem>>, vector<8x128xf32>,
    %c7_i32 = arith.constant 7 : i32
    %c8_i32_144 = arith.constant 8 : i32
    %288 = arith.muli %c7_i32, %c8_i32_144 : i32
    %289 = tpu.assume_multiple %288, 8 : i32
    %c0_145 = arith.constant 0 : index
    %c0_146 = arith.constant 0 : index
    %290 = vector.load %arg13[%c0_145, %c0_146] : memref<8x128xf32, #tpu.memory_space<vmem>>, vector<8x128xf32>
    %c0_147 = arith.constant 0 : index
    %c0_148 = arith.constant 0 : index
    %291 = vector.load %arg14[%c0_147, %c0_148] : memref<8x128xf32, #tpu.memory_space<vmem>>, vector<8x128xf32>
    %292 = arith.index_cast %289 : i32 to index
    %c0_149 = arith.constant 0 : index
    %293 = vector.load %arg12[%292, %c0_149] : memref<64x512xf32, #tpu.memory_space<vmem>>, vector<8x512xf32>
    %c0_150 = arith.constant 0 : index
    %c0_151 = arith.constant 0 : index
    %c0_152 = arith.constant 0 : index
    %294 = vector.load %arg2[%c0_150, %c0_151, %c0_152] : memref<3x128x512xf32, #tpu.memory_space<vmem>>, vector<1x128x512xf32>
    %295 = vector.shape_cast %294 : vector<1x128x512xf32> to vector<128x512xf32>
    %cst_153 = arith.constant dense<0.000000e+00> : vector<8x512xf32>
    %296 = tpu.matmul %290, %295, %cst_153 {dimension_numbers = #tpu.dot_dimension_numbers<[1], [0], [0], [1], [0, 0, 1, 1], [], []>} : vector<8x128xf32>, vector<128x512xf32>, vector<8x512xf32> -> vector<8x512xf32>
    %297 = arith.addf %293, %296 : vector<8x512xf32>
    %298 = vector.extract_strided_slice %297 {offsets = [0, 0], sizes = [8, 128], strides = [1, 1]} : vector<8x512xf32> to vector<8x128xf32>
    %299 = arith.negf %298 : vector<8x128xf32>
    %300 = math.exp %299 : vector<8x128xf32>
    %cst_154 = arith.constant 1.000000e+00 : f32
    %301 = vector.broadcast %cst_154 : f32 to vector<8x128xf32>
    %302 = arith.addf %301, %300 : vector<8x128xf32>
    %303 = arith.divf %301, %302 : vector<8x128xf32>
    %304 = vector.extract_strided_slice %297 {offsets = [0, 128], sizes = [8, 128], strides = [1, 1]} : vector<8x512xf32> to vector<8x128xf32>
    %305 = arith.negf %304 : vector<8x128xf32>
    %306 = math.exp %305 : vector<8x128xf32>
    %cst_155 = arith.constant 1.000000e+00 : f32
    %307 = vector.broadcast %cst_155 : f32 to vector<8x128xf32>
    %308 = arith.addf %307, %306 : vector<8x128xf32>
    %309 = arith.divf %307, %308 : vector<8x128xf32>
    %310 = vector.extract_strided_slice %297 {offsets = [0, 256], sizes = [8, 128], strides = [1, 1]} : vector<8x512xf32> to vector<8x128xf32>
    %311 = math.tanh %310 : vector<8x128xf32>
    %312 = vector.extract_strided_slice %297 {offsets = [0, 384], sizes = [8, 128], strides = [1, 1]} : vector<8x512xf32> to vector<8x128xf32>
    %313 = arith.negf %312 : vector<8x128xf32>
    %314 = math.exp %313 : vector<8x128xf32>
    %cst_156 = arith.constant 1.000000e+00 : f32
    %315 = vector.broadcast %cst_156 : f32 to vector<8x128xf32>
    %316 = arith.addf %315, %314 : vector<8x128xf32>
    %317 = arith.divf %315, %316 : vector<8x128xf32>
    %318 = arith.mulf %309, %291 : vector<8x128xf32>
    %319 = arith.mulf %303, %311 : vector<8x128xf32>
    %320 = arith.addf %318, %319 : vector<8x128xf32>
    %321 = math.tanh %320 : vector<8x128xf32>
    %322 = arith.mulf %317, %321 : vector<8x128xf32>
    %c0_157 = arith.constant 0 : index
    %c0_158 = arith.constant 0 : index
    %323 = vector.load %arg13[%c0_157, %c0_158] : memref<8x128xf32, #tpu.memory_space<vmem>>, vector<8x128xf32>
    tpu.vector_store %arg13[%c0_157, %c0_158], %322 {strides = array<i32>} : memref<8x128xf32, #tpu.memory_space<vmem>>, vector<8x128xf32>,
    %c0_159 = arith.constant 0 : index
    %c0_160 = arith.constant 0 : index
    %324 = vector.load %arg14[%c0_159, %c0_160] : memref<8x128xf32, #tpu.memory_space<vmem>>, vector<8x128xf32>
    tpu.vector_store %arg14[%c0_159, %c0_160], %320 {strides = array<i32>} : memref<8x128xf32, #tpu.memory_space<vmem>>, vector<8x128xf32>,
    %325 = arith.index_cast %289 : i32 to index
    %c0_161 = arith.constant 0 : index
    %326 = vector.load %arg11[%325, %c0_161] : memref<64x128xf32, #tpu.memory_space<vmem>>, vector<8x128xf32>
    tpu.vector_store %arg11[%325, %c0_161], %322 {strides = array<i32>} : memref<64x128xf32, #tpu.memory_space<vmem>>, vector<8x128xf32>,
    %c8_i32_162 = arith.constant 8 : i32
    %c0_163 = arith.constant 0 : index
    %c0_164 = arith.constant 0 : index
    %327 = vector.load %arg13[%c0_163, %c0_164] : memref<8x128xf32, #tpu.memory_space<vmem>>, vector<8x128xf32>
    %c0_165 = arith.constant 0 : index
    %c0_166 = arith.constant 0 : index
    %c0_167 = arith.constant 0 : index
    %328 = vector.load %arg9[%c0_165, %c0_166, %c0_167] : memref<3x8x128xf32, #tpu.memory_space<vmem>>, vector<1x8x128xf32>
    %329 = vector.shape_cast %328 : vector<1x8x128xf32> to vector<8x128xf32>
    %330 = vector.shape_cast %327 : vector<8x128xf32> to vector<1x8x128xf32>
    tpu.vector_store %arg9[%c0_165, %c0_166, %c0_167], %330 {strides = array<i32>} : memref<3x8x128xf32, #tpu.memory_space<vmem>>, vector<1x8x128xf32>,
    %c0_168 = arith.constant 0 : index
    %c0_169 = arith.constant 0 : index
    %331 = vector.load %arg14[%c0_168, %c0_169] : memref<8x128xf32, #tpu.memory_space<vmem>>, vector<8x128xf32>
    %c0_170 = arith.constant 0 : index
    %c0_171 = arith.constant 0 : index
    %c0_172 = arith.constant 0 : index
    %332 = vector.load %arg10[%c0_170, %c0_171, %c0_172] : memref<3x8x128xf32, #tpu.memory_space<vmem>>, vector<1x8x128xf32>
    %333 = vector.shape_cast %332 : vector<1x8x128xf32> to vector<8x128xf32>
    %334 = vector.shape_cast %331 : vector<8x128xf32> to vector<1x8x128xf32>
    tpu.vector_store %arg10[%c0_170, %c0_171, %c0_172], %334 {strides = array<i32>} : memref<3x8x128xf32, #tpu.memory_space<vmem>>, vector<1x8x128xf32>,
    %c0_173 = arith.constant 0 : index
    %c0_174 = arith.constant 0 : index
    %335 = vector.load %arg11[%c0_173, %c0_174] : memref<64x128xf32, #tpu.memory_space<vmem>>, vector<64x128xf32>
    %c1 = arith.constant 1 : index
    %c0_175 = arith.constant 0 : index
    %c0_176 = arith.constant 0 : index
    %336 = vector.load %arg1[%c1, %c0_175, %c0_176] : memref<3x128x512xf32, #tpu.memory_space<vmem>>, vector<1x128x512xf32>
    %337 = vector.shape_cast %336 : vector<1x128x512xf32> to vector<128x512xf32>
    %cst_177 = arith.constant dense<0.000000e+00> : vector<64x512xf32>
    %338 = tpu.matmul %335, %337, %cst_177 {dimension_numbers = #tpu.dot_dimension_numbers<[1], [0], [0], [1], [0, 0, 1, 1], [], []>} : vector<64x128xf32>, vector<128x512xf32>, vector<64x512xf32> -> vector<64x512xf32>
    %c1_178 = arith.constant 1 : index
    %c0_179 = arith.constant 0 : index
    %c0_180 = arith.constant 0 : index
    %339 = vector.load %arg3[%c1_178, %c0_179, %c0_180] : memref<3x1x512xf32, #tpu.memory_space<vmem>>, vector<1x1x512xf32>
    %340 = vector.shape_cast %339 : vector<1x1x512xf32> to vector<1x512xf32>
    %341 = vector.broadcast %340 : vector<1x512xf32> to vector<64x512xf32>
    %342 = arith.addf %338, %341 : vector<64x512xf32>
    %c0_181 = arith.constant 0 : index
    %c0_182 = arith.constant 0 : index
    %343 = vector.load %arg12[%c0_181, %c0_182] : memref<64x512xf32, #tpu.memory_space<vmem>>, vector<64x512xf32>
    tpu.vector_store %arg12[%c0_181, %c0_182], %342 {strides = array<i32>} : memref<64x512xf32, #tpu.memory_space<vmem>>, vector<64x512xf32>,
    %c1_183 = arith.constant 1 : index
    %c0_184 = arith.constant 0 : index
    %c0_185 = arith.constant 0 : index
    %344 = vector.load %arg4[%c1_183, %c0_184, %c0_185] : memref<3x8x128xf32, #tpu.memory_space<vmem>>, vector<1x8x128xf32>
    %345 = vector.shape_cast %344 : vector<1x8x128xf32> to vector<8x128xf32>
    %c0_186 = arith.constant 0 : index
    %c0_187 = arith.constant 0 : index
    %346 = vector.load %arg13[%c0_186, %c0_187] : memref<8x128xf32, #tpu.memory_space<vmem>>, vector<8x128xf32>
    tpu.vector_store %arg13[%c0_186, %c0_187], %345 {strides = array<i32>} : memref<8x128xf32, #tpu.memory_space<vmem>>, vector<8x128xf32>,
    %c1_188 = arith.constant 1 : index
    %c0_189 = arith.constant 0 : index
    %c0_190 = arith.constant 0 : index
    %347 = vector.load %arg5[%c1_188, %c0_189, %c0_190] : memref<3x8x128xf32, #tpu.memory_space<vmem>>, vector<1x8x128xf32>
    %348 = vector.shape_cast %347 : vector<1x8x128xf32> to vector<8x128xf32>
    %c0_191 = arith.constant 0 : index
    %c0_192 = arith.constant 0 : index
    %349 = vector.load %arg14[%c0_191, %c0_192] : memref<8x128xf32, #tpu.memory_space<vmem>>, vector<8x128xf32>
    tpu.vector_store %arg14[%c0_191, %c0_192], %348 {strides = array<i32>} : memref<8x128xf32, #tpu.memory_space<vmem>>, vector<8x128xf32>,
    %c0_i32_193 = arith.constant 0 : i32
    %c8_i32_194 = arith.constant 8 : i32
    %350 = arith.muli %c0_i32_193, %c8_i32_194 : i32
    %351 = tpu.assume_multiple %350, 8 : i32
    %c0_195 = arith.constant 0 : index
    %c0_196 = arith.constant 0 : index
    %352 = vector.load %arg13[%c0_195, %c0_196] : memref<8x128xf32, #tpu.memory_space<vmem>>, vector<8x128xf32>
    %c0_197 = arith.constant 0 : index
    %c0_198 = arith.constant 0 : index
    %353 = vector.load %arg14[%c0_197, %c0_198] : memref<8x128xf32, #tpu.memory_space<vmem>>, vector<8x128xf32>
    %354 = arith.index_cast %351 : i32 to index
    %c0_199 = arith.constant 0 : index
    %355 = vector.load %arg12[%354, %c0_199] : memref<64x512xf32, #tpu.memory_space<vmem>>, vector<8x512xf32>
    %c1_200 = arith.constant 1 : index
    %c0_201 = arith.constant 0 : index
    %c0_202 = arith.constant 0 : index
    %356 = vector.load %arg2[%c1_200, %c0_201, %c0_202] : memref<3x128x512xf32, #tpu.memory_space<vmem>>, vector<1x128x512xf32>
    %357 = vector.shape_cast %356 : vector<1x128x512xf32> to vector<128x512xf32>
    %cst_203 = arith.constant dense<0.000000e+00> : vector<8x512xf32>
    %358 = tpu.matmul %352, %357, %cst_203 {dimension_numbers = #tpu.dot_dimension_numbers<[1], [0], [0], [1], [0, 0, 1, 1], [], []>} : vector<8x128xf32>, vector<128x512xf32>, vector<8x512xf32> -> vector<8x512xf32>
    %359 = arith.addf %355, %358 : vector<8x512xf32>
    %360 = vector.extract_strided_slice %359 {offsets = [0, 0], sizes = [8, 128], strides = [1, 1]} : vector<8x512xf32> to vector<8x128xf32>
    %361 = arith.negf %360 : vector<8x128xf32>
    %362 = math.exp %361 : vector<8x128xf32>
    %cst_204 = arith.constant 1.000000e+00 : f32
    %363 = vector.broadcast %cst_204 : f32 to vector<8x128xf32>
    %364 = arith.addf %363, %362 : vector<8x128xf32>
    %365 = arith.divf %363, %364 : vector<8x128xf32>
    %366 = vector.extract_strided_slice %359 {offsets = [0, 128], sizes = [8, 128], strides = [1, 1]} : vector<8x512xf32> to vector<8x128xf32>
    %367 = arith.negf %366 : vector<8x128xf32>
    %368 = math.exp %367 : vector<8x128xf32>
    %cst_205 = arith.constant 1.000000e+00 : f32
    %369 = vector.broadcast %cst_205 : f32 to vector<8x128xf32>
    %370 = arith.addf %369, %368 : vector<8x128xf32>
    %371 = arith.divf %369, %370 : vector<8x128xf32>
    %372 = vector.extract_strided_slice %359 {offsets = [0, 256], sizes = [8, 128], strides = [1, 1]} : vector<8x512xf32> to vector<8x128xf32>
    %373 = math.tanh %372 : vector<8x128xf32>
    %374 = vector.extract_strided_slice %359 {offsets = [0, 384], sizes = [8, 128], strides = [1, 1]} : vector<8x512xf32> to vector<8x128xf32>
    %375 = arith.negf %374 : vector<8x128xf32>
    %376 = math.exp %375 : vector<8x128xf32>
    %cst_206 = arith.constant 1.000000e+00 : f32
    %377 = vector.broadcast %cst_206 : f32 to vector<8x128xf32>
    %378 = arith.addf %377, %376 : vector<8x128xf32>
    %379 = arith.divf %377, %378 : vector<8x128xf32>
    %380 = arith.mulf %371, %353 : vector<8x128xf32>
    %381 = arith.mulf %365, %373 : vector<8x128xf32>
    %382 = arith.addf %380, %381 : vector<8x128xf32>
    %383 = math.tanh %382 : vector<8x128xf32>
    %384 = arith.mulf %379, %383 : vector<8x128xf32>
    %c0_207 = arith.constant 0 : index
    %c0_208 = arith.constant 0 : index
    %385 = vector.load %arg13[%c0_207, %c0_208] : memref<8x128xf32, #tpu.memory_space<vmem>>, vector<8x128xf32>
    tpu.vector_store %arg13[%c0_207, %c0_208], %384 {strides = array<i32>} : memref<8x128xf32, #tpu.memory_space<vmem>>, vector<8x128xf32>,
    %c0_209 = arith.constant 0 : index
    %c0_210 = arith.constant 0 : index
    %386 = vector.load %arg14[%c0_209, %c0_210] : memref<8x128xf32, #tpu.memory_space<vmem>>, vector<8x128xf32>
    tpu.vector_store %arg14[%c0_209, %c0_210], %382 {strides = array<i32>} : memref<8x128xf32, #tpu.memory_space<vmem>>, vector<8x128xf32>,
    %387 = arith.index_cast %351 : i32 to index
    %c0_211 = arith.constant 0 : index
    %388 = vector.load %arg11[%387, %c0_211] : memref<64x128xf32, #tpu.memory_space<vmem>>, vector<8x128xf32>
    tpu.vector_store %arg11[%387, %c0_211], %384 {strides = array<i32>} : memref<64x128xf32, #tpu.memory_space<vmem>>, vector<8x128xf32>,
    %c1_i32_212 = arith.constant 1 : i32
    %c8_i32_213 = arith.constant 8 : i32
    %389 = arith.muli %c1_i32_212, %c8_i32_213 : i32
    %390 = tpu.assume_multiple %389, 8 : i32
    %c0_214 = arith.constant 0 : index
    %c0_215 = arith.constant 0 : index
    %391 = vector.load %arg13[%c0_214, %c0_215] : memref<8x128xf32, #tpu.memory_space<vmem>>, vector<8x128xf32>
    %c0_216 = arith.constant 0 : index
    %c0_217 = arith.constant 0 : index
    %392 = vector.load %arg14[%c0_216, %c0_217] : memref<8x128xf32, #tpu.memory_space<vmem>>, vector<8x128xf32>
    %393 = arith.index_cast %390 : i32 to index
    %c0_218 = arith.constant 0 : index
    %394 = vector.load %arg12[%393, %c0_218] : memref<64x512xf32, #tpu.memory_space<vmem>>, vector<8x512xf32>
    %c1_219 = arith.constant 1 : index
    %c0_220 = arith.constant 0 : index
    %c0_221 = arith.constant 0 : index
    %395 = vector.load %arg2[%c1_219, %c0_220, %c0_221] : memref<3x128x512xf32, #tpu.memory_space<vmem>>, vector<1x128x512xf32>
    %396 = vector.shape_cast %395 : vector<1x128x512xf32> to vector<128x512xf32>
    %cst_222 = arith.constant dense<0.000000e+00> : vector<8x512xf32>
    %397 = tpu.matmul %391, %396, %cst_222 {dimension_numbers = #tpu.dot_dimension_numbers<[1], [0], [0], [1], [0, 0, 1, 1], [], []>} : vector<8x128xf32>, vector<128x512xf32>, vector<8x512xf32> -> vector<8x512xf32>
    %398 = arith.addf %394, %397 : vector<8x512xf32>
    %399 = vector.extract_strided_slice %398 {offsets = [0, 0], sizes = [8, 128], strides = [1, 1]} : vector<8x512xf32> to vector<8x128xf32>
    %400 = arith.negf %399 : vector<8x128xf32>
    %401 = math.exp %400 : vector<8x128xf32>
    %cst_223 = arith.constant 1.000000e+00 : f32
    %402 = vector.broadcast %cst_223 : f32 to vector<8x128xf32>
    %403 = arith.addf %402, %401 : vector<8x128xf32>
    %404 = arith.divf %402, %403 : vector<8x128xf32>
    %405 = vector.extract_strided_slice %398 {offsets = [0, 128], sizes = [8, 128], strides = [1, 1]} : vector<8x512xf32> to vector<8x128xf32>
    %406 = arith.negf %405 : vector<8x128xf32>
    %407 = math.exp %406 : vector<8x128xf32>
    %cst_224 = arith.constant 1.000000e+00 : f32
    %408 = vector.broadcast %cst_224 : f32 to vector<8x128xf32>
    %409 = arith.addf %408, %407 : vector<8x128xf32>
    %410 = arith.divf %408, %409 : vector<8x128xf32>
    %411 = vector.extract_strided_slice %398 {offsets = [0, 256], sizes = [8, 128], strides = [1, 1]} : vector<8x512xf32> to vector<8x128xf32>
    %412 = math.tanh %411 : vector<8x128xf32>
    %413 = vector.extract_strided_slice %398 {offsets = [0, 384], sizes = [8, 128], strides = [1, 1]} : vector<8x512xf32> to vector<8x128xf32>
    %414 = arith.negf %413 : vector<8x128xf32>
    %415 = math.exp %414 : vector<8x128xf32>
    %cst_225 = arith.constant 1.000000e+00 : f32
    %416 = vector.broadcast %cst_225 : f32 to vector<8x128xf32>
    %417 = arith.addf %416, %415 : vector<8x128xf32>
    %418 = arith.divf %416, %417 : vector<8x128xf32>
    %419 = arith.mulf %410, %392 : vector<8x128xf32>
    %420 = arith.mulf %404, %412 : vector<8x128xf32>
    %421 = arith.addf %419, %420 : vector<8x128xf32>
    %422 = math.tanh %421 : vector<8x128xf32>
    %423 = arith.mulf %418, %422 : vector<8x128xf32>
    %c0_226 = arith.constant 0 : index
    %c0_227 = arith.constant 0 : index
    %424 = vector.load %arg13[%c0_226, %c0_227] : memref<8x128xf32, #tpu.memory_space<vmem>>, vector<8x128xf32>
    tpu.vector_store %arg13[%c0_226, %c0_227], %423 {strides = array<i32>} : memref<8x128xf32, #tpu.memory_space<vmem>>, vector<8x128xf32>,
    %c0_228 = arith.constant 0 : index
    %c0_229 = arith.constant 0 : index
    %425 = vector.load %arg14[%c0_228, %c0_229] : memref<8x128xf32, #tpu.memory_space<vmem>>, vector<8x128xf32>
    tpu.vector_store %arg14[%c0_228, %c0_229], %421 {strides = array<i32>} : memref<8x128xf32, #tpu.memory_space<vmem>>, vector<8x128xf32>,
    %426 = arith.index_cast %390 : i32 to index
    %c0_230 = arith.constant 0 : index
    %427 = vector.load %arg11[%426, %c0_230] : memref<64x128xf32, #tpu.memory_space<vmem>>, vector<8x128xf32>
    tpu.vector_store %arg11[%426, %c0_230], %423 {strides = array<i32>} : memref<64x128xf32, #tpu.memory_space<vmem>>, vector<8x128xf32>,
    %c2_i32_231 = arith.constant 2 : i32
    %c8_i32_232 = arith.constant 8 : i32
    %428 = arith.muli %c2_i32_231, %c8_i32_232 : i32
    %429 = tpu.assume_multiple %428, 8 : i32
    %c0_233 = arith.constant 0 : index
    %c0_234 = arith.constant 0 : index
    %430 = vector.load %arg13[%c0_233, %c0_234] : memref<8x128xf32, #tpu.memory_space<vmem>>, vector<8x128xf32>
    %c0_235 = arith.constant 0 : index
    %c0_236 = arith.constant 0 : index
    %431 = vector.load %arg14[%c0_235, %c0_236] : memref<8x128xf32, #tpu.memory_space<vmem>>, vector<8x128xf32>
    %432 = arith.index_cast %429 : i32 to index
    %c0_237 = arith.constant 0 : index
    %433 = vector.load %arg12[%432, %c0_237] : memref<64x512xf32, #tpu.memory_space<vmem>>, vector<8x512xf32>
    %c1_238 = arith.constant 1 : index
    %c0_239 = arith.constant 0 : index
    %c0_240 = arith.constant 0 : index
    %434 = vector.load %arg2[%c1_238, %c0_239, %c0_240] : memref<3x128x512xf32, #tpu.memory_space<vmem>>, vector<1x128x512xf32>
    %435 = vector.shape_cast %434 : vector<1x128x512xf32> to vector<128x512xf32>
    %cst_241 = arith.constant dense<0.000000e+00> : vector<8x512xf32>
    %436 = tpu.matmul %430, %435, %cst_241 {dimension_numbers = #tpu.dot_dimension_numbers<[1], [0], [0], [1], [0, 0, 1, 1], [], []>} : vector<8x128xf32>, vector<128x512xf32>, vector<8x512xf32> -> vector<8x512xf32>
    %437 = arith.addf %433, %436 : vector<8x512xf32>
    %438 = vector.extract_strided_slice %437 {offsets = [0, 0], sizes = [8, 128], strides = [1, 1]} : vector<8x512xf32> to vector<8x128xf32>
    %439 = arith.negf %438 : vector<8x128xf32>
    %440 = math.exp %439 : vector<8x128xf32>
    %cst_242 = arith.constant 1.000000e+00 : f32
    %441 = vector.broadcast %cst_242 : f32 to vector<8x128xf32>
    %442 = arith.addf %441, %440 : vector<8x128xf32>
    %443 = arith.divf %441, %442 : vector<8x128xf32>
    %444 = vector.extract_strided_slice %437 {offsets = [0, 128], sizes = [8, 128], strides = [1, 1]} : vector<8x512xf32> to vector<8x128xf32>
    %445 = arith.negf %444 : vector<8x128xf32>
    %446 = math.exp %445 : vector<8x128xf32>
    %cst_243 = arith.constant 1.000000e+00 : f32
    %447 = vector.broadcast %cst_243 : f32 to vector<8x128xf32>
    %448 = arith.addf %447, %446 : vector<8x128xf32>
    %449 = arith.divf %447, %448 : vector<8x128xf32>
    %450 = vector.extract_strided_slice %437 {offsets = [0, 256], sizes = [8, 128], strides = [1, 1]} : vector<8x512xf32> to vector<8x128xf32>
    %451 = math.tanh %450 : vector<8x128xf32>
    %452 = vector.extract_strided_slice %437 {offsets = [0, 384], sizes = [8, 128], strides = [1, 1]} : vector<8x512xf32> to vector<8x128xf32>
    %453 = arith.negf %452 : vector<8x128xf32>
    %454 = math.exp %453 : vector<8x128xf32>
    %cst_244 = arith.constant 1.000000e+00 : f32
    %455 = vector.broadcast %cst_244 : f32 to vector<8x128xf32>
    %456 = arith.addf %455, %454 : vector<8x128xf32>
    %457 = arith.divf %455, %456 : vector<8x128xf32>
    %458 = arith.mulf %449, %431 : vector<8x128xf32>
    %459 = arith.mulf %443, %451 : vector<8x128xf32>
    %460 = arith.addf %458, %459 : vector<8x128xf32>
    %461 = math.tanh %460 : vector<8x128xf32>
    %462 = arith.mulf %457, %461 : vector<8x128xf32>
    %c0_245 = arith.constant 0 : index
    %c0_246 = arith.constant 0 : index
    %463 = vector.load %arg13[%c0_245, %c0_246] : memref<8x128xf32, #tpu.memory_space<vmem>>, vector<8x128xf32>
    tpu.vector_store %arg13[%c0_245, %c0_246], %462 {strides = array<i32>} : memref<8x128xf32, #tpu.memory_space<vmem>>, vector<8x128xf32>,
    %c0_247 = arith.constant 0 : index
    %c0_248 = arith.constant 0 : index
    %464 = vector.load %arg14[%c0_247, %c0_248] : memref<8x128xf32, #tpu.memory_space<vmem>>, vector<8x128xf32>
    tpu.vector_store %arg14[%c0_247, %c0_248], %460 {strides = array<i32>} : memref<8x128xf32, #tpu.memory_space<vmem>>, vector<8x128xf32>,
    %465 = arith.index_cast %429 : i32 to index
    %c0_249 = arith.constant 0 : index
    %466 = vector.load %arg11[%465, %c0_249] : memref<64x128xf32, #tpu.memory_space<vmem>>, vector<8x128xf32>
    tpu.vector_store %arg11[%465, %c0_249], %462 {strides = array<i32>} : memref<64x128xf32, #tpu.memory_space<vmem>>, vector<8x128xf32>,
    %c3_i32_250 = arith.constant 3 : i32
    %c8_i32_251 = arith.constant 8 : i32
    %467 = arith.muli %c3_i32_250, %c8_i32_251 : i32
    %468 = tpu.assume_multiple %467, 8 : i32
    %c0_252 = arith.constant 0 : index
    %c0_253 = arith.constant 0 : index
    %469 = vector.load %arg13[%c0_252, %c0_253] : memref<8x128xf32, #tpu.memory_space<vmem>>, vector<8x128xf32>
    %c0_254 = arith.constant 0 : index
    %c0_255 = arith.constant 0 : index
    %470 = vector.load %arg14[%c0_254, %c0_255] : memref<8x128xf32, #tpu.memory_space<vmem>>, vector<8x128xf32>
    %471 = arith.index_cast %468 : i32 to index
    %c0_256 = arith.constant 0 : index
    %472 = vector.load %arg12[%471, %c0_256] : memref<64x512xf32, #tpu.memory_space<vmem>>, vector<8x512xf32>
    %c1_257 = arith.constant 1 : index
    %c0_258 = arith.constant 0 : index
    %c0_259 = arith.constant 0 : index
    %473 = vector.load %arg2[%c1_257, %c0_258, %c0_259] : memref<3x128x512xf32, #tpu.memory_space<vmem>>, vector<1x128x512xf32>
    %474 = vector.shape_cast %473 : vector<1x128x512xf32> to vector<128x512xf32>
    %cst_260 = arith.constant dense<0.000000e+00> : vector<8x512xf32>
    %475 = tpu.matmul %469, %474, %cst_260 {dimension_numbers = #tpu.dot_dimension_numbers<[1], [0], [0], [1], [0, 0, 1, 1], [], []>} : vector<8x128xf32>, vector<128x512xf32>, vector<8x512xf32> -> vector<8x512xf32>
    %476 = arith.addf %472, %475 : vector<8x512xf32>
    %477 = vector.extract_strided_slice %476 {offsets = [0, 0], sizes = [8, 128], strides = [1, 1]} : vector<8x512xf32> to vector<8x128xf32>
    %478 = arith.negf %477 : vector<8x128xf32>
    %479 = math.exp %478 : vector<8x128xf32>
    %cst_261 = arith.constant 1.000000e+00 : f32
    %480 = vector.broadcast %cst_261 : f32 to vector<8x128xf32>
    %481 = arith.addf %480, %479 : vector<8x128xf32>
    %482 = arith.divf %480, %481 : vector<8x128xf32>
    %483 = vector.extract_strided_slice %476 {offsets = [0, 128], sizes = [8, 128], strides = [1, 1]} : vector<8x512xf32> to vector<8x128xf32>
    %484 = arith.negf %483 : vector<8x128xf32>
    %485 = math.exp %484 : vector<8x128xf32>
    %cst_262 = arith.constant 1.000000e+00 : f32
    %486 = vector.broadcast %cst_262 : f32 to vector<8x128xf32>
    %487 = arith.addf %486, %485 : vector<8x128xf32>
    %488 = arith.divf %486, %487 : vector<8x128xf32>
    %489 = vector.extract_strided_slice %476 {offsets = [0, 256], sizes = [8, 128], strides = [1, 1]} : vector<8x512xf32> to vector<8x128xf32>
    %490 = math.tanh %489 : vector<8x128xf32>
    %491 = vector.extract_strided_slice %476 {offsets = [0, 384], sizes = [8, 128], strides = [1, 1]} : vector<8x512xf32> to vector<8x128xf32>
    %492 = arith.negf %491 : vector<8x128xf32>
    %493 = math.exp %492 : vector<8x128xf32>
    %cst_263 = arith.constant 1.000000e+00 : f32
    %494 = vector.broadcast %cst_263 : f32 to vector<8x128xf32>
    %495 = arith.addf %494, %493 : vector<8x128xf32>
    %496 = arith.divf %494, %495 : vector<8x128xf32>
    %497 = arith.mulf %488, %470 : vector<8x128xf32>
    %498 = arith.mulf %482, %490 : vector<8x128xf32>
    %499 = arith.addf %497, %498 : vector<8x128xf32>
    %500 = math.tanh %499 : vector<8x128xf32>
    %501 = arith.mulf %496, %500 : vector<8x128xf32>
    %c0_264 = arith.constant 0 : index
    %c0_265 = arith.constant 0 : index
    %502 = vector.load %arg13[%c0_264, %c0_265] : memref<8x128xf32, #tpu.memory_space<vmem>>, vector<8x128xf32>
    tpu.vector_store %arg13[%c0_264, %c0_265], %501 {strides = array<i32>} : memref<8x128xf32, #tpu.memory_space<vmem>>, vector<8x128xf32>,
    %c0_266 = arith.constant 0 : index
    %c0_267 = arith.constant 0 : index
    %503 = vector.load %arg14[%c0_266, %c0_267] : memref<8x128xf32, #tpu.memory_space<vmem>>, vector<8x128xf32>
    tpu.vector_store %arg14[%c0_266, %c0_267], %499 {strides = array<i32>} : memref<8x128xf32, #tpu.memory_space<vmem>>, vector<8x128xf32>,
    %504 = arith.index_cast %468 : i32 to index
    %c0_268 = arith.constant 0 : index
    %505 = vector.load %arg11[%504, %c0_268] : memref<64x128xf32, #tpu.memory_space<vmem>>, vector<8x128xf32>
    tpu.vector_store %arg11[%504, %c0_268], %501 {strides = array<i32>} : memref<64x128xf32, #tpu.memory_space<vmem>>, vector<8x128xf32>,
    %c4_i32_269 = arith.constant 4 : i32
    %c8_i32_270 = arith.constant 8 : i32
    %506 = arith.muli %c4_i32_269, %c8_i32_270 : i32
    %507 = tpu.assume_multiple %506, 8 : i32
    %c0_271 = arith.constant 0 : index
    %c0_272 = arith.constant 0 : index
    %508 = vector.load %arg13[%c0_271, %c0_272] : memref<8x128xf32, #tpu.memory_space<vmem>>, vector<8x128xf32>
    %c0_273 = arith.constant 0 : index
    %c0_274 = arith.constant 0 : index
    %509 = vector.load %arg14[%c0_273, %c0_274] : memref<8x128xf32, #tpu.memory_space<vmem>>, vector<8x128xf32>
    %510 = arith.index_cast %507 : i32 to index
    %c0_275 = arith.constant 0 : index
    %511 = vector.load %arg12[%510, %c0_275] : memref<64x512xf32, #tpu.memory_space<vmem>>, vector<8x512xf32>
    %c1_276 = arith.constant 1 : index
    %c0_277 = arith.constant 0 : index
    %c0_278 = arith.constant 0 : index
    %512 = vector.load %arg2[%c1_276, %c0_277, %c0_278] : memref<3x128x512xf32, #tpu.memory_space<vmem>>, vector<1x128x512xf32>
    %513 = vector.shape_cast %512 : vector<1x128x512xf32> to vector<128x512xf32>
    %cst_279 = arith.constant dense<0.000000e+00> : vector<8x512xf32>
    %514 = tpu.matmul %508, %513, %cst_279 {dimension_numbers = #tpu.dot_dimension_numbers<[1], [0], [0], [1], [0, 0, 1, 1], [], []>} : vector<8x128xf32>, vector<128x512xf32>, vector<8x512xf32> -> vector<8x512xf32>
    %515 = arith.addf %511, %514 : vector<8x512xf32>
    %516 = vector.extract_strided_slice %515 {offsets = [0, 0], sizes = [8, 128], strides = [1, 1]} : vector<8x512xf32> to vector<8x128xf32>
    %517 = arith.negf %516 : vector<8x128xf32>
    %518 = math.exp %517 : vector<8x128xf32>
    %cst_280 = arith.constant 1.000000e+00 : f32
    %519 = vector.broadcast %cst_280 : f32 to vector<8x128xf32>
    %520 = arith.addf %519, %518 : vector<8x128xf32>
    %521 = arith.divf %519, %520 : vector<8x128xf32>
    %522 = vector.extract_strided_slice %515 {offsets = [0, 128], sizes = [8, 128], strides = [1, 1]} : vector<8x512xf32> to vector<8x128xf32>
    %523 = arith.negf %522 : vector<8x128xf32>
    %524 = math.exp %523 : vector<8x128xf32>
    %cst_281 = arith.constant 1.000000e+00 : f32
    %525 = vector.broadcast %cst_281 : f32 to vector<8x128xf32>
    %526 = arith.addf %525, %524 : vector<8x128xf32>
    %527 = arith.divf %525, %526 : vector<8x128xf32>
    %528 = vector.extract_strided_slice %515 {offsets = [0, 256], sizes = [8, 128], strides = [1, 1]} : vector<8x512xf32> to vector<8x128xf32>
    %529 = math.tanh %528 : vector<8x128xf32>
    %530 = vector.extract_strided_slice %515 {offsets = [0, 384], sizes = [8, 128], strides = [1, 1]} : vector<8x512xf32> to vector<8x128xf32>
    %531 = arith.negf %530 : vector<8x128xf32>
    %532 = math.exp %531 : vector<8x128xf32>
    %cst_282 = arith.constant 1.000000e+00 : f32
    %533 = vector.broadcast %cst_282 : f32 to vector<8x128xf32>
    %534 = arith.addf %533, %532 : vector<8x128xf32>
    %535 = arith.divf %533, %534 : vector<8x128xf32>
    %536 = arith.mulf %527, %509 : vector<8x128xf32>
    %537 = arith.mulf %521, %529 : vector<8x128xf32>
    %538 = arith.addf %536, %537 : vector<8x128xf32>
    %539 = math.tanh %538 : vector<8x128xf32>
    %540 = arith.mulf %535, %539 : vector<8x128xf32>
    %c0_283 = arith.constant 0 : index
    %c0_284 = arith.constant 0 : index
    %541 = vector.load %arg13[%c0_283, %c0_284] : memref<8x128xf32, #tpu.memory_space<vmem>>, vector<8x128xf32>
    tpu.vector_store %arg13[%c0_283, %c0_284], %540 {strides = array<i32>} : memref<8x128xf32, #tpu.memory_space<vmem>>, vector<8x128xf32>,
    %c0_285 = arith.constant 0 : index
    %c0_286 = arith.constant 0 : index
    %542 = vector.load %arg14[%c0_285, %c0_286] : memref<8x128xf32, #tpu.memory_space<vmem>>, vector<8x128xf32>
    tpu.vector_store %arg14[%c0_285, %c0_286], %538 {strides = array<i32>} : memref<8x128xf32, #tpu.memory_space<vmem>>, vector<8x128xf32>,
    %543 = arith.index_cast %507 : i32 to index
    %c0_287 = arith.constant 0 : index
    %544 = vector.load %arg11[%543, %c0_287] : memref<64x128xf32, #tpu.memory_space<vmem>>, vector<8x128xf32>
    tpu.vector_store %arg11[%543, %c0_287], %540 {strides = array<i32>} : memref<64x128xf32, #tpu.memory_space<vmem>>, vector<8x128xf32>,
    %c5_i32_288 = arith.constant 5 : i32
    %c8_i32_289 = arith.constant 8 : i32
    %545 = arith.muli %c5_i32_288, %c8_i32_289 : i32
    %546 = tpu.assume_multiple %545, 8 : i32
    %c0_290 = arith.constant 0 : index
    %c0_291 = arith.constant 0 : index
    %547 = vector.load %arg13[%c0_290, %c0_291] : memref<8x128xf32, #tpu.memory_space<vmem>>, vector<8x128xf32>
    %c0_292 = arith.constant 0 : index
    %c0_293 = arith.constant 0 : index
    %548 = vector.load %arg14[%c0_292, %c0_293] : memref<8x128xf32, #tpu.memory_space<vmem>>, vector<8x128xf32>
    %549 = arith.index_cast %546 : i32 to index
    %c0_294 = arith.constant 0 : index
    %550 = vector.load %arg12[%549, %c0_294] : memref<64x512xf32, #tpu.memory_space<vmem>>, vector<8x512xf32>
    %c1_295 = arith.constant 1 : index
    %c0_296 = arith.constant 0 : index
    %c0_297 = arith.constant 0 : index
    %551 = vector.load %arg2[%c1_295, %c0_296, %c0_297] : memref<3x128x512xf32, #tpu.memory_space<vmem>>, vector<1x128x512xf32>
    %552 = vector.shape_cast %551 : vector<1x128x512xf32> to vector<128x512xf32>
    %cst_298 = arith.constant dense<0.000000e+00> : vector<8x512xf32>
    %553 = tpu.matmul %547, %552, %cst_298 {dimension_numbers = #tpu.dot_dimension_numbers<[1], [0], [0], [1], [0, 0, 1, 1], [], []>} : vector<8x128xf32>, vector<128x512xf32>, vector<8x512xf32> -> vector<8x512xf32>
    %554 = arith.addf %550, %553 : vector<8x512xf32>
    %555 = vector.extract_strided_slice %554 {offsets = [0, 0], sizes = [8, 128], strides = [1, 1]} : vector<8x512xf32> to vector<8x128xf32>
    %556 = arith.negf %555 : vector<8x128xf32>
    %557 = math.exp %556 : vector<8x128xf32>
    %cst_299 = arith.constant 1.000000e+00 : f32
    %558 = vector.broadcast %cst_299 : f32 to vector<8x128xf32>
    %559 = arith.addf %558, %557 : vector<8x128xf32>
    %560 = arith.divf %558, %559 : vector<8x128xf32>
    %561 = vector.extract_strided_slice %554 {offsets = [0, 128], sizes = [8, 128], strides = [1, 1]} : vector<8x512xf32> to vector<8x128xf32>
    %562 = arith.negf %561 : vector<8x128xf32>
    %563 = math.exp %562 : vector<8x128xf32>
    %cst_300 = arith.constant 1.000000e+00 : f32
    %564 = vector.broadcast %cst_300 : f32 to vector<8x128xf32>
    %565 = arith.addf %564, %563 : vector<8x128xf32>
    %566 = arith.divf %564, %565 : vector<8x128xf32>
    %567 = vector.extract_strided_slice %554 {offsets = [0, 256], sizes = [8, 128], strides = [1, 1]} : vector<8x512xf32> to vector<8x128xf32>
    %568 = math.tanh %567 : vector<8x128xf32>
    %569 = vector.extract_strided_slice %554 {offsets = [0, 384], sizes = [8, 128], strides = [1, 1]} : vector<8x512xf32> to vector<8x128xf32>
    %570 = arith.negf %569 : vector<8x128xf32>
    %571 = math.exp %570 : vector<8x128xf32>
    %cst_301 = arith.constant 1.000000e+00 : f32
    %572 = vector.broadcast %cst_301 : f32 to vector<8x128xf32>
    %573 = arith.addf %572, %571 : vector<8x128xf32>
    %574 = arith.divf %572, %573 : vector<8x128xf32>
    %575 = arith.mulf %566, %548 : vector<8x128xf32>
    %576 = arith.mulf %560, %568 : vector<8x128xf32>
    %577 = arith.addf %575, %576 : vector<8x128xf32>
    %578 = math.tanh %577 : vector<8x128xf32>
    %579 = arith.mulf %574, %578 : vector<8x128xf32>
    %c0_302 = arith.constant 0 : index
    %c0_303 = arith.constant 0 : index
    %580 = vector.load %arg13[%c0_302, %c0_303] : memref<8x128xf32, #tpu.memory_space<vmem>>, vector<8x128xf32>
    tpu.vector_store %arg13[%c0_302, %c0_303], %579 {strides = array<i32>} : memref<8x128xf32, #tpu.memory_space<vmem>>, vector<8x128xf32>,
    %c0_304 = arith.constant 0 : index
    %c0_305 = arith.constant 0 : index
    %581 = vector.load %arg14[%c0_304, %c0_305] : memref<8x128xf32, #tpu.memory_space<vmem>>, vector<8x128xf32>
    tpu.vector_store %arg14[%c0_304, %c0_305], %577 {strides = array<i32>} : memref<8x128xf32, #tpu.memory_space<vmem>>, vector<8x128xf32>,
    %582 = arith.index_cast %546 : i32 to index
    %c0_306 = arith.constant 0 : index
    %583 = vector.load %arg11[%582, %c0_306] : memref<64x128xf32, #tpu.memory_space<vmem>>, vector<8x128xf32>
    tpu.vector_store %arg11[%582, %c0_306], %579 {strides = array<i32>} : memref<64x128xf32, #tpu.memory_space<vmem>>, vector<8x128xf32>,
    %c6_i32_307 = arith.constant 6 : i32
    %c8_i32_308 = arith.constant 8 : i32
    %584 = arith.muli %c6_i32_307, %c8_i32_308 : i32
    %585 = tpu.assume_multiple %584, 8 : i32
    %c0_309 = arith.constant 0 : index
    %c0_310 = arith.constant 0 : index
    %586 = vector.load %arg13[%c0_309, %c0_310] : memref<8x128xf32, #tpu.memory_space<vmem>>, vector<8x128xf32>
    %c0_311 = arith.constant 0 : index
    %c0_312 = arith.constant 0 : index
    %587 = vector.load %arg14[%c0_311, %c0_312] : memref<8x128xf32, #tpu.memory_space<vmem>>, vector<8x128xf32>
    %588 = arith.index_cast %585 : i32 to index
    %c0_313 = arith.constant 0 : index
    %589 = vector.load %arg12[%588, %c0_313] : memref<64x512xf32, #tpu.memory_space<vmem>>, vector<8x512xf32>
    %c1_314 = arith.constant 1 : index
    %c0_315 = arith.constant 0 : index
    %c0_316 = arith.constant 0 : index
    %590 = vector.load %arg2[%c1_314, %c0_315, %c0_316] : memref<3x128x512xf32, #tpu.memory_space<vmem>>, vector<1x128x512xf32>
    %591 = vector.shape_cast %590 : vector<1x128x512xf32> to vector<128x512xf32>
    %cst_317 = arith.constant dense<0.000000e+00> : vector<8x512xf32>
    %592 = tpu.matmul %586, %591, %cst_317 {dimension_numbers = #tpu.dot_dimension_numbers<[1], [0], [0], [1], [0, 0, 1, 1], [], []>} : vector<8x128xf32>, vector<128x512xf32>, vector<8x512xf32> -> vector<8x512xf32>
    %593 = arith.addf %589, %592 : vector<8x512xf32>
    %594 = vector.extract_strided_slice %593 {offsets = [0, 0], sizes = [8, 128], strides = [1, 1]} : vector<8x512xf32> to vector<8x128xf32>
    %595 = arith.negf %594 : vector<8x128xf32>
    %596 = math.exp %595 : vector<8x128xf32>
    %cst_318 = arith.constant 1.000000e+00 : f32
    %597 = vector.broadcast %cst_318 : f32 to vector<8x128xf32>
    %598 = arith.addf %597, %596 : vector<8x128xf32>
    %599 = arith.divf %597, %598 : vector<8x128xf32>
    %600 = vector.extract_strided_slice %593 {offsets = [0, 128], sizes = [8, 128], strides = [1, 1]} : vector<8x512xf32> to vector<8x128xf32>
    %601 = arith.negf %600 : vector<8x128xf32>
    %602 = math.exp %601 : vector<8x128xf32>
    %cst_319 = arith.constant 1.000000e+00 : f32
    %603 = vector.broadcast %cst_319 : f32 to vector<8x128xf32>
    %604 = arith.addf %603, %602 : vector<8x128xf32>
    %605 = arith.divf %603, %604 : vector<8x128xf32>
    %606 = vector.extract_strided_slice %593 {offsets = [0, 256], sizes = [8, 128], strides = [1, 1]} : vector<8x512xf32> to vector<8x128xf32>
    %607 = math.tanh %606 : vector<8x128xf32>
    %608 = vector.extract_strided_slice %593 {offsets = [0, 384], sizes = [8, 128], strides = [1, 1]} : vector<8x512xf32> to vector<8x128xf32>
    %609 = arith.negf %608 : vector<8x128xf32>
    %610 = math.exp %609 : vector<8x128xf32>
    %cst_320 = arith.constant 1.000000e+00 : f32
    %611 = vector.broadcast %cst_320 : f32 to vector<8x128xf32>
    %612 = arith.addf %611, %610 : vector<8x128xf32>
    %613 = arith.divf %611, %612 : vector<8x128xf32>
    %614 = arith.mulf %605, %587 : vector<8x128xf32>
    %615 = arith.mulf %599, %607 : vector<8x128xf32>
    %616 = arith.addf %614, %615 : vector<8x128xf32>
    %617 = math.tanh %616 : vector<8x128xf32>
    %618 = arith.mulf %613, %617 : vector<8x128xf32>
    %c0_321 = arith.constant 0 : index
    %c0_322 = arith.constant 0 : index
    %619 = vector.load %arg13[%c0_321, %c0_322] : memref<8x128xf32, #tpu.memory_space<vmem>>, vector<8x128xf32>
    tpu.vector_store %arg13[%c0_321, %c0_322], %618 {strides = array<i32>} : memref<8x128xf32, #tpu.memory_space<vmem>>, vector<8x128xf32>,
    %c0_323 = arith.constant 0 : index
    %c0_324 = arith.constant 0 : index
    %620 = vector.load %arg14[%c0_323, %c0_324] : memref<8x128xf32, #tpu.memory_space<vmem>>, vector<8x128xf32>
    tpu.vector_store %arg14[%c0_323, %c0_324], %616 {strides = array<i32>} : memref<8x128xf32, #tpu.memory_space<vmem>>, vector<8x128xf32>,
    %621 = arith.index_cast %585 : i32 to index
    %c0_325 = arith.constant 0 : index
    %622 = vector.load %arg11[%621, %c0_325] : memref<64x128xf32, #tpu.memory_space<vmem>>, vector<8x128xf32>
    tpu.vector_store %arg11[%621, %c0_325], %618 {strides = array<i32>} : memref<64x128xf32, #tpu.memory_space<vmem>>, vector<8x128xf32>,
    %c7_i32_326 = arith.constant 7 : i32
    %c8_i32_327 = arith.constant 8 : i32
    %623 = arith.muli %c7_i32_326, %c8_i32_327 : i32
    %624 = tpu.assume_multiple %623, 8 : i32
    %c0_328 = arith.constant 0 : index
    %c0_329 = arith.constant 0 : index
    %625 = vector.load %arg13[%c0_328, %c0_329] : memref<8x128xf32, #tpu.memory_space<vmem>>, vector<8x128xf32>
    %c0_330 = arith.constant 0 : index
    %c0_331 = arith.constant 0 : index
    %626 = vector.load %arg14[%c0_330, %c0_331] : memref<8x128xf32, #tpu.memory_space<vmem>>, vector<8x128xf32>
    %627 = arith.index_cast %624 : i32 to index
    %c0_332 = arith.constant 0 : index
    %628 = vector.load %arg12[%627, %c0_332] : memref<64x512xf32, #tpu.memory_space<vmem>>, vector<8x512xf32>
    %c1_333 = arith.constant 1 : index
    %c0_334 = arith.constant 0 : index
    %c0_335 = arith.constant 0 : index
    %629 = vector.load %arg2[%c1_333, %c0_334, %c0_335] : memref<3x128x512xf32, #tpu.memory_space<vmem>>, vector<1x128x512xf32>
    %630 = vector.shape_cast %629 : vector<1x128x512xf32> to vector<128x512xf32>
    %cst_336 = arith.constant dense<0.000000e+00> : vector<8x512xf32>
    %631 = tpu.matmul %625, %630, %cst_336 {dimension_numbers = #tpu.dot_dimension_numbers<[1], [0], [0], [1], [0, 0, 1, 1], [], []>} : vector<8x128xf32>, vector<128x512xf32>, vector<8x512xf32> -> vector<8x512xf32>
    %632 = arith.addf %628, %631 : vector<8x512xf32>
    %633 = vector.extract_strided_slice %632 {offsets = [0, 0], sizes = [8, 128], strides = [1, 1]} : vector<8x512xf32> to vector<8x128xf32>
    %634 = arith.negf %633 : vector<8x128xf32>
    %635 = math.exp %634 : vector<8x128xf32>
    %cst_337 = arith.constant 1.000000e+00 : f32
    %636 = vector.broadcast %cst_337 : f32 to vector<8x128xf32>
    %637 = arith.addf %636, %635 : vector<8x128xf32>
    %638 = arith.divf %636, %637 : vector<8x128xf32>
    %639 = vector.extract_strided_slice %632 {offsets = [0, 128], sizes = [8, 128], strides = [1, 1]} : vector<8x512xf32> to vector<8x128xf32>
    %640 = arith.negf %639 : vector<8x128xf32>
    %641 = math.exp %640 : vector<8x128xf32>
    %cst_338 = arith.constant 1.000000e+00 : f32
    %642 = vector.broadcast %cst_338 : f32 to vector<8x128xf32>
    %643 = arith.addf %642, %641 : vector<8x128xf32>
    %644 = arith.divf %642, %643 : vector<8x128xf32>
    %645 = vector.extract_strided_slice %632 {offsets = [0, 256], sizes = [8, 128], strides = [1, 1]} : vector<8x512xf32> to vector<8x128xf32>
    %646 = math.tanh %645 : vector<8x128xf32>
    %647 = vector.extract_strided_slice %632 {offsets = [0, 384], sizes = [8, 128], strides = [1, 1]} : vector<8x512xf32> to vector<8x128xf32>
    %648 = arith.negf %647 : vector<8x128xf32>
    %649 = math.exp %648 : vector<8x128xf32>
    %cst_339 = arith.constant 1.000000e+00 : f32
    %650 = vector.broadcast %cst_339 : f32 to vector<8x128xf32>
    %651 = arith.addf %650, %649 : vector<8x128xf32>
    %652 = arith.divf %650, %651 : vector<8x128xf32>
    %653 = arith.mulf %644, %626 : vector<8x128xf32>
    %654 = arith.mulf %638, %646 : vector<8x128xf32>
    %655 = arith.addf %653, %654 : vector<8x128xf32>
    %656 = math.tanh %655 : vector<8x128xf32>
    %657 = arith.mulf %652, %656 : vector<8x128xf32>
    %c0_340 = arith.constant 0 : index
    %c0_341 = arith.constant 0 : index
    %658 = vector.load %arg13[%c0_340, %c0_341] : memref<8x128xf32, #tpu.memory_space<vmem>>, vector<8x128xf32>
    tpu.vector_store %arg13[%c0_340, %c0_341], %657 {strides = array<i32>} : memref<8x128xf32, #tpu.memory_space<vmem>>, vector<8x128xf32>,
    %c0_342 = arith.constant 0 : index
    %c0_343 = arith.constant 0 : index
    %659 = vector.load %arg14[%c0_342, %c0_343] : memref<8x128xf32, #tpu.memory_space<vmem>>, vector<8x128xf32>
    tpu.vector_store %arg14[%c0_342, %c0_343], %655 {strides = array<i32>} : memref<8x128xf32, #tpu.memory_space<vmem>>, vector<8x128xf32>,
    %660 = arith.index_cast %624 : i32 to index
    %c0_344 = arith.constant 0 : index
    %661 = vector.load %arg11[%660, %c0_344] : memref<64x128xf32, #tpu.memory_space<vmem>>, vector<8x128xf32>
    tpu.vector_store %arg11[%660, %c0_344], %657 {strides = array<i32>} : memref<64x128xf32, #tpu.memory_space<vmem>>, vector<8x128xf32>,
    %c8_i32_345 = arith.constant 8 : i32
    %c0_346 = arith.constant 0 : index
    %c0_347 = arith.constant 0 : index
    %662 = vector.load %arg13[%c0_346, %c0_347] : memref<8x128xf32, #tpu.memory_space<vmem>>, vector<8x128xf32>
    %c1_348 = arith.constant 1 : index
    %c0_349 = arith.constant 0 : index
    %c0_350 = arith.constant 0 : index
    %663 = vector.load %arg9[%c1_348, %c0_349, %c0_350] : memref<3x8x128xf32, #tpu.memory_space<vmem>>, vector<1x8x128xf32>
    %664 = vector.shape_cast %663 : vector<1x8x128xf32> to vector<8x128xf32>
    %665 = vector.shape_cast %662 : vector<8x128xf32> to vector<1x8x128xf32>
    tpu.vector_store %arg9[%c1_348, %c0_349, %c0_350], %665 {strides = array<i32>} : memref<3x8x128xf32, #tpu.memory_space<vmem>>, vector<1x8x128xf32>,
    %c0_351 = arith.constant 0 : index
    %c0_352 = arith.constant 0 : index
    %666 = vector.load %arg14[%c0_351, %c0_352] : memref<8x128xf32, #tpu.memory_space<vmem>>, vector<8x128xf32>
    %c1_353 = arith.constant 1 : index
    %c0_354 = arith.constant 0 : index
    %c0_355 = arith.constant 0 : index
    %667 = vector.load %arg10[%c1_353, %c0_354, %c0_355] : memref<3x8x128xf32, #tpu.memory_space<vmem>>, vector<1x8x128xf32>
    %668 = vector.shape_cast %667 : vector<1x8x128xf32> to vector<8x128xf32>
    %669 = vector.shape_cast %666 : vector<8x128xf32> to vector<1x8x128xf32>
    tpu.vector_store %arg10[%c1_353, %c0_354, %c0_355], %669 {strides = array<i32>} : memref<3x8x128xf32, #tpu.memory_space<vmem>>, vector<1x8x128xf32>,
    %c0_356 = arith.constant 0 : index
    %c0_357 = arith.constant 0 : index
    %670 = vector.load %arg11[%c0_356, %c0_357] : memref<64x128xf32, #tpu.memory_space<vmem>>, vector<64x128xf32>
    %c2 = arith.constant 2 : index
    %c0_358 = arith.constant 0 : index
    %c0_359 = arith.constant 0 : index
    %671 = vector.load %arg1[%c2, %c0_358, %c0_359] : memref<3x128x512xf32, #tpu.memory_space<vmem>>, vector<1x128x512xf32>
    %672 = vector.shape_cast %671 : vector<1x128x512xf32> to vector<128x512xf32>
    %cst_360 = arith.constant dense<0.000000e+00> : vector<64x512xf32>
    %673 = tpu.matmul %670, %672, %cst_360 {dimension_numbers = #tpu.dot_dimension_numbers<[1], [0], [0], [1], [0, 0, 1, 1], [], []>} : vector<64x128xf32>, vector<128x512xf32>, vector<64x512xf32> -> vector<64x512xf32>
    %c2_361 = arith.constant 2 : index
    %c0_362 = arith.constant 0 : index
    %c0_363 = arith.constant 0 : index
    %674 = vector.load %arg3[%c2_361, %c0_362, %c0_363] : memref<3x1x512xf32, #tpu.memory_space<vmem>>, vector<1x1x512xf32>
    %675 = vector.shape_cast %674 : vector<1x1x512xf32> to vector<1x512xf32>
    %676 = vector.broadcast %675 : vector<1x512xf32> to vector<64x512xf32>
    %677 = arith.addf %673, %676 : vector<64x512xf32>
    %c0_364 = arith.constant 0 : index
    %c0_365 = arith.constant 0 : index
    %678 = vector.load %arg12[%c0_364, %c0_365] : memref<64x512xf32, #tpu.memory_space<vmem>>, vector<64x512xf32>
    tpu.vector_store %arg12[%c0_364, %c0_365], %677 {strides = array<i32>} : memref<64x512xf32, #tpu.memory_space<vmem>>, vector<64x512xf32>,
    %c2_366 = arith.constant 2 : index
    %c0_367 = arith.constant 0 : index
    %c0_368 = arith.constant 0 : index
    %679 = vector.load %arg4[%c2_366, %c0_367, %c0_368] : memref<3x8x128xf32, #tpu.memory_space<vmem>>, vector<1x8x128xf32>
    %680 = vector.shape_cast %679 : vector<1x8x128xf32> to vector<8x128xf32>
    %c0_369 = arith.constant 0 : index
    %c0_370 = arith.constant 0 : index
    %681 = vector.load %arg13[%c0_369, %c0_370] : memref<8x128xf32, #tpu.memory_space<vmem>>, vector<8x128xf32>
    tpu.vector_store %arg13[%c0_369, %c0_370], %680 {strides = array<i32>} : memref<8x128xf32, #tpu.memory_space<vmem>>, vector<8x128xf32>,
    %c2_371 = arith.constant 2 : index
    %c0_372 = arith.constant 0 : index
    %c0_373 = arith.constant 0 : index
    %682 = vector.load %arg5[%c2_371, %c0_372, %c0_373] : memref<3x8x128xf32, #tpu.memory_space<vmem>>, vector<1x8x128xf32>
    %683 = vector.shape_cast %682 : vector<1x8x128xf32> to vector<8x128xf32>
    %c0_374 = arith.constant 0 : index
    %c0_375 = arith.constant 0 : index
    %684 = vector.load %arg14[%c0_374, %c0_375] : memref<8x128xf32, #tpu.memory_space<vmem>>, vector<8x128xf32>
    tpu.vector_store %arg14[%c0_374, %c0_375], %683 {strides = array<i32>} : memref<8x128xf32, #tpu.memory_space<vmem>>, vector<8x128xf32>,
    %c0_i32_376 = arith.constant 0 : i32
    %c8_i32_377 = arith.constant 8 : i32
    %685 = arith.muli %c0_i32_376, %c8_i32_377 : i32
    %686 = tpu.assume_multiple %685, 8 : i32
    %c0_378 = arith.constant 0 : index
    %c0_379 = arith.constant 0 : index
    %687 = vector.load %arg13[%c0_378, %c0_379] : memref<8x128xf32, #tpu.memory_space<vmem>>, vector<8x128xf32>
    %c0_380 = arith.constant 0 : index
    %c0_381 = arith.constant 0 : index
    %688 = vector.load %arg14[%c0_380, %c0_381] : memref<8x128xf32, #tpu.memory_space<vmem>>, vector<8x128xf32>
    %689 = arith.index_cast %686 : i32 to index
    %c0_382 = arith.constant 0 : index
    %690 = vector.load %arg12[%689, %c0_382] : memref<64x512xf32, #tpu.memory_space<vmem>>, vector<8x512xf32>
    %c2_383 = arith.constant 2 : index
    %c0_384 = arith.constant 0 : index
    %c0_385 = arith.constant 0 : index
    %691 = vector.load %arg2[%c2_383, %c0_384, %c0_385] : memref<3x128x512xf32, #tpu.memory_space<vmem>>, vector<1x128x512xf32>
    %692 = vector.shape_cast %691 : vector<1x128x512xf32> to vector<128x512xf32>
    %cst_386 = arith.constant dense<0.000000e+00> : vector<8x512xf32>
    %693 = tpu.matmul %687, %692, %cst_386 {dimension_numbers = #tpu.dot_dimension_numbers<[1], [0], [0], [1], [0, 0, 1, 1], [], []>} : vector<8x128xf32>, vector<128x512xf32>, vector<8x512xf32> -> vector<8x512xf32>
    %694 = arith.addf %690, %693 : vector<8x512xf32>
    %695 = vector.extract_strided_slice %694 {offsets = [0, 0], sizes = [8, 128], strides = [1, 1]} : vector<8x512xf32> to vector<8x128xf32>
    %696 = arith.negf %695 : vector<8x128xf32>
    %697 = math.exp %696 : vector<8x128xf32>
    %cst_387 = arith.constant 1.000000e+00 : f32
    %698 = vector.broadcast %cst_387 : f32 to vector<8x128xf32>
    %699 = arith.addf %698, %697 : vector<8x128xf32>
    %700 = arith.divf %698, %699 : vector<8x128xf32>
    %701 = vector.extract_strided_slice %694 {offsets = [0, 128], sizes = [8, 128], strides = [1, 1]} : vector<8x512xf32> to vector<8x128xf32>
    %702 = arith.negf %701 : vector<8x128xf32>
    %703 = math.exp %702 : vector<8x128xf32>
    %cst_388 = arith.constant 1.000000e+00 : f32
    %704 = vector.broadcast %cst_388 : f32 to vector<8x128xf32>
    %705 = arith.addf %704, %703 : vector<8x128xf32>
    %706 = arith.divf %704, %705 : vector<8x128xf32>
    %707 = vector.extract_strided_slice %694 {offsets = [0, 256], sizes = [8, 128], strides = [1, 1]} : vector<8x512xf32> to vector<8x128xf32>
    %708 = math.tanh %707 : vector<8x128xf32>
    %709 = vector.extract_strided_slice %694 {offsets = [0, 384], sizes = [8, 128], strides = [1, 1]} : vector<8x512xf32> to vector<8x128xf32>
    %710 = arith.negf %709 : vector<8x128xf32>
    %711 = math.exp %710 : vector<8x128xf32>
    %cst_389 = arith.constant 1.000000e+00 : f32
    %712 = vector.broadcast %cst_389 : f32 to vector<8x128xf32>
    %713 = arith.addf %712, %711 : vector<8x128xf32>
    %714 = arith.divf %712, %713 : vector<8x128xf32>
    %715 = arith.mulf %706, %688 : vector<8x128xf32>
    %716 = arith.mulf %700, %708 : vector<8x128xf32>
    %717 = arith.addf %715, %716 : vector<8x128xf32>
    %718 = math.tanh %717 : vector<8x128xf32>
    %719 = arith.mulf %714, %718 : vector<8x128xf32>
    %c0_390 = arith.constant 0 : index
    %c0_391 = arith.constant 0 : index
    %720 = vector.load %arg13[%c0_390, %c0_391] : memref<8x128xf32, #tpu.memory_space<vmem>>, vector<8x128xf32>
    tpu.vector_store %arg13[%c0_390, %c0_391], %719 {strides = array<i32>} : memref<8x128xf32, #tpu.memory_space<vmem>>, vector<8x128xf32>,
    %c0_392 = arith.constant 0 : index
    %c0_393 = arith.constant 0 : index
    %721 = vector.load %arg14[%c0_392, %c0_393] : memref<8x128xf32, #tpu.memory_space<vmem>>, vector<8x128xf32>
    tpu.vector_store %arg14[%c0_392, %c0_393], %717 {strides = array<i32>} : memref<8x128xf32, #tpu.memory_space<vmem>>, vector<8x128xf32>,
    %722 = arith.index_cast %686 : i32 to index
    %c0_394 = arith.constant 0 : index
    %723 = vector.load %arg11[%722, %c0_394] : memref<64x128xf32, #tpu.memory_space<vmem>>, vector<8x128xf32>
    tpu.vector_store %arg11[%722, %c0_394], %719 {strides = array<i32>} : memref<64x128xf32, #tpu.memory_space<vmem>>, vector<8x128xf32>,
    %c1_i32_395 = arith.constant 1 : i32
    %c8_i32_396 = arith.constant 8 : i32
    %724 = arith.muli %c1_i32_395, %c8_i32_396 : i32
    %725 = tpu.assume_multiple %724, 8 : i32
    %c0_397 = arith.constant 0 : index
    %c0_398 = arith.constant 0 : index
    %726 = vector.load %arg13[%c0_397, %c0_398] : memref<8x128xf32, #tpu.memory_space<vmem>>, vector<8x128xf32>
    %c0_399 = arith.constant 0 : index
    %c0_400 = arith.constant 0 : index
    %727 = vector.load %arg14[%c0_399, %c0_400] : memref<8x128xf32, #tpu.memory_space<vmem>>, vector<8x128xf32>
    %728 = arith.index_cast %725 : i32 to index
    %c0_401 = arith.constant 0 : index
    %729 = vector.load %arg12[%728, %c0_401] : memref<64x512xf32, #tpu.memory_space<vmem>>, vector<8x512xf32>
    %c2_402 = arith.constant 2 : index
    %c0_403 = arith.constant 0 : index
    %c0_404 = arith.constant 0 : index
    %730 = vector.load %arg2[%c2_402, %c0_403, %c0_404] : memref<3x128x512xf32, #tpu.memory_space<vmem>>, vector<1x128x512xf32>
    %731 = vector.shape_cast %730 : vector<1x128x512xf32> to vector<128x512xf32>
    %cst_405 = arith.constant dense<0.000000e+00> : vector<8x512xf32>
    %732 = tpu.matmul %726, %731, %cst_405 {dimension_numbers = #tpu.dot_dimension_numbers<[1], [0], [0], [1], [0, 0, 1, 1], [], []>} : vector<8x128xf32>, vector<128x512xf32>, vector<8x512xf32> -> vector<8x512xf32>
    %733 = arith.addf %729, %732 : vector<8x512xf32>
    %734 = vector.extract_strided_slice %733 {offsets = [0, 0], sizes = [8, 128], strides = [1, 1]} : vector<8x512xf32> to vector<8x128xf32>
    %735 = arith.negf %734 : vector<8x128xf32>
    %736 = math.exp %735 : vector<8x128xf32>
    %cst_406 = arith.constant 1.000000e+00 : f32
    %737 = vector.broadcast %cst_406 : f32 to vector<8x128xf32>
    %738 = arith.addf %737, %736 : vector<8x128xf32>
    %739 = arith.divf %737, %738 : vector<8x128xf32>
    %740 = vector.extract_strided_slice %733 {offsets = [0, 128], sizes = [8, 128], strides = [1, 1]} : vector<8x512xf32> to vector<8x128xf32>
    %741 = arith.negf %740 : vector<8x128xf32>
    %742 = math.exp %741 : vector<8x128xf32>
    %cst_407 = arith.constant 1.000000e+00 : f32
    %743 = vector.broadcast %cst_407 : f32 to vector<8x128xf32>
    %744 = arith.addf %743, %742 : vector<8x128xf32>
    %745 = arith.divf %743, %744 : vector<8x128xf32>
    %746 = vector.extract_strided_slice %733 {offsets = [0, 256], sizes = [8, 128], strides = [1, 1]} : vector<8x512xf32> to vector<8x128xf32>
    %747 = math.tanh %746 : vector<8x128xf32>
    %748 = vector.extract_strided_slice %733 {offsets = [0, 384], sizes = [8, 128], strides = [1, 1]} : vector<8x512xf32> to vector<8x128xf32>
    %749 = arith.negf %748 : vector<8x128xf32>
    %750 = math.exp %749 : vector<8x128xf32>
    %cst_408 = arith.constant 1.000000e+00 : f32
    %751 = vector.broadcast %cst_408 : f32 to vector<8x128xf32>
    %752 = arith.addf %751, %750 : vector<8x128xf32>
    %753 = arith.divf %751, %752 : vector<8x128xf32>
    %754 = arith.mulf %745, %727 : vector<8x128xf32>
    %755 = arith.mulf %739, %747 : vector<8x128xf32>
    %756 = arith.addf %754, %755 : vector<8x128xf32>
    %757 = math.tanh %756 : vector<8x128xf32>
    %758 = arith.mulf %753, %757 : vector<8x128xf32>
    %c0_409 = arith.constant 0 : index
    %c0_410 = arith.constant 0 : index
    %759 = vector.load %arg13[%c0_409, %c0_410] : memref<8x128xf32, #tpu.memory_space<vmem>>, vector<8x128xf32>
    tpu.vector_store %arg13[%c0_409, %c0_410], %758 {strides = array<i32>} : memref<8x128xf32, #tpu.memory_space<vmem>>, vector<8x128xf32>,
    %c0_411 = arith.constant 0 : index
    %c0_412 = arith.constant 0 : index
    %760 = vector.load %arg14[%c0_411, %c0_412] : memref<8x128xf32, #tpu.memory_space<vmem>>, vector<8x128xf32>
    tpu.vector_store %arg14[%c0_411, %c0_412], %756 {strides = array<i32>} : memref<8x128xf32, #tpu.memory_space<vmem>>, vector<8x128xf32>,
    %761 = arith.index_cast %725 : i32 to index
    %c0_413 = arith.constant 0 : index
    %762 = vector.load %arg11[%761, %c0_413] : memref<64x128xf32, #tpu.memory_space<vmem>>, vector<8x128xf32>
    tpu.vector_store %arg11[%761, %c0_413], %758 {strides = array<i32>} : memref<64x128xf32, #tpu.memory_space<vmem>>, vector<8x128xf32>,
    %c2_i32_414 = arith.constant 2 : i32
    %c8_i32_415 = arith.constant 8 : i32
    %763 = arith.muli %c2_i32_414, %c8_i32_415 : i32
    %764 = tpu.assume_multiple %763, 8 : i32
    %c0_416 = arith.constant 0 : index
    %c0_417 = arith.constant 0 : index
    %765 = vector.load %arg13[%c0_416, %c0_417] : memref<8x128xf32, #tpu.memory_space<vmem>>, vector<8x128xf32>
    %c0_418 = arith.constant 0 : index
    %c0_419 = arith.constant 0 : index
    %766 = vector.load %arg14[%c0_418, %c0_419] : memref<8x128xf32, #tpu.memory_space<vmem>>, vector<8x128xf32>
    %767 = arith.index_cast %764 : i32 to index
    %c0_420 = arith.constant 0 : index
    %768 = vector.load %arg12[%767, %c0_420] : memref<64x512xf32, #tpu.memory_space<vmem>>, vector<8x512xf32>
    %c2_421 = arith.constant 2 : index
    %c0_422 = arith.constant 0 : index
    %c0_423 = arith.constant 0 : index
    %769 = vector.load %arg2[%c2_421, %c0_422, %c0_423] : memref<3x128x512xf32, #tpu.memory_space<vmem>>, vector<1x128x512xf32>
    %770 = vector.shape_cast %769 : vector<1x128x512xf32> to vector<128x512xf32>
    %cst_424 = arith.constant dense<0.000000e+00> : vector<8x512xf32>
    %771 = tpu.matmul %765, %770, %cst_424 {dimension_numbers = #tpu.dot_dimension_numbers<[1], [0], [0], [1], [0, 0, 1, 1], [], []>} : vector<8x128xf32>, vector<128x512xf32>, vector<8x512xf32> -> vector<8x512xf32>
    %772 = arith.addf %768, %771 : vector<8x512xf32>
    %773 = vector.extract_strided_slice %772 {offsets = [0, 0], sizes = [8, 128], strides = [1, 1]} : vector<8x512xf32> to vector<8x128xf32>
    %774 = arith.negf %773 : vector<8x128xf32>
    %775 = math.exp %774 : vector<8x128xf32>
    %cst_425 = arith.constant 1.000000e+00 : f32
    %776 = vector.broadcast %cst_425 : f32 to vector<8x128xf32>
    %777 = arith.addf %776, %775 : vector<8x128xf32>
    %778 = arith.divf %776, %777 : vector<8x128xf32>
    %779 = vector.extract_strided_slice %772 {offsets = [0, 128], sizes = [8, 128], strides = [1, 1]} : vector<8x512xf32> to vector<8x128xf32>
    %780 = arith.negf %779 : vector<8x128xf32>
    %781 = math.exp %780 : vector<8x128xf32>
    %cst_426 = arith.constant 1.000000e+00 : f32
    %782 = vector.broadcast %cst_426 : f32 to vector<8x128xf32>
    %783 = arith.addf %782, %781 : vector<8x128xf32>
    %784 = arith.divf %782, %783 : vector<8x128xf32>
    %785 = vector.extract_strided_slice %772 {offsets = [0, 256], sizes = [8, 128], strides = [1, 1]} : vector<8x512xf32> to vector<8x128xf32>
    %786 = math.tanh %785 : vector<8x128xf32>
    %787 = vector.extract_strided_slice %772 {offsets = [0, 384], sizes = [8, 128], strides = [1, 1]} : vector<8x512xf32> to vector<8x128xf32>
    %788 = arith.negf %787 : vector<8x128xf32>
    %789 = math.exp %788 : vector<8x128xf32>
    %cst_427 = arith.constant 1.000000e+00 : f32
    %790 = vector.broadcast %cst_427 : f32 to vector<8x128xf32>
    %791 = arith.addf %790, %789 : vector<8x128xf32>
    %792 = arith.divf %790, %791 : vector<8x128xf32>
    %793 = arith.mulf %784, %766 : vector<8x128xf32>
    %794 = arith.mulf %778, %786 : vector<8x128xf32>
    %795 = arith.addf %793, %794 : vector<8x128xf32>
    %796 = math.tanh %795 : vector<8x128xf32>
    %797 = arith.mulf %792, %796 : vector<8x128xf32>
    %c0_428 = arith.constant 0 : index
    %c0_429 = arith.constant 0 : index
    %798 = vector.load %arg13[%c0_428, %c0_429] : memref<8x128xf32, #tpu.memory_space<vmem>>, vector<8x128xf32>
    tpu.vector_store %arg13[%c0_428, %c0_429], %797 {strides = array<i32>} : memref<8x128xf32, #tpu.memory_space<vmem>>, vector<8x128xf32>,
    %c0_430 = arith.constant 0 : index
    %c0_431 = arith.constant 0 : index
    %799 = vector.load %arg14[%c0_430, %c0_431] : memref<8x128xf32, #tpu.memory_space<vmem>>, vector<8x128xf32>
    tpu.vector_store %arg14[%c0_430, %c0_431], %795 {strides = array<i32>} : memref<8x128xf32, #tpu.memory_space<vmem>>, vector<8x128xf32>,
    %800 = arith.index_cast %764 : i32 to index
    %c0_432 = arith.constant 0 : index
    %801 = vector.load %arg11[%800, %c0_432] : memref<64x128xf32, #tpu.memory_space<vmem>>, vector<8x128xf32>
    tpu.vector_store %arg11[%800, %c0_432], %797 {strides = array<i32>} : memref<64x128xf32, #tpu.memory_space<vmem>>, vector<8x128xf32>,
    %c3_i32_433 = arith.constant 3 : i32
    %c8_i32_434 = arith.constant 8 : i32
    %802 = arith.muli %c3_i32_433, %c8_i32_434 : i32
    %803 = tpu.assume_multiple %802, 8 : i32
    %c0_435 = arith.constant 0 : index
    %c0_436 = arith.constant 0 : index
    %804 = vector.load %arg13[%c0_435, %c0_436] : memref<8x128xf32, #tpu.memory_space<vmem>>, vector<8x128xf32>
    %c0_437 = arith.constant 0 : index
    %c0_438 = arith.constant 0 : index
    %805 = vector.load %arg14[%c0_437, %c0_438] : memref<8x128xf32, #tpu.memory_space<vmem>>, vector<8x128xf32>
    %806 = arith.index_cast %803 : i32 to index
    %c0_439 = arith.constant 0 : index
    %807 = vector.load %arg12[%806, %c0_439] : memref<64x512xf32, #tpu.memory_space<vmem>>, vector<8x512xf32>
    %c2_440 = arith.constant 2 : index
    %c0_441 = arith.constant 0 : index
    %c0_442 = arith.constant 0 : index
    %808 = vector.load %arg2[%c2_440, %c0_441, %c0_442] : memref<3x128x512xf32, #tpu.memory_space<vmem>>, vector<1x128x512xf32>
    %809 = vector.shape_cast %808 : vector<1x128x512xf32> to vector<128x512xf32>
    %cst_443 = arith.constant dense<0.000000e+00> : vector<8x512xf32>
    %810 = tpu.matmul %804, %809, %cst_443 {dimension_numbers = #tpu.dot_dimension_numbers<[1], [0], [0], [1], [0, 0, 1, 1], [], []>} : vector<8x128xf32>, vector<128x512xf32>, vector<8x512xf32> -> vector<8x512xf32>
    %811 = arith.addf %807, %810 : vector<8x512xf32>
    %812 = vector.extract_strided_slice %811 {offsets = [0, 0], sizes = [8, 128], strides = [1, 1]} : vector<8x512xf32> to vector<8x128xf32>
    %813 = arith.negf %812 : vector<8x128xf32>
    %814 = math.exp %813 : vector<8x128xf32>
    %cst_444 = arith.constant 1.000000e+00 : f32
    %815 = vector.broadcast %cst_444 : f32 to vector<8x128xf32>
    %816 = arith.addf %815, %814 : vector<8x128xf32>
    %817 = arith.divf %815, %816 : vector<8x128xf32>
    %818 = vector.extract_strided_slice %811 {offsets = [0, 128], sizes = [8, 128], strides = [1, 1]} : vector<8x512xf32> to vector<8x128xf32>
    %819 = arith.negf %818 : vector<8x128xf32>
    %820 = math.exp %819 : vector<8x128xf32>
    %cst_445 = arith.constant 1.000000e+00 : f32
    %821 = vector.broadcast %cst_445 : f32 to vector<8x128xf32>
    %822 = arith.addf %821, %820 : vector<8x128xf32>
    %823 = arith.divf %821, %822 : vector<8x128xf32>
    %824 = vector.extract_strided_slice %811 {offsets = [0, 256], sizes = [8, 128], strides = [1, 1]} : vector<8x512xf32> to vector<8x128xf32>
    %825 = math.tanh %824 : vector<8x128xf32>
    %826 = vector.extract_strided_slice %811 {offsets = [0, 384], sizes = [8, 128], strides = [1, 1]} : vector<8x512xf32> to vector<8x128xf32>
    %827 = arith.negf %826 : vector<8x128xf32>
    %828 = math.exp %827 : vector<8x128xf32>
    %cst_446 = arith.constant 1.000000e+00 : f32
    %829 = vector.broadcast %cst_446 : f32 to vector<8x128xf32>
    %830 = arith.addf %829, %828 : vector<8x128xf32>
    %831 = arith.divf %829, %830 : vector<8x128xf32>
    %832 = arith.mulf %823, %805 : vector<8x128xf32>
    %833 = arith.mulf %817, %825 : vector<8x128xf32>
    %834 = arith.addf %832, %833 : vector<8x128xf32>
    %835 = math.tanh %834 : vector<8x128xf32>
    %836 = arith.mulf %831, %835 : vector<8x128xf32>
    %c0_447 = arith.constant 0 : index
    %c0_448 = arith.constant 0 : index
    %837 = vector.load %arg13[%c0_447, %c0_448] : memref<8x128xf32, #tpu.memory_space<vmem>>, vector<8x128xf32>
    tpu.vector_store %arg13[%c0_447, %c0_448], %836 {strides = array<i32>} : memref<8x128xf32, #tpu.memory_space<vmem>>, vector<8x128xf32>,
    %c0_449 = arith.constant 0 : index
    %c0_450 = arith.constant 0 : index
    %838 = vector.load %arg14[%c0_449, %c0_450] : memref<8x128xf32, #tpu.memory_space<vmem>>, vector<8x128xf32>
    tpu.vector_store %arg14[%c0_449, %c0_450], %834 {strides = array<i32>} : memref<8x128xf32, #tpu.memory_space<vmem>>, vector<8x128xf32>,
    %839 = arith.index_cast %803 : i32 to index
    %c0_451 = arith.constant 0 : index
    %840 = vector.load %arg11[%839, %c0_451] : memref<64x128xf32, #tpu.memory_space<vmem>>, vector<8x128xf32>
    tpu.vector_store %arg11[%839, %c0_451], %836 {strides = array<i32>} : memref<64x128xf32, #tpu.memory_space<vmem>>, vector<8x128xf32>,
    %c4_i32_452 = arith.constant 4 : i32
    %c8_i32_453 = arith.constant 8 : i32
    %841 = arith.muli %c4_i32_452, %c8_i32_453 : i32
    %842 = tpu.assume_multiple %841, 8 : i32
    %c0_454 = arith.constant 0 : index
    %c0_455 = arith.constant 0 : index
    %843 = vector.load %arg13[%c0_454, %c0_455] : memref<8x128xf32, #tpu.memory_space<vmem>>, vector<8x128xf32>
    %c0_456 = arith.constant 0 : index
    %c0_457 = arith.constant 0 : index
    %844 = vector.load %arg14[%c0_456, %c0_457] : memref<8x128xf32, #tpu.memory_space<vmem>>, vector<8x128xf32>
    %845 = arith.index_cast %842 : i32 to index
    %c0_458 = arith.constant 0 : index
    %846 = vector.load %arg12[%845, %c0_458] : memref<64x512xf32, #tpu.memory_space<vmem>>, vector<8x512xf32>
    %c2_459 = arith.constant 2 : index
    %c0_460 = arith.constant 0 : index
    %c0_461 = arith.constant 0 : index
    %847 = vector.load %arg2[%c2_459, %c0_460, %c0_461] : memref<3x128x512xf32, #tpu.memory_space<vmem>>, vector<1x128x512xf32>
    %848 = vector.shape_cast %847 : vector<1x128x512xf32> to vector<128x512xf32>
    %cst_462 = arith.constant dense<0.000000e+00> : vector<8x512xf32>
    %849 = tpu.matmul %843, %848, %cst_462 {dimension_numbers = #tpu.dot_dimension_numbers<[1], [0], [0], [1], [0, 0, 1, 1], [], []>} : vector<8x128xf32>, vector<128x512xf32>, vector<8x512xf32> -> vector<8x512xf32>
    %850 = arith.addf %846, %849 : vector<8x512xf32>
    %851 = vector.extract_strided_slice %850 {offsets = [0, 0], sizes = [8, 128], strides = [1, 1]} : vector<8x512xf32> to vector<8x128xf32>
    %852 = arith.negf %851 : vector<8x128xf32>
    %853 = math.exp %852 : vector<8x128xf32>
    %cst_463 = arith.constant 1.000000e+00 : f32
    %854 = vector.broadcast %cst_463 : f32 to vector<8x128xf32>
    %855 = arith.addf %854, %853 : vector<8x128xf32>
    %856 = arith.divf %854, %855 : vector<8x128xf32>
    %857 = vector.extract_strided_slice %850 {offsets = [0, 128], sizes = [8, 128], strides = [1, 1]} : vector<8x512xf32> to vector<8x128xf32>
    %858 = arith.negf %857 : vector<8x128xf32>
    %859 = math.exp %858 : vector<8x128xf32>
    %cst_464 = arith.constant 1.000000e+00 : f32
    %860 = vector.broadcast %cst_464 : f32 to vector<8x128xf32>
    %861 = arith.addf %860, %859 : vector<8x128xf32>
    %862 = arith.divf %860, %861 : vector<8x128xf32>
    %863 = vector.extract_strided_slice %850 {offsets = [0, 256], sizes = [8, 128], strides = [1, 1]} : vector<8x512xf32> to vector<8x128xf32>
    %864 = math.tanh %863 : vector<8x128xf32>
    %865 = vector.extract_strided_slice %850 {offsets = [0, 384], sizes = [8, 128], strides = [1, 1]} : vector<8x512xf32> to vector<8x128xf32>
    %866 = arith.negf %865 : vector<8x128xf32>
    %867 = math.exp %866 : vector<8x128xf32>
    %cst_465 = arith.constant 1.000000e+00 : f32
    %868 = vector.broadcast %cst_465 : f32 to vector<8x128xf32>
    %869 = arith.addf %868, %867 : vector<8x128xf32>
    %870 = arith.divf %868, %869 : vector<8x128xf32>
    %871 = arith.mulf %862, %844 : vector<8x128xf32>
    %872 = arith.mulf %856, %864 : vector<8x128xf32>
    %873 = arith.addf %871, %872 : vector<8x128xf32>
    %874 = math.tanh %873 : vector<8x128xf32>
    %875 = arith.mulf %870, %874 : vector<8x128xf32>
    %c0_466 = arith.constant 0 : index
    %c0_467 = arith.constant 0 : index
    %876 = vector.load %arg13[%c0_466, %c0_467] : memref<8x128xf32, #tpu.memory_space<vmem>>, vector<8x128xf32>
    tpu.vector_store %arg13[%c0_466, %c0_467], %875 {strides = array<i32>} : memref<8x128xf32, #tpu.memory_space<vmem>>, vector<8x128xf32>,
    %c0_468 = arith.constant 0 : index
    %c0_469 = arith.constant 0 : index
    %877 = vector.load %arg14[%c0_468, %c0_469] : memref<8x128xf32, #tpu.memory_space<vmem>>, vector<8x128xf32>
    tpu.vector_store %arg14[%c0_468, %c0_469], %873 {strides = array<i32>} : memref<8x128xf32, #tpu.memory_space<vmem>>, vector<8x128xf32>,
    %878 = arith.index_cast %842 : i32 to index
    %c0_470 = arith.constant 0 : index
    %879 = vector.load %arg11[%878, %c0_470] : memref<64x128xf32, #tpu.memory_space<vmem>>, vector<8x128xf32>
    tpu.vector_store %arg11[%878, %c0_470], %875 {strides = array<i32>} : memref<64x128xf32, #tpu.memory_space<vmem>>, vector<8x128xf32>,
    %c5_i32_471 = arith.constant 5 : i32
    %c8_i32_472 = arith.constant 8 : i32
    %880 = arith.muli %c5_i32_471, %c8_i32_472 : i32
    %881 = tpu.assume_multiple %880, 8 : i32
    %c0_473 = arith.constant 0 : index
    %c0_474 = arith.constant 0 : index
    %882 = vector.load %arg13[%c0_473, %c0_474] : memref<8x128xf32, #tpu.memory_space<vmem>>, vector<8x128xf32>
    %c0_475 = arith.constant 0 : index
    %c0_476 = arith.constant 0 : index
    %883 = vector.load %arg14[%c0_475, %c0_476] : memref<8x128xf32, #tpu.memory_space<vmem>>, vector<8x128xf32>
    %884 = arith.index_cast %881 : i32 to index
    %c0_477 = arith.constant 0 : index
    %885 = vector.load %arg12[%884, %c0_477] : memref<64x512xf32, #tpu.memory_space<vmem>>, vector<8x512xf32>
    %c2_478 = arith.constant 2 : index
    %c0_479 = arith.constant 0 : index
    %c0_480 = arith.constant 0 : index
    %886 = vector.load %arg2[%c2_478, %c0_479, %c0_480] : memref<3x128x512xf32, #tpu.memory_space<vmem>>, vector<1x128x512xf32>
    %887 = vector.shape_cast %886 : vector<1x128x512xf32> to vector<128x512xf32>
    %cst_481 = arith.constant dense<0.000000e+00> : vector<8x512xf32>
    %888 = tpu.matmul %882, %887, %cst_481 {dimension_numbers = #tpu.dot_dimension_numbers<[1], [0], [0], [1], [0, 0, 1, 1], [], []>} : vector<8x128xf32>, vector<128x512xf32>, vector<8x512xf32> -> vector<8x512xf32>
    %889 = arith.addf %885, %888 : vector<8x512xf32>
    %890 = vector.extract_strided_slice %889 {offsets = [0, 0], sizes = [8, 128], strides = [1, 1]} : vector<8x512xf32> to vector<8x128xf32>
    %891 = arith.negf %890 : vector<8x128xf32>
    %892 = math.exp %891 : vector<8x128xf32>
    %cst_482 = arith.constant 1.000000e+00 : f32
    %893 = vector.broadcast %cst_482 : f32 to vector<8x128xf32>
    %894 = arith.addf %893, %892 : vector<8x128xf32>
    %895 = arith.divf %893, %894 : vector<8x128xf32>
    %896 = vector.extract_strided_slice %889 {offsets = [0, 128], sizes = [8, 128], strides = [1, 1]} : vector<8x512xf32> to vector<8x128xf32>
    %897 = arith.negf %896 : vector<8x128xf32>
    %898 = math.exp %897 : vector<8x128xf32>
    %cst_483 = arith.constant 1.000000e+00 : f32
    %899 = vector.broadcast %cst_483 : f32 to vector<8x128xf32>
    %900 = arith.addf %899, %898 : vector<8x128xf32>
    %901 = arith.divf %899, %900 : vector<8x128xf32>
    %902 = vector.extract_strided_slice %889 {offsets = [0, 256], sizes = [8, 128], strides = [1, 1]} : vector<8x512xf32> to vector<8x128xf32>
    %903 = math.tanh %902 : vector<8x128xf32>
    %904 = vector.extract_strided_slice %889 {offsets = [0, 384], sizes = [8, 128], strides = [1, 1]} : vector<8x512xf32> to vector<8x128xf32>
    %905 = arith.negf %904 : vector<8x128xf32>
    %906 = math.exp %905 : vector<8x128xf32>
    %cst_484 = arith.constant 1.000000e+00 : f32
    %907 = vector.broadcast %cst_484 : f32 to vector<8x128xf32>
    %908 = arith.addf %907, %906 : vector<8x128xf32>
    %909 = arith.divf %907, %908 : vector<8x128xf32>
    %910 = arith.mulf %901, %883 : vector<8x128xf32>
    %911 = arith.mulf %895, %903 : vector<8x128xf32>
    %912 = arith.addf %910, %911 : vector<8x128xf32>
    %913 = math.tanh %912 : vector<8x128xf32>
    %914 = arith.mulf %909, %913 : vector<8x128xf32>
    %c0_485 = arith.constant 0 : index
    %c0_486 = arith.constant 0 : index
    %915 = vector.load %arg13[%c0_485, %c0_486] : memref<8x128xf32, #tpu.memory_space<vmem>>, vector<8x128xf32>
    tpu.vector_store %arg13[%c0_485, %c0_486], %914 {strides = array<i32>} : memref<8x128xf32, #tpu.memory_space<vmem>>, vector<8x128xf32>,
    %c0_487 = arith.constant 0 : index
    %c0_488 = arith.constant 0 : index
    %916 = vector.load %arg14[%c0_487, %c0_488] : memref<8x128xf32, #tpu.memory_space<vmem>>, vector<8x128xf32>
    tpu.vector_store %arg14[%c0_487, %c0_488], %912 {strides = array<i32>} : memref<8x128xf32, #tpu.memory_space<vmem>>, vector<8x128xf32>,
    %917 = arith.index_cast %881 : i32 to index
    %c0_489 = arith.constant 0 : index
    %918 = vector.load %arg11[%917, %c0_489] : memref<64x128xf32, #tpu.memory_space<vmem>>, vector<8x128xf32>
    tpu.vector_store %arg11[%917, %c0_489], %914 {strides = array<i32>} : memref<64x128xf32, #tpu.memory_space<vmem>>, vector<8x128xf32>,
    %c6_i32_490 = arith.constant 6 : i32
    %c8_i32_491 = arith.constant 8 : i32
    %919 = arith.muli %c6_i32_490, %c8_i32_491 : i32
    %920 = tpu.assume_multiple %919, 8 : i32
    %c0_492 = arith.constant 0 : index
    %c0_493 = arith.constant 0 : index
    %921 = vector.load %arg13[%c0_492, %c0_493] : memref<8x128xf32, #tpu.memory_space<vmem>>, vector<8x128xf32>
    %c0_494 = arith.constant 0 : index
    %c0_495 = arith.constant 0 : index
    %922 = vector.load %arg14[%c0_494, %c0_495] : memref<8x128xf32, #tpu.memory_space<vmem>>, vector<8x128xf32>
    %923 = arith.index_cast %920 : i32 to index
    %c0_496 = arith.constant 0 : index
    %924 = vector.load %arg12[%923, %c0_496] : memref<64x512xf32, #tpu.memory_space<vmem>>, vector<8x512xf32>
    %c2_497 = arith.constant 2 : index
    %c0_498 = arith.constant 0 : index
    %c0_499 = arith.constant 0 : index
    %925 = vector.load %arg2[%c2_497, %c0_498, %c0_499] : memref<3x128x512xf32, #tpu.memory_space<vmem>>, vector<1x128x512xf32>
    %926 = vector.shape_cast %925 : vector<1x128x512xf32> to vector<128x512xf32>
    %cst_500 = arith.constant dense<0.000000e+00> : vector<8x512xf32>
    %927 = tpu.matmul %921, %926, %cst_500 {dimension_numbers = #tpu.dot_dimension_numbers<[1], [0], [0], [1], [0, 0, 1, 1], [], []>} : vector<8x128xf32>, vector<128x512xf32>, vector<8x512xf32> -> vector<8x512xf32>
    %928 = arith.addf %924, %927 : vector<8x512xf32>
    %929 = vector.extract_strided_slice %928 {offsets = [0, 0], sizes = [8, 128], strides = [1, 1]} : vector<8x512xf32> to vector<8x128xf32>
    %930 = arith.negf %929 : vector<8x128xf32>
    %931 = math.exp %930 : vector<8x128xf32>
    %cst_501 = arith.constant 1.000000e+00 : f32
    %932 = vector.broadcast %cst_501 : f32 to vector<8x128xf32>
    %933 = arith.addf %932, %931 : vector<8x128xf32>
    %934 = arith.divf %932, %933 : vector<8x128xf32>
    %935 = vector.extract_strided_slice %928 {offsets = [0, 128], sizes = [8, 128], strides = [1, 1]} : vector<8x512xf32> to vector<8x128xf32>
    %936 = arith.negf %935 : vector<8x128xf32>
    %937 = math.exp %936 : vector<8x128xf32>
    %cst_502 = arith.constant 1.000000e+00 : f32
    %938 = vector.broadcast %cst_502 : f32 to vector<8x128xf32>
    %939 = arith.addf %938, %937 : vector<8x128xf32>
    %940 = arith.divf %938, %939 : vector<8x128xf32>
    %941 = vector.extract_strided_slice %928 {offsets = [0, 256], sizes = [8, 128], strides = [1, 1]} : vector<8x512xf32> to vector<8x128xf32>
    %942 = math.tanh %941 : vector<8x128xf32>
    %943 = vector.extract_strided_slice %928 {offsets = [0, 384], sizes = [8, 128], strides = [1, 1]} : vector<8x512xf32> to vector<8x128xf32>
    %944 = arith.negf %943 : vector<8x128xf32>
    %945 = math.exp %944 : vector<8x128xf32>
    %cst_503 = arith.constant 1.000000e+00 : f32
    %946 = vector.broadcast %cst_503 : f32 to vector<8x128xf32>
    %947 = arith.addf %946, %945 : vector<8x128xf32>
    %948 = arith.divf %946, %947 : vector<8x128xf32>
    %949 = arith.mulf %940, %922 : vector<8x128xf32>
    %950 = arith.mulf %934, %942 : vector<8x128xf32>
    %951 = arith.addf %949, %950 : vector<8x128xf32>
    %952 = math.tanh %951 : vector<8x128xf32>
    %953 = arith.mulf %948, %952 : vector<8x128xf32>
    %c0_504 = arith.constant 0 : index
    %c0_505 = arith.constant 0 : index
    %954 = vector.load %arg13[%c0_504, %c0_505] : memref<8x128xf32, #tpu.memory_space<vmem>>, vector<8x128xf32>
    tpu.vector_store %arg13[%c0_504, %c0_505], %953 {strides = array<i32>} : memref<8x128xf32, #tpu.memory_space<vmem>>, vector<8x128xf32>,
    %c0_506 = arith.constant 0 : index
    %c0_507 = arith.constant 0 : index
    %955 = vector.load %arg14[%c0_506, %c0_507] : memref<8x128xf32, #tpu.memory_space<vmem>>, vector<8x128xf32>
    tpu.vector_store %arg14[%c0_506, %c0_507], %951 {strides = array<i32>} : memref<8x128xf32, #tpu.memory_space<vmem>>, vector<8x128xf32>,
    %956 = arith.index_cast %920 : i32 to index
    %c0_508 = arith.constant 0 : index
    %957 = vector.load %arg11[%956, %c0_508] : memref<64x128xf32, #tpu.memory_space<vmem>>, vector<8x128xf32>
    tpu.vector_store %arg11[%956, %c0_508], %953 {strides = array<i32>} : memref<64x128xf32, #tpu.memory_space<vmem>>, vector<8x128xf32>,
    %c7_i32_509 = arith.constant 7 : i32
    %c8_i32_510 = arith.constant 8 : i32
    %958 = arith.muli %c7_i32_509, %c8_i32_510 : i32
    %959 = tpu.assume_multiple %958, 8 : i32
    %c0_511 = arith.constant 0 : index
    %c0_512 = arith.constant 0 : index
    %960 = vector.load %arg13[%c0_511, %c0_512] : memref<8x128xf32, #tpu.memory_space<vmem>>, vector<8x128xf32>
    %c0_513 = arith.constant 0 : index
    %c0_514 = arith.constant 0 : index
    %961 = vector.load %arg14[%c0_513, %c0_514] : memref<8x128xf32, #tpu.memory_space<vmem>>, vector<8x128xf32>
    %962 = arith.index_cast %959 : i32 to index
    %c0_515 = arith.constant 0 : index
    %963 = vector.load %arg12[%962, %c0_515] : memref<64x512xf32, #tpu.memory_space<vmem>>, vector<8x512xf32>
    %c2_516 = arith.constant 2 : index
    %c0_517 = arith.constant 0 : index
    %c0_518 = arith.constant 0 : index
    %964 = vector.load %arg2[%c2_516, %c0_517, %c0_518] : memref<3x128x512xf32, #tpu.memory_space<vmem>>, vector<1x128x512xf32>
    %965 = vector.shape_cast %964 : vector<1x128x512xf32> to vector<128x512xf32>
    %cst_519 = arith.constant dense<0.000000e+00> : vector<8x512xf32>
    %966 = tpu.matmul %960, %965, %cst_519 {dimension_numbers = #tpu.dot_dimension_numbers<[1], [0], [0], [1], [0, 0, 1, 1], [], []>} : vector<8x128xf32>, vector<128x512xf32>, vector<8x512xf32> -> vector<8x512xf32>
    %967 = arith.addf %963, %966 : vector<8x512xf32>
    %968 = vector.extract_strided_slice %967 {offsets = [0, 0], sizes = [8, 128], strides = [1, 1]} : vector<8x512xf32> to vector<8x128xf32>
    %969 = arith.negf %968 : vector<8x128xf32>
    %970 = math.exp %969 : vector<8x128xf32>
    %cst_520 = arith.constant 1.000000e+00 : f32
    %971 = vector.broadcast %cst_520 : f32 to vector<8x128xf32>
    %972 = arith.addf %971, %970 : vector<8x128xf32>
    %973 = arith.divf %971, %972 : vector<8x128xf32>
    %974 = vector.extract_strided_slice %967 {offsets = [0, 128], sizes = [8, 128], strides = [1, 1]} : vector<8x512xf32> to vector<8x128xf32>
    %975 = arith.negf %974 : vector<8x128xf32>
    %976 = math.exp %975 : vector<8x128xf32>
    %cst_521 = arith.constant 1.000000e+00 : f32
    %977 = vector.broadcast %cst_521 : f32 to vector<8x128xf32>
    %978 = arith.addf %977, %976 : vector<8x128xf32>
    %979 = arith.divf %977, %978 : vector<8x128xf32>
    %980 = vector.extract_strided_slice %967 {offsets = [0, 256], sizes = [8, 128], strides = [1, 1]} : vector<8x512xf32> to vector<8x128xf32>
    %981 = math.tanh %980 : vector<8x128xf32>
    %982 = vector.extract_strided_slice %967 {offsets = [0, 384], sizes = [8, 128], strides = [1, 1]} : vector<8x512xf32> to vector<8x128xf32>
    %983 = arith.negf %982 : vector<8x128xf32>
    %984 = math.exp %983 : vector<8x128xf32>
    %cst_522 = arith.constant 1.000000e+00 : f32
    %985 = vector.broadcast %cst_522 : f32 to vector<8x128xf32>
    %986 = arith.addf %985, %984 : vector<8x128xf32>
    %987 = arith.divf %985, %986 : vector<8x128xf32>
    %988 = arith.mulf %979, %961 : vector<8x128xf32>
    %989 = arith.mulf %973, %981 : vector<8x128xf32>
    %990 = arith.addf %988, %989 : vector<8x128xf32>
    %991 = math.tanh %990 : vector<8x128xf32>
    %992 = arith.mulf %987, %991 : vector<8x128xf32>
    %c0_523 = arith.constant 0 : index
    %c0_524 = arith.constant 0 : index
    %993 = vector.load %arg13[%c0_523, %c0_524] : memref<8x128xf32, #tpu.memory_space<vmem>>, vector<8x128xf32>
    tpu.vector_store %arg13[%c0_523, %c0_524], %992 {strides = array<i32>} : memref<8x128xf32, #tpu.memory_space<vmem>>, vector<8x128xf32>,
    %c0_525 = arith.constant 0 : index
    %c0_526 = arith.constant 0 : index
    %994 = vector.load %arg14[%c0_525, %c0_526] : memref<8x128xf32, #tpu.memory_space<vmem>>, vector<8x128xf32>
    tpu.vector_store %arg14[%c0_525, %c0_526], %990 {strides = array<i32>} : memref<8x128xf32, #tpu.memory_space<vmem>>, vector<8x128xf32>,
    %995 = arith.index_cast %959 : i32 to index
    %c0_527 = arith.constant 0 : index
    %996 = vector.load %arg11[%995, %c0_527] : memref<64x128xf32, #tpu.memory_space<vmem>>, vector<8x128xf32>
    tpu.vector_store %arg11[%995, %c0_527], %992 {strides = array<i32>} : memref<64x128xf32, #tpu.memory_space<vmem>>, vector<8x128xf32>,
    %c8_i32_528 = arith.constant 8 : i32
    %c0_529 = arith.constant 0 : index
    %c0_530 = arith.constant 0 : index
    %997 = vector.load %arg13[%c0_529, %c0_530] : memref<8x128xf32, #tpu.memory_space<vmem>>, vector<8x128xf32>
    %c2_531 = arith.constant 2 : index
    %c0_532 = arith.constant 0 : index
    %c0_533 = arith.constant 0 : index
    %998 = vector.load %arg9[%c2_531, %c0_532, %c0_533] : memref<3x8x128xf32, #tpu.memory_space<vmem>>, vector<1x8x128xf32>
    %999 = vector.shape_cast %998 : vector<1x8x128xf32> to vector<8x128xf32>
    %1000 = vector.shape_cast %997 : vector<8x128xf32> to vector<1x8x128xf32>
    tpu.vector_store %arg9[%c2_531, %c0_532, %c0_533], %1000 {strides = array<i32>} : memref<3x8x128xf32, #tpu.memory_space<vmem>>, vector<1x8x128xf32>,
    %c0_534 = arith.constant 0 : index
    %c0_535 = arith.constant 0 : index
    %1001 = vector.load %arg14[%c0_534, %c0_535] : memref<8x128xf32, #tpu.memory_space<vmem>>, vector<8x128xf32>
    %c2_536 = arith.constant 2 : index
    %c0_537 = arith.constant 0 : index
    %c0_538 = arith.constant 0 : index
    %1002 = vector.load %arg10[%c2_536, %c0_537, %c0_538] : memref<3x8x128xf32, #tpu.memory_space<vmem>>, vector<1x8x128xf32>
    %1003 = vector.shape_cast %1002 : vector<1x8x128xf32> to vector<8x128xf32>
    %1004 = vector.shape_cast %1001 : vector<8x128xf32> to vector<1x8x128xf32>
    tpu.vector_store %arg10[%c2_536, %c0_537, %c0_538], %1004 {strides = array<i32>} : memref<3x8x128xf32, #tpu.memory_space<vmem>>, vector<1x8x128xf32>,
    %c0_539 = arith.constant 0 : index
    %c0_540 = arith.constant 0 : index
    %1005 = vector.load %arg11[%c0_539, %c0_540] : memref<64x128xf32, #tpu.memory_space<vmem>>, vector<64x128xf32>
    %c0_541 = arith.constant 0 : index
    %c0_542 = arith.constant 0 : index
    %1006 = vector.load %arg6[%c0_541, %c0_542] : memref<128x128xf32, #tpu.memory_space<vmem>>, vector<128x128xf32>
    %cst_543 = arith.constant dense<0.000000e+00> : vector<64x128xf32>
    %1007 = tpu.matmul %1005, %1006, %cst_543 {dimension_numbers = #tpu.dot_dimension_numbers<[1], [0], [0], [1], [0, 0, 1, 1], [], []>} : vector<64x128xf32>, vector<128x128xf32>, vector<64x128xf32> -> vector<64x128xf32>
    %c0_544 = arith.constant 0 : index
    %c0_545 = arith.constant 0 : index
    %1008 = vector.load %arg7[%c0_544, %c0_545] : memref<1x128xf32, #tpu.memory_space<vmem>>, vector<1x128xf32>
    %1009 = vector.broadcast %1008 : vector<1x128xf32> to vector<64x128xf32>
    %1010 = arith.addf %1007, %1009 : vector<64x128xf32>
    %c0_546 = arith.constant 0 : index
    %c0_547 = arith.constant 0 : index
    %1011 = vector.load %arg8[%c0_546, %c0_547] : memref<64x128xf32, #tpu.memory_space<vmem>>, vector<64x128xf32>
    tpu.vector_store %arg8[%c0_546, %c0_547], %1010 {strides = array<i32>} : memref<64x128xf32, #tpu.memory_space<vmem>>, vector<64x128xf32>,
    return
  }
}

</mosaic_0001>

<llo_original>
// kernel: _lambda_.1
$region0: #{_lambda_.1}
  #allocation0 [shape = 'u32[]', space=smem, size = 0x4, offset = 0x4, fixed_abs, tag = 'smem constant byte address 0x4 - core index']
  #allocation1 [shape = 'u32[144,128]{1,0:T(1,128)}', space=vmem, size = 0x12000, scoped, tag = 'internal scratch']
  #allocation2 [shape = 'f32[64,128]{1,0:T(8,128)}', space=vmem, size = 0x8000, scoped, tag = 'scratch operand']
  #allocation3 [shape = 'f32[64,512]{1,0:T(8,128)}', space=vmem, size = 0x20000, scoped, tag = 'scratch operand']
  #allocation4 [shape = 'f32[8,128]{1,0:T(8,128)}', space=vmem, size = 0x1000, scoped, tag = 'scratch operand']
  #allocation5 [shape = 'f32[8,128]{1,0:T(8,128)}', space=vmem, size = 0x1000, scoped, tag = 'scratch operand']
  %s0 = inlined_call_operand.vmem [shape: f32[64,128], index: 0, kind: input, shape index: {}]
  %s1 = inlined_call_operand.hbm [shape: f32[3,128,512], index: 1, kind: input, shape index: {}]
  %s2 = inlined_call_operand.hbm [shape: f32[3,128,512], index: 2, kind: input, shape index: {}]
  %s3 = inlined_call_operand.vmem [shape: f32[3,1,512], index: 3, kind: input, shape index: {}]
  %s4 = inlined_call_operand.vmem [shape: f32[3,8,128], index: 4, kind: input, shape index: {}]
  %s5 = inlined_call_operand.vmem [shape: f32[3,8,128], index: 5, kind: input, shape index: {}]
  %s6 = inlined_call_operand.vmem [shape: f32[128,128], index: 6, kind: input, shape index: {}]
  %s7 = inlined_call_operand.vmem [shape: f32[1,128], index: 7, kind: input, shape index: {}]
  %s8 = inlined_call_operand.vmem [shape: f32[64,128], index: 8, kind: output, shape index: {0}]
  %s9 = inlined_call_operand.vmem [shape: f32[3,8,128], index: 9, kind: output, shape index: {1}]
  %s10 = inlined_call_operand.vmem [shape: f32[3,8,128], index: 10, kind: output, shape index: {2}]
  %11 = xla_tuple %s8, %s9, %s10
  %s12 = sld [smem:[#allocation0]]
  $region66: #{_lambda_.1} parent=0
    _
  %s14 = ssub.s32 1, %s12
  %s15 = scalar_select 0, %s14, %s12
  $region1: #{_lambda_.1} parent=0
    #allocation6 [shape = 'u8[786432]{0}', space=vmem, size = 0xc0000, scoped, tag = 'input window, operand 1, single buffered']
    #allocation7 [shape = 's32[1]{0}', space=sflag, size = 0x4, scoped, tag = 'scoped memory for _lambda_.1']
    #allocation8 [shape = 'u8[786432]{0}', space=vmem, size = 0xc0000, scoped, tag = 'input window, operand 2, single buffered']
    #allocation9 [shape = 's32[1]{0}', space=sflag, size = 0x4, scoped, tag = 'scoped memory for _lambda_.1']
    %16 = vsyncpa [#allocation7], 0
    %17 = vsyncpa [#allocation9], 0
    // Predicated region
    $region2: #{_lambda_.1} parent=1 // pred_check
      _
    $region3: #{_lambda_.1} parent=1 // pred_check_branch
      %19 = sbr.rel (0) target = $region5
    $region4: #{_lambda_.1} parent=1 // pred_region
      _
    $region5: #{_lambda_.1} parent=1 // pred_fallthru
      _
    // Predicated region
    $region6: #{_lambda_.1} parent=1 // pred_check
      _
    $region7: #{_lambda_.1} parent=1 // pred_check_branch
      %21 = sbr.rel (0) target = $region9
    $region8: #{_lambda_.1} parent=1 // pred_region
      %s23 = ssub.s32 24576, 24576
      %24 = vsyncadd [#allocation7], %s23
      %s25 = sshll.u32 [#allocation6], 4
      %s26 = int_to_ptr.vmem [resolvable:$true] %s25
      %31 = dma.hbm_to_vmem [thread:$0]  %s1, 24576, %s26, [#allocation7], 512, 512, 32
    $region9: #{_lambda_.1} parent=1 // pred_fallthru
      _
    // Predicated region
    $region10: #{_lambda_.1} parent=1 // pred_check
      _
    $region11: #{_lambda_.1} parent=1 // pred_check_branch
      %33 = sbr.rel (0) target = $region13
    $region12: #{_lambda_.1} parent=1 // pred_region
      %s35 = ssub.s32 24576, 24576
      %36 = vsyncadd [#allocation9], %s35
      %s37 = sshll.u32 [#allocation8], 4
      %s38 = int_to_ptr.vmem [resolvable:$true] %s37
      %43 = dma.hbm_to_vmem [thread:$0]  %s2, 24576, %s38, [#allocation9], 512, 512, 32
    $region13: #{_lambda_.1} parent=1 // pred_fallthru
      _
    // Predicated region
    $region14: #{_lambda_.1} parent=1 // pred_check
      _
    $region15: #{_lambda_.1} parent=1 // pred_check_branch
      %45 = sbr.rel (0) target = $region17
    $region16: #{_lambda_.1} parent=1 // pred_region
      _
    $region17: #{_lambda_.1} parent=1 // pred_fallthru
      _
    // Predicated region
    $region18: #{_lambda_.1} parent=1 // pred_check
      _
    $region19: #{_lambda_.1} parent=1 // pred_check_branch
      %47 = sbr.rel (0) target = $region21
    $region20: #{_lambda_.1} parent=1 // pred_region
      _
    $region21: #{_lambda_.1} parent=1 // pred_fallthru
      _
    // Predicated region
    $region22: #{_lambda_.1} parent=1 // pred_check
      _
    $region23: #{_lambda_.1} parent=1 // pred_check_branch
      %49 = sbr.rel (0) target = $region25
    $region24: #{_lambda_.1} parent=1 // pred_region
      _
    $region25: #{_lambda_.1} parent=1 // pred_fallthru
      _
    // Predicated region
    $region26: #{_lambda_.1} parent=1 // pred_check
      _
    $region27: #{_lambda_.1} parent=1 // pred_check_branch
      %51 = sbr.rel (0) target = $region29
    $region28: #{_lambda_.1} parent=1 // pred_region
      _
    $region29: #{_lambda_.1} parent=1 // pred_fallthru
      _
    // Predicated region
    $region30: #{_lambda_.1} parent=1 // pred_check
      _
    $region31: #{_lambda_.1} parent=1 // pred_check_branch
      %53 = sbr.rel (0) target = $region33
    $region32: #{_lambda_.1} parent=1 // pred_region
      _
    $region33: #{_lambda_.1} parent=1 // pred_fallthru
      _
    // Predicated region
    $region34: #{_lambda_.1} parent=1 // pred_check
      _
    $region35: #{_lambda_.1} parent=1 // pred_check_branch
      %55 = sbr.rel (0) target = $region37
    $region36: #{_lambda_.1} parent=1 // pred_region
      %56 = dma.done [#allocation7], 24576
    $region37: #{_lambda_.1} parent=1 // pred_fallthru
      _
    // Predicated region
    $region38: #{_lambda_.1} parent=1 // pred_check
      _
    $region39: #{_lambda_.1} parent=1 // pred_check_branch
      %58 = sbr.rel (0) target = $region41
    $region40: #{_lambda_.1} parent=1 // pred_region
      %59 = dma.done [#allocation9], 24576
    $region41: #{_lambda_.1} parent=1 // pred_fallthru
      _
    %v60 = vld [vmem:[%s0] sm:$0xff]
    %v61 = vld [vmem:[%s0 + $0x8] sm:$0xff]
    %v62 = vld [vmem:[%s0 + $0x10] sm:$0xff]
    %v63 = vld [vmem:[%s0 + $0x18] sm:$0xff]
    %v64 = vld [vmem:[%s0 + $0x20] sm:$0xff]
    %v65 = vld [vmem:[%s0 + $0x28] sm:$0xff]
    %v66 = vld [vmem:[%s0 + $0x30] sm:$0xff]
    %v67 = vld [vmem:[%s0 + $0x38] sm:$0xff]
    %v68 = vld [vmem:[#allocation6] sm:$0xff]
    %v69 = vld [vmem:[#allocation6 + $0x8] sm:$0xff]
    %v70 = vld [vmem:[#allocation6 + $0x10] sm:$0xff]
    %v71 = vld [vmem:[#allocation6 + $0x18] sm:$0xff]
    %v72 = vld [vmem:[#allocation6 + $0x20] sm:$0xff]
    %v73 = vld [vmem:[#allocation6 + $0x28] sm:$0xff]
    %v74 = vld [vmem:[#allocation6 + $0x30] sm:$0xff]
    %v75 = vld [vmem:[#allocation6 + $0x38] sm:$0xff]
    %v76 = vld [vmem:[#allocation6 + $0x40] sm:$0xff]
    %v77 = vld [vmem:[#allocation6 + $0x48] sm:$0xff]
    %v78 = vld [vmem:[#allocation6 + $0x50] sm:$0xff]
    %v79 = vld [vmem:[#allocation6 + $0x58] sm:$0xff]
    %v80 = vld [vmem:[#allocation6 + $0x60] sm:$0xff]
    %v81 = vld [vmem:[#allocation6 + $0x68] sm:$0xff]
    %v82 = vld [vmem:[#allocation6 + $0x70] sm:$0xff]
    %v83 = vld [vmem:[#allocation6 + $0x78] sm:$0xff]
    %v84 = vld [vmem:[#allocation6 + $0x80] sm:$0xff]
    %v85 = vld [vmem:[#allocation6 + $0x88] sm:$0xff]
    %v86 = vld [vmem:[#allocation6 + $0x90] sm:$0xff]
    %v87 = vld [vmem:[#allocation6 + $0x98] sm:$0xff]
    %v88 = vld [vmem:[#allocation6 + $0xa0] sm:$0xff]
    %v89 = vld [vmem:[#allocation6 + $0xa8] sm:$0xff]
    %v90 = vld [vmem:[#allocation6 + $0xb0] sm:$0xff]
    %v91 = vld [vmem:[#allocation6 + $0xb8] sm:$0xff]
    %v92 = vld [vmem:[#allocation6 + $0xc0] sm:$0xff]
    %v93 = vld [vmem:[#allocation6 + $0xc8] sm:$0xff]
    %v94 = vld [vmem:[#allocation6 + $0xd0] sm:$0xff]
    %v95 = vld [vmem:[#allocation6 + $0xd8] sm:$0xff]
    %v96 = vld [vmem:[#allocation6 + $0xe0] sm:$0xff]
    %v97 = vld [vmem:[#allocation6 + $0xe8] sm:$0xff]
    %v98 = vld [vmem:[#allocation6 + $0xf0] sm:$0xff]
    %v99 = vld [vmem:[#allocation6 + $0xf8] sm:$0xff]
    %v100 = vld [vmem:[#allocation6 + $0x100] sm:$0xff]
    %v101 = vld [vmem:[#allocation6 + $0x108] sm:$0xff]
    %v102 = vld [vmem:[#allocation6 + $0x110] sm:$0xff]
    %v103 = vld [vmem:[#allocation6 + $0x118] sm:$0xff]
    %v104 = vld [vmem:[#allocation6 + $0x120] sm:$0xff]
    %v105 = vld [vmem:[#allocation6 + $0x128] sm:$0xff]
    %v106 = vld [vmem:[#allocation6 + $0x130] sm:$0xff]
    %v107 = vld [vmem:[#allocation6 + $0x138] sm:$0xff]
    %v108 = vld [vmem:[#allocation6 + $0x140] sm:$0xff]
    %v109 = vld [vmem:[#allocation6 + $0x148] sm:$0xff]
    %v110 = vld [vmem:[#allocation6 + $0x150] sm:$0xff]
    %v111 = vld [vmem:[#allocation6 + $0x158] sm:$0xff]
    %v112 = vld [vmem:[#allocation6 + $0x160] sm:$0xff]
    %v113 = vld [vmem:[#allocation6 + $0x168] sm:$0xff]
    %v114 = vld [vmem:[#allocation6 + $0x170] sm:$0xff]
    %v115 = vld [vmem:[#allocation6 + $0x178] sm:$0xff]
    %v116 = vld [vmem:[#allocation6 + $0x180] sm:$0xff]
    %v117 = vld [vmem:[#allocation6 + $0x188] sm:$0xff]
    %v118 = vld [vmem:[#allocation6 + $0x190] sm:$0xff]
    %v119 = vld [vmem:[#allocation6 + $0x198] sm:$0xff]
    %v120 = vld [vmem:[#allocation6 + $0x1a0] sm:$0xff]
    %v121 = vld [vmem:[#allocation6 + $0x1a8] sm:$0xff]
    %v122 = vld [vmem:[#allocation6 + $0x1b0] sm:$0xff]
    %v123 = vld [vmem:[#allocation6 + $0x1b8] sm:$0xff]
    %v124 = vld [vmem:[#allocation6 + $0x1c0] sm:$0xff]
    %v125 = vld [vmem:[#allocation6 + $0x1c8] sm:$0xff]
    %v126 = vld [vmem:[#allocation6 + $0x1d0] sm:$0xff]
    %v127 = vld [vmem:[#allocation6 + $0x1d8] sm:$0xff]
    %v128 = vld [vmem:[#allocation6 + $0x1e0] sm:$0xff]
    %v129 = vld [vmem:[#allocation6 + $0x1e8] sm:$0xff]
    %v130 = vld [vmem:[#allocation6 + $0x1f0] sm:$0xff]
    %v131 = vld [vmem:[#allocation6 + $0x1f8] sm:$0xff]
    %v132 = vld [vmem:[%s3] sm:$0xf]
    %v134 = vlaneseq
    %v135 = vshrl.u32 %v134, 7
    %v136 = vsub.s32 0, %v135
    %v137 = vrot.slane %v132, %v136
    %v138 = vlaneseq
    %v139 = vshrl.u32 %v138, 7
    %v140 = vsub.s32 1, %v139
    %v141 = vrot.slane %v132, %v140
    %v142 = vlaneseq
    %v143 = vshrl.u32 %v142, 7
    %v144 = vsub.s32 2, %v143
    %v145 = vrot.slane %v132, %v144
    %v146 = vlaneseq
    %v147 = vshrl.u32 %v146, 7
    %v148 = vsub.s32 3, %v147
    %v149 = vrot.slane %v132, %v148
    %154 = vmatprep.subr.mxu0 %v69
    %155 = vmatpush1.msra.mxu0 %v68
    %156 = vmatprep.subr.mxu0 %v73
    %157 = vmatpush1.msra.mxu0 %v72
    %158 = vmatprep.subr.mxu0 %v77
    %159 = vmatpush1.msra.mxu0 %v76
    %160 = vmatprep.subr.mxu0 %v81
    %161 = vmatpush1.msra.mxu0 %v80
    %162 = vmatprep.subr.mxu0 %v85
    %163 = vmatpush1.msra.mxu0 %v84
    %164 = vmatprep.subr.mxu0 %v89
    %165 = vmatpush1.msra.mxu0 %v88
    %166 = vmatprep.subr.mxu0 %v93
    %167 = vmatpush1.msra.mxu0 %v92
    %168 = vmatprep.subr.mxu0 %v97
    %169 = vmatpush1.msra.mxu0 %v96
    %170 = vmatprep.subr.mxu0 %v101
    %171 = vmatpush1.msra.mxu0 %v100
    %172 = vmatprep.subr.mxu0 %v105
    %173 = vmatpush1.msra.mxu0 %v104
    %174 = vmatprep.subr.mxu0 %v109
    %175 = vmatpush1.msra.mxu0 %v108
    %176 = vmatprep.subr.mxu0 %v113
    %177 = vmatpush1.msra.mxu0 %v112
    %178 = vmatprep.subr.mxu0 %v117
    %179 = vmatpush1.msra.mxu0 %v116
    %180 = vmatprep.subr.mxu0 %v121
    %181 = vmatpush1.msra.mxu0 %v120
    %182 = vmatprep.subr.mxu0 %v125
    %183 = vmatpush1.msra.mxu0 %v124
    %184 = vmatprep.subr.mxu0 %v129
    %185 = vmatpush1.msra.mxu0 %v128
    %186 = vmatprep.subr.mxu0 0.0
    %187 = vmatpush1.msra.mxu0 0.0
    %188 = vmatprep.subr.mxu0 0.0
    %189 = vmatpush1.msra.mxu0 0.0
    %190 = vmatprep.subr.mxu0 0.0
    %191 = vmatpush1.msra.mxu0 0.0
    %192 = vmatprep.subr.mxu0 0.0
    %193 = vmatpush1.msra.mxu0 0.0
    %194 = vmatprep.subr.mxu0 0.0
    %195 = vmatpush1.msra.mxu0 0.0
    %196 = vmatprep.subr.mxu0 0.0
    %197 = vmatpush1.msra.mxu0 0.0
    %198 = vmatprep.subr.mxu0 0.0
    %199 = vmatpush1.msra.mxu0 0.0
    %200 = vmatprep.subr.mxu0 0.0
    %201 = vmatpush1.msra.mxu0 0.0
    %202 = vmatprep.subr.mxu0 0.0
    %203 = vmatpush1.msra.mxu0 0.0
    %204 = vmatprep.subr.mxu0 0.0
    %205 = vmatpush1.msra.mxu0 0.0
    %206 = vmatprep.subr.mxu0 0.0
    %207 = vmatpush1.msra.mxu0 0.0
    %208 = vmatprep.subr.mxu0 0.0
    %209 = vmatpush1.msra.mxu0 0.0
    %210 = vmatprep.subr.mxu0 0.0
    %211 = vmatpush1.msra.mxu0 0.0
    %212 = vmatprep.subr.mxu0 0.0
    %213 = vmatpush1.msra.mxu0 0.0
    %214 = vmatprep.subr.mxu0 0.0
    %215 = vmatpush1.msra.mxu0 0.0
    %216 = vmatprep.subr.mxu0 0.0
    %217 = vmatpush1.msra.mxu0 0.0
    %218 = vmatprep.mubr.f32.mxu0 0.0
    %219 = vmatmul.mubr.f32.gmra.mrb[0].mxu0 %v60
    %v220 = vpop.f32.mrb[0].mxu0
    %v221 = vadd.f32 %v137, %v220
    %v222 = vpop.f32.mrb[0].mxu0
    %v223 = vadd.f32 %v141, %v222
    %224 = vmatprep.mubr.f32.mxu0 0.0
    %225 = vmatmul.mubr.f32.gmra.mrb[0].mxu0 %v61
    %v226 = vpop.f32.mrb[0].mxu0
    %v227 = vadd.f32 %v137, %v226
    %v228 = vpop.f32.mrb[0].mxu0
    %v229 = vadd.f32 %v141, %v228
    %230 = vmatprep.mubr.f32.mxu0 0.0
    %231 = vmatmul.mubr.f32.gmra.mrb[0].mxu0 %v62
    %v232 = vpop.f32.mrb[0].mxu0
    %v233 = vadd.f32 %v137, %v232
    %v234 = vpop.f32.mrb[0].mxu0
    %v235 = vadd.f32 %v141, %v234
    %236 = vmatprep.mubr.f32.mxu0 0.0
    %237 = vmatmul.mubr.f32.gmra.mrb[0].mxu0 %v63
    %v238 = vpop.f32.mrb[0].mxu0
    %v239 = vadd.f32 %v137, %v238
    %v240 = vpop.f32.mrb[0].mxu0
    %v241 = vadd.f32 %v141, %v240
    %242 = vmatprep.mubr.f32.mxu0 0.0
    %243 = vmatmul.mubr.f32.gmra.mrb[0].mxu0 %v64
    %v244 = vpop.f32.mrb[0].mxu0
    %v245 = vadd.f32 %v137, %v244
    %v246 = vpop.f32.mrb[0].mxu0
    %v247 = vadd.f32 %v141, %v246
    %248 = vmatprep.mubr.f32.mxu0 0.0
    %249 = vmatmul.mubr.f32.gmra.mrb[0].mxu0 %v65
    %v250 = vpop.f32.mrb[0].mxu0
    %v251 = vadd.f32 %v137, %v250
    %v252 = vpop.f32.mrb[0].mxu0
    %v253 = vadd.f32 %v141, %v252
    %254 = vmatprep.mubr.f32.mxu0 0.0
    %255 = vmatmul.mubr.f32.gmra.mrb[0].mxu0 %v66
    %v256 = vpop.f32.mrb[0].mxu0
    %v257 = vadd.f32 %v137, %v256
    %v258 = vpop.f32.mrb[0].mxu0
    %v259 = vadd.f32 %v141, %v258
    %260 = vmatprep.mubr.f32.mxu0 0.0
    %261 = vmatmul.mubr.f32.gmra.mrb[0].mxu0 %v67
    %v262 = vpop.f32.mrb[0].mxu0
    %v263 = vadd.f32 %v137, %v262
    %v264 = vpop.f32.mrb[0].mxu0
    %v265 = vadd.f32 %v141, %v264
    %266 = vdwg.mxu0
    %267 = vmatprep.subr.mxu0 %v71
    %268 = vmatpush1.msra.mxu0 %v70
    %269 = vmatprep.subr.mxu0 %v75
    %270 = vmatpush1.msra.mxu0 %v74
    %271 = vmatprep.subr.mxu0 %v79
    %272 = vmatpush1.msra.mxu0 %v78
    %273 = vmatprep.subr.mxu0 %v83
    %274 = vmatpush1.msra.mxu0 %v82
    %275 = vmatprep.subr.mxu0 %v87
    %276 = vmatpush1.msra.mxu0 %v86
    %277 = vmatprep.subr.mxu0 %v91
    %278 = vmatpush1.msra.mxu0 %v90
    %279 = vmatprep.subr.mxu0 %v95
    %280 = vmatpush1.msra.mxu0 %v94
    %281 = vmatprep.subr.mxu0 %v99
    %282 = vmatpush1.msra.mxu0 %v98
    %283 = vmatprep.subr.mxu0 %v103
    %284 = vmatpush1.msra.mxu0 %v102
    %285 = vmatprep.subr.mxu0 %v107
    %286 = vmatpush1.msra.mxu0 %v106
    %287 = vmatprep.subr.mxu0 %v111
    %288 = vmatpush1.msra.mxu0 %v110
    %289 = vmatprep.subr.mxu0 %v115
    %290 = vmatpush1.msra.mxu0 %v114
    %291 = vmatprep.subr.mxu0 %v119
    %292 = vmatpush1.msra.mxu0 %v118
    %293 = vmatprep.subr.mxu0 %v123
    %294 = vmatpush1.msra.mxu0 %v122
    %295 = vmatprep.subr.mxu0 %v127
    %296 = vmatpush1.msra.mxu0 %v126
    %297 = vmatprep.subr.mxu0 %v131
    %298 = vmatpush1.msra.mxu0 %v130
    %299 = vmatprep.subr.mxu0 0.0
    %300 = vmatpush1.msra.mxu0 0.0
    %301 = vmatprep.subr.mxu0 0.0
    %302 = vmatpush1.msra.mxu0 0.0
    %303 = vmatprep.subr.mxu0 0.0
    %304 = vmatpush1.msra.mxu0 0.0
    %305 = vmatprep.subr.mxu0 0.0
    %306 = vmatpush1.msra.mxu0 0.0
    %307 = vmatprep.subr.mxu0 0.0
    %308 = vmatpush1.msra.mxu0 0.0
    %309 = vmatprep.subr.mxu0 0.0
    %310 = vmatpush1.msra.mxu0 0.0
    %311 = vmatprep.subr.mxu0 0.0
    %312 = vmatpush1.msra.mxu0 0.0
    %313 = vmatprep.subr.mxu0 0.0
    %314 = vmatpush1.msra.mxu0 0.0
    %315 = vmatprep.subr.mxu0 0.0
    %316 = vmatpush1.msra.mxu0 0.0
    %317 = vmatprep.subr.mxu0 0.0
    %318 = vmatpush1.msra.mxu0 0.0
    %319 = vmatprep.subr.mxu0 0.0
    %320 = vmatpush1.msra.mxu0 0.0
    %321 = vmatprep.subr.mxu0 0.0
    %322 = vmatpush1.msra.mxu0 0.0
    %323 = vmatprep.subr.mxu0 0.0
    %324 = vmatpush1.msra.mxu0 0.0
    %325 = vmatprep.subr.mxu0 0.0
    %326 = vmatpush1.msra.mxu0 0.0
    %327 = vmatprep.subr.mxu0 0.0
    %328 = vmatpush1.msra.mxu0 0.0
    %329 = vmatprep.subr.mxu0 0.0
    %330 = vmatpush1.msra.mxu0 0.0
    %331 = vmatprep.mubr.f32.mxu0 0.0
    %332 = vmatmul.mubr.f32.gmra.mrb[0].mxu0 %v60
    %v333 = vpop.f32.mrb[0].mxu0
    %v334 = vadd.f32 %v145, %v333
    %v335 = vpop.f32.mrb[0].mxu0
    %v336 = vadd.f32 %v149, %v335
    %337 = vmatprep.mubr.f32.mxu0 0.0
    %338 = vmatmul.mubr.f32.gmra.mrb[0].mxu0 %v61
    %v339 = vpop.f32.mrb[0].mxu0
    %v340 = vadd.f32 %v145, %v339
    %v341 = vpop.f32.mrb[0].mxu0
    %v342 = vadd.f32 %v149, %v341
    %343 = vmatprep.mubr.f32.mxu0 0.0
    %344 = vmatmul.mubr.f32.gmra.mrb[0].mxu0 %v62
    %v345 = vpop.f32.mrb[0].mxu0
    %v346 = vadd.f32 %v145, %v345
    %v347 = vpop.f32.mrb[0].mxu0
    %v348 = vadd.f32 %v149, %v347
    %349 = vmatprep.mubr.f32.mxu0 0.0
    %350 = vmatmul.mubr.f32.gmra.mrb[0].mxu0 %v63
    %v351 = vpop.f32.mrb[0].mxu0
    %v352 = vadd.f32 %v145, %v351
    %v353 = vpop.f32.mrb[0].mxu0
    %v354 = vadd.f32 %v149, %v353
    %355 = vmatprep.mubr.f32.mxu0 0.0
    %356 = vmatmul.mubr.f32.gmra.mrb[0].mxu0 %v64
    %v357 = vpop.f32.mrb[0].mxu0
    %v358 = vadd.f32 %v145, %v357
    %v359 = vpop.f32.mrb[0].mxu0
    %v360 = vadd.f32 %v149, %v359
    %361 = vmatprep.mubr.f32.mxu0 0.0
    %362 = vmatmul.mubr.f32.gmra.mrb[0].mxu0 %v65
    %v363 = vpop.f32.mrb[0].mxu0
    %v364 = vadd.f32 %v145, %v363
    %v365 = vpop.f32.mrb[0].mxu0
    %v366 = vadd.f32 %v149, %v365
    %367 = vmatprep.mubr.f32.mxu0 0.0
    %368 = vmatmul.mubr.f32.gmra.mrb[0].mxu0 %v66
    %v369 = vpop.f32.mrb[0].mxu0
    %v370 = vadd.f32 %v145, %v369
    %v371 = vpop.f32.mrb[0].mxu0
    %v372 = vadd.f32 %v149, %v371
    %373 = vmatprep.mubr.f32.mxu0 0.0
    %374 = vmatmul.mubr.f32.gmra.mrb[0].mxu0 %v67
    %v375 = vpop.f32.mrb[0].mxu0
    %v376 = vadd.f32 %v145, %v375
    %v377 = vpop.f32.mrb[0].mxu0
    %v378 = vadd.f32 %v149, %v377
    %379 = vdwg.mxu0
    %380 = vst [vmem:[#allocation3] sm:$0xff] %v221
    %381 = vst [vmem:[#allocation3 + $0x8] sm:$0xff] %v223
    %382 = vst [vmem:[#allocation3 + $0x10] sm:$0xff] %v334
    %383 = vst [vmem:[#allocation3 + $0x18] sm:$0xff] %v336
    %384 = vst [vmem:[#allocation3 + $0x20] sm:$0xff] %v227
    %385 = vst [vmem:[#allocation3 + $0x28] sm:$0xff] %v229
    %386 = vst [vmem:[#allocation3 + $0x30] sm:$0xff] %v340
    %387 = vst [vmem:[#allocation3 + $0x38] sm:$0xff] %v342
    %388 = vst [vmem:[#allocation3 + $0x40] sm:$0xff] %v233
    %389 = vst [vmem:[#allocation3 + $0x48] sm:$0xff] %v235
    %390 = vst [vmem:[#allocation3 + $0x50] sm:$0xff] %v346
    %391 = vst [vmem:[#allocation3 + $0x58] sm:$0xff] %v348
    %392 = vst [vmem:[#allocation3 + $0x60] sm:$0xff] %v239
    %393 = vst [vmem:[#allocation3 + $0x68] sm:$0xff] %v241
    %394 = vst [vmem:[#allocation3 + $0x70] sm:$0xff] %v352
    %395 = vst [vmem:[#allocation3 + $0x78] sm:$0xff] %v354
    %396 = vst [vmem:[#allocation3 + $0x80] sm:$0xff] %v245
    %397 = vst [vmem:[#allocation3 + $0x88] sm:$0xff] %v247
    %398 = vst [vmem:[#allocation3 + $0x90] sm:$0xff] %v358
    %399 = vst [vmem:[#allocation3 + $0x98] sm:$0xff] %v360
    %400 = vst [vmem:[#allocation3 + $0xa0] sm:$0xff] %v251
    %401 = vst [vmem:[#allocation3 + $0xa8] sm:$0xff] %v253
    %402 = vst [vmem:[#allocation3 + $0xb0] sm:$0xff] %v364
    %403 = vst [vmem:[#allocation3 + $0xb8] sm:$0xff] %v366
    %404 = vst [vmem:[#allocation3 + $0xc0] sm:$0xff] %v257
    %405 = vst [vmem:[#allocation3 + $0xc8] sm:$0xff] %v259
    %406 = vst [vmem:[#allocation3 + $0xd0] sm:$0xff] %v370
    %407 = vst [vmem:[#allocation3 + $0xd8] sm:$0xff] %v372
    %408 = vst [vmem:[#allocation3 + $0xe0] sm:$0xff] %v263
    %409 = vst [vmem:[#allocation3 + $0xe8] sm:$0xff] %v265
    %410 = vst [vmem:[#allocation3 + $0xf0] sm:$0xff] %v376
    %411 = vst [vmem:[#allocation3 + $0xf8] sm:$0xff] %v378
    %v412 = vld [vmem:[%s4] sm:$0xff]
    %413 = vst [vmem:[#allocation4] sm:$0xff] %v412
    %v414 = vld [vmem:[%s5] sm:$0xff]
    %415 = vst [vmem:[#allocation5] sm:$0xff] %v414
    %v416 = vld [vmem:[#allocation4] sm:$0xff]
    %v417 = vld [vmem:[#allocation5] sm:$0xff]
    %s418 = smul.u32 0, 4
    %s419 = smul.addr %s418, 8
    %s420 = scalar_lea.vmem [#allocation3], %s419
    %v421 = vld [vmem:[%s420] sm:$0xff]
    %v422 = vld [vmem:[%s420 + $0x8] sm:$0xff]
    %v423 = vld [vmem:[%s420 + $0x10] sm:$0xff]
    %v424 = vld [vmem:[%s420 + $0x18] sm:$0xff]
    %v425 = vld [vmem:[#allocation8] sm:$0xff]
    %v426 = vld [vmem:[#allocation8 + $0x8] sm:$0xff]
    %v427 = vld [vmem:[#allocation8 + $0x10] sm:$0xff]
    %v428 = vld [vmem:[#allocation8 + $0x18] sm:$0xff]
    %v429 = vld [vmem:[#allocation8 + $0x20] sm:$0xff]
    %v430 = vld [vmem:[#allocation8 + $0x28] sm:$0xff]
    %v431 = vld [vmem:[#allocation8 + $0x30] sm:$0xff]
    %v432 = vld [vmem:[#allocation8 + $0x38] sm:$0xff]
    %v433 = vld [vmem:[#allocation8 + $0x40] sm:$0xff]
    %v434 = vld [vmem:[#allocation8 + $0x48] sm:$0xff]
    %v435 = vld [vmem:[#allocation8 + $0x50] sm:$0xff]
    %v436 = vld [vmem:[#allocation8 + $0x58] sm:$0xff]
    %v437 = vld [vmem:[#allocation8 + $0x60] sm:$0xff]
    %v438 = vld [vmem:[#allocation8 + $0x68] sm:$0xff]
    %v439 = vld [vmem:[#allocation8 + $0x70] sm:$0xff]
    %v440 = vld [vmem:[#allocation8 + $0x78] sm:$0xff]
    %v441 = vld [vmem:[#allocation8 + $0x80] sm:$0xff]
    %v442 = vld [vmem:[#allocation8 + $0x88] sm:$0xff]
    %v443 = vld [vmem:[#allocation8 + $0x90] sm:$0xff]
    %v444 = vld [vmem:[#allocation8 + $0x98] sm:$0xff]
    %v445 = vld [vmem:[#allocation8 + $0xa0] sm:$0xff]
    %v446 = vld [vmem:[#allocation8 + $0xa8] sm:$0xff]
    %v447 = vld [vmem:[#allocation8 + $0xb0] sm:$0xff]
    %v448 = vld [vmem:[#allocation8 + $0xb8] sm:$0xff]
    %v449 = vld [vmem:[#allocation8 + $0xc0] sm:$0xff]
    %v450 = vld [vmem:[#allocation8 + $0xc8] sm:$0xff]
    %v451 = vld [vmem:[#allocation8 + $0xd0] sm:$0xff]
    %v452 = vld [vmem:[#allocation8 + $0xd8] sm:$0xff]
    %v453 = vld [vmem:[#allocation8 + $0xe0] sm:$0xff]
    %v454 = vld [vmem:[#allocation8 + $0xe8] sm:$0xff]
    %v455 = vld [vmem:[#allocation8 + $0xf0] sm:$0xff]
    %v456 = vld [vmem:[#allocation8 + $0xf8] sm:$0xff]
    %v457 = vld [vmem:[#allocation8 + $0x100] sm:$0xff]
    %v458 = vld [vmem:[#allocation8 + $0x108] sm:$0xff]
    %v459 = vld [vmem:[#allocation8 + $0x110] sm:$0xff]
    %v460 = vld [vmem:[#allocation8 + $0x118] sm:$0xff]
    %v461 = vld [vmem:[#allocation8 + $0x120] sm:$0xff]
    %v462 = vld [vmem:[#allocation8 + $0x128] sm:$0xff]
    %v463 = vld [vmem:[#allocation8 + $0x130] sm:$0xff]
    %v464 = vld [vmem:[#allocation8 + $0x138] sm:$0xff]
    %v465 = vld [vmem:[#allocation8 + $0x140] sm:$0xff]
    %v466 = vld [vmem:[#allocation8 + $0x148] sm:$0xff]
    %v467 = vld [vmem:[#allocation8 + $0x150] sm:$0xff]
    %v468 = vld [vmem:[#allocation8 + $0x158] sm:$0xff]
    %v469 = vld [vmem:[#allocation8 + $0x160] sm:$0xff]
    %v470 = vld [vmem:[#allocation8 + $0x168] sm:$0xff]
    %v471 = vld [vmem:[#allocation8 + $0x170] sm:$0xff]
    %v472 = vld [vmem:[#allocation8 + $0x178] sm:$0xff]
    %v473 = vld [vmem:[#allocation8 + $0x180] sm:$0xff]
    %v474 = vld [vmem:[#allocation8 + $0x188] sm:$0xff]
    %v475 = vld [vmem:[#allocation8 + $0x190] sm:$0xff]
    %v476 = vld [vmem:[#allocation8 + $0x198] sm:$0xff]
    %v477 = vld [vmem:[#allocation8 + $0x1a0] sm:$0xff]
    %v478 = vld [vmem:[#allocation8 + $0x1a8] sm:$0xff]
    %v479 = vld [vmem:[#allocation8 + $0x1b0] sm:$0xff]
    %v480 = vld [vmem:[#allocation8 + $0x1b8] sm:$0xff]
    %v481 = vld [vmem:[#allocation8 + $0x1c0] sm:$0xff]
    %v482 = vld [vmem:[#allocation8 + $0x1c8] sm:$0xff]
    %v483 = vld [vmem:[#allocation8 + $0x1d0] sm:$0xff]
    %v484 = vld [vmem:[#allocation8 + $0x1d8] sm:$0xff]
    %v485 = vld [vmem:[#allocation8 + $0x1e0] sm:$0xff]
    %v486 = vld [vmem:[#allocation8 + $0x1e8] sm:$0xff]
    %v487 = vld [vmem:[#allocation8 + $0x1f0] sm:$0xff]
    %v488 = vld [vmem:[#allocation8 + $0x1f8] sm:$0xff]
    %489 = vmatprep.subr.mxu0 %v426
    %490 = vmatpush1.msra.mxu0 %v425
    %491 = vmatprep.subr.mxu0 %v430
    %492 = vmatpush1.msra.mxu0 %v429
    %493 = vmatprep.subr.mxu0 %v434
    %494 = vmatpush1.msra.mxu0 %v433
    %495 = vmatprep.subr.mxu0 %v438
    %496 = vmatpush1.msra.mxu0 %v437
    %497 = vmatprep.subr.mxu0 %v442
    %498 = vmatpush1.msra.mxu0 %v441
    %499 = vmatprep.subr.mxu0 %v446
    %500 = vmatpush1.msra.mxu0 %v445
    %501 = vmatprep.subr.mxu0 %v450
    %502 = vmatpush1.msra.mxu0 %v449
    %503 = vmatprep.subr.mxu0 %v454
    %504 = vmatpush1.msra.mxu0 %v453
    %505 = vmatprep.subr.mxu0 %v458
    %506 = vmatpush1.msra.mxu0 %v457
    %507 = vmatprep.subr.mxu0 %v462
    %508 = vmatpush1.msra.mxu0 %v461
    %509 = vmatprep.subr.mxu0 %v466
    %510 = vmatpush1.msra.mxu0 %v465
    %511 = vmatprep.subr.mxu0 %v470
    %512 = vmatpush1.msra.mxu0 %v469
    %513 = vmatprep.subr.mxu0 %v474
    %514 = vmatpush1.msra.mxu0 %v473
    %515 = vmatprep.subr.mxu0 %v478
    %516 = vmatpush1.msra.mxu0 %v477
    %517 = vmatprep.subr.mxu0 %v482
    %518 = vmatpush1.msra.mxu0 %v481
    %519 = vmatprep.subr.mxu0 %v486
    %520 = vmatpush1.msra.mxu0 %v485
    %521 = vmatprep.subr.mxu0 0.0
    %522 = vmatpush1.msra.mxu0 0.0
    %523 = vmatprep.subr.mxu0 0.0
    %524 = vmatpush1.msra.mxu0 0.0
    %525 = vmatprep.subr.mxu0 0.0
    %526 = vmatpush1.msra.mxu0 0.0
    %527 = vmatprep.subr.mxu0 0.0
    %528 = vmatpush1.msra.mxu0 0.0
    %529 = vmatprep.subr.mxu0 0.0
    %530 = vmatpush1.msra.mxu0 0.0
    %531 = vmatprep.subr.mxu0 0.0
    %532 = vmatpush1.msra.mxu0 0.0
    %533 = vmatprep.subr.mxu0 0.0
    %534 = vmatpush1.msra.mxu0 0.0
    %535 = vmatprep.subr.mxu0 0.0
    %536 = vmatpush1.msra.mxu0 0.0
    %537 = vmatprep.subr.mxu0 0.0
    %538 = vmatpush1.msra.mxu0 0.0
    %539 = vmatprep.subr.mxu0 0.0
    %540 = vmatpush1.msra.mxu0 0.0
    %541 = vmatprep.subr.mxu0 0.0
    %542 = vmatpush1.msra.mxu0 0.0
    %543 = vmatprep.subr.mxu0 0.0
    %544 = vmatpush1.msra.mxu0 0.0
    %545 = vmatprep.subr.mxu0 0.0
    %546 = vmatpush1.msra.mxu0 0.0
    %547 = vmatprep.subr.mxu0 0.0
    %548 = vmatpush1.msra.mxu0 0.0
    %549 = vmatprep.subr.mxu0 0.0
    %550 = vmatpush1.msra.mxu0 0.0
    %551 = vmatprep.subr.mxu0 0.0
    %552 = vmatpush1.msra.mxu0 0.0
    %553 = vmatprep.mubr.f32.mxu0 0.0
    %554 = vmatmul.mubr.f32.gmra.mrb[0].mxu0 %v416
    %v555 = vpop.f32.mrb[0].mxu0
    %v556 = vadd.f32 0.0, %v555
    %v557 = vpop.f32.mrb[0].mxu0
    %v558 = vadd.f32 0.0, %v557
    %559 = vdwg.mxu0
    %560 = vmatprep.subr.mxu0 %v428
    %561 = vmatpush1.msra.mxu0 %v427
    %562 = vmatprep.subr.mxu0 %v432
    %563 = vmatpush1.msra.mxu0 %v431
    %564 = vmatprep.subr.mxu0 %v436
    %565 = vmatpush1.msra.mxu0 %v435
    %566 = vmatprep.subr.mxu0 %v440
    %567 = vmatpush1.msra.mxu0 %v439
    %568 = vmatprep.subr.mxu0 %v444
    %569 = vmatpush1.msra.mxu0 %v443
    %570 = vmatprep.subr.mxu0 %v448
    %571 = vmatpush1.msra.mxu0 %v447
    %572 = vmatprep.subr.mxu0 %v452
    %573 = vmatpush1.msra.mxu0 %v451
    %574 = vmatprep.subr.mxu0 %v456
    %575 = vmatpush1.msra.mxu0 %v455
    %576 = vmatprep.subr.mxu0 %v460
    %577 = vmatpush1.msra.mxu0 %v459
    %578 = vmatprep.subr.mxu0 %v464
    %579 = vmatpush1.msra.mxu0 %v463
    %580 = vmatprep.subr.mxu0 %v468
    %581 = vmatpush1.msra.mxu0 %v467
    %582 = vmatprep.subr.mxu0 %v472
    %583 = vmatpush1.msra.mxu0 %v471
    %584 = vmatprep.subr.mxu0 %v476
    %585 = vmatpush1.msra.mxu0 %v475
    %586 = vmatprep.subr.mxu0 %v480
    %587 = vmatpush1.msra.mxu0 %v479
    %588 = vmatprep.subr.mxu0 %v484
    %589 = vmatpush1.msra.mxu0 %v483
    %590 = vmatprep.subr.mxu0 %v488
    %591 = vmatpush1.msra.mxu0 %v487
    %592 = vmatprep.subr.mxu0 0.0
    %593 = vmatpush1.msra.mxu0 0.0
    %594 = vmatprep.subr.mxu0 0.0
    %595 = vmatpush1.msra.mxu0 0.0
    %596 = vmatprep.subr.mxu0 0.0
    %597 = vmatpush1.msra.mxu0 0.0
    %598 = vmatprep.subr.mxu0 0.0
    %599 = vmatpush1.msra.mxu0 0.0
    %600 = vmatprep.subr.mxu0 0.0
    %601 = vmatpush1.msra.mxu0 0.0
    %602 = vmatprep.subr.mxu0 0.0
    %603 = vmatpush1.msra.mxu0 0.0
    %604 = vmatprep.subr.mxu0 0.0
    %605 = vmatpush1.msra.mxu0 0.0
    %606 = vmatprep.subr.mxu0 0.0
    %607 = vmatpush1.msra.mxu0 0.0
    %608 = vmatprep.subr.mxu0 0.0
    %609 = vmatpush1.msra.mxu0 0.0
    %610 = vmatprep.subr.mxu0 0.0
    %611 = vmatpush1.msra.mxu0 0.0
    %612 = vmatprep.subr.mxu0 0.0
    %613 = vmatpush1.msra.mxu0 0.0
    %614 = vmatprep.subr.mxu0 0.0
    %615 = vmatpush1.msra.mxu0 0.0
    %616 = vmatprep.subr.mxu0 0.0
    %617 = vmatpush1.msra.mxu0 0.0
    %618 = vmatprep.subr.mxu0 0.0
    %619 = vmatpush1.msra.mxu0 0.0
    %620 = vmatprep.subr.mxu0 0.0
    %621 = vmatpush1.msra.mxu0 0.0
    %622 = vmatprep.subr.mxu0 0.0
    %623 = vmatpush1.msra.mxu0 0.0
    %624 = vmatprep.mubr.f32.mxu0 0.0
    %625 = vmatmul.mubr.f32.gmra.mrb[0].mxu0 %v416
    %v626 = vpop.f32.mrb[0].mxu0
    %v627 = vadd.f32 0.0, %v626
    %v628 = vpop.f32.mrb[0].mxu0
    %v629 = vadd.f32 0.0, %v628
    %630 = vdwg.mxu0
    %v631 = vadd.f32 %v421, %v556
    %v632 = vadd.f32 %v422, %v558
    %v633 = vadd.f32 %v423, %v627
    %v634 = vadd.f32 %v424, %v629
    %v635 = vxor.u32 %v631, 2147483648
    %v636 = vmul.f32 %v635, 1.442695
    %v637 = vpow.pop %v636
    %v638 = vadd.f32 %v637, 1.0
    %v639 = vrcp.pop %v638
    %v640 = vmul.f32 1.0, %v639
    %v641 = vxor.u32 %v632, 2147483648
    %v642 = vmul.f32 %v641, 1.442695
    %v643 = vpow.pop %v642
    %v644 = vadd.f32 %v643, 1.0
    %v645 = vrcp.pop %v644
    %v646 = vmul.f32 1.0, %v645
    %v647 = vtanh.pop %v633
    %v648 = vxor.u32 %v634, 2147483648
    %v649 = vmul.f32 %v648, 1.442695
    %v650 = vpow.pop %v649
    %v651 = vadd.f32 %v650, 1.0
    %v652 = vrcp.pop %v651
    %v653 = vmul.f32 1.0, %v652
    %v654 = vmul.f32 %v646, %v417
    %v655 = vmul.f32 %v640, %v647
    %v656 = vadd.f32 %v654, %v655
    %v657 = vtanh.pop %v656
    %v658 = vmul.f32 %v653, %v657
    %659 = vst [vmem:[#allocation4] sm:$0xff] %v658
    %660 = vst [vmem:[#allocation5] sm:$0xff] %v656
    %661 = vst [vmem:[#allocation2] sm:$0xff] %v658
    %v662 = vld [vmem:[#allocation4] sm:$0xff]
    %v663 = vld [vmem:[#allocation5] sm:$0xff]
    %s664 = smul.u32 1, 4
    %s665 = smul.addr %s664, 8
    %s666 = scalar_lea.vmem [#allocation3], %s665
    %v667 = vld [vmem:[%s666] sm:$0xff]
    %v668 = vld [vmem:[%s666 + $0x8] sm:$0xff]
    %v669 = vld [vmem:[%s666 + $0x10] sm:$0xff]
    %v670 = vld [vmem:[%s666 + $0x18] sm:$0xff]
    %v671 = vld [vmem:[#allocation8] sm:$0xff]
    %v672 = vld [vmem:[#allocation8 + $0x8] sm:$0xff]
    %v673 = vld [vmem:[#allocation8 + $0x10] sm:$0xff]
    %v674 = vld [vmem:[#allocation8 + $0x18] sm:$0xff]
    %v675 = vld [vmem:[#allocation8 + $0x20] sm:$0xff]
    %v676 = vld [vmem:[#allocation8 + $0x28] sm:$0xff]
    %v677 = vld [vmem:[#allocation8 + $0x30] sm:$0xff]
    %v678 = vld [vmem:[#allocation8 + $0x38] sm:$0xff]
    %v679 = vld [vmem:[#allocation8 + $0x40] sm:$0xff]
    %v680 = vld [vmem:[#allocation8 + $0x48] sm:$0xff]
    %v681 = vld [vmem:[#allocation8 + $0x50] sm:$0xff]
    %v682 = vld [vmem:[#allocation8 + $0x58] sm:$0xff]
    %v683 = vld [vmem:[#allocation8 + $0x60] sm:$0xff]
    %v684 = vld [vmem:[#allocation8 + $0x68] sm:$0xff]
    %v685 = vld [vmem:[#allocation8 + $0x70] sm:$0xff]
    %v686 = vld [vmem:[#allocation8 + $0x78] sm:$0xff]
    %v687 = vld [vmem:[#allocation8 + $0x80] sm:$0xff]
    %v688 = vld [vmem:[#allocation8 + $0x88] sm:$0xff]
    %v689 = vld [vmem:[#allocation8 + $0x90] sm:$0xff]
    %v690 = vld [vmem:[#allocation8 + $0x98] sm:$0xff]
    %v691 = vld [vmem:[#allocation8 + $0xa0] sm:$0xff]
    %v692 = vld [vmem:[#allocation8 + $0xa8] sm:$0xff]
    %v693 = vld [vmem:[#allocation8 + $0xb0] sm:$0xff]
    %v694 = vld [vmem:[#allocation8 + $0xb8] sm:$0xff]
    %v695 = vld [vmem:[#allocation8 + $0xc0] sm:$0xff]
    %v696 = vld [vmem:[#allocation8 + $0xc8] sm:$0xff]
    %v697 = vld [vmem:[#allocation8 + $0xd0] sm:$0xff]
    %v698 = vld [vmem:[#allocation8 + $0xd8] sm:$0xff]
    %v699 = vld [vmem:[#allocation8 + $0xe0] sm:$0xff]
    %v700 = vld [vmem:[#allocation8 + $0xe8] sm:$0xff]
    %v701 = vld [vmem:[#allocation8 + $0xf0] sm:$0xff]
    %v702 = vld [vmem:[#allocation8 + $0xf8] sm:$0xff]
    %v703 = vld [vmem:[#allocation8 + $0x100] sm:$0xff]
    %v704 = vld [vmem:[#allocation8 + $0x108] sm:$0xff]
    %v705 = vld [vmem:[#allocation8 + $0x110] sm:$0xff]
    %v706 = vld [vmem:[#allocation8 + $0x118] sm:$0xff]
    %v707 = vld [vmem:[#allocation8 + $0x120] sm:$0xff]
    %v708 = vld [vmem:[#allocation8 + $0x128] sm:$0xff]
    %v709 = vld [vmem:[#allocation8 + $0x130] sm:$0xff]
    %v710 = vld [vmem:[#allocation8 + $0x138] sm:$0xff]
    %v711 = vld [vmem:[#allocation8 + $0x140] sm:$0xff]
    %v712 = vld [vmem:[#allocation8 + $0x148] sm:$0xff]
    %v713 = vld [vmem:[#allocation8 + $0x150] sm:$0xff]
    %v714 = vld [vmem:[#allocation8 + $0x158] sm:$0xff]
    %v715 = vld [vmem:[#allocation8 + $0x160] sm:$0xff]
    %v716 = vld [vmem:[#allocation8 + $0x168] sm:$0xff]
    %v717 = vld [vmem:[#allocation8 + $0x170] sm:$0xff]
    %v718 = vld [vmem:[#allocation8 + $0x178] sm:$0xff]
    %v719 = vld [vmem:[#allocation8 + $0x180] sm:$0xff]
    %v720 = vld [vmem:[#allocation8 + $0x188] sm:$0xff]
    %v721 = vld [vmem:[#allocation8 + $0x190] sm:$0xff]
    %v722 = vld [vmem:[#allocation8 + $0x198] sm:$0xff]
    %v723 = vld [vmem:[#allocation8 + $0x1a0] sm:$0xff]
    %v724 = vld [vmem:[#allocation8 + $0x1a8] sm:$0xff]
    %v725 = vld [vmem:[#allocation8 + $0x1b0] sm:$0xff]
    %v726 = vld [vmem:[#allocation8 + $0x1b8] sm:$0xff]
    %v727 = vld [vmem:[#allocation8 + $0x1c0] sm:$0xff]
    %v728 = vld [vmem:[#allocation8 + $0x1c8] sm:$0xff]
    %v729 = vld [vmem:[#allocation8 + $0x1d0] sm:$0xff]
    %v730 = vld [vmem:[#allocation8 + $0x1d8] sm:$0xff]
    %v731 = vld [vmem:[#allocation8 + $0x1e0] sm:$0xff]
    %v732 = vld [vmem:[#allocation8 + $0x1e8] sm:$0xff]
    %v733 = vld [vmem:[#allocation8 + $0x1f0] sm:$0xff]
    %v734 = vld [vmem:[#allocation8 + $0x1f8] sm:$0xff]
    %735 = vmatprep.subr.mxu0 %v672
    %736 = vmatpush1.msra.mxu0 %v671
    %737 = vmatprep.subr.mxu0 %v676
    %738 = vmatpush1.msra.mxu0 %v675
    %739 = vmatprep.subr.mxu0 %v680
    %740 = vmatpush1.msra.mxu0 %v679
    %741 = vmatprep.subr.mxu0 %v684
    %742 = vmatpush1.msra.mxu0 %v683
    %743 = vmatprep.subr.mxu0 %v688
    %744 = vmatpush1.msra.mxu0 %v687
    %745 = vmatprep.subr.mxu0 %v692
    %746 = vmatpush1.msra.mxu0 %v691
    %747 = vmatprep.subr.mxu0 %v696
    %748 = vmatpush1.msra.mxu0 %v695
    %749 = vmatprep.subr.mxu0 %v700
    %750 = vmatpush1.msra.mxu0 %v699
    %751 = vmatprep.subr.mxu0 %v704
    %752 = vmatpush1.msra.mxu0 %v703
    %753 = vmatprep.subr.mxu0 %v708
    %754 = vmatpush1.msra.mxu0 %v707
    %755 = vmatprep.subr.mxu0 %v712
    %756 = vmatpush1.msra.mxu0 %v711
    %757 = vmatprep.subr.mxu0 %v716
    %758 = vmatpush1.msra.mxu0 %v715
    %759 = vmatprep.subr.mxu0 %v720
    %760 = vmatpush1.msra.mxu0 %v719
    %761 = vmatprep.subr.mxu0 %v724
    %762 = vmatpush1.msra.mxu0 %v723
    %763 = vmatprep.subr.mxu0 %v728
    %764 = vmatpush1.msra.mxu0 %v727
    %765 = vmatprep.subr.mxu0 %v732
    %766 = vmatpush1.msra.mxu0 %v731
    %767 = vmatprep.subr.mxu0 0.0
    %768 = vmatpush1.msra.mxu0 0.0
    %769 = vmatprep.subr.mxu0 0.0
    %770 = vmatpush1.msra.mxu0 0.0
    %771 = vmatprep.subr.mxu0 0.0
    %772 = vmatpush1.msra.mxu0 0.0
    %773 = vmatprep.subr.mxu0 0.0
    %774 = vmatpush1.msra.mxu0 0.0
    %775 = vmatprep.subr.mxu0 0.0
    %776 = vmatpush1.msra.mxu0 0.0
    %777 = vmatprep.subr.mxu0 0.0
    %778 = vmatpush1.msra.mxu0 0.0
    %779 = vmatprep.subr.mxu0 0.0
    %780 = vmatpush1.msra.mxu0 0.0
    %781 = vmatprep.subr.mxu0 0.0
    %782 = vmatpush1.msra.mxu0 0.0
    %783 = vmatprep.subr.mxu0 0.0
    %784 = vmatpush1.msra.mxu0 0.0
    %785 = vmatprep.subr.mxu0 0.0
    %786 = vmatpush1.msra.mxu0 0.0
    %787 = vmatprep.subr.mxu0 0.0
    %788 = vmatpush1.msra.mxu0 0.0
    %789 = vmatprep.subr.mxu0 0.0
    %790 = vmatpush1.msra.mxu0 0.0
    %791 = vmatprep.subr.mxu0 0.0
    %792 = vmatpush1.msra.mxu0 0.0
    %793 = vmatprep.subr.mxu0 0.0
    %794 = vmatpush1.msra.mxu0 0.0
    %795 = vmatprep.subr.mxu0 0.0
    %796 = vmatpush1.msra.mxu0 0.0
    %797 = vmatprep.subr.mxu0 0.0
    %798 = vmatpush1.msra.mxu0 0.0
    %799 = vmatprep.mubr.f32.mxu0 0.0
    %800 = vmatmul.mubr.f32.gmra.mrb[0].mxu0 %v662
    %v801 = vpop.f32.mrb[0].mxu0
    %v802 = vadd.f32 0.0, %v801
    %v803 = vpop.f32.mrb[0].mxu0
    %v804 = vadd.f32 0.0, %v803
    %805 = vdwg.mxu0
    %806 = vmatprep.subr.mxu0 %v674
    %807 = vmatpush1.msra.mxu0 %v673
    %808 = vmatprep.subr.mxu0 %v678
    %809 = vmatpush1.msra.mxu0 %v677
    %810 = vmatprep.subr.mxu0 %v682
    %811 = vmatpush1.msra.mxu0 %v681
    %812 = vmatprep.subr.mxu0 %v686
    %813 = vmatpush1.msra.mxu0 %v685
    %814 = vmatprep.subr.mxu0 %v690
    %815 = vmatpush1.msra.mxu0 %v689
    %816 = vmatprep.subr.mxu0 %v694
    %817 = vmatpush1.msra.mxu0 %v693
    %818 = vmatprep.subr.mxu0 %v698
    %819 = vmatpush1.msra.mxu0 %v697
    %820 = vmatprep.subr.mxu0 %v702
    %821 = vmatpush1.msra.mxu0 %v701
    %822 = vmatprep.subr.mxu0 %v706
    %823 = vmatpush1.msra.mxu0 %v705
    %824 = vmatprep.subr.mxu0 %v710
    %825 = vmatpush1.msra.mxu0 %v709
    %826 = vmatprep.subr.mxu0 %v714
    %827 = vmatpush1.msra.mxu0 %v713
    %828 = vmatprep.subr.mxu0 %v718
    %829 = vmatpush1.msra.mxu0 %v717
    %830 = vmatprep.subr.mxu0 %v722
    %831 = vmatpush1.msra.mxu0 %v721
    %832 = vmatprep.subr.mxu0 %v726
    %833 = vmatpush1.msra.mxu0 %v725
    %834 = vmatprep.subr.mxu0 %v730
    %835 = vmatpush1.msra.mxu0 %v729
    %836 = vmatprep.subr.mxu0 %v734
    %837 = vmatpush1.msra.mxu0 %v733
    %838 = vmatprep.subr.mxu0 0.0
    %839 = vmatpush1.msra.mxu0 0.0
    %840 = vmatprep.subr.mxu0 0.0
    %841 = vmatpush1.msra.mxu0 0.0
    %842 = vmatprep.subr.mxu0 0.0
    %843 = vmatpush1.msra.mxu0 0.0
    %844 = vmatprep.subr.mxu0 0.0
    %845 = vmatpush1.msra.mxu0 0.0
    %846 = vmatprep.subr.mxu0 0.0
    %847 = vmatpush1.msra.mxu0 0.0
    %848 = vmatprep.subr.mxu0 0.0
    %849 = vmatpush1.msra.mxu0 0.0
    %850 = vmatprep.subr.mxu0 0.0
    %851 = vmatpush1.msra.mxu0 0.0
    %852 = vmatprep.subr.mxu0 0.0
    %853 = vmatpush1.msra.mxu0 0.0
    %854 = vmatprep.subr.mxu0 0.0
    %855 = vmatpush1.msra.mxu0 0.0
    %856 = vmatprep.subr.mxu0 0.0
    %857 = vmatpush1.msra.mxu0 0.0
    %858 = vmatprep.subr.mxu0 0.0
    %859 = vmatpush1.msra.mxu0 0.0
    %860 = vmatprep.subr.mxu0 0.0
    %861 = vmatpush1.msra.mxu0 0.0
    %862 = vmatprep.subr.mxu0 0.0
    %863 = vmatpush1.msra.mxu0 0.0
    %864 = vmatprep.subr.mxu0 0.0
    %865 = vmatpush1.msra.mxu0 0.0
    %866 = vmatprep.subr.mxu0 0.0
    %867 = vmatpush1.msra.mxu0 0.0
    %868 = vmatprep.subr.mxu0 0.0
    %869 = vmatpush1.msra.mxu0 0.0
    %870 = vmatprep.mubr.f32.mxu0 0.0
    %871 = vmatmul.mubr.f32.gmra.mrb[0].mxu0 %v662
    %v872 = vpop.f32.mrb[0].mxu0
    %v873 = vadd.f32 0.0, %v872
    %v874 = vpop.f32.mrb[0].mxu0
    %v875 = vadd.f32 0.0, %v874
    %876 = vdwg.mxu0
    %v877 = vadd.f32 %v667, %v802
    %v878 = vadd.f32 %v668, %v804
    %v879 = vadd.f32 %v669, %v873
    %v880 = vadd.f32 %v670, %v875
    %v881 = vxor.u32 %v877, 2147483648
    %v882 = vmul.f32 %v881, 1.442695
    %v883 = vpow.pop %v882
    %v884 = vadd.f32 %v883, 1.0
    %v885 = vrcp.pop %v884
    %v886 = vmul.f32 1.0, %v885
    %v887 = vxor.u32 %v878, 2147483648
    %v888 = vmul.f32 %v887, 1.442695
    %v889 = vpow.pop %v888
    %v890 = vadd.f32 %v889, 1.0
    %v891 = vrcp.pop %v890
    %v892 = vmul.f32 1.0, %v891
    %v893 = vtanh.pop %v879
    %v894 = vxor.u32 %v880, 2147483648
    %v895 = vmul.f32 %v894, 1.442695
    %v896 = vpow.pop %v895
    %v897 = vadd.f32 %v896, 1.0
    %v898 = vrcp.pop %v897
    %v899 = vmul.f32 1.0, %v898
    %v900 = vmul.f32 %v892, %v663
    %v901 = vmul.f32 %v886, %v893
    %v902 = vadd.f32 %v900, %v901
    %v903 = vtanh.pop %v902
    %v904 = vmul.f32 %v899, %v903
    %905 = vst [vmem:[#allocation4] sm:$0xff] %v904
    %906 = vst [vmem:[#allocation5] sm:$0xff] %v902
    %s907 = scalar_lea.vmem [#allocation2], 8
    %908 = vst [vmem:[%s907] sm:$0xff] %v904
    %v909 = vld [vmem:[#allocation4] sm:$0xff]
    %v910 = vld [vmem:[#allocation5] sm:$0xff]
    %s911 = smul.u32 2, 4
    %s912 = smul.addr %s911, 8
    %s913 = scalar_lea.vmem [#allocation3], %s912
    %v914 = vld [vmem:[%s913] sm:$0xff]
    %v915 = vld [vmem:[%s913 + $0x8] sm:$0xff]
    %v916 = vld [vmem:[%s913 + $0x10] sm:$0xff]
    %v917 = vld [vmem:[%s913 + $0x18] sm:$0xff]
    %v918 = vld [vmem:[#allocation8] sm:$0xff]
    %v919 = vld [vmem:[#allocation8 + $0x8] sm:$0xff]
    %v920 = vld [vmem:[#allocation8 + $0x10] sm:$0xff]
    %v921 = vld [vmem:[#allocation8 + $0x18] sm:$0xff]
    %v922 = vld [vmem:[#allocation8 + $0x20] sm:$0xff]
    %v923 = vld [vmem:[#allocation8 + $0x28] sm:$0xff]
    %v924 = vld [vmem:[#allocation8 + $0x30] sm:$0xff]
    %v925 = vld [vmem:[#allocation8 + $0x38] sm:$0xff]
    %v926 = vld [vmem:[#allocation8 + $0x40] sm:$0xff]
    %v927 = vld [vmem:[#allocation8 + $0x48] sm:$0xff]
    %v928 = vld [vmem:[#allocation8 + $0x50] sm:$0xff]
    %v929 = vld [vmem:[#allocation8 + $0x58] sm:$0xff]
    %v930 = vld [vmem:[#allocation8 + $0x60] sm:$0xff]
    %v931 = vld [vmem:[#allocation8 + $0x68] sm:$0xff]
    %v932 = vld [vmem:[#allocation8 + $0x70] sm:$0xff]
    %v933 = vld [vmem:[#allocation8 + $0x78] sm:$0xff]
    %v934 = vld [vmem:[#allocation8 + $0x80] sm:$0xff]
    %v935 = vld [vmem:[#allocation8 + $0x88] sm:$0xff]
    %v936 = vld [vmem:[#allocation8 + $0x90] sm:$0xff]
    %v937 = vld [vmem:[#allocation8 + $0x98] sm:$0xff]
    %v938 = vld [vmem:[#allocation8 + $0xa0] sm:$0xff]
    %v939 = vld [vmem:[#allocation8 + $0xa8] sm:$0xff]
    %v940 = vld [vmem:[#allocation8 + $0xb0] sm:$0xff]
    %v941 = vld [vmem:[#allocation8 + $0xb8] sm:$0xff]
    %v942 = vld [vmem:[#allocation8 + $0xc0] sm:$0xff]
    %v943 = vld [vmem:[#allocation8 + $0xc8] sm:$0xff]
    %v944 = vld [vmem:[#allocation8 + $0xd0] sm:$0xff]
    %v945 = vld [vmem:[#allocation8 + $0xd8] sm:$0xff]
    %v946 = vld [vmem:[#allocation8 + $0xe0] sm:$0xff]
    %v947 = vld [vmem:[#allocation8 + $0xe8] sm:$0xff]
    %v948 = vld [vmem:[#allocation8 + $0xf0] sm:$0xff]
    %v949 = vld [vmem:[#allocation8 + $0xf8] sm:$0xff]
    %v950 = vld [vmem:[#allocation8 + $0x100] sm:$0xff]
    %v951 = vld [vmem:[#allocation8 + $0x108] sm:$0xff]
    %v952 = vld [vmem:[#allocation8 + $0x110] sm:$0xff]
    %v953 = vld [vmem:[#allocation8 + $0x118] sm:$0xff]
    %v954 = vld [vmem:[#allocation8 + $0x120] sm:$0xff]
    %v955 = vld [vmem:[#allocation8 + $0x128] sm:$0xff]
    %v956 = vld [vmem:[#allocation8 + $0x130] sm:$0xff]
    %v957 = vld [vmem:[#allocation8 + $0x138] sm:$0xff]
    %v958 = vld [vmem:[#allocation8 + $0x140] sm:$0xff]
    %v959 = vld [vmem:[#allocation8 + $0x148] sm:$0xff]
    %v960 = vld [vmem:[#allocation8 + $0x150] sm:$0xff]
    %v961 = vld [vmem:[#allocation8 + $0x158] sm:$0xff]
    %v962 = vld [vmem:[#allocation8 + $0x160] sm:$0xff]
    %v963 = vld [vmem:[#allocation8 + $0x168] sm:$0xff]
    %v964 = vld [vmem:[#allocation8 + $0x170] sm:$0xff]
    %v965 = vld [vmem:[#allocation8 + $0x178] sm:$0xff]
    %v966 = vld [vmem:[#allocation8 + $0x180] sm:$0xff]
    %v967 = vld [vmem:[#allocation8 + $0x188] sm:$0xff]
    %v968 = vld [vmem:[#allocation8 + $0x190] sm:$0xff]
    %v969 = vld [vmem:[#allocation8 + $0x198] sm:$0xff]
    %v970 = vld [vmem:[#allocation8 + $0x1a0] sm:$0xff]
    %v971 = vld [vmem:[#allocation8 + $0x1a8] sm:$0xff]
    %v972 = vld [vmem:[#allocation8 + $0x1b0] sm:$0xff]
    %v973 = vld [vmem:[#allocation8 + $0x1b8] sm:$0xff]
    %v974 = vld [vmem:[#allocation8 + $0x1c0] sm:$0xff]
    %v975 = vld [vmem:[#allocation8 + $0x1c8] sm:$0xff]
    %v976 = vld [vmem:[#allocation8 + $0x1d0] sm:$0xff]
    %v977 = vld [vmem:[#allocation8 + $0x1d8] sm:$0xff]
    %v978 = vld [vmem:[#allocation8 + $0x1e0] sm:$0xff]
    %v979 = vld [vmem:[#allocation8 + $0x1e8] sm:$0xff]
    %v980 = vld [vmem:[#allocation8 + $0x1f0] sm:$0xff]
    %v981 = vld [vmem:[#allocation8 + $0x1f8] sm:$0xff]
    %982 = vmatprep.subr.mxu0 %v919
    %983 = vmatpush1.msra.mxu0 %v918
    %984 = vmatprep.subr.mxu0 %v923
    %985 = vmatpush1.msra.mxu0 %v922
    %986 = vmatprep.subr.mxu0 %v927
    %987 = vmatpush1.msra.mxu0 %v926
    %988 = vmatprep.subr.mxu0 %v931
    %989 = vmatpush1.msra.mxu0 %v930
    %990 = vmatprep.subr.mxu0 %v935
    %991 = vmatpush1.msra.mxu0 %v934
    %992 = vmatprep.subr.mxu0 %v939
    %993 = vmatpush1.msra.mxu0 %v938
    %994 = vmatprep.subr.mxu0 %v943
    %995 = vmatpush1.msra.mxu0 %v942
    %996 = vmatprep.subr.mxu0 %v947
    %997 = vmatpush1.msra.mxu0 %v946
    %998 = vmatprep.subr.mxu0 %v951
    %999 = vmatpush1.msra.mxu0 %v950
    %1000 = vmatprep.subr.mxu0 %v955
    %1001 = vmatpush1.msra.mxu0 %v954
    %1002 = vmatprep.subr.mxu0 %v959
    %1003 = vmatpush1.msra.mxu0 %v958
    %1004 = vmatprep.subr.mxu0 %v963
    %1005 = vmatpush1.msra.mxu0 %v962
    %1006 = vmatprep.subr.mxu0 %v967
    %1007 = vmatpush1.msra.mxu0 %v966
    %1008 = vmatprep.subr.mxu0 %v971
    %1009 = vmatpush1.msra.mxu0 %v970
    %1010 = vmatprep.subr.mxu0 %v975
    %1011 = vmatpush1.msra.mxu0 %v974
    %1012 = vmatprep.subr.mxu0 %v979
    %1013 = vmatpush1.msra.mxu0 %v978
    %1014 = vmatprep.subr.mxu0 0.0
    %1015 = vmatpush1.msra.mxu0 0.0
    %1016 = vmatprep.subr.mxu0 0.0
    %1017 = vmatpush1.msra.mxu0 0.0
    %1018 = vmatprep.subr.mxu0 0.0
    %1019 = vmatpush1.msra.mxu0 0.0
    %1020 = vmatprep.subr.mxu0 0.0
    %1021 = vmatpush1.msra.mxu0 0.0
    %1022 = vmatprep.subr.mxu0 0.0
    %1023 = vmatpush1.msra.mxu0 0.0
    %1024 = vmatprep.subr.mxu0 0.0
    %1025 = vmatpush1.msra.mxu0 0.0
    %1026 = vmatprep.subr.mxu0 0.0
    %1027 = vmatpush1.msra.mxu0 0.0
    %1028 = vmatprep.subr.mxu0 0.0
    %1029 = vmatpush1.msra.mxu0 0.0
    %1030 = vmatprep.subr.mxu0 0.0
    %1031 = vmatpush1.msra.mxu0 0.0
    %1032 = vmatprep.subr.mxu0 0.0
    %1033 = vmatpush1.msra.mxu0 0.0
    %1034 = vmatprep.subr.mxu0 0.0
    %1035 = vmatpush1.msra.mxu0 0.0
    %1036 = vmatprep.subr.mxu0 0.0
    %1037 = vmatpush1.msra.mxu0 0.0
    %1038 = vmatprep.subr.mxu0 0.0
    %1039 = vmatpush1.msra.mxu0 0.0
    %1040 = vmatprep.subr.mxu0 0.0
    %1041 = vmatpush1.msra.mxu0 0.0
    %1042 = vmatprep.subr.mxu0 0.0
    %1043 = vmatpush1.msra.mxu0 0.0
    %1044 = vmatprep.subr.mxu0 0.0
    %1045 = vmatpush1.msra.mxu0 0.0
    %1046 = vmatprep.mubr.f32.mxu0 0.0
    %1047 = vmatmul.mubr.f32.gmra.mrb[0].mxu0 %v909
    %v1048 = vpop.f32.mrb[0].mxu0
    %v1049 = vadd.f32 0.0, %v1048
    %v1050 = vpop.f32.mrb[0].mxu0
    %v1051 = vadd.f32 0.0, %v1050
    %1052 = vdwg.mxu0
    %1053 = vmatprep.subr.mxu0 %v921
    %1054 = vmatpush1.msra.mxu0 %v920
    %1055 = vmatprep.subr.mxu0 %v925
    %1056 = vmatpush1.msra.mxu0 %v924
    %1057 = vmatprep.subr.mxu0 %v929
    %1058 = vmatpush1.msra.mxu0 %v928
    %1059 = vmatprep.subr.mxu0 %v933
    %1060 = vmatpush1.msra.mxu0 %v932
    %1061 = vmatprep.subr.mxu0 %v937
    %1062 = vmatpush1.msra.mxu0 %v936
    %1063 = vmatprep.subr.mxu0 %v941
    %1064 = vmatpush1.msra.mxu0 %v940
    %1065 = vmatprep.subr.mxu0 %v945
    %1066 = vmatpush1.msra.mxu0 %v944
    %1067 = vmatprep.subr.mxu0 %v949
    %1068 = vmatpush1.msra.mxu0 %v948
    %1069 = vmatprep.subr.mxu0 %v953
    %1070 = vmatpush1.msra.mxu0 %v952
    %1071 = vmatprep.subr.mxu0 %v957
    %1072 = vmatpush1.msra.mxu0 %v956
    %1073 = vmatprep.subr.mxu0 %v961
    %1074 = vmatpush1.msra.mxu0 %v960
    %1075 = vmatprep.subr.mxu0 %v965
    %1076 = vmatpush1.msra.mxu0 %v964
    %1077 = vmatprep.subr.mxu0 %v969
    %1078 = vmatpush1.msra.mxu0 %v968
    %1079 = vmatprep.subr.mxu0 %v973
    %1080 = vmatpush1.msra.mxu0 %v972
    %1081 = vmatprep.subr.mxu0 %v977
    %1082 = vmatpush1.msra.mxu0 %v976
    %1083 = vmatprep.subr.mxu0 %v981
    %1084 = vmatpush1.msra.mxu0 %v980
    %1085 = vmatprep.subr.mxu0 0.0
    %1086 = vmatpush1.msra.mxu0 0.0
    %1087 = vmatprep.subr.mxu0 0.0
    %1088 = vmatpush1.msra.mxu0 0.0
    %1089 = vmatprep.subr.mxu0 0.0
    %1090 = vmatpush1.msra.mxu0 0.0
    %1091 = vmatprep.subr.mxu0 0.0
    %1092 = vmatpush1.msra.mxu0 0.0
    %1093 = vmatprep.subr.mxu0 0.0
    %1094 = vmatpush1.msra.mxu0 0.0
    %1095 = vmatprep.subr.mxu0 0.0
    %1096 = vmatpush1.msra.mxu0 0.0
    %1097 = vmatprep.subr.mxu0 0.0
    %1098 = vmatpush1.msra.mxu0 0.0
    %1099 = vmatprep.subr.mxu0 0.0
    %1100 = vmatpush1.msra.mxu0 0.0
    %1101 = vmatprep.subr.mxu0 0.0
    %1102 = vmatpush1.msra.mxu0 0.0
    %1103 = vmatprep.subr.mxu0 0.0
    %1104 = vmatpush1.msra.mxu0 0.0
    %1105 = vmatprep.subr.mxu0 0.0
    %1106 = vmatpush1.msra.mxu0 0.0
    %1107 = vmatprep.subr.mxu0 0.0
    %1108 = vmatpush1.msra.mxu0 0.0
    %1109 = vmatprep.subr.mxu0 0.0
    %1110 = vmatpush1.msra.mxu0 0.0
    %1111 = vmatprep.subr.mxu0 0.0
    %1112 = vmatpush1.msra.mxu0 0.0
    %1113 = vmatprep.subr.mxu0 0.0
    %1114 = vmatpush1.msra.mxu0 0.0
    %1115 = vmatprep.subr.mxu0 0.0
    %1116 = vmatpush1.msra.mxu0 0.0
    %1117 = vmatprep.mubr.f32.mxu0 0.0
    %1118 = vmatmul.mubr.f32.gmra.mrb[0].mxu0 %v909
    %v1119 = vpop.f32.mrb[0].mxu0
    %v1120 = vadd.f32 0.0, %v1119
    %v1121 = vpop.f32.mrb[0].mxu0
    %v1122 = vadd.f32 0.0, %v1121
    %1123 = vdwg.mxu0
    %v1124 = vadd.f32 %v914, %v1049
    %v1125 = vadd.f32 %v915, %v1051
    %v1126 = vadd.f32 %v916, %v1120
    %v1127 = vadd.f32 %v917, %v1122
    %v1128 = vxor.u32 %v1124, 2147483648
    %v1129 = vmul.f32 %v1128, 1.442695
    %v1130 = vpow.pop %v1129
    %v1131 = vadd.f32 %v1130, 1.0
    %v1132 = vrcp.pop %v1131
    %v1133 = vmul.f32 1.0, %v1132
    %v1134 = vxor.u32 %v1125, 2147483648
    %v1135 = vmul.f32 %v1134, 1.442695
    %v1136 = vpow.pop %v1135
    %v1137 = vadd.f32 %v1136, 1.0
    %v1138 = vrcp.pop %v1137
    %v1139 = vmul.f32 1.0, %v1138
    %v1140 = vtanh.pop %v1126
    %v1141 = vxor.u32 %v1127, 2147483648
    %v1142 = vmul.f32 %v1141, 1.442695
    %v1143 = vpow.pop %v1142
    %v1144 = vadd.f32 %v1143, 1.0
    %v1145 = vrcp.pop %v1144
    %v1146 = vmul.f32 1.0, %v1145
    %v1147 = vmul.f32 %v1139, %v910
    %v1148 = vmul.f32 %v1133, %v1140
    %v1149 = vadd.f32 %v1147, %v1148
    %v1150 = vtanh.pop %v1149
    %v1151 = vmul.f32 %v1146, %v1150
    %1152 = vst [vmem:[#allocation4] sm:$0xff] %v1151
    %1153 = vst [vmem:[#allocation5] sm:$0xff] %v1149
    %s1154 = scalar_lea.vmem [#allocation2], 16
    %1155 = vst [vmem:[%s1154] sm:$0xff] %v1151
    %v1156 = vld [vmem:[#allocation4] sm:$0xff]
    %v1157 = vld [vmem:[#allocation5] sm:$0xff]
    %s1158 = smul.u32 3, 4
    %s1159 = smul.addr %s1158, 8
    %s1160 = scalar_lea.vmem [#allocation3], %s1159
    %v1161 = vld [vmem:[%s1160] sm:$0xff]
    %v1162 = vld [vmem:[%s1160 + $0x8] sm:$0xff]
    %v1163 = vld [vmem:[%s1160 + $0x10] sm:$0xff]
    %v1164 = vld [vmem:[%s1160 + $0x18] sm:$0xff]
    %v1165 = vld [vmem:[#allocation8] sm:$0xff]
    %v1166 = vld [vmem:[#allocation8 + $0x8] sm:$0xff]
    %v1167 = vld [vmem:[#allocation8 + $0x10] sm:$0xff]
    %v1168 = vld [vmem:[#allocation8 + $0x18] sm:$0xff]
    %v1169 = vld [vmem:[#allocation8 + $0x20] sm:$0xff]
    %v1170 = vld [vmem:[#allocation8 + $0x28] sm:$0xff]
    %v1171 = vld [vmem:[#allocation8 + $0x30] sm:$0xff]
    %v1172 = vld [vmem:[#allocation8 + $0x38] sm:$0xff]
    %v1173 = vld [vmem:[#allocation8 + $0x40] sm:$0xff]
    %v1174 = vld [vmem:[#allocation8 + $0x48] sm:$0xff]
    %v1175 = vld [vmem:[#allocation8 + $0x50] sm:$0xff]
    %v1176 = vld [vmem:[#allocation8 + $0x58] sm:$0xff]
    %v1177 = vld [vmem:[#allocation8 + $0x60] sm:$0xff]
    %v1178 = vld [vmem:[#allocation8 + $0x68] sm:$0xff]
    %v1179 = vld [vmem:[#allocation8 + $0x70] sm:$0xff]
    %v1180 = vld [vmem:[#allocation8 + $0x78] sm:$0xff]
    %v1181 = vld [vmem:[#allocation8 + $0x80] sm:$0xff]
    %v1182 = vld [vmem:[#allocation8 + $0x88] sm:$0xff]
    %v1183 = vld [vmem:[#allocation8 + $0x90] sm:$0xff]
    %v1184 = vld [vmem:[#allocation8 + $0x98] sm:$0xff]
    %v1185 = vld [vmem:[#allocation8 + $0xa0] sm:$0xff]
    %v1186 = vld [vmem:[#allocation8 + $0xa8] sm:$0xff]
    %v1187 = vld [vmem:[#allocation8 + $0xb0] sm:$0xff]
    %v1188 = vld [vmem:[#allocation8 + $0xb8] sm:$0xff]
    %v1189 = vld [vmem:[#allocation8 + $0xc0] sm:$0xff]
    %v1190 = vld [vmem:[#allocation8 + $0xc8] sm:$0xff]
    %v1191 = vld [vmem:[#allocation8 + $0xd0] sm:$0xff]
    %v1192 = vld [vmem:[#allocation8 + $0xd8] sm:$0xff]
    %v1193 = vld [vmem:[#allocation8 + $0xe0] sm:$0xff]
    %v1194 = vld [vmem:[#allocation8 + $0xe8] sm:$0xff]
    %v1195 = vld [vmem:[#allocation8 + $0xf0] sm:$0xff]
    %v1196 = vld [vmem:[#allocation8 + $0xf8] sm:$0xff]
    %v1197 = vld [vmem:[#allocation8 + $0x100] sm:$0xff]
    %v1198 = vld [vmem:[#allocation8 + $0x108] sm:$0xff]
    %v1199 = vld [vmem:[#allocation8 + $0x110] sm:$0xff]
    %v1200 = vld [vmem:[#allocation8 + $0x118] sm:$0xff]
    %v1201 = vld [vmem:[#allocation8 + $0x120] sm:$0xff]
    %v1202 = vld [vmem:[#allocation8 + $0x128] sm:$0xff]
    %v1203 = vld [vmem:[#allocation8 + $0x130] sm:$0xff]
    %v1204 = vld [vmem:[#allocation8 + $0x138] sm:$0xff]
    %v1205 = vld [vmem:[#allocation8 + $0x140] sm:$0xff]
    %v1206 = vld [vmem:[#allocation8 + $0x148] sm:$0xff]
    %v1207 = vld [vmem:[#allocation8 + $0x150] sm:$0xff]
    %v1208 = vld [vmem:[#allocation8 + $0x158] sm:$0xff]
    %v1209 = vld [vmem:[#allocation8 + $0x160] sm:$0xff]
    %v1210 = vld [vmem:[#allocation8 + $0x168] sm:$0xff]
    %v1211 = vld [vmem:[#allocation8 + $0x170] sm:$0xff]
    %v1212 = vld [vmem:[#allocation8 + $0x178] sm:$0xff]
    %v1213 = vld [vmem:[#allocation8 + $0x180] sm:$0xff]
    %v1214 = vld [vmem:[#allocation8 + $0x188] sm:$0xff]
    %v1215 = vld [vmem:[#allocation8 + $0x190] sm:$0xff]
    %v1216 = vld [vmem:[#allocation8 + $0x198] sm:$0xff]
    %v1217 = vld [vmem:[#allocation8 + $0x1a0] sm:$0xff]
    %v1218 = vld [vmem:[#allocation8 + $0x1a8] sm:$0xff]
    %v1219 = vld [vmem:[#allocation8 + $0x1b0] sm:$0xff]
    %v1220 = vld [vmem:[#allocation8 + $0x1b8] sm:$0xff]
    %v1221 = vld [vmem:[#allocation8 + $0x1c0] sm:$0xff]
    %v1222 = vld [vmem:[#allocation8 + $0x1c8] sm:$0xff]
    %v1223 = vld [vmem:[#allocation8 + $0x1d0] sm:$0xff]
    %v1224 = vld [vmem:[#allocation8 + $0x1d8] sm:$0xff]
    %v1225 = vld [vmem:[#allocation8 + $0x1e0] sm:$0xff]
    %v1226 = vld [vmem:[#allocation8 + $0x1e8] sm:$0xff]
    %v1227 = vld [vmem:[#allocation8 + $0x1f0] sm:$0xff]
    %v1228 = vld [vmem:[#allocation8 + $0x1f8] sm:$0xff]
    %1229 = vmatprep.subr.mxu0 %v1166
    %1230 = vmatpush1.msra.mxu0 %v1165
    %1231 = vmatprep.subr.mxu0 %v1170
    %1232 = vmatpush1.msra.mxu0 %v1169
    %1233 = vmatprep.subr.mxu0 %v1174
    %1234 = vmatpush1.msra.mxu0 %v1173
    %1235 = vmatprep.subr.mxu0 %v1178
    %1236 = vmatpush1.msra.mxu0 %v1177
    %1237 = vmatprep.subr.mxu0 %v1182
    %1238 = vmatpush1.msra.mxu0 %v1181
    %1239 = vmatprep.subr.mxu0 %v1186
    %1240 = vmatpush1.msra.mxu0 %v1185
    %1241 = vmatprep.subr.mxu0 %v1190
    %1242 = vmatpush1.msra.mxu0 %v1189
    %1243 = vmatprep.subr.mxu0 %v1194
    %1244 = vmatpush1.msra.mxu0 %v1193
    %1245 = vmatprep.subr.mxu0 %v1198
    %1246 = vmatpush1.msra.mxu0 %v1197
    %1247 = vmatprep.subr.mxu0 %v1202
    %1248 = vmatpush1.msra.mxu0 %v1201
    %1249 = vmatprep.subr.mxu0 %v1206
    %1250 = vmatpush1.msra.mxu0 %v1205
    %1251 = vmatprep.subr.mxu0 %v1210
    %1252 = vmatpush1.msra.mxu0 %v1209
    %1253 = vmatprep.subr.mxu0 %v1214
    %1254 = vmatpush1.msra.mxu0 %v1213
    %1255 = vmatprep.subr.mxu0 %v1218
    %1256 = vmatpush1.msra.mxu0 %v1217
    %1257 = vmatprep.subr.mxu0 %v1222
    %1258 = vmatpush1.msra.mxu0 %v1221
    %1259 = vmatprep.subr.mxu0 %v1226
    %1260 = vmatpush1.msra.mxu0 %v1225
    %1261 = vmatprep.subr.mxu0 0.0
    %1262 = vmatpush1.msra.mxu0 0.0
    %1263 = vmatprep.subr.mxu0 0.0
    %1264 = vmatpush1.msra.mxu0 0.0
    %1265 = vmatprep.subr.mxu0 0.0
    %1266 = vmatpush1.msra.mxu0 0.0
    %1267 = vmatprep.subr.mxu0 0.0
    %1268 = vmatpush1.msra.mxu0 0.0
    %1269 = vmatprep.subr.mxu0 0.0
    %1270 = vmatpush1.msra.mxu0 0.0
    %1271 = vmatprep.subr.mxu0 0.0
    %1272 = vmatpush1.msra.mxu0 0.0
    %1273 = vmatprep.subr.mxu0 0.0
    %1274 = vmatpush1.msra.mxu0 0.0
    %1275 = vmatprep.subr.mxu0 0.0
    %1276 = vmatpush1.msra.mxu0 0.0
    %1277 = vmatprep.subr.mxu0 0.0
    %1278 = vmatpush1.msra.mxu0 0.0
    %1279 = vmatprep.subr.mxu0 0.0
    %1280 = vmatpush1.msra.mxu0 0.0
    %1281 = vmatprep.subr.mxu0 0.0
    %1282 = vmatpush1.msra.mxu0 0.0
    %1283 = vmatprep.subr.mxu0 0.0
    %1284 = vmatpush1.msra.mxu0 0.0
    %1285 = vmatprep.subr.mxu0 0.0
    %1286 = vmatpush1.msra.mxu0 0.0
    %1287 = vmatprep.subr.mxu0 0.0
    %1288 = vmatpush1.msra.mxu0 0.0
    %1289 = vmatprep.subr.mxu0 0.0
    %1290 = vmatpush1.msra.mxu0 0.0
    %1291 = vmatprep.subr.mxu0 0.0
    %1292 = vmatpush1.msra.mxu0 0.0
    %1293 = vmatprep.mubr.f32.mxu0 0.0
    %1294 = vmatmul.mubr.f32.gmra.mrb[0].mxu0 %v1156
    %v1295 = vpop.f32.mrb[0].mxu0
    %v1296 = vadd.f32 0.0, %v1295
    %v1297 = vpop.f32.mrb[0].mxu0
    %v1298 = vadd.f32 0.0, %v1297
    %1299 = vdwg.mxu0
    %1300 = vmatprep.subr.mxu0 %v1168
    %1301 = vmatpush1.msra.mxu0 %v1167
    %1302 = vmatprep.subr.mxu0 %v1172
    %1303 = vmatpush1.msra.mxu0 %v1171
    %1304 = vmatprep.subr.mxu0 %v1176
    %1305 = vmatpush1.msra.mxu0 %v1175
    %1306 = vmatprep.subr.mxu0 %v1180
    %1307 = vmatpush1.msra.mxu0 %v1179
    %1308 = vmatprep.subr.mxu0 %v1184
    %1309 = vmatpush1.msra.mxu0 %v1183
    %1310 = vmatprep.subr.mxu0 %v1188
    %1311 = vmatpush1.msra.mxu0 %v1187
    %1312 = vmatprep.subr.mxu0 %v1192
    %1313 = vmatpush1.msra.mxu0 %v1191
    %1314 = vmatprep.subr.mxu0 %v1196
    %1315 = vmatpush1.msra.mxu0 %v1195
    %1316 = vmatprep.subr.mxu0 %v1200
    %1317 = vmatpush1.msra.mxu0 %v1199
    %1318 = vmatprep.subr.mxu0 %v1204
    %1319 = vmatpush1.msra.mxu0 %v1203
    %1320 = vmatprep.subr.mxu0 %v1208
    %1321 = vmatpush1.msra.mxu0 %v1207
    %1322 = vmatprep.subr.mxu0 %v1212
    %1323 = vmatpush1.msra.mxu0 %v1211
    %1324 = vmatprep.subr.mxu0 %v1216
    %1325 = vmatpush1.msra.mxu0 %v1215
    %1326 = vmatprep.subr.mxu0 %v1220
    %1327 = vmatpush1.msra.mxu0 %v1219
    %1328 = vmatprep.subr.mxu0 %v1224
    %1329 = vmatpush1.msra.mxu0 %v1223
    %1330 = vmatprep.subr.mxu0 %v1228
    %1331 = vmatpush1.msra.mxu0 %v1227
    %1332 = vmatprep.subr.mxu0 0.0
    %1333 = vmatpush1.msra.mxu0 0.0
    %1334 = vmatprep.subr.mxu0 0.0
    %1335 = vmatpush1.msra.mxu0 0.0
    %1336 = vmatprep.subr.mxu0 0.0
    %1337 = vmatpush1.msra.mxu0 0.0
    %1338 = vmatprep.subr.mxu0 0.0
    %1339 = vmatpush1.msra.mxu0 0.0
    %1340 = vmatprep.subr.mxu0 0.0
    %1341 = vmatpush1.msra.mxu0 0.0
    %1342 = vmatprep.subr.mxu0 0.0
    %1343 = vmatpush1.msra.mxu0 0.0
    %1344 = vmatprep.subr.mxu0 0.0
    %1345 = vmatpush1.msra.mxu0 0.0
    %1346 = vmatprep.subr.mxu0 0.0
    %1347 = vmatpush1.msra.mxu0 0.0
    %1348 = vmatprep.subr.mxu0 0.0
    %1349 = vmatpush1.msra.mxu0 0.0
    %1350 = vmatprep.subr.mxu0 0.0
    %1351 = vmatpush1.msra.mxu0 0.0
    %1352 = vmatprep.subr.mxu0 0.0
    %1353 = vmatpush1.msra.mxu0 0.0
    %1354 = vmatprep.subr.mxu0 0.0
    %1355 = vmatpush1.msra.mxu0 0.0
    %1356 = vmatprep.subr.mxu0 0.0
    %1357 = vmatpush1.msra.mxu0 0.0
    %1358 = vmatprep.subr.mxu0 0.0
    %1359 = vmatpush1.msra.mxu0 0.0
    %1360 = vmatprep.subr.mxu0 0.0
    %1361 = vmatpush1.msra.mxu0 0.0
    %1362 = vmatprep.subr.mxu0 0.0
    %1363 = vmatpush1.msra.mxu0 0.0
    %1364 = vmatprep.mubr.f32.mxu0 0.0
    %1365 = vmatmul.mubr.f32.gmra.mrb[0].mxu0 %v1156
    %v1366 = vpop.f32.mrb[0].mxu0
    %v1367 = vadd.f32 0.0, %v1366
    %v1368 = vpop.f32.mrb[0].mxu0
    %v1369 = vadd.f32 0.0, %v1368
    %1370 = vdwg.mxu0
    %v1371 = vadd.f32 %v1161, %v1296
    %v1372 = vadd.f32 %v1162, %v1298
    %v1373 = vadd.f32 %v1163, %v1367
    %v1374 = vadd.f32 %v1164, %v1369
    %v1375 = vxor.u32 %v1371, 2147483648
    %v1376 = vmul.f32 %v1375, 1.442695
    %v1377 = vpow.pop %v1376
    %v1378 = vadd.f32 %v1377, 1.0
    %v1379 = vrcp.pop %v1378
    %v1380 = vmul.f32 1.0, %v1379
    %v1381 = vxor.u32 %v1372, 2147483648
    %v1382 = vmul.f32 %v1381, 1.442695
    %v1383 = vpow.pop %v1382
    %v1384 = vadd.f32 %v1383, 1.0
    %v1385 = vrcp.pop %v1384
    %v1386 = vmul.f32 1.0, %v1385
    %v1387 = vtanh.pop %v1373
    %v1388 = vxor.u32 %v1374, 2147483648
    %v1389 = vmul.f32 %v1388, 1.442695
    %v1390 = vpow.pop %v1389
    %v1391 = vadd.f32 %v1390, 1.0
    %v1392 = vrcp.pop %v1391
    %v1393 = vmul.f32 1.0, %v1392
    %v1394 = vmul.f32 %v1386, %v1157
    %v1395 = vmul.f32 %v1380, %v1387
    %v1396 = vadd.f32 %v1394, %v1395
    %v1397 = vtanh.pop %v1396
    %v1398 = vmul.f32 %v1393, %v1397
    %1399 = vst [vmem:[#allocation4] sm:$0xff] %v1398
    %1400 = vst [vmem:[#allocation5] sm:$0xff] %v1396
    %s1401 = scalar_lea.vmem [#allocation2], 24
    %1402 = vst [vmem:[%s1401] sm:$0xff] %v1398
    %v1403 = vld [vmem:[#allocation4] sm:$0xff]
    %v1404 = vld [vmem:[#allocation5] sm:$0xff]
    %s1405 = smul.u32 4, 4
    %s1406 = smul.addr %s1405, 8
    %s1407 = scalar_lea.vmem [#allocation3], %s1406
    %v1408 = vld [vmem:[%s1407] sm:$0xff]
    %v1409 = vld [vmem:[%s1407 + $0x8] sm:$0xff]
    %v1410 = vld [vmem:[%s1407 + $0x10] sm:$0xff]
    %v1411 = vld [vmem:[%s1407 + $0x18] sm:$0xff]
    %v1412 = vld [vmem:[#allocation8] sm:$0xff]
    %v1413 = vld [vmem:[#allocation8 + $0x8] sm:$0xff]
    %v1414 = vld [vmem:[#allocation8 + $0x10] sm:$0xff]
    %v1415 = vld [vmem:[#allocation8 + $0x18] sm:$0xff]
    %v1416 = vld [vmem:[#allocation8 + $0x20] sm:$0xff]
    %v1417 = vld [vmem:[#allocation8 + $0x28] sm:$0xff]
    %v1418 = vld [vmem:[#allocation8 + $0x30] sm:$0xff]
    %v1419 = vld [vmem:[#allocation8 + $0x38] sm:$0xff]
    %v1420 = vld [vmem:[#allocation8 + $0x40] sm:$0xff]
    %v1421 = vld [vmem:[#allocation8 + $0x48] sm:$0xff]
    %v1422 = vld [vmem:[#allocation8 + $0x50] sm:$0xff]
    %v1423 = vld [vmem:[#allocation8 + $0x58] sm:$0xff]
    %v1424 = vld [vmem:[#allocation8 + $0x60] sm:$0xff]
    %v1425 = vld [vmem:[#allocation8 + $0x68] sm:$0xff]
    %v1426 = vld [vmem:[#allocation8 + $0x70] sm:$0xff]
    %v1427 = vld [vmem:[#allocation8 + $0x78] sm:$0xff]
    %v1428 = vld [vmem:[#allocation8 + $0x80] sm:$0xff]
    %v1429 = vld [vmem:[#allocation8 + $0x88] sm:$0xff]
    %v1430 = vld [vmem:[#allocation8 + $0x90] sm:$0xff]
    %v1431 = vld [vmem:[#allocation8 + $0x98] sm:$0xff]
    %v1432 = vld [vmem:[#allocation8 + $0xa0] sm:$0xff]
    %v1433 = vld [vmem:[#allocation8 + $0xa8] sm:$0xff]
    %v1434 = vld [vmem:[#allocation8 + $0xb0] sm:$0xff]
    %v1435 = vld [vmem:[#allocation8 + $0xb8] sm:$0xff]
    %v1436 = vld [vmem:[#allocation8 + $0xc0] sm:$0xff]
    %v1437 = vld [vmem:[#allocation8 + $0xc8] sm:$0xff]
    %v1438 = vld [vmem:[#allocation8 + $0xd0] sm:$0xff]
    %v1439 = vld [vmem:[#allocation8 + $0xd8] sm:$0xff]
    %v1440 = vld [vmem:[#allocation8 + $0xe0] sm:$0xff]
    %v1441 = vld [vmem:[#allocation8 + $0xe8] sm:$0xff]
    %v1442 = vld [vmem:[#allocation8 + $0xf0] sm:$0xff]
    %v1443 = vld [vmem:[#allocation8 + $0xf8] sm:$0xff]
    %v1444 = vld [vmem:[#allocation8 + $0x100] sm:$0xff]
    %v1445 = vld [vmem:[#allocation8 + $0x108] sm:$0xff]
    %v1446 = vld [vmem:[#allocation8 + $0x110] sm:$0xff]
    %v1447 = vld [vmem:[#allocation8 + $0x118] sm:$0xff]
    %v1448 = vld [vmem:[#allocation8 + $0x120] sm:$0xff]
    %v1449 = vld [vmem:[#allocation8 + $0x128] sm:$0xff]
    %v1450 = vld [vmem:[#allocation8 + $0x130] sm:$0xff]
    %v1451 = vld [vmem:[#allocation8 + $0x138] sm:$0xff]
    %v1452 = vld [vmem:[#allocation8 + $0x140] sm:$0xff]
    %v1453 = vld [vmem:[#allocation8 + $0x148] sm:$0xff]
    %v1454 = vld [vmem:[#allocation8 + $0x150] sm:$0xff]
    %v1455 = vld [vmem:[#allocation8 + $0x158] sm:$0xff]
    %v1456 = vld [vmem:[#allocation8 + $0x160] sm:$0xff]
    %v1457 = vld [vmem:[#allocation8 + $0x168] sm:$0xff]
    %v1458 = vld [vmem:[#allocation8 + $0x170] sm:$0xff]
    %v1459 = vld [vmem:[#allocation8 + $0x178] sm:$0xff]
    %v1460 = vld [vmem:[#allocation8 + $0x180] sm:$0xff]
    %v1461 = vld [vmem:[#allocation8 + $0x188] sm:$0xff]
    %v1462 = vld [vmem:[#allocation8 + $0x190] sm:$0xff]
    %v1463 = vld [vmem:[#allocation8 + $0x198] sm:$0xff]
    %v1464 = vld [vmem:[#allocation8 + $0x1a0] sm:$0xff]
    %v1465 = vld [vmem:[#allocation8 + $0x1a8] sm:$0xff]
    %v1466 = vld [vmem:[#allocation8 + $0x1b0] sm:$0xff]
    %v1467 = vld [vmem:[#allocation8 + $0x1b8] sm:$0xff]
    %v1468 = vld [vmem:[#allocation8 + $0x1c0] sm:$0xff]
    %v1469 = vld [vmem:[#allocation8 + $0x1c8] sm:$0xff]
    %v1470 = vld [vmem:[#allocation8 + $0x1d0] sm:$0xff]
    %v1471 = vld [vmem:[#allocation8 + $0x1d8] sm:$0xff]
    %v1472 = vld [vmem:[#allocation8 + $0x1e0] sm:$0xff]
    %v1473 = vld [vmem:[#allocation8 + $0x1e8] sm:$0xff]
    %v1474 = vld [vmem:[#allocation8 + $0x1f0] sm:$0xff]
    %v1475 = vld [vmem:[#allocation8 + $0x1f8] sm:$0xff]
    %1476 = vmatprep.subr.mxu0 %v1413
    %1477 = vmatpush1.msra.mxu0 %v1412
    %1478 = vmatprep.subr.mxu0 %v1417
    %1479 = vmatpush1.msra.mxu0 %v1416
    %1480 = vmatprep.subr.mxu0 %v1421
    %1481 = vmatpush1.msra.mxu0 %v1420
    %1482 = vmatprep.subr.mxu0 %v1425
    %1483 = vmatpush1.msra.mxu0 %v1424
    %1484 = vmatprep.subr.mxu0 %v1429
    %1485 = vmatpush1.msra.mxu0 %v1428
    %1486 = vmatprep.subr.mxu0 %v1433
    %1487 = vmatpush1.msra.mxu0 %v1432
    %1488 = vmatprep.subr.mxu0 %v1437
    %1489 = vmatpush1.msra.mxu0 %v1436
    %1490 = vmatprep.subr.mxu0 %v1441
    %1491 = vmatpush1.msra.mxu0 %v1440
    %1492 = vmatprep.subr.mxu0 %v1445
    %1493 = vmatpush1.msra.mxu0 %v1444
    %1494 = vmatprep.subr.mxu0 %v1449
    %1495 = vmatpush1.msra.mxu0 %v1448
    %1496 = vmatprep.subr.mxu0 %v1453
    %1497 = vmatpush1.msra.mxu0 %v1452
    %1498 = vmatprep.subr.mxu0 %v1457
    %1499 = vmatpush1.msra.mxu0 %v1456
    %1500 = vmatprep.subr.mxu0 %v1461
    %1501 = vmatpush1.msra.mxu0 %v1460
    %1502 = vmatprep.subr.mxu0 %v1465
    %1503 = vmatpush1.msra.mxu0 %v1464
    %1504 = vmatprep.subr.mxu0 %v1469
    %1505 = vmatpush1.msra.mxu0 %v1468
    %1506 = vmatprep.subr.mxu0 %v1473
    %1507 = vmatpush1.msra.mxu0 %v1472
    %1508 = vmatprep.subr.mxu0 0.0
    %1509 = vmatpush1.msra.mxu0 0.0
    %1510 = vmatprep.subr.mxu0 0.0
    %1511 = vmatpush1.msra.mxu0 0.0
    %1512 = vmatprep.subr.mxu0 0.0
    %1513 = vmatpush1.msra.mxu0 0.0
    %1514 = vmatprep.subr.mxu0 0.0
    %1515 = vmatpush1.msra.mxu0 0.0
    %1516 = vmatprep.subr.mxu0 0.0
    %1517 = vmatpush1.msra.mxu0 0.0
    %1518 = vmatprep.subr.mxu0 0.0
    %1519 = vmatpush1.msra.mxu0 0.0
    %1520 = vmatprep.subr.mxu0 0.0
    %1521 = vmatpush1.msra.mxu0 0.0
    %1522 = vmatprep.subr.mxu0 0.0
    %1523 = vmatpush1.msra.mxu0 0.0
    %1524 = vmatprep.subr.mxu0 0.0
    %1525 = vmatpush1.msra.mxu0 0.0
    %1526 = vmatprep.subr.mxu0 0.0
    %1527 = vmatpush1.msra.mxu0 0.0
    %1528 = vmatprep.subr.mxu0 0.0
    %1529 = vmatpush1.msra.mxu0 0.0
    %1530 = vmatprep.subr.mxu0 0.0
    %1531 = vmatpush1.msra.mxu0 0.0
    %1532 = vmatprep.subr.mxu0 0.0
    %1533 = vmatpush1.msra.mxu0 0.0
    %1534 = vmatprep.subr.mxu0 0.0
    %1535 = vmatpush1.msra.mxu0 0.0
    %1536 = vmatprep.subr.mxu0 0.0
    %1537 = vmatpush1.msra.mxu0 0.0
    %1538 = vmatprep.subr.mxu0 0.0
    %1539 = vmatpush1.msra.mxu0 0.0
    %1540 = vmatprep.mubr.f32.mxu0 0.0
    %1541 = vmatmul.mubr.f32.gmra.mrb[0].mxu0 %v1403
    %v1542 = vpop.f32.mrb[0].mxu0
    %v1543 = vadd.f32 0.0, %v1542
    %v1544 = vpop.f32.mrb[0].mxu0
    %v1545 = vadd.f32 0.0, %v1544
    %1546 = vdwg.mxu0
    %1547 = vmatprep.subr.mxu0 %v1415
    %1548 = vmatpush1.msra.mxu0 %v1414
    %1549 = vmatprep.subr.mxu0 %v1419
    %1550 = vmatpush1.msra.mxu0 %v1418
    %1551 = vmatprep.subr.mxu0 %v1423
    %1552 = vmatpush1.msra.mxu0 %v1422
    %1553 = vmatprep.subr.mxu0 %v1427
    %1554 = vmatpush1.msra.mxu0 %v1426
    %1555 = vmatprep.subr.mxu0 %v1431
    %1556 = vmatpush1.msra.mxu0 %v1430
    %1557 = vmatprep.subr.mxu0 %v1435
    %1558 = vmatpush1.msra.mxu0 %v1434
    %1559 = vmatprep.subr.mxu0 %v1439
    %1560 = vmatpush1.msra.mxu0 %v1438
    %1561 = vmatprep.subr.mxu0 %v1443
    %1562 = vmatpush1.msra.mxu0 %v1442
    %1563 = vmatprep.subr.mxu0 %v1447
    %1564 = vmatpush1.msra.mxu0 %v1446
    %1565 = vmatprep.subr.mxu0 %v1451
    %1566 = vmatpush1.msra.mxu0 %v1450
    %1567 = vmatprep.subr.mxu0 %v1455
    %1568 = vmatpush1.msra.mxu0 %v1454
    %1569 = vmatprep.subr.mxu0 %v1459
    %1570 = vmatpush1.msra.mxu0 %v1458
    %1571 = vmatprep.subr.mxu0 %v1463
    %1572 = vmatpush1.msra.mxu0 %v1462
    %1573 = vmatprep.subr.mxu0 %v1467
    %1574 = vmatpush1.msra.mxu0 %v1466
    %1575 = vmatprep.subr.mxu0 %v1471
    %1576 = vmatpush1.msra.mxu0 %v1470
    %1577 = vmatprep.subr.mxu0 %v1475
    %1578 = vmatpush1.msra.mxu0 %v1474
    %1579 = vmatprep.subr.mxu0 0.0
    %1580 = vmatpush1.msra.mxu0 0.0
    %1581 = vmatprep.subr.mxu0 0.0
    %1582 = vmatpush1.msra.mxu0 0.0
    %1583 = vmatprep.subr.mxu0 0.0
    %1584 = vmatpush1.msra.mxu0 0.0
    %1585 = vmatprep.subr.mxu0 0.0
    %1586 = vmatpush1.msra.mxu0 0.0
    %1587 = vmatprep.subr.mxu0 0.0
    %1588 = vmatpush1.msra.mxu0 0.0
    %1589 = vmatprep.subr.mxu0 0.0
    %1590 = vmatpush1.msra.mxu0 0.0
    %1591 = vmatprep.subr.mxu0 0.0
    %1592 = vmatpush1.msra.mxu0 0.0
    %1593 = vmatprep.subr.mxu0 0.0
    %1594 = vmatpush1.msra.mxu0 0.0
    %1595 = vmatprep.subr.mxu0 0.0
    %1596 = vmatpush1.msra.mxu0 0.0
    %1597 = vmatprep.subr.mxu0 0.0
    %1598 = vmatpush1.msra.mxu0 0.0
    %1599 = vmatprep.subr.mxu0 0.0
    %1600 = vmatpush1.msra.mxu0 0.0
    %1601 = vmatprep.subr.mxu0 0.0
    %1602 = vmatpush1.msra.mxu0 0.0
    %1603 = vmatprep.subr.mxu0 0.0
    %1604 = vmatpush1.msra.mxu0 0.0
    %1605 = vmatprep.subr.mxu0 0.0
    %1606 = vmatpush1.msra.mxu0 0.0
    %1607 = vmatprep.subr.mxu0 0.0
    %1608 = vmatpush1.msra.mxu0 0.0
    %1609 = vmatprep.subr.mxu0 0.0
    %1610 = vmatpush1.msra.mxu0 0.0
    %1611 = vmatprep.mubr.f32.mxu0 0.0
    %1612 = vmatmul.mubr.f32.gmra.mrb[0].mxu0 %v1403
    %v1613 = vpop.f32.mrb[0].mxu0
    %v1614 = vadd.f32 0.0, %v1613
    %v1615 = vpop.f32.mrb[0].mxu0
    %v1616 = vadd.f32 0.0, %v1615
    %1617 = vdwg.mxu0
    %v1618 = vadd.f32 %v1408, %v1543
    %v1619 = vadd.f32 %v1409, %v1545
    %v1620 = vadd.f32 %v1410, %v1614
    %v1621 = vadd.f32 %v1411, %v1616
    %v1622 = vxor.u32 %v1618, 2147483648
    %v1623 = vmul.f32 %v1622, 1.442695
    %v1624 = vpow.pop %v1623
    %v1625 = vadd.f32 %v1624, 1.0
    %v1626 = vrcp.pop %v1625
    %v1627 = vmul.f32 1.0, %v1626
    %v1628 = vxor.u32 %v1619, 2147483648
    %v1629 = vmul.f32 %v1628, 1.442695
    %v1630 = vpow.pop %v1629
    %v1631 = vadd.f32 %v1630, 1.0
    %v1632 = vrcp.pop %v1631
    %v1633 = vmul.f32 1.0, %v1632
    %v1634 = vtanh.pop %v1620
    %v1635 = vxor.u32 %v1621, 2147483648
    %v1636 = vmul.f32 %v1635, 1.442695
    %v1637 = vpow.pop %v1636
    %v1638 = vadd.f32 %v1637, 1.0
    %v1639 = vrcp.pop %v1638
    %v1640 = vmul.f32 1.0, %v1639
    %v1641 = vmul.f32 %v1633, %v1404
    %v1642 = vmul.f32 %v1627, %v1634
    %v1643 = vadd.f32 %v1641, %v1642
    %v1644 = vtanh.pop %v1643
    %v1645 = vmul.f32 %v1640, %v1644
    %1646 = vst [vmem:[#allocation4] sm:$0xff] %v1645
    %1647 = vst [vmem:[#allocation5] sm:$0xff] %v1643
    %s1648 = scalar_lea.vmem [#allocation2], 32
    %1649 = vst [vmem:[%s1648] sm:$0xff] %v1645
    %v1650 = vld [vmem:[#allocation4] sm:$0xff]
    %v1651 = vld [vmem:[#allocation5] sm:$0xff]
    %s1652 = smul.u32 5, 4
    %s1653 = smul.addr %s1652, 8
    %s1654 = scalar_lea.vmem [#allocation3], %s1653
    %v1655 = vld [vmem:[%s1654] sm:$0xff]
    %v1656 = vld [vmem:[%s1654 + $0x8] sm:$0xff]
    %v1657 = vld [vmem:[%s1654 + $0x10] sm:$0xff]
    %v1658 = vld [vmem:[%s1654 + $0x18] sm:$0xff]
    %v1659 = vld [vmem:[#allocation8] sm:$0xff]
    %v1660 = vld [vmem:[#allocation8 + $0x8] sm:$0xff]
    %v1661 = vld [vmem:[#allocation8 + $0x10] sm:$0xff]
    %v1662 = vld [vmem:[#allocation8 + $0x18] sm:$0xff]
    %v1663 = vld [vmem:[#allocation8 + $0x20] sm:$0xff]
    %v1664 = vld [vmem:[#allocation8 + $0x28] sm:$0xff]
    %v1665 = vld [vmem:[#allocation8 + $0x30] sm:$0xff]
    %v1666 = vld [vmem:[#allocation8 + $0x38] sm:$0xff]
    %v1667 = vld [vmem:[#allocation8 + $0x40] sm:$0xff]
    %v1668 = vld [vmem:[#allocation8 + $0x48] sm:$0xff]
    %v1669 = vld [vmem:[#allocation8 + $0x50] sm:$0xff]
    %v1670 = vld [vmem:[#allocation8 + $0x58] sm:$0xff]
    %v1671 = vld [vmem:[#allocation8 + $0x60] sm:$0xff]
    %v1672 = vld [vmem:[#allocation8 + $0x68] sm:$0xff]
    %v1673 = vld [vmem:[#allocation8 + $0x70] sm:$0xff]
    %v1674 = vld [vmem:[#allocation8 + $0x78] sm:$0xff]
    %v1675 = vld [vmem:[#allocation8 + $0x80] sm:$0xff]
    %v1676 = vld [vmem:[#allocation8 + $0x88] sm:$0xff]
    %v1677 = vld [vmem:[#allocation8 + $0x90] sm:$0xff]
    %v1678 = vld [vmem:[#allocation8 + $0x98] sm:$0xff]
    %v1679 = vld [vmem:[#allocation8 + $0xa0] sm:$0xff]
    %v1680 = vld [vmem:[#allocation8 + $0xa8] sm:$0xff]
    %v1681 = vld [vmem:[#allocation8 + $0xb0] sm:$0xff]
    %v1682 = vld [vmem:[#allocation8 + $0xb8] sm:$0xff]
    %v1683 = vld [vmem:[#allocation8 + $0xc0] sm:$0xff]
    %v1684 = vld [vmem:[#allocation8 + $0xc8] sm:$0xff]
    %v1685 = vld [vmem:[#allocation8 + $0xd0] sm:$0xff]
    %v1686 = vld [vmem:[#allocation8 + $0xd8] sm:$0xff]
    %v1687 = vld [vmem:[#allocation8 + $0xe0] sm:$0xff]
    %v1688 = vld [vmem:[#allocation8 + $0xe8] sm:$0xff]
    %v1689 = vld [vmem:[#allocation8 + $0xf0] sm:$0xff]
    %v1690 = vld [vmem:[#allocation8 + $0xf8] sm:$0xff]
    %v1691 = vld [vmem:[#allocation8 + $0x100] sm:$0xff]
    %v1692 = vld [vmem:[#allocation8 + $0x108] sm:$0xff]
    %v1693 = vld [vmem:[#allocation8 + $0x110] sm:$0xff]
    %v1694 = vld [vmem:[#allocation8 + $0x118] sm:$0xff]
    %v1695 = vld [vmem:[#allocation8 + $0x120] sm:$0xff]
    %v1696 = vld [vmem:[#allocation8 + $0x128] sm:$0xff]
    %v1697 = vld [vmem:[#allocation8 + $0x130] sm:$0xff]
    %v1698 = vld [vmem:[#allocation8 + $0x138] sm:$0xff]
    %v1699 = vld [vmem:[#allocation8 + $0x140] sm:$0xff]
    %v1700 = vld [vmem:[#allocation8 + $0x148] sm:$0xff]
    %v1701 = vld [vmem:[#allocation8 + $0x150] sm:$0xff]
    %v1702 = vld [vmem:[#allocation8 + $0x158] sm:$0xff]
    %v1703 = vld [vmem:[#allocation8 + $0x160] sm:$0xff]
    %v1704 = vld [vmem:[#allocation8 + $0x168] sm:$0xff]
    %v1705 = vld [vmem:[#allocation8 + $0x170] sm:$0xff]
    %v1706 = vld [vmem:[#allocation8 + $0x178] sm:$0xff]
    %v1707 = vld [vmem:[#allocation8 + $0x180] sm:$0xff]
    %v1708 = vld [vmem:[#allocation8 + $0x188] sm:$0xff]
    %v1709 = vld [vmem:[#allocation8 + $0x190] sm:$0xff]
    %v1710 = vld [vmem:[#allocation8 + $0x198] sm:$0xff]
    %v1711 = vld [vmem:[#allocation8 + $0x1a0] sm:$0xff]
    %v1712 = vld [vmem:[#allocation8 + $0x1a8] sm:$0xff]
    %v1713 = vld [vmem:[#allocation8 + $0x1b0] sm:$0xff]
    %v1714 = vld [vmem:[#allocation8 + $0x1b8] sm:$0xff]
    %v1715 = vld [vmem:[#allocation8 + $0x1c0] sm:$0xff]
    %v1716 = vld [vmem:[#allocation8 + $0x1c8] sm:$0xff]
    %v1717 = vld [vmem:[#allocation8 + $0x1d0] sm:$0xff]
    %v1718 = vld [vmem:[#allocation8 + $0x1d8] sm:$0xff]
    %v1719 = vld [vmem:[#allocation8 + $0x1e0] sm:$0xff]
    %v1720 = vld [vmem:[#allocation8 + $0x1e8] sm:$0xff]
    %v1721 = vld [vmem:[#allocation8 + $0x1f0] sm:$0xff]
    %v1722 = vld [vmem:[#allocation8 + $0x1f8] sm:$0xff]
    %1723 = vmatprep.subr.mxu0 %v1660
    %1724 = vmatpush1.msra.mxu0 %v1659
    %1725 = vmatprep.subr.mxu0 %v1664
    %1726 = vmatpush1.msra.mxu0 %v1663
    %1727 = vmatprep.subr.mxu0 %v1668
    %1728 = vmatpush1.msra.mxu0 %v1667
    %1729 = vmatprep.subr.mxu0 %v1672
    %1730 = vmatpush1.msra.mxu0 %v1671
    %1731 = vmatprep.subr.mxu0 %v1676
    %1732 = vmatpush1.msra.mxu0 %v1675
    %1733 = vmatprep.subr.mxu0 %v1680
    %1734 = vmatpush1.msra.mxu0 %v1679
    %1735 = vmatprep.subr.mxu0 %v1684
    %1736 = vmatpush1.msra.mxu0 %v1683
    %1737 = vmatprep.subr.mxu0 %v1688
    %1738 = vmatpush1.msra.mxu0 %v1687
    %1739 = vmatprep.subr.mxu0 %v1692
    %1740 = vmatpush1.msra.mxu0 %v1691
    %1741 = vmatprep.subr.mxu0 %v1696
    %1742 = vmatpush1.msra.mxu0 %v1695
    %1743 = vmatprep.subr.mxu0 %v1700
    %1744 = vmatpush1.msra.mxu0 %v1699
    %1745 = vmatprep.subr.mxu0 %v1704
    %1746 = vmatpush1.msra.mxu0 %v1703
    %1747 = vmatprep.subr.mxu0 %v1708
    %1748 = vmatpush1.msra.mxu0 %v1707
    %1749 = vmatprep.subr.mxu0 %v1712
    %1750 = vmatpush1.msra.mxu0 %v1711
    %1751 = vmatprep.subr.mxu0 %v1716
    %1752 = vmatpush1.msra.mxu0 %v1715
    %1753 = vmatprep.subr.mxu0 %v1720
    %1754 = vmatpush1.msra.mxu0 %v1719
    %1755 = vmatprep.subr.mxu0 0.0
    %1756 = vmatpush1.msra.mxu0 0.0
    %1757 = vmatprep.subr.mxu0 0.0
    %1758 = vmatpush1.msra.mxu0 0.0
    %1759 = vmatprep.subr.mxu0 0.0
    %1760 = vmatpush1.msra.mxu0 0.0
    %1761 = vmatprep.subr.mxu0 0.0
    %1762 = vmatpush1.msra.mxu0 0.0
    %1763 = vmatprep.subr.mxu0 0.0
    %1764 = vmatpush1.msra.mxu0 0.0
    %1765 = vmatprep.subr.mxu0 0.0
    %1766 = vmatpush1.msra.mxu0 0.0
    %1767 = vmatprep.subr.mxu0 0.0
    %1768 = vmatpush1.msra.mxu0 0.0
    %1769 = vmatprep.subr.mxu0 0.0
    %1770 = vmatpush1.msra.mxu0 0.0
    %1771 = vmatprep.subr.mxu0 0.0
    %1772 = vmatpush1.msra.mxu0 0.0
    %1773 = vmatprep.subr.mxu0 0.0
    %1774 = vmatpush1.msra.mxu0 0.0
    %1775 = vmatprep.subr.mxu0 0.0
    %1776 = vmatpush1.msra.mxu0 0.0
    %1777 = vmatprep.subr.mxu0 0.0
    %1778 = vmatpush1.msra.mxu0 0.0
    %1779 = vmatprep.subr.mxu0 0.0
    %1780 = vmatpush1.msra.mxu0 0.0
    %1781 = vmatprep.subr.mxu0 0.0
    %1782 = vmatpush1.msra.mxu0 0.0
    %1783 = vmatprep.subr.mxu0 0.0
    %1784 = vmatpush1.msra.mxu0 0.0
    %1785 = vmatprep.subr.mxu0 0.0
    %1786 = vmatpush1.msra.mxu0 0.0
    %1787 = vmatprep.mubr.f32.mxu0 0.0
    %1788 = vmatmul.mubr.f32.gmra.mrb[0].mxu0 %v1650
    %v1789 = vpop.f32.mrb[0].mxu0
    %v1790 = vadd.f32 0.0, %v1789
    %v1791 = vpop.f32.mrb[0].mxu0
    %v1792 = vadd.f32 0.0, %v1791
    %1793 = vdwg.mxu0
    %1794 = vmatprep.subr.mxu0 %v1662
    %1795 = vmatpush1.msra.mxu0 %v1661
    %1796 = vmatprep.subr.mxu0 %v1666
    %1797 = vmatpush1.msra.mxu0 %v1665
    %1798 = vmatprep.subr.mxu0 %v1670
    %1799 = vmatpush1.msra.mxu0 %v1669
    %1800 = vmatprep.subr.mxu0 %v1674
    %1801 = vmatpush1.msra.mxu0 %v1673
    %1802 = vmatprep.subr.mxu0 %v1678
    %1803 = vmatpush1.msra.mxu0 %v1677
    %1804 = vmatprep.subr.mxu0 %v1682
    %1805 = vmatpush1.msra.mxu0 %v1681
    %1806 = vmatprep.subr.mxu0 %v1686
    %1807 = vmatpush1.msra.mxu0 %v1685
    %1808 = vmatprep.subr.mxu0 %v1690
    %1809 = vmatpush1.msra.mxu0 %v1689
    %1810 = vmatprep.subr.mxu0 %v1694
    %1811 = vmatpush1.msra.mxu0 %v1693
    %1812 = vmatprep.subr.mxu0 %v1698
    %1813 = vmatpush1.msra.mxu0 %v1697
    %1814 = vmatprep.subr.mxu0 %v1702
    %1815 = vmatpush1.msra.mxu0 %v1701
    %1816 = vmatprep.subr.mxu0 %v1706
    %1817 = vmatpush1.msra.mxu0 %v1705
    %1818 = vmatprep.subr.mxu0 %v1710
    %1819 = vmatpush1.msra.mxu0 %v1709
    %1820 = vmatprep.subr.mxu0 %v1714
    %1821 = vmatpush1.msra.mxu0 %v1713
    %1822 = vmatprep.subr.mxu0 %v1718
    %1823 = vmatpush1.msra.mxu0 %v1717
    %1824 = vmatprep.subr.mxu0 %v1722
    %1825 = vmatpush1.msra.mxu0 %v1721
    %1826 = vmatprep.subr.mxu0 0.0
    %1827 = vmatpush1.msra.mxu0 0.0
    %1828 = vmatprep.subr.mxu0 0.0
    %1829 = vmatpush1.msra.mxu0 0.0
    %1830 = vmatprep.subr.mxu0 0.0
    %1831 = vmatpush1.msra.mxu0 0.0
    %1832 = vmatprep.subr.mxu0 0.0
    %1833 = vmatpush1.msra.mxu0 0.0
    %1834 = vmatprep.subr.mxu0 0.0
    %1835 = vmatpush1.msra.mxu0 0.0
    %1836 = vmatprep.subr.mxu0 0.0
    %1837 = vmatpush1.msra.mxu0 0.0
    %1838 = vmatprep.subr.mxu0 0.0
    %1839 = vmatpush1.msra.mxu0 0.0
    %1840 = vmatprep.subr.mxu0 0.0
    %1841 = vmatpush1.msra.mxu0 0.0
    %1842 = vmatprep.subr.mxu0 0.0
    %1843 = vmatpush1.msra.mxu0 0.0
    %1844 = vmatprep.subr.mxu0 0.0
    %1845 = vmatpush1.msra.mxu0 0.0
    %1846 = vmatprep.subr.mxu0 0.0
    %1847 = vmatpush1.msra.mxu0 0.0
    %1848 = vmatprep.subr.mxu0 0.0
    %1849 = vmatpush1.msra.mxu0 0.0
    %1850 = vmatprep.subr.mxu0 0.0
    %1851 = vmatpush1.msra.mxu0 0.0
    %1852 = vmatprep.subr.mxu0 0.0
    %1853 = vmatpush1.msra.mxu0 0.0
    %1854 = vmatprep.subr.mxu0 0.0
    %1855 = vmatpush1.msra.mxu0 0.0
    %1856 = vmatprep.subr.mxu0 0.0
    %1857 = vmatpush1.msra.mxu0 0.0
    %1858 = vmatprep.mubr.f32.mxu0 0.0
    %1859 = vmatmul.mubr.f32.gmra.mrb[0].mxu0 %v1650
    %v1860 = vpop.f32.mrb[0].mxu0
    %v1861 = vadd.f32 0.0, %v1860
    %v1862 = vpop.f32.mrb[0].mxu0
    %v1863 = vadd.f32 0.0, %v1862
    %1864 = vdwg.mxu0
    %v1865 = vadd.f32 %v1655, %v1790
    %v1866 = vadd.f32 %v1656, %v1792
    %v1867 = vadd.f32 %v1657, %v1861
    %v1868 = vadd.f32 %v1658, %v1863
    %v1869 = vxor.u32 %v1865, 2147483648
    %v1870 = vmul.f32 %v1869, 1.442695
    %v1871 = vpow.pop %v1870
    %v1872 = vadd.f32 %v1871, 1.0
    %v1873 = vrcp.pop %v1872
    %v1874 = vmul.f32 1.0, %v1873
    %v1875 = vxor.u32 %v1866, 2147483648
    %v1876 = vmul.f32 %v1875, 1.442695
    %v1877 = vpow.pop %v1876
    %v1878 = vadd.f32 %v1877, 1.0
    %v1879 = vrcp.pop %v1878
    %v1880 = vmul.f32 1.0, %v1879
    %v1881 = vtanh.pop %v1867
    %v1882 = vxor.u32 %v1868, 2147483648
    %v1883 = vmul.f32 %v1882, 1.442695
    %v1884 = vpow.pop %v1883
    %v1885 = vadd.f32 %v1884, 1.0
    %v1886 = vrcp.pop %v1885
    %v1887 = vmul.f32 1.0, %v1886
    %v1888 = vmul.f32 %v1880, %v1651
    %v1889 = vmul.f32 %v1874, %v1881
    %v1890 = vadd.f32 %v1888, %v1889
    %v1891 = vtanh.pop %v1890
    %v1892 = vmul.f32 %v1887, %v1891
    %1893 = vst [vmem:[#allocation4] sm:$0xff] %v1892
    %1894 = vst [vmem:[#allocation5] sm:$0xff] %v1890
    %s1895 = scalar_lea.vmem [#allocation2], 40
    %1896 = vst [vmem:[%s1895] sm:$0xff] %v1892
    %v1897 = vld [vmem:[#allocation4] sm:$0xff]
    %v1898 = vld [vmem:[#allocation5] sm:$0xff]
    %s1899 = smul.u32 6, 4
    %s1900 = smul.addr %s1899, 8
    %s1901 = scalar_lea.vmem [#allocation3], %s1900
    %v1902 = vld [vmem:[%s1901] sm:$0xff]
    %v1903 = vld [vmem:[%s1901 + $0x8] sm:$0xff]
    %v1904 = vld [vmem:[%s1901 + $0x10] sm:$0xff]
    %v1905 = vld [vmem:[%s1901 + $0x18] sm:$0xff]
    %v1906 = vld [vmem:[#allocation8] sm:$0xff]
    %v1907 = vld [vmem:[#allocation8 + $0x8] sm:$0xff]
    %v1908 = vld [vmem:[#allocation8 + $0x10] sm:$0xff]
    %v1909 = vld [vmem:[#allocation8 + $0x18] sm:$0xff]
    %v1910 = vld [vmem:[#allocation8 + $0x20] sm:$0xff]
    %v1911 = vld [vmem:[#allocation8 + $0x28] sm:$0xff]
    %v1912 = vld [vmem:[#allocation8 + $0x30] sm:$0xff]
    %v1913 = vld [vmem:[#allocation8 + $0x38] sm:$0xff]
    %v1914 = vld [vmem:[#allocation8 + $0x40] sm:$0xff]
    %v1915 = vld [vmem:[#allocation8 + $0x48] sm:$0xff]
    %v1916 = vld [vmem:[#allocation8 + $0x50] sm:$0xff]
    %v1917 = vld [vmem:[#allocation8 + $0x58] sm:$0xff]
    %v1918 = vld [vmem:[#allocation8 + $0x60] sm:$0xff]
    %v1919 = vld [vmem:[#allocation8 + $0x68] sm:$0xff]
    %v1920 = vld [vmem:[#allocation8 + $0x70] sm:$0xff]
    %v1921 = vld [vmem:[#allocation8 + $0x78] sm:$0xff]
    %v1922 = vld [vmem:[#allocation8 + $0x80] sm:$0xff]
    %v1923 = vld [vmem:[#allocation8 + $0x88] sm:$0xff]
    %v1924 = vld [vmem:[#allocation8 + $0x90] sm:$0xff]
    %v1925 = vld [vmem:[#allocation8 + $0x98] sm:$0xff]
    %v1926 = vld [vmem:[#allocation8 + $0xa0] sm:$0xff]
    %v1927 = vld [vmem:[#allocation8 + $0xa8] sm:$0xff]
    %v1928 = vld [vmem:[#allocation8 + $0xb0] sm:$0xff]
    %v1929 = vld [vmem:[#allocation8 + $0xb8] sm:$0xff]
    %v1930 = vld [vmem:[#allocation8 + $0xc0] sm:$0xff]
    %v1931 = vld [vmem:[#allocation8 + $0xc8] sm:$0xff]
    %v1932 = vld [vmem:[#allocation8 + $0xd0] sm:$0xff]
    %v1933 = vld [vmem:[#allocation8 + $0xd8] sm:$0xff]
    %v1934 = vld [vmem:[#allocation8 + $0xe0] sm:$0xff]
    %v1935 = vld [vmem:[#allocation8 + $0xe8] sm:$0xff]
    %v1936 = vld [vmem:[#allocation8 + $0xf0] sm:$0xff]
    %v1937 = vld [vmem:[#allocation8 + $0xf8] sm:$0xff]
    %v1938 = vld [vmem:[#allocation8 + $0x100] sm:$0xff]
    %v1939 = vld [vmem:[#allocation8 + $0x108] sm:$0xff]
    %v1940 = vld [vmem:[#allocation8 + $0x110] sm:$0xff]
    %v1941 = vld [vmem:[#allocation8 + $0x118] sm:$0xff]
    %v1942 = vld [vmem:[#allocation8 + $0x120] sm:$0xff]
    %v1943 = vld [vmem:[#allocation8 + $0x128] sm:$0xff]
    %v1944 = vld [vmem:[#allocation8 + $0x130] sm:$0xff]
    %v1945 = vld [vmem:[#allocation8 + $0x138] sm:$0xff]
    %v1946 = vld [vmem:[#allocation8 + $0x140] sm:$0xff]
    %v1947 = vld [vmem:[#allocation8 + $0x148] sm:$0xff]
    %v1948 = vld [vmem:[#allocation8 + $0x150] sm:$0xff]
    %v1949 = vld [vmem:[#allocation8 + $0x158] sm:$0xff]
    %v1950 = vld [vmem:[#allocation8 + $0x160] sm:$0xff]
    %v1951 = vld [vmem:[#allocation8 + $0x168] sm:$0xff]
    %v1952 = vld [vmem:[#allocation8 + $0x170] sm:$0xff]
    %v1953 = vld [vmem:[#allocation8 + $0x178] sm:$0xff]
    %v1954 = vld [vmem:[#allocation8 + $0x180] sm:$0xff]
    %v1955 = vld [vmem:[#allocation8 + $0x188] sm:$0xff]
    %v1956 = vld [vmem:[#allocation8 + $0x190] sm:$0xff]
    %v1957 = vld [vmem:[#allocation8 + $0x198] sm:$0xff]
    %v1958 = vld [vmem:[#allocation8 + $0x1a0] sm:$0xff]
    %v1959 = vld [vmem:[#allocation8 + $0x1a8] sm:$0xff]
    %v1960 = vld [vmem:[#allocation8 + $0x1b0] sm:$0xff]
    %v1961 = vld [vmem:[#allocation8 + $0x1b8] sm:$0xff]
    %v1962 = vld [vmem:[#allocation8 + $0x1c0] sm:$0xff]
    %v1963 = vld [vmem:[#allocation8 + $0x1c8] sm:$0xff]
    %v1964 = vld [vmem:[#allocation8 + $0x1d0] sm:$0xff]
    %v1965 = vld [vmem:[#allocation8 + $0x1d8] sm:$0xff]
    %v1966 = vld [vmem:[#allocation8 + $0x1e0] sm:$0xff]
    %v1967 = vld [vmem:[#allocation8 + $0x1e8] sm:$0xff]
    %v1968 = vld [vmem:[#allocation8 + $0x1f0] sm:$0xff]
    %v1969 = vld [vmem:[#allocation8 + $0x1f8] sm:$0xff]
    %1970 = vmatprep.subr.mxu0 %v1907
    %1971 = vmatpush1.msra.mxu0 %v1906
    %1972 = vmatprep.subr.mxu0 %v1911
    %1973 = vmatpush1.msra.mxu0 %v1910
    %1974 = vmatprep.subr.mxu0 %v1915
    %1975 = vmatpush1.msra.mxu0 %v1914
    %1976 = vmatprep.subr.mxu0 %v1919
    %1977 = vmatpush1.msra.mxu0 %v1918
    %1978 = vmatprep.subr.mxu0 %v1923
    %1979 = vmatpush1.msra.mxu0 %v1922
    %1980 = vmatprep.subr.mxu0 %v1927
    %1981 = vmatpush1.msra.mxu0 %v1926
    %1982 = vmatprep.subr.mxu0 %v1931
    %1983 = vmatpush1.msra.mxu0 %v1930
    %1984 = vmatprep.subr.mxu0 %v1935
    %1985 = vmatpush1.msra.mxu0 %v1934
    %1986 = vmatprep.subr.mxu0 %v1939
    %1987 = vmatpush1.msra.mxu0 %v1938
    %1988 = vmatprep.subr.mxu0 %v1943
    %1989 = vmatpush1.msra.mxu0 %v1942
    %1990 = vmatprep.subr.mxu0 %v1947
    %1991 = vmatpush1.msra.mxu0 %v1946
    %1992 = vmatprep.subr.mxu0 %v1951
    %1993 = vmatpush1.msra.mxu0 %v1950
    %1994 = vmatprep.subr.mxu0 %v1955
    %1995 = vmatpush1.msra.mxu0 %v1954
    %1996 = vmatprep.subr.mxu0 %v1959
    %1997 = vmatpush1.msra.mxu0 %v1958
    %1998 = vmatprep.subr.mxu0 %v1963
    %1999 = vmatpush1.msra.mxu0 %v1962
    %2000 = vmatprep.subr.mxu0 %v1967
    %2001 = vmatpush1.msra.mxu0 %v1966
    %2002 = vmatprep.subr.mxu0 0.0
    %2003 = vmatpush1.msra.mxu0 0.0
    %2004 = vmatprep.subr.mxu0 0.0
    %2005 = vmatpush1.msra.mxu0 0.0
    %2006 = vmatprep.subr.mxu0 0.0
    %2007 = vmatpush1.msra.mxu0 0.0
    %2008 = vmatprep.subr.mxu0 0.0
    %2009 = vmatpush1.msra.mxu0 0.0
    %2010 = vmatprep.subr.mxu0 0.0
    %2011 = vmatpush1.msra.mxu0 0.0
    %2012 = vmatprep.subr.mxu0 0.0
    %2013 = vmatpush1.msra.mxu0 0.0
    %2014 = vmatprep.subr.mxu0 0.0
    %2015 = vmatpush1.msra.mxu0 0.0
    %2016 = vmatprep.subr.mxu0 0.0
    %2017 = vmatpush1.msra.mxu0 0.0
    %2018 = vmatprep.subr.mxu0 0.0
    %2019 = vmatpush1.msra.mxu0 0.0
    %2020 = vmatprep.subr.mxu0 0.0
    %2021 = vmatpush1.msra.mxu0 0.0
    %2022 = vmatprep.subr.mxu0 0.0
    %2023 = vmatpush1.msra.mxu0 0.0
    %2024 = vmatprep.subr.mxu0 0.0
    %2025 = vmatpush1.msra.mxu0 0.0
    %2026 = vmatprep.subr.mxu0 0.0
    %2027 = vmatpush1.msra.mxu0 0.0
    %2028 = vmatprep.subr.mxu0 0.0
    %2029 = vmatpush1.msra.mxu0 0.0
    %2030 = vmatprep.subr.mxu0 0.0
    %2031 = vmatpush1.msra.mxu0 0.0
    %2032 = vmatprep.subr.mxu0 0.0
    %2033 = vmatpush1.msra.mxu0 0.0
    %2034 = vmatprep.mubr.f32.mxu0 0.0
    %2035 = vmatmul.mubr.f32.gmra.mrb[0].mxu0 %v1897
    %v2036 = vpop.f32.mrb[0].mxu0
    %v2037 = vadd.f32 0.0, %v2036
    %v2038 = vpop.f32.mrb[0].mxu0
    %v2039 = vadd.f32 0.0, %v2038
    %2040 = vdwg.mxu0
    %2041 = vmatprep.subr.mxu0 %v1909
    %2042 = vmatpush1.msra.mxu0 %v1908
    %2043 = vmatprep.subr.mxu0 %v1913
    %2044 = vmatpush1.msra.mxu0 %v1912
    %2045 = vmatprep.subr.mxu0 %v1917
    %2046 = vmatpush1.msra.mxu0 %v1916
    %2047 = vmatprep.subr.mxu0 %v1921
    %2048 = vmatpush1.msra.mxu0 %v1920
    %2049 = vmatprep.subr.mxu0 %v1925
    %2050 = vmatpush1.msra.mxu0 %v1924
    %2051 = vmatprep.subr.mxu0 %v1929
    %2052 = vmatpush1.msra.mxu0 %v1928
    %2053 = vmatprep.subr.mxu0 %v1933
    %2054 = vmatpush1.msra.mxu0 %v1932
    %2055 = vmatprep.subr.mxu0 %v1937
    %2056 = vmatpush1.msra.mxu0 %v1936
    %2057 = vmatprep.subr.mxu0 %v1941
    %2058 = vmatpush1.msra.mxu0 %v1940
    %2059 = vmatprep.subr.mxu0 %v1945
    %2060 = vmatpush1.msra.mxu0 %v1944
    %2061 = vmatprep.subr.mxu0 %v1949
    %2062 = vmatpush1.msra.mxu0 %v1948
    %2063 = vmatprep.subr.mxu0 %v1953
    %2064 = vmatpush1.msra.mxu0 %v1952
    %2065 = vmatprep.subr.mxu0 %v1957
    %2066 = vmatpush1.msra.mxu0 %v1956
    %2067 = vmatprep.subr.mxu0 %v1961
    %2068 = vmatpush1.msra.mxu0 %v1960
    %2069 = vmatprep.subr.mxu0 %v1965
    %2070 = vmatpush1.msra.mxu0 %v1964
    %2071 = vmatprep.subr.mxu0 %v1969
    %2072 = vmatpush1.msra.mxu0 %v1968
    %2073 = vmatprep.subr.mxu0 0.0
    %2074 = vmatpush1.msra.mxu0 0.0
    %2075 = vmatprep.subr.mxu0 0.0
    %2076 = vmatpush1.msra.mxu0 0.0
    %2077 = vmatprep.subr.mxu0 0.0
    %2078 = vmatpush1.msra.mxu0 0.0
    %2079 = vmatprep.subr.mxu0 0.0
    %2080 = vmatpush1.msra.mxu0 0.0
    %2081 = vmatprep.subr.mxu0 0.0
    %2082 = vmatpush1.msra.mxu0 0.0
    %2083 = vmatprep.subr.mxu0 0.0
    %2084 = vmatpush1.msra.mxu0 0.0
    %2085 = vmatprep.subr.mxu0 0.0
    %2086 = vmatpush1.msra.mxu0 0.0
    %2087 = vmatprep.subr.mxu0 0.0
    %2088 = vmatpush1.msra.mxu0 0.0
    %2089 = vmatprep.subr.mxu0 0.0
    %2090 = vmatpush1.msra.mxu0 0.0
    %2091 = vmatprep.subr.mxu0 0.0
    %2092 = vmatpush1.msra.mxu0 0.0
    %2093 = vmatprep.subr.mxu0 0.0
    %2094 = vmatpush1.msra.mxu0 0.0
    %2095 = vmatprep.subr.mxu0 0.0
    %2096 = vmatpush1.msra.mxu0 0.0
    %2097 = vmatprep.subr.mxu0 0.0
    %2098 = vmatpush1.msra.mxu0 0.0
    %2099 = vmatprep.subr.mxu0 0.0
    %2100 = vmatpush1.msra.mxu0 0.0
    %2101 = vmatprep.subr.mxu0 0.0
    %2102 = vmatpush1.msra.mxu0 0.0
    %2103 = vmatprep.subr.mxu0 0.0
    %2104 = vmatpush1.msra.mxu0 0.0
    %2105 = vmatprep.mubr.f32.mxu0 0.0
    %2106 = vmatmul.mubr.f32.gmra.mrb[0].mxu0 %v1897
    %v2107 = vpop.f32.mrb[0].mxu0
    %v2108 = vadd.f32 0.0, %v2107
    %v2109 = vpop.f32.mrb[0].mxu0
    %v2110 = vadd.f32 0.0, %v2109
    %2111 = vdwg.mxu0
    %v2112 = vadd.f32 %v1902, %v2037
    %v2113 = vadd.f32 %v1903, %v2039
    %v2114 = vadd.f32 %v1904, %v2108
    %v2115 = vadd.f32 %v1905, %v2110
    %v2116 = vxor.u32 %v2112, 2147483648
    %v2117 = vmul.f32 %v2116, 1.442695
    %v2118 = vpow.pop %v2117
    %v2119 = vadd.f32 %v2118, 1.0
    %v2120 = vrcp.pop %v2119
    %v2121 = vmul.f32 1.0, %v2120
    %v2122 = vxor.u32 %v2113, 2147483648
    %v2123 = vmul.f32 %v2122, 1.442695
    %v2124 = vpow.pop %v2123
    %v2125 = vadd.f32 %v2124, 1.0
    %v2126 = vrcp.pop %v2125
    %v2127 = vmul.f32 1.0, %v2126
    %v2128 = vtanh.pop %v2114
    %v2129 = vxor.u32 %v2115, 2147483648
    %v2130 = vmul.f32 %v2129, 1.442695
    %v2131 = vpow.pop %v2130
    %v2132 = vadd.f32 %v2131, 1.0
    %v2133 = vrcp.pop %v2132
    %v2134 = vmul.f32 1.0, %v2133
    %v2135 = vmul.f32 %v2127, %v1898
    %v2136 = vmul.f32 %v2121, %v2128
    %v2137 = vadd.f32 %v2135, %v2136
    %v2138 = vtanh.pop %v2137
    %v2139 = vmul.f32 %v2134, %v2138
    %2140 = vst [vmem:[#allocation4] sm:$0xff] %v2139
    %2141 = vst [vmem:[#allocation5] sm:$0xff] %v2137
    %s2142 = scalar_lea.vmem [#allocation2], 48
    %2143 = vst [vmem:[%s2142] sm:$0xff] %v2139
    %v2144 = vld [vmem:[#allocation4] sm:$0xff]
    %v2145 = vld [vmem:[#allocation5] sm:$0xff]
    %s2146 = smul.u32 7, 4
    %s2147 = smul.addr %s2146, 8
    %s2148 = scalar_lea.vmem [#allocation3], %s2147
    %v2149 = vld [vmem:[%s2148] sm:$0xff]
    %v2150 = vld [vmem:[%s2148 + $0x8] sm:$0xff]
    %v2151 = vld [vmem:[%s2148 + $0x10] sm:$0xff]
    %v2152 = vld [vmem:[%s2148 + $0x18] sm:$0xff]
    %v2153 = vld [vmem:[#allocation8] sm:$0xff]
    %v2154 = vld [vmem:[#allocation8 + $0x8] sm:$0xff]
    %v2155 = vld [vmem:[#allocation8 + $0x10] sm:$0xff]
    %v2156 = vld [vmem:[#allocation8 + $0x18] sm:$0xff]
    %v2157 = vld [vmem:[#allocation8 + $0x20] sm:$0xff]
    %v2158 = vld [vmem:[#allocation8 + $0x28] sm:$0xff]
    %v2159 = vld [vmem:[#allocation8 + $0x30] sm:$0xff]
    %v2160 = vld [vmem:[#allocation8 + $0x38] sm:$0xff]
    %v2161 = vld [vmem:[#allocation8 + $0x40] sm:$0xff]
    %v2162 = vld [vmem:[#allocation8 + $0x48] sm:$0xff]
    %v2163 = vld [vmem:[#allocation8 + $0x50] sm:$0xff]
    %v2164 = vld [vmem:[#allocation8 + $0x58] sm:$0xff]
    %v2165 = vld [vmem:[#allocation8 + $0x60] sm:$0xff]
    %v2166 = vld [vmem:[#allocation8 + $0x68] sm:$0xff]
    %v2167 = vld [vmem:[#allocation8 + $0x70] sm:$0xff]
    %v2168 = vld [vmem:[#allocation8 + $0x78] sm:$0xff]
    %v2169 = vld [vmem:[#allocation8 + $0x80] sm:$0xff]
    %v2170 = vld [vmem:[#allocation8 + $0x88] sm:$0xff]
    %v2171 = vld [vmem:[#allocation8 + $0x90] sm:$0xff]
    %v2172 = vld [vmem:[#allocation8 + $0x98] sm:$0xff]
    %v2173 = vld [vmem:[#allocation8 + $0xa0] sm:$0xff]
    %v2174 = vld [vmem:[#allocation8 + $0xa8] sm:$0xff]
    %v2175 = vld [vmem:[#allocation8 + $0xb0] sm:$0xff]
    %v2176 = vld [vmem:[#allocation8 + $0xb8] sm:$0xff]
    %v2177 = vld [vmem:[#allocation8 + $0xc0] sm:$0xff]
    %v2178 = vld [vmem:[#allocation8 + $0xc8] sm:$0xff]
    %v2179 = vld [vmem:[#allocation8 + $0xd0] sm:$0xff]
    %v2180 = vld [vmem:[#allocation8 + $0xd8] sm:$0xff]
    %v2181 = vld [vmem:[#allocation8 + $0xe0] sm:$0xff]
    %v2182 = vld [vmem:[#allocation8 + $0xe8] sm:$0xff]
    %v2183 = vld [vmem:[#allocation8 + $0xf0] sm:$0xff]
    %v2184 = vld [vmem:[#allocation8 + $0xf8] sm:$0xff]
    %v2185 = vld [vmem:[#allocation8 + $0x100] sm:$0xff]
    %v2186 = vld [vmem:[#allocation8 + $0x108] sm:$0xff]
    %v2187 = vld [vmem:[#allocation8 + $0x110] sm:$0xff]
    %v2188 = vld [vmem:[#allocation8 + $0x118] sm:$0xff]
    %v2189 = vld [vmem:[#allocation8 + $0x120] sm:$0xff]
    %v2190 = vld [vmem:[#allocation8 + $0x128] sm:$0xff]
    %v2191 = vld [vmem:[#allocation8 + $0x130] sm:$0xff]
    %v2192 = vld [vmem:[#allocation8 + $0x138] sm:$0xff]
    %v2193 = vld [vmem:[#allocation8 + $0x140] sm:$0xff]
    %v2194 = vld [vmem:[#allocation8 + $0x148] sm:$0xff]
    %v2195 = vld [vmem:[#allocation8 + $0x150] sm:$0xff]
    %v2196 = vld [vmem:[#allocation8 + $0x158] sm:$0xff]
    %v2197 = vld [vmem:[#allocation8 + $0x160] sm:$0xff]
    %v2198 = vld [vmem:[#allocation8 + $0x168] sm:$0xff]
    %v2199 = vld [vmem:[#allocation8 + $0x170] sm:$0xff]
    %v2200 = vld [vmem:[#allocation8 + $0x178] sm:$0xff]
    %v2201 = vld [vmem:[#allocation8 + $0x180] sm:$0xff]
    %v2202 = vld [vmem:[#allocation8 + $0x188] sm:$0xff]
    %v2203 = vld [vmem:[#allocation8 + $0x190] sm:$0xff]
    %v2204 = vld [vmem:[#allocation8 + $0x198] sm:$0xff]
    %v2205 = vld [vmem:[#allocation8 + $0x1a0] sm:$0xff]
    %v2206 = vld [vmem:[#allocation8 + $0x1a8] sm:$0xff]
    %v2207 = vld [vmem:[#allocation8 + $0x1b0] sm:$0xff]
    %v2208 = vld [vmem:[#allocation8 + $0x1b8] sm:$0xff]
    %v2209 = vld [vmem:[#allocation8 + $0x1c0] sm:$0xff]
    %v2210 = vld [vmem:[#allocation8 + $0x1c8] sm:$0xff]
    %v2211 = vld [vmem:[#allocation8 + $0x1d0] sm:$0xff]
    %v2212 = vld [vmem:[#allocation8 + $0x1d8] sm:$0xff]
    %v2213 = vld [vmem:[#allocation8 + $0x1e0] sm:$0xff]
    %v2214 = vld [vmem:[#allocation8 + $0x1e8] sm:$0xff]
    %v2215 = vld [vmem:[#allocation8 + $0x1f0] sm:$0xff]
    %v2216 = vld [vmem:[#allocation8 + $0x1f8] sm:$0xff]
    %2217 = vmatprep.subr.mxu0 %v2154
    %2218 = vmatpush1.msra.mxu0 %v2153
    %2219 = vmatprep.subr.mxu0 %v2158
    %2220 = vmatpush1.msra.mxu0 %v2157
    %2221 = vmatprep.subr.mxu0 %v2162
    %2222 = vmatpush1.msra.mxu0 %v2161
    %2223 = vmatprep.subr.mxu0 %v2166
    %2224 = vmatpush1.msra.mxu0 %v2165
    %2225 = vmatprep.subr.mxu0 %v2170
    %2226 = vmatpush1.msra.mxu0 %v2169
    %2227 = vmatprep.subr.mxu0 %v2174
    %2228 = vmatpush1.msra.mxu0 %v2173
    %2229 = vmatprep.subr.mxu0 %v2178
    %2230 = vmatpush1.msra.mxu0 %v2177
    %2231 = vmatprep.subr.mxu0 %v2182
    %2232 = vmatpush1.msra.mxu0 %v2181
    %2233 = vmatprep.subr.mxu0 %v2186
    %2234 = vmatpush1.msra.mxu0 %v2185
    %2235 = vmatprep.subr.mxu0 %v2190
    %2236 = vmatpush1.msra.mxu0 %v2189
    %2237 = vmatprep.subr.mxu0 %v2194
    %2238 = vmatpush1.msra.mxu0 %v2193
    %2239 = vmatprep.subr.mxu0 %v2198
    %2240 = vmatpush1.msra.mxu0 %v2197
    %2241 = vmatprep.subr.mxu0 %v2202
    %2242 = vmatpush1.msra.mxu0 %v2201
    %2243 = vmatprep.subr.mxu0 %v2206
    %2244 = vmatpush1.msra.mxu0 %v2205
    %2245 = vmatprep.subr.mxu0 %v2210
    %2246 = vmatpush1.msra.mxu0 %v2209
    %2247 = vmatprep.subr.mxu0 %v2214
    %2248 = vmatpush1.msra.mxu0 %v2213
    %2249 = vmatprep.subr.mxu0 0.0
    %2250 = vmatpush1.msra.mxu0 0.0
    %2251 = vmatprep.subr.mxu0 0.0
    %2252 = vmatpush1.msra.mxu0 0.0
    %2253 = vmatprep.subr.mxu0 0.0
    %2254 = vmatpush1.msra.mxu0 0.0
    %2255 = vmatprep.subr.mxu0 0.0
    %2256 = vmatpush1.msra.mxu0 0.0
    %2257 = vmatprep.subr.mxu0 0.0
    %2258 = vmatpush1.msra.mxu0 0.0
    %2259 = vmatprep.subr.mxu0 0.0
    %2260 = vmatpush1.msra.mxu0 0.0
    %2261 = vmatprep.subr.mxu0 0.0
    %2262 = vmatpush1.msra.mxu0 0.0
    %2263 = vmatprep.subr.mxu0 0.0
    %2264 = vmatpush1.msra.mxu0 0.0
    %2265 = vmatprep.subr.mxu0 0.0
    %2266 = vmatpush1.msra.mxu0 0.0
    %2267 = vmatprep.subr.mxu0 0.0
    %2268 = vmatpush1.msra.mxu0 0.0
    %2269 = vmatprep.subr.mxu0 0.0
    %2270 = vmatpush1.msra.mxu0 0.0
    %2271 = vmatprep.subr.mxu0 0.0
    %2272 = vmatpush1.msra.mxu0 0.0
    %2273 = vmatprep.subr.mxu0 0.0
    %2274 = vmatpush1.msra.mxu0 0.0
    %2275 = vmatprep.subr.mxu0 0.0
    %2276 = vmatpush1.msra.mxu0 0.0
    %2277 = vmatprep.subr.mxu0 0.0
    %2278 = vmatpush1.msra.mxu0 0.0
    %2279 = vmatprep.subr.mxu0 0.0
    %2280 = vmatpush1.msra.mxu0 0.0
    %2281 = vmatprep.mubr.f32.mxu0 0.0
    %2282 = vmatmul.mubr.f32.gmra.mrb[0].mxu0 %v2144
    %v2283 = vpop.f32.mrb[0].mxu0
    %v2284 = vadd.f32 0.0, %v2283
    %v2285 = vpop.f32.mrb[0].mxu0
    %v2286 = vadd.f32 0.0, %v2285
    %2287 = vdwg.mxu0
    %2288 = vmatprep.subr.mxu0 %v2156
    %2289 = vmatpush1.msra.mxu0 %v2155
    %2290 = vmatprep.subr.mxu0 %v2160
    %2291 = vmatpush1.msra.mxu0 %v2159
    %2292 = vmatprep.subr.mxu0 %v2164
    %2293 = vmatpush1.msra.mxu0 %v2163
    %2294 = vmatprep.subr.mxu0 %v2168
    %2295 = vmatpush1.msra.mxu0 %v2167
    %2296 = vmatprep.subr.mxu0 %v2172
    %2297 = vmatpush1.msra.mxu0 %v2171
    %2298 = vmatprep.subr.mxu0 %v2176
    %2299 = vmatpush1.msra.mxu0 %v2175
    %2300 = vmatprep.subr.mxu0 %v2180
    %2301 = vmatpush1.msra.mxu0 %v2179
    %2302 = vmatprep.subr.mxu0 %v2184
    %2303 = vmatpush1.msra.mxu0 %v2183
    %2304 = vmatprep.subr.mxu0 %v2188
    %2305 = vmatpush1.msra.mxu0 %v2187
    %2306 = vmatprep.subr.mxu0 %v2192
    %2307 = vmatpush1.msra.mxu0 %v2191
    %2308 = vmatprep.subr.mxu0 %v2196
    %2309 = vmatpush1.msra.mxu0 %v2195
    %2310 = vmatprep.subr.mxu0 %v2200
    %2311 = vmatpush1.msra.mxu0 %v2199
    %2312 = vmatprep.subr.mxu0 %v2204
    %2313 = vmatpush1.msra.mxu0 %v2203
    %2314 = vmatprep.subr.mxu0 %v2208
    %2315 = vmatpush1.msra.mxu0 %v2207
    %2316 = vmatprep.subr.mxu0 %v2212
    %2317 = vmatpush1.msra.mxu0 %v2211
    %2318 = vmatprep.subr.mxu0 %v2216
    %2319 = vmatpush1.msra.mxu0 %v2215
    %2320 = vmatprep.subr.mxu0 0.0
    %2321 = vmatpush1.msra.mxu0 0.0
    %2322 = vmatprep.subr.mxu0 0.0
    %2323 = vmatpush1.msra.mxu0 0.0
    %2324 = vmatprep.subr.mxu0 0.0
    %2325 = vmatpush1.msra.mxu0 0.0
    %2326 = vmatprep.subr.mxu0 0.0
    %2327 = vmatpush1.msra.mxu0 0.0
    %2328 = vmatprep.subr.mxu0 0.0
    %2329 = vmatpush1.msra.mxu0 0.0
    %2330 = vmatprep.subr.mxu0 0.0
    %2331 = vmatpush1.msra.mxu0 0.0
    %2332 = vmatprep.subr.mxu0 0.0
    %2333 = vmatpush1.msra.mxu0 0.0
    %2334 = vmatprep.subr.mxu0 0.0
    %2335 = vmatpush1.msra.mxu0 0.0
    %2336 = vmatprep.subr.mxu0 0.0
    %2337 = vmatpush1.msra.mxu0 0.0
    %2338 = vmatprep.subr.mxu0 0.0
    %2339 = vmatpush1.msra.mxu0 0.0
    %2340 = vmatprep.subr.mxu0 0.0
    %2341 = vmatpush1.msra.mxu0 0.0
    %2342 = vmatprep.subr.mxu0 0.0
    %2343 = vmatpush1.msra.mxu0 0.0
    %2344 = vmatprep.subr.mxu0 0.0
    %2345 = vmatpush1.msra.mxu0 0.0
    %2346 = vmatprep.subr.mxu0 0.0
    %2347 = vmatpush1.msra.mxu0 0.0
    %2348 = vmatprep.subr.mxu0 0.0
    %2349 = vmatpush1.msra.mxu0 0.0
    %2350 = vmatprep.subr.mxu0 0.0
    %2351 = vmatpush1.msra.mxu0 0.0
    %2352 = vmatprep.mubr.f32.mxu0 0.0
    %2353 = vmatmul.mubr.f32.gmra.mrb[0].mxu0 %v2144
    %v2354 = vpop.f32.mrb[0].mxu0
    %v2355 = vadd.f32 0.0, %v2354
    %v2356 = vpop.f32.mrb[0].mxu0
    %v2357 = vadd.f32 0.0, %v2356
    %2358 = vdwg.mxu0
    %v2359 = vadd.f32 %v2149, %v2284
    %v2360 = vadd.f32 %v2150, %v2286
    %v2361 = vadd.f32 %v2151, %v2355
    %v2362 = vadd.f32 %v2152, %v2357
    %v2363 = vxor.u32 %v2359, 2147483648
    %v2364 = vmul.f32 %v2363, 1.442695
    %v2365 = vpow.pop %v2364
    %v2366 = vadd.f32 %v2365, 1.0
    %v2367 = vrcp.pop %v2366
    %v2368 = vmul.f32 1.0, %v2367
    %v2369 = vxor.u32 %v2360, 2147483648
    %v2370 = vmul.f32 %v2369, 1.442695
    %v2371 = vpow.pop %v2370
    %v2372 = vadd.f32 %v2371, 1.0
    %v2373 = vrcp.pop %v2372
    %v2374 = vmul.f32 1.0, %v2373
    %v2375 = vtanh.pop %v2361
    %v2376 = vxor.u32 %v2362, 2147483648
    %v2377 = vmul.f32 %v2376, 1.442695
    %v2378 = vpow.pop %v2377
    %v2379 = vadd.f32 %v2378, 1.0
    %v2380 = vrcp.pop %v2379
    %v2381 = vmul.f32 1.0, %v2380
    %v2382 = vmul.f32 %v2374, %v2145
    %v2383 = vmul.f32 %v2368, %v2375
    %v2384 = vadd.f32 %v2382, %v2383
    %v2385 = vtanh.pop %v2384
    %v2386 = vmul.f32 %v2381, %v2385
    %2387 = vst [vmem:[#allocation4] sm:$0xff] %v2386
    %2388 = vst [vmem:[#allocation5] sm:$0xff] %v2384
    %s2389 = scalar_lea.vmem [#allocation2], 56
    %2390 = vst [vmem:[%s2389] sm:$0xff] %v2386
    %v2391 = vld [vmem:[#allocation4] sm:$0xff]
    %2392 = vst [vmem:[%s9] sm:$0xff] %v2391
    %v2393 = vld [vmem:[#allocation5] sm:$0xff]
    %2394 = vst [vmem:[%s10] sm:$0xff] %v2393
    %v2395 = vld [vmem:[#allocation2] sm:$0xff]
    %v2396 = vld [vmem:[#allocation2 + $0x8] sm:$0xff]
    %v2397 = vld [vmem:[#allocation2 + $0x10] sm:$0xff]
    %v2398 = vld [vmem:[#allocation2 + $0x18] sm:$0xff]
    %v2399 = vld [vmem:[#allocation2 + $0x20] sm:$0xff]
    %v2400 = vld [vmem:[#allocation2 + $0x28] sm:$0xff]
    %v2401 = vld [vmem:[#allocation2 + $0x30] sm:$0xff]
    %v2402 = vld [vmem:[#allocation2 + $0x38] sm:$0xff]
    %s2403 = scalar_lea.vmem [#allocation6], 512
    %v2404 = vld [vmem:[%s2403] sm:$0xff]
    %v2405 = vld [vmem:[%s2403 + $0x8] sm:$0xff]
    %v2406 = vld [vmem:[%s2403 + $0x10] sm:$0xff]
    %v2407 = vld [vmem:[%s2403 + $0x18] sm:$0xff]
    %v2408 = vld [vmem:[%s2403 + $0x20] sm:$0xff]
    %v2409 = vld [vmem:[%s2403 + $0x28] sm:$0xff]
    %v2410 = vld [vmem:[%s2403 + $0x30] sm:$0xff]
    %v2411 = vld [vmem:[%s2403 + $0x38] sm:$0xff]
    %v2412 = vld [vmem:[%s2403 + $0x40] sm:$0xff]
    %v2413 = vld [vmem:[%s2403 + $0x48] sm:$0xff]
    %v2414 = vld [vmem:[%s2403 + $0x50] sm:$0xff]
    %v2415 = vld [vmem:[%s2403 + $0x58] sm:$0xff]
    %v2416 = vld [vmem:[%s2403 + $0x60] sm:$0xff]
    %v2417 = vld [vmem:[%s2403 + $0x68] sm:$0xff]
    %v2418 = vld [vmem:[%s2403 + $0x70] sm:$0xff]
    %v2419 = vld [vmem:[%s2403 + $0x78] sm:$0xff]
    %v2420 = vld [vmem:[%s2403 + $0x80] sm:$0xff]
    %v2421 = vld [vmem:[%s2403 + $0x88] sm:$0xff]
    %v2422 = vld [vmem:[%s2403 + $0x90] sm:$0xff]
    %v2423 = vld [vmem:[%s2403 + $0x98] sm:$0xff]
    %v2424 = vld [vmem:[%s2403 + $0xa0] sm:$0xff]
    %v2425 = vld [vmem:[%s2403 + $0xa8] sm:$0xff]
    %v2426 = vld [vmem:[%s2403 + $0xb0] sm:$0xff]
    %v2427 = vld [vmem:[%s2403 + $0xb8] sm:$0xff]
    %v2428 = vld [vmem:[%s2403 + $0xc0] sm:$0xff]
    %v2429 = vld [vmem:[%s2403 + $0xc8] sm:$0xff]
    %v2430 = vld [vmem:[%s2403 + $0xd0] sm:$0xff]
    %v2431 = vld [vmem:[%s2403 + $0xd8] sm:$0xff]
    %v2432 = vld [vmem:[%s2403 + $0xe0] sm:$0xff]
    %v2433 = vld [vmem:[%s2403 + $0xe8] sm:$0xff]
    %v2434 = vld [vmem:[%s2403 + $0xf0] sm:$0xff]
    %v2435 = vld [vmem:[%s2403 + $0xf8] sm:$0xff]
    %v2436 = vld [vmem:[%s2403 + $0x100] sm:$0xff]
    %v2437 = vld [vmem:[%s2403 + $0x108] sm:$0xff]
    %v2438 = vld [vmem:[%s2403 + $0x110] sm:$0xff]
    %v2439 = vld [vmem:[%s2403 + $0x118] sm:$0xff]
    %v2440 = vld [vmem:[%s2403 + $0x120] sm:$0xff]
    %v2441 = vld [vmem:[%s2403 + $0x128] sm:$0xff]
    %v2442 = vld [vmem:[%s2403 + $0x130] sm:$0xff]
    %v2443 = vld [vmem:[%s2403 + $0x138] sm:$0xff]
    %v2444 = vld [vmem:[%s2403 + $0x140] sm:$0xff]
    %v2445 = vld [vmem:[%s2403 + $0x148] sm:$0xff]
    %v2446 = vld [vmem:[%s2403 + $0x150] sm:$0xff]
    %v2447 = vld [vmem:[%s2403 + $0x158] sm:$0xff]
    %v2448 = vld [vmem:[%s2403 + $0x160] sm:$0xff]
    %v2449 = vld [vmem:[%s2403 + $0x168] sm:$0xff]
    %v2450 = vld [vmem:[%s2403 + $0x170] sm:$0xff]
    %v2451 = vld [vmem:[%s2403 + $0x178] sm:$0xff]
    %v2452 = vld [vmem:[%s2403 + $0x180] sm:$0xff]
    %v2453 = vld [vmem:[%s2403 + $0x188] sm:$0xff]
    %v2454 = vld [vmem:[%s2403 + $0x190] sm:$0xff]
    %v2455 = vld [vmem:[%s2403 + $0x198] sm:$0xff]
    %v2456 = vld [vmem:[%s2403 + $0x1a0] sm:$0xff]
    %v2457 = vld [vmem:[%s2403 + $0x1a8] sm:$0xff]
    %v2458 = vld [vmem:[%s2403 + $0x1b0] sm:$0xff]
    %v2459 = vld [vmem:[%s2403 + $0x1b8] sm:$0xff]
    %v2460 = vld [vmem:[%s2403 + $0x1c0] sm:$0xff]
    %v2461 = vld [vmem:[%s2403 + $0x1c8] sm:$0xff]
    %v2462 = vld [vmem:[%s2403 + $0x1d0] sm:$0xff]
    %v2463 = vld [vmem:[%s2403 + $0x1d8] sm:$0xff]
    %v2464 = vld [vmem:[%s2403 + $0x1e0] sm:$0xff]
    %v2465 = vld [vmem:[%s2403 + $0x1e8] sm:$0xff]
    %v2466 = vld [vmem:[%s2403 + $0x1f0] sm:$0xff]
    %v2467 = vld [vmem:[%s2403 + $0x1f8] sm:$0xff]
    %s2468 = scalar_lea.vmem %s3, 4
    %v2469 = vld [vmem:[%s2468] sm:$0xf]
    %v2471 = vlaneseq
    %v2472 = vshrl.u32 %v2471, 7
    %v2473 = vsub.s32 0, %v2472
    %v2474 = vrot.slane %v2469, %v2473
    %v2475 = vlaneseq
    %v2476 = vshrl.u32 %v2475, 7
    %v2477 = vsub.s32 1, %v2476
    %v2478 = vrot.slane %v2469, %v2477
    %v2479 = vlaneseq
    %v2480 = vshrl.u32 %v2479, 7
    %v2481 = vsub.s32 2, %v2480
    %v2482 = vrot.slane %v2469, %v2481
    %v2483 = vlaneseq
    %v2484 = vshrl.u32 %v2483, 7
    %v2485 = vsub.s32 3, %v2484
    %v2486 = vrot.slane %v2469, %v2485
    %2491 = vmatprep.subr.mxu0 %v2405
    %2492 = vmatpush1.msra.mxu0 %v2404
    %2493 = vmatprep.subr.mxu0 %v2409
    %2494 = vmatpush1.msra.mxu0 %v2408
    %2495 = vmatprep.subr.mxu0 %v2413
    %2496 = vmatpush1.msra.mxu0 %v2412
    %2497 = vmatprep.subr.mxu0 %v2417
    %2498 = vmatpush1.msra.mxu0 %v2416
    %2499 = vmatprep.subr.mxu0 %v2421
    %2500 = vmatpush1.msra.mxu0 %v2420
    %2501 = vmatprep.subr.mxu0 %v2425
    %2502 = vmatpush1.msra.mxu0 %v2424
    %2503 = vmatprep.subr.mxu0 %v2429
    %2504 = vmatpush1.msra.mxu0 %v2428
    %2505 = vmatprep.subr.mxu0 %v2433
    %2506 = vmatpush1.msra.mxu0 %v2432
    %2507 = vmatprep.subr.mxu0 %v2437
    %2508 = vmatpush1.msra.mxu0 %v2436
    %2509 = vmatprep.subr.mxu0 %v2441
    %2510 = vmatpush1.msra.mxu0 %v2440
    %2511 = vmatprep.subr.mxu0 %v2445
    %2512 = vmatpush1.msra.mxu0 %v2444
    %2513 = vmatprep.subr.mxu0 %v2449
    %2514 = vmatpush1.msra.mxu0 %v2448
    %2515 = vmatprep.subr.mxu0 %v2453
    %2516 = vmatpush1.msra.mxu0 %v2452
    %2517 = vmatprep.subr.mxu0 %v2457
    %2518 = vmatpush1.msra.mxu0 %v2456
    %2519 = vmatprep.subr.mxu0 %v2461
    %2520 = vmatpush1.msra.mxu0 %v2460
    %2521 = vmatprep.subr.mxu0 %v2465
    %2522 = vmatpush1.msra.mxu0 %v2464
    %2523 = vmatprep.subr.mxu0 0.0
    %2524 = vmatpush1.msra.mxu0 0.0
    %2525 = vmatprep.subr.mxu0 0.0
    %2526 = vmatpush1.msra.mxu0 0.0
    %2527 = vmatprep.subr.mxu0 0.0
    %2528 = vmatpush1.msra.mxu0 0.0
    %2529 = vmatprep.subr.mxu0 0.0
    %2530 = vmatpush1.msra.mxu0 0.0
    %2531 = vmatprep.subr.mxu0 0.0
    %2532 = vmatpush1.msra.mxu0 0.0
    %2533 = vmatprep.subr.mxu0 0.0
    %2534 = vmatpush1.msra.mxu0 0.0
    %2535 = vmatprep.subr.mxu0 0.0
    %2536 = vmatpush1.msra.mxu0 0.0
    %2537 = vmatprep.subr.mxu0 0.0
    %2538 = vmatpush1.msra.mxu0 0.0
    %2539 = vmatprep.subr.mxu0 0.0
    %2540 = vmatpush1.msra.mxu0 0.0
    %2541 = vmatprep.subr.mxu0 0.0
    %2542 = vmatpush1.msra.mxu0 0.0
    %2543 = vmatprep.subr.mxu0 0.0
    %2544 = vmatpush1.msra.mxu0 0.0
    %2545 = vmatprep.subr.mxu0 0.0
    %2546 = vmatpush1.msra.mxu0 0.0
    %2547 = vmatprep.subr.mxu0 0.0
    %2548 = vmatpush1.msra.mxu0 0.0
    %2549 = vmatprep.subr.mxu0 0.0
    %2550 = vmatpush1.msra.mxu0 0.0
    %2551 = vmatprep.subr.mxu0 0.0
    %2552 = vmatpush1.msra.mxu0 0.0
    %2553 = vmatprep.subr.mxu0 0.0
    %2554 = vmatpush1.msra.mxu0 0.0
    %2555 = vmatprep.mubr.f32.mxu0 0.0
    %2556 = vmatmul.mubr.f32.gmra.mrb[0].mxu0 %v2395
    %v2557 = vpop.f32.mrb[0].mxu0
    %v2558 = vadd.f32 %v2474, %v2557
    %v2559 = vpop.f32.mrb[0].mxu0
    %v2560 = vadd.f32 %v2478, %v2559
    %2561 = vmatprep.mubr.f32.mxu0 0.0
    %2562 = vmatmul.mubr.f32.gmra.mrb[0].mxu0 %v2396
    %v2563 = vpop.f32.mrb[0].mxu0
    %v2564 = vadd.f32 %v2474, %v2563
    %v2565 = vpop.f32.mrb[0].mxu0
    %v2566 = vadd.f32 %v2478, %v2565
    %2567 = vmatprep.mubr.f32.mxu0 0.0
    %2568 = vmatmul.mubr.f32.gmra.mrb[0].mxu0 %v2397
    %v2569 = vpop.f32.mrb[0].mxu0
    %v2570 = vadd.f32 %v2474, %v2569
    %v2571 = vpop.f32.mrb[0].mxu0
    %v2572 = vadd.f32 %v2478, %v2571
    %2573 = vmatprep.mubr.f32.mxu0 0.0
    %2574 = vmatmul.mubr.f32.gmra.mrb[0].mxu0 %v2398
    %v2575 = vpop.f32.mrb[0].mxu0
    %v2576 = vadd.f32 %v2474, %v2575
    %v2577 = vpop.f32.mrb[0].mxu0
    %v2578 = vadd.f32 %v2478, %v2577
    %2579 = vmatprep.mubr.f32.mxu0 0.0
    %2580 = vmatmul.mubr.f32.gmra.mrb[0].mxu0 %v2399
    %v2581 = vpop.f32.mrb[0].mxu0
    %v2582 = vadd.f32 %v2474, %v2581
    %v2583 = vpop.f32.mrb[0].mxu0
    %v2584 = vadd.f32 %v2478, %v2583
    %2585 = vmatprep.mubr.f32.mxu0 0.0
    %2586 = vmatmul.mubr.f32.gmra.mrb[0].mxu0 %v2400
    %v2587 = vpop.f32.mrb[0].mxu0
    %v2588 = vadd.f32 %v2474, %v2587
    %v2589 = vpop.f32.mrb[0].mxu0
    %v2590 = vadd.f32 %v2478, %v2589
    %2591 = vmatprep.mubr.f32.mxu0 0.0
    %2592 = vmatmul.mubr.f32.gmra.mrb[0].mxu0 %v2401
    %v2593 = vpop.f32.mrb[0].mxu0
    %v2594 = vadd.f32 %v2474, %v2593
    %v2595 = vpop.f32.mrb[0].mxu0
    %v2596 = vadd.f32 %v2478, %v2595
    %2597 = vmatprep.mubr.f32.mxu0 0.0
    %2598 = vmatmul.mubr.f32.gmra.mrb[0].mxu0 %v2402
    %v2599 = vpop.f32.mrb[0].mxu0
    %v2600 = vadd.f32 %v2474, %v2599
    %v2601 = vpop.f32.mrb[0].mxu0
    %v2602 = vadd.f32 %v2478, %v2601
    %2603 = vdwg.mxu0
    %2604 = vmatprep.subr.mxu0 %v2407
    %2605 = vmatpush1.msra.mxu0 %v2406
    %2606 = vmatprep.subr.mxu0 %v2411
    %2607 = vmatpush1.msra.mxu0 %v2410
    %2608 = vmatprep.subr.mxu0 %v2415
    %2609 = vmatpush1.msra.mxu0 %v2414
    %2610 = vmatprep.subr.mxu0 %v2419
    %2611 = vmatpush1.msra.mxu0 %v2418
    %2612 = vmatprep.subr.mxu0 %v2423
    %2613 = vmatpush1.msra.mxu0 %v2422
    %2614 = vmatprep.subr.mxu0 %v2427
    %2615 = vmatpush1.msra.mxu0 %v2426
    %2616 = vmatprep.subr.mxu0 %v2431
    %2617 = vmatpush1.msra.mxu0 %v2430
    %2618 = vmatprep.subr.mxu0 %v2435
    %2619 = vmatpush1.msra.mxu0 %v2434
    %2620 = vmatprep.subr.mxu0 %v2439
    %2621 = vmatpush1.msra.mxu0 %v2438
    %2622 = vmatprep.subr.mxu0 %v2443
    %2623 = vmatpush1.msra.mxu0 %v2442
    %2624 = vmatprep.subr.mxu0 %v2447
    %2625 = vmatpush1.msra.mxu0 %v2446
    %2626 = vmatprep.subr.mxu0 %v2451
    %2627 = vmatpush1.msra.mxu0 %v2450
    %2628 = vmatprep.subr.mxu0 %v2455
    %2629 = vmatpush1.msra.mxu0 %v2454
    %2630 = vmatprep.subr.mxu0 %v2459
    %2631 = vmatpush1.msra.mxu0 %v2458
    %2632 = vmatprep.subr.mxu0 %v2463
    %2633 = vmatpush1.msra.mxu0 %v2462
    %2634 = vmatprep.subr.mxu0 %v2467
    %2635 = vmatpush1.msra.mxu0 %v2466
    %2636 = vmatprep.subr.mxu0 0.0
    %2637 = vmatpush1.msra.mxu0 0.0
    %2638 = vmatprep.subr.mxu0 0.0
    %2639 = vmatpush1.msra.mxu0 0.0
    %2640 = vmatprep.subr.mxu0 0.0
    %2641 = vmatpush1.msra.mxu0 0.0
    %2642 = vmatprep.subr.mxu0 0.0
    %2643 = vmatpush1.msra.mxu0 0.0
    %2644 = vmatprep.subr.mxu0 0.0
    %2645 = vmatpush1.msra.mxu0 0.0
    %2646 = vmatprep.subr.mxu0 0.0
    %2647 = vmatpush1.msra.mxu0 0.0
    %2648 = vmatprep.subr.mxu0 0.0
    %2649 = vmatpush1.msra.mxu0 0.0
    %2650 = vmatprep.subr.mxu0 0.0
    %2651 = vmatpush1.msra.mxu0 0.0
    %2652 = vmatprep.subr.mxu0 0.0
    %2653 = vmatpush1.msra.mxu0 0.0
    %2654 = vmatprep.subr.mxu0 0.0
    %2655 = vmatpush1.msra.mxu0 0.0
    %2656 = vmatprep.subr.mxu0 0.0
    %2657 = vmatpush1.msra.mxu0 0.0
    %2658 = vmatprep.subr.mxu0 0.0
    %2659 = vmatpush1.msra.mxu0 0.0
    %2660 = vmatprep.subr.mxu0 0.0
    %2661 = vmatpush1.msra.mxu0 0.0
    %2662 = vmatprep.subr.mxu0 0.0
    %2663 = vmatpush1.msra.mxu0 0.0
    %2664 = vmatprep.subr.mxu0 0.0
    %2665 = vmatpush1.msra.mxu0 0.0
    %2666 = vmatprep.subr.mxu0 0.0
    %2667 = vmatpush1.msra.mxu0 0.0
    %2668 = vmatprep.mubr.f32.mxu0 0.0
    %2669 = vmatmul.mubr.f32.gmra.mrb[0].mxu0 %v2395
    %v2670 = vpop.f32.mrb[0].mxu0
    %v2671 = vadd.f32 %v2482, %v2670
    %v2672 = vpop.f32.mrb[0].mxu0
    %v2673 = vadd.f32 %v2486, %v2672
    %2674 = vmatprep.mubr.f32.mxu0 0.0
    %2675 = vmatmul.mubr.f32.gmra.mrb[0].mxu0 %v2396
    %v2676 = vpop.f32.mrb[0].mxu0
    %v2677 = vadd.f32 %v2482, %v2676
    %v2678 = vpop.f32.mrb[0].mxu0
    %v2679 = vadd.f32 %v2486, %v2678
    %2680 = vmatprep.mubr.f32.mxu0 0.0
    %2681 = vmatmul.mubr.f32.gmra.mrb[0].mxu0 %v2397
    %v2682 = vpop.f32.mrb[0].mxu0
    %v2683 = vadd.f32 %v2482, %v2682
    %v2684 = vpop.f32.mrb[0].mxu0
    %v2685 = vadd.f32 %v2486, %v2684
    %2686 = vmatprep.mubr.f32.mxu0 0.0
    %2687 = vmatmul.mubr.f32.gmra.mrb[0].mxu0 %v2398
    %v2688 = vpop.f32.mrb[0].mxu0
    %v2689 = vadd.f32 %v2482, %v2688
    %v2690 = vpop.f32.mrb[0].mxu0
    %v2691 = vadd.f32 %v2486, %v2690
    %2692 = vmatprep.mubr.f32.mxu0 0.0
    %2693 = vmatmul.mubr.f32.gmra.mrb[0].mxu0 %v2399
    %v2694 = vpop.f32.mrb[0].mxu0
    %v2695 = vadd.f32 %v2482, %v2694
    %v2696 = vpop.f32.mrb[0].mxu0
    %v2697 = vadd.f32 %v2486, %v2696
    %2698 = vmatprep.mubr.f32.mxu0 0.0
    %2699 = vmatmul.mubr.f32.gmra.mrb[0].mxu0 %v2400
    %v2700 = vpop.f32.mrb[0].mxu0
    %v2701 = vadd.f32 %v2482, %v2700
    %v2702 = vpop.f32.mrb[0].mxu0
    %v2703 = vadd.f32 %v2486, %v2702
    %2704 = vmatprep.mubr.f32.mxu0 0.0
    %2705 = vmatmul.mubr.f32.gmra.mrb[0].mxu0 %v2401
    %v2706 = vpop.f32.mrb[0].mxu0
    %v2707 = vadd.f32 %v2482, %v2706
    %v2708 = vpop.f32.mrb[0].mxu0
    %v2709 = vadd.f32 %v2486, %v2708
    %2710 = vmatprep.mubr.f32.mxu0 0.0
    %2711 = vmatmul.mubr.f32.gmra.mrb[0].mxu0 %v2402
    %v2712 = vpop.f32.mrb[0].mxu0
    %v2713 = vadd.f32 %v2482, %v2712
    %v2714 = vpop.f32.mrb[0].mxu0
    %v2715 = vadd.f32 %v2486, %v2714
    %2716 = vdwg.mxu0
    %2717 = vst [vmem:[#allocation3] sm:$0xff] %v2558
    %2718 = vst [vmem:[#allocation3 + $0x8] sm:$0xff] %v2560
    %2719 = vst [vmem:[#allocation3 + $0x10] sm:$0xff] %v2671
    %2720 = vst [vmem:[#allocation3 + $0x18] sm:$0xff] %v2673
    %2721 = vst [vmem:[#allocation3 + $0x20] sm:$0xff] %v2564
    %2722 = vst [vmem:[#allocation3 + $0x28] sm:$0xff] %v2566
    %2723 = vst [vmem:[#allocation3 + $0x30] sm:$0xff] %v2677
    %2724 = vst [vmem:[#allocation3 + $0x38] sm:$0xff] %v2679
    %2725 = vst [vmem:[#allocation3 + $0x40] sm:$0xff] %v2570
    %2726 = vst [vmem:[#allocation3 + $0x48] sm:$0xff] %v2572
    %2727 = vst [vmem:[#allocation3 + $0x50] sm:$0xff] %v2683
    %2728 = vst [vmem:[#allocation3 + $0x58] sm:$0xff] %v2685
    %2729 = vst [vmem:[#allocation3 + $0x60] sm:$0xff] %v2576
    %2730 = vst [vmem:[#allocation3 + $0x68] sm:$0xff] %v2578
    %2731 = vst [vmem:[#allocation3 + $0x70] sm:$0xff] %v2689
    %2732 = vst [vmem:[#allocation3 + $0x78] sm:$0xff] %v2691
    %2733 = vst [vmem:[#allocation3 + $0x80] sm:$0xff] %v2582
    %2734 = vst [vmem:[#allocation3 + $0x88] sm:$0xff] %v2584
    %2735 = vst [vmem:[#allocation3 + $0x90] sm:$0xff] %v2695
    %2736 = vst [vmem:[#allocation3 + $0x98] sm:$0xff] %v2697
    %2737 = vst [vmem:[#allocation3 + $0xa0] sm:$0xff] %v2588
    %2738 = vst [vmem:[#allocation3 + $0xa8] sm:$0xff] %v2590
    %2739 = vst [vmem:[#allocation3 + $0xb0] sm:$0xff] %v2701
    %2740 = vst [vmem:[#allocation3 + $0xb8] sm:$0xff] %v2703
    %2741 = vst [vmem:[#allocation3 + $0xc0] sm:$0xff] %v2594
    %2742 = vst [vmem:[#allocation3 + $0xc8] sm:$0xff] %v2596
    %2743 = vst [vmem:[#allocation3 + $0xd0] sm:$0xff] %v2707
    %2744 = vst [vmem:[#allocation3 + $0xd8] sm:$0xff] %v2709
    %2745 = vst [vmem:[#allocation3 + $0xe0] sm:$0xff] %v2600
    %2746 = vst [vmem:[#allocation3 + $0xe8] sm:$0xff] %v2602
    %2747 = vst [vmem:[#allocation3 + $0xf0] sm:$0xff] %v2713
    %2748 = vst [vmem:[#allocation3 + $0xf8] sm:$0xff] %v2715
    %s2749 = scalar_lea.vmem %s4, 8
    %v2750 = vld [vmem:[%s2749] sm:$0xff]
    %2751 = vst [vmem:[#allocation4] sm:$0xff] %v2750
    %s2752 = scalar_lea.vmem %s5, 8
    %v2753 = vld [vmem:[%s2752] sm:$0xff]
    %2754 = vst [vmem:[#allocation5] sm:$0xff] %v2753
    %v2755 = vld [vmem:[#allocation4] sm:$0xff]
    %v2756 = vld [vmem:[#allocation5] sm:$0xff]
    %v2757 = vld [vmem:[%s420] sm:$0xff]
    %v2758 = vld [vmem:[%s420 + $0x8] sm:$0xff]
    %v2759 = vld [vmem:[%s420 + $0x10] sm:$0xff]
    %v2760 = vld [vmem:[%s420 + $0x18] sm:$0xff]
    %s2761 = scalar_lea.vmem [#allocation8], 512
    %v2762 = vld [vmem:[%s2761] sm:$0xff]
    %v2763 = vld [vmem:[%s2761 + $0x8] sm:$0xff]
    %v2764 = vld [vmem:[%s2761 + $0x10] sm:$0xff]
    %v2765 = vld [vmem:[%s2761 + $0x18] sm:$0xff]
    %v2766 = vld [vmem:[%s2761 + $0x20] sm:$0xff]
    %v2767 = vld [vmem:[%s2761 + $0x28] sm:$0xff]
    %v2768 = vld [vmem:[%s2761 + $0x30] sm:$0xff]
    %v2769 = vld [vmem:[%s2761 + $0x38] sm:$0xff]
    %v2770 = vld [vmem:[%s2761 + $0x40] sm:$0xff]
    %v2771 = vld [vmem:[%s2761 + $0x48] sm:$0xff]
    %v2772 = vld [vmem:[%s2761 + $0x50] sm:$0xff]
    %v2773 = vld [vmem:[%s2761 + $0x58] sm:$0xff]
    %v2774 = vld [vmem:[%s2761 + $0x60] sm:$0xff]
    %v2775 = vld [vmem:[%s2761 + $0x68] sm:$0xff]
    %v2776 = vld [vmem:[%s2761 + $0x70] sm:$0xff]
    %v2777 = vld [vmem:[%s2761 + $0x78] sm:$0xff]
    %v2778 = vld [vmem:[%s2761 + $0x80] sm:$0xff]
    %v2779 = vld [vmem:[%s2761 + $0x88] sm:$0xff]
    %v2780 = vld [vmem:[%s2761 + $0x90] sm:$0xff]
    %v2781 = vld [vmem:[%s2761 + $0x98] sm:$0xff]
    %v2782 = vld [vmem:[%s2761 + $0xa0] sm:$0xff]
    %v2783 = vld [vmem:[%s2761 + $0xa8] sm:$0xff]
    %v2784 = vld [vmem:[%s2761 + $0xb0] sm:$0xff]
    %v2785 = vld [vmem:[%s2761 + $0xb8] sm:$0xff]
    %v2786 = vld [vmem:[%s2761 + $0xc0] sm:$0xff]
    %v2787 = vld [vmem:[%s2761 + $0xc8] sm:$0xff]
    %v2788 = vld [vmem:[%s2761 + $0xd0] sm:$0xff]
    %v2789 = vld [vmem:[%s2761 + $0xd8] sm:$0xff]
    %v2790 = vld [vmem:[%s2761 + $0xe0] sm:$0xff]
    %v2791 = vld [vmem:[%s2761 + $0xe8] sm:$0xff]
    %v2792 = vld [vmem:[%s2761 + $0xf0] sm:$0xff]
    %v2793 = vld [vmem:[%s2761 + $0xf8] sm:$0xff]
    %v2794 = vld [vmem:[%s2761 + $0x100] sm:$0xff]
    %v2795 = vld [vmem:[%s2761 + $0x108] sm:$0xff]
    %v2796 = vld [vmem:[%s2761 + $0x110] sm:$0xff]
    %v2797 = vld [vmem:[%s2761 + $0x118] sm:$0xff]
    %v2798 = vld [vmem:[%s2761 + $0x120] sm:$0xff]
    %v2799 = vld [vmem:[%s2761 + $0x128] sm:$0xff]
    %v2800 = vld [vmem:[%s2761 + $0x130] sm:$0xff]
    %v2801 = vld [vmem:[%s2761 + $0x138] sm:$0xff]
    %v2802 = vld [vmem:[%s2761 + $0x140] sm:$0xff]
    %v2803 = vld [vmem:[%s2761 + $0x148] sm:$0xff]
    %v2804 = vld [vmem:[%s2761 + $0x150] sm:$0xff]
    %v2805 = vld [vmem:[%s2761 + $0x158] sm:$0xff]
    %v2806 = vld [vmem:[%s2761 + $0x160] sm:$0xff]
    %v2807 = vld [vmem:[%s2761 + $0x168] sm:$0xff]
    %v2808 = vld [vmem:[%s2761 + $0x170] sm:$0xff]
    %v2809 = vld [vmem:[%s2761 + $0x178] sm:$0xff]
    %v2810 = vld [vmem:[%s2761 + $0x180] sm:$0xff]
    %v2811 = vld [vmem:[%s2761 + $0x188] sm:$0xff]
    %v2812 = vld [vmem:[%s2761 + $0x190] sm:$0xff]
    %v2813 = vld [vmem:[%s2761 + $0x198] sm:$0xff]
    %v2814 = vld [vmem:[%s2761 + $0x1a0] sm:$0xff]
    %v2815 = vld [vmem:[%s2761 + $0x1a8] sm:$0xff]
    %v2816 = vld [vmem:[%s2761 + $0x1b0] sm:$0xff]
    %v2817 = vld [vmem:[%s2761 + $0x1b8] sm:$0xff]
    %v2818 = vld [vmem:[%s2761 + $0x1c0] sm:$0xff]
    %v2819 = vld [vmem:[%s2761 + $0x1c8] sm:$0xff]
    %v2820 = vld [vmem:[%s2761 + $0x1d0] sm:$0xff]
    %v2821 = vld [vmem:[%s2761 + $0x1d8] sm:$0xff]
    %v2822 = vld [vmem:[%s2761 + $0x1e0] sm:$0xff]
    %v2823 = vld [vmem:[%s2761 + $0x1e8] sm:$0xff]
    %v2824 = vld [vmem:[%s2761 + $0x1f0] sm:$0xff]
    %v2825 = vld [vmem:[%s2761 + $0x1f8] sm:$0xff]
    %2826 = vmatprep.subr.mxu0 %v2763
    %2827 = vmatpush1.msra.mxu0 %v2762
    %2828 = vmatprep.subr.mxu0 %v2767
    %2829 = vmatpush1.msra.mxu0 %v2766
    %2830 = vmatprep.subr.mxu0 %v2771
    %2831 = vmatpush1.msra.mxu0 %v2770
    %2832 = vmatprep.subr.mxu0 %v2775
    %2833 = vmatpush1.msra.mxu0 %v2774
    %2834 = vmatprep.subr.mxu0 %v2779
    %2835 = vmatpush1.msra.mxu0 %v2778
    %2836 = vmatprep.subr.mxu0 %v2783
    %2837 = vmatpush1.msra.mxu0 %v2782
    %2838 = vmatprep.subr.mxu0 %v2787
    %2839 = vmatpush1.msra.mxu0 %v2786
    %2840 = vmatprep.subr.mxu0 %v2791
    %2841 = vmatpush1.msra.mxu0 %v2790
    %2842 = vmatprep.subr.mxu0 %v2795
    %2843 = vmatpush1.msra.mxu0 %v2794
    %2844 = vmatprep.subr.mxu0 %v2799
    %2845 = vmatpush1.msra.mxu0 %v2798
    %2846 = vmatprep.subr.mxu0 %v2803
    %2847 = vmatpush1.msra.mxu0 %v2802
    %2848 = vmatprep.subr.mxu0 %v2807
    %2849 = vmatpush1.msra.mxu0 %v2806
    %2850 = vmatprep.subr.mxu0 %v2811
    %2851 = vmatpush1.msra.mxu0 %v2810
    %2852 = vmatprep.subr.mxu0 %v2815
    %2853 = vmatpush1.msra.mxu0 %v2814
    %2854 = vmatprep.subr.mxu0 %v2819
    %2855 = vmatpush1.msra.mxu0 %v2818
    %2856 = vmatprep.subr.mxu0 %v2823
    %2857 = vmatpush1.msra.mxu0 %v2822
    %2858 = vmatprep.subr.mxu0 0.0
    %2859 = vmatpush1.msra.mxu0 0.0
    %2860 = vmatprep.subr.mxu0 0.0
    %2861 = vmatpush1.msra.mxu0 0.0
    %2862 = vmatprep.subr.mxu0 0.0
    %2863 = vmatpush1.msra.mxu0 0.0
    %2864 = vmatprep.subr.mxu0 0.0
    %2865 = vmatpush1.msra.mxu0 0.0
    %2866 = vmatprep.subr.mxu0 0.0
    %2867 = vmatpush1.msra.mxu0 0.0
    %2868 = vmatprep.subr.mxu0 0.0
    %2869 = vmatpush1.msra.mxu0 0.0
    %2870 = vmatprep.subr.mxu0 0.0
    %2871 = vmatpush1.msra.mxu0 0.0
    %2872 = vmatprep.subr.mxu0 0.0
    %2873 = vmatpush1.msra.mxu0 0.0
    %2874 = vmatprep.subr.mxu0 0.0
    %2875 = vmatpush1.msra.mxu0 0.0
    %2876 = vmatprep.subr.mxu0 0.0
    %2877 = vmatpush1.msra.mxu0 0.0
    %2878 = vmatprep.subr.mxu0 0.0
    %2879 = vmatpush1.msra.mxu0 0.0
    %2880 = vmatprep.subr.mxu0 0.0
    %2881 = vmatpush1.msra.mxu0 0.0
    %2882 = vmatprep.subr.mxu0 0.0
    %2883 = vmatpush1.msra.mxu0 0.0
    %2884 = vmatprep.subr.mxu0 0.0
    %2885 = vmatpush1.msra.mxu0 0.0
    %2886 = vmatprep.subr.mxu0 0.0
    %2887 = vmatpush1.msra.mxu0 0.0
    %2888 = vmatprep.subr.mxu0 0.0
    %2889 = vmatpush1.msra.mxu0 0.0
    %2890 = vmatprep.mubr.f32.mxu0 0.0
    %2891 = vmatmul.mubr.f32.gmra.mrb[0].mxu0 %v2755
    %v2892 = vpop.f32.mrb[0].mxu0
    %v2893 = vadd.f32 0.0, %v2892
    %v2894 = vpop.f32.mrb[0].mxu0
    %v2895 = vadd.f32 0.0, %v2894
    %2896 = vdwg.mxu0
    %2897 = vmatprep.subr.mxu0 %v2765
    %2898 = vmatpush1.msra.mxu0 %v2764
    %2899 = vmatprep.subr.mxu0 %v2769
    %2900 = vmatpush1.msra.mxu0 %v2768
    %2901 = vmatprep.subr.mxu0 %v2773
    %2902 = vmatpush1.msra.mxu0 %v2772
    %2903 = vmatprep.subr.mxu0 %v2777
    %2904 = vmatpush1.msra.mxu0 %v2776
    %2905 = vmatprep.subr.mxu0 %v2781
    %2906 = vmatpush1.msra.mxu0 %v2780
    %2907 = vmatprep.subr.mxu0 %v2785
    %2908 = vmatpush1.msra.mxu0 %v2784
    %2909 = vmatprep.subr.mxu0 %v2789
    %2910 = vmatpush1.msra.mxu0 %v2788
    %2911 = vmatprep.subr.mxu0 %v2793
    %2912 = vmatpush1.msra.mxu0 %v2792
    %2913 = vmatprep.subr.mxu0 %v2797
    %2914 = vmatpush1.msra.mxu0 %v2796
    %2915 = vmatprep.subr.mxu0 %v2801
    %2916 = vmatpush1.msra.mxu0 %v2800
    %2917 = vmatprep.subr.mxu0 %v2805
    %2918 = vmatpush1.msra.mxu0 %v2804
    %2919 = vmatprep.subr.mxu0 %v2809
    %2920 = vmatpush1.msra.mxu0 %v2808
    %2921 = vmatprep.subr.mxu0 %v2813
    %2922 = vmatpush1.msra.mxu0 %v2812
    %2923 = vmatprep.subr.mxu0 %v2817
    %2924 = vmatpush1.msra.mxu0 %v2816
    %2925 = vmatprep.subr.mxu0 %v2821
    %2926 = vmatpush1.msra.mxu0 %v2820
    %2927 = vmatprep.subr.mxu0 %v2825
    %2928 = vmatpush1.msra.mxu0 %v2824
    %2929 = vmatprep.subr.mxu0 0.0
    %2930 = vmatpush1.msra.mxu0 0.0
    %2931 = vmatprep.subr.mxu0 0.0
    %2932 = vmatpush1.msra.mxu0 0.0
    %2933 = vmatprep.subr.mxu0 0.0
    %2934 = vmatpush1.msra.mxu0 0.0
    %2935 = vmatprep.subr.mxu0 0.0
    %2936 = vmatpush1.msra.mxu0 0.0
    %2937 = vmatprep.subr.mxu0 0.0
    %2938 = vmatpush1.msra.mxu0 0.0
    %2939 = vmatprep.subr.mxu0 0.0
    %2940 = vmatpush1.msra.mxu0 0.0
    %2941 = vmatprep.subr.mxu0 0.0
    %2942 = vmatpush1.msra.mxu0 0.0
    %2943 = vmatprep.subr.mxu0 0.0
    %2944 = vmatpush1.msra.mxu0 0.0
    %2945 = vmatprep.subr.mxu0 0.0
    %2946 = vmatpush1.msra.mxu0 0.0
    %2947 = vmatprep.subr.mxu0 0.0
    %2948 = vmatpush1.msra.mxu0 0.0
    %2949 = vmatprep.subr.mxu0 0.0
    %2950 = vmatpush1.msra.mxu0 0.0
    %2951 = vmatprep.subr.mxu0 0.0
    %2952 = vmatpush1.msra.mxu0 0.0
    %2953 = vmatprep.subr.mxu0 0.0
    %2954 = vmatpush1.msra.mxu0 0.0
    %2955 = vmatprep.subr.mxu0 0.0
    %2956 = vmatpush1.msra.mxu0 0.0
    %2957 = vmatprep.subr.mxu0 0.0
    %2958 = vmatpush1.msra.mxu0 0.0
    %2959 = vmatprep.subr.mxu0 0.0
    %2960 = vmatpush1.msra.mxu0 0.0
    %2961 = vmatprep.mubr.f32.mxu0 0.0
    %2962 = vmatmul.mubr.f32.gmra.mrb[0].mxu0 %v2755
    %v2963 = vpop.f32.mrb[0].mxu0
    %v2964 = vadd.f32 0.0, %v2963
    %v2965 = vpop.f32.mrb[0].mxu0
    %v2966 = vadd.f32 0.0, %v2965
    %2967 = vdwg.mxu0
    %v2968 = vadd.f32 %v2757, %v2893
    %v2969 = vadd.f32 %v2758, %v2895
    %v2970 = vadd.f32 %v2759, %v2964
    %v2971 = vadd.f32 %v2760, %v2966
    %v2972 = vxor.u32 %v2968, 2147483648
    %v2973 = vmul.f32 %v2972, 1.442695
    %v2974 = vpow.pop %v2973
    %v2975 = vadd.f32 %v2974, 1.0
    %v2976 = vrcp.pop %v2975
    %v2977 = vmul.f32 1.0, %v2976
    %v2978 = vxor.u32 %v2969, 2147483648
    %v2979 = vmul.f32 %v2978, 1.442695
    %v2980 = vpow.pop %v2979
    %v2981 = vadd.f32 %v2980, 1.0
    %v2982 = vrcp.pop %v2981
    %v2983 = vmul.f32 1.0, %v2982
    %v2984 = vtanh.pop %v2970
    %v2985 = vxor.u32 %v2971, 2147483648
    %v2986 = vmul.f32 %v2985, 1.442695
    %v2987 = vpow.pop %v2986
    %v2988 = vadd.f32 %v2987, 1.0
    %v2989 = vrcp.pop %v2988
    %v2990 = vmul.f32 1.0, %v2989
    %v2991 = vmul.f32 %v2983, %v2756
    %v2992 = vmul.f32 %v2977, %v2984
    %v2993 = vadd.f32 %v2991, %v2992
    %v2994 = vtanh.pop %v2993
    %v2995 = vmul.f32 %v2990, %v2994
    %2996 = vst [vmem:[#allocation4] sm:$0xff] %v2995
    %2997 = vst [vmem:[#allocation5] sm:$0xff] %v2993
    %2998 = vst [vmem:[#allocation2] sm:$0xff] %v2995
    %v2999 = vld [vmem:[#allocation4] sm:$0xff]
    %v3000 = vld [vmem:[#allocation5] sm:$0xff]
    %v3001 = vld [vmem:[%s666] sm:$0xff]
    %v3002 = vld [vmem:[%s666 + $0x8] sm:$0xff]
    %v3003 = vld [vmem:[%s666 + $0x10] sm:$0xff]
    %v3004 = vld [vmem:[%s666 + $0x18] sm:$0xff]
    %v3005 = vld [vmem:[%s2761] sm:$0xff]
    %v3006 = vld [vmem:[%s2761 + $0x8] sm:$0xff]
    %v3007 = vld [vmem:[%s2761 + $0x10] sm:$0xff]
    %v3008 = vld [vmem:[%s2761 + $0x18] sm:$0xff]
    %v3009 = vld [vmem:[%s2761 + $0x20] sm:$0xff]
    %v3010 = vld [vmem:[%s2761 + $0x28] sm:$0xff]
    %v3011 = vld [vmem:[%s2761 + $0x30] sm:$0xff]
    %v3012 = vld [vmem:[%s2761 + $0x38] sm:$0xff]
    %v3013 = vld [vmem:[%s2761 + $0x40] sm:$0xff]
    %v3014 = vld [vmem:[%s2761 + $0x48] sm:$0xff]
    %v3015 = vld [vmem:[%s2761 + $0x50] sm:$0xff]
    %v3016 = vld [vmem:[%s2761 + $0x58] sm:$0xff]
    %v3017 = vld [vmem:[%s2761 + $0x60] sm:$0xff]
    %v3018 = vld [vmem:[%s2761 + $0x68] sm:$0xff]
    %v3019 = vld [vmem:[%s2761 + $0x70] sm:$0xff]
    %v3020 = vld [vmem:[%s2761 + $0x78] sm:$0xff]
    %v3021 = vld [vmem:[%s2761 + $0x80] sm:$0xff]
    %v3022 = vld [vmem:[%s2761 + $0x88] sm:$0xff]
    %v3023 = vld [vmem:[%s2761 + $0x90] sm:$0xff]
    %v3024 = vld [vmem:[%s2761 + $0x98] sm:$0xff]
    %v3025 = vld [vmem:[%s2761 + $0xa0] sm:$0xff]
    %v3026 = vld [vmem:[%s2761 + $0xa8] sm:$0xff]
    %v3027 = vld [vmem:[%s2761 + $0xb0] sm:$0xff]
    %v3028 = vld [vmem:[%s2761 + $0xb8] sm:$0xff]
    %v3029 = vld [vmem:[%s2761 + $0xc0] sm:$0xff]
    %v3030 = vld [vmem:[%s2761 + $0xc8] sm:$0xff]
    %v3031 = vld [vmem:[%s2761 + $0xd0] sm:$0xff]
    %v3032 = vld [vmem:[%s2761 + $0xd8] sm:$0xff]
    %v3033 = vld [vmem:[%s2761 + $0xe0] sm:$0xff]
    %v3034 = vld [vmem:[%s2761 + $0xe8] sm:$0xff]
    %v3035 = vld [vmem:[%s2761 + $0xf0] sm:$0xff]
    %v3036 = vld [vmem:[%s2761 + $0xf8] sm:$0xff]
    %v3037 = vld [vmem:[%s2761 + $0x100] sm:$0xff]
    %v3038 = vld [vmem:[%s2761 + $0x108] sm:$0xff]
    %v3039 = vld [vmem:[%s2761 + $0x110] sm:$0xff]
    %v3040 = vld [vmem:[%s2761 + $0x118] sm:$0xff]
    %v3041 = vld [vmem:[%s2761 + $0x120] sm:$0xff]
    %v3042 = vld [vmem:[%s2761 + $0x128] sm:$0xff]
    %v3043 = vld [vmem:[%s2761 + $0x130] sm:$0xff]
    %v3044 = vld [vmem:[%s2761 + $0x138] sm:$0xff]
    %v3045 = vld [vmem:[%s2761 + $0x140] sm:$0xff]
    %v3046 = vld [vmem:[%s2761 + $0x148] sm:$0xff]
    %v3047 = vld [vmem:[%s2761 + $0x150] sm:$0xff]
    %v3048 = vld [vmem:[%s2761 + $0x158] sm:$0xff]
    %v3049 = vld [vmem:[%s2761 + $0x160] sm:$0xff]
    %v3050 = vld [vmem:[%s2761 + $0x168] sm:$0xff]
    %v3051 = vld [vmem:[%s2761 + $0x170] sm:$0xff]
    %v3052 = vld [vmem:[%s2761 + $0x178] sm:$0xff]
    %v3053 = vld [vmem:[%s2761 + $0x180] sm:$0xff]
    %v3054 = vld [vmem:[%s2761 + $0x188] sm:$0xff]
    %v3055 = vld [vmem:[%s2761 + $0x190] sm:$0xff]
    %v3056 = vld [vmem:[%s2761 + $0x198] sm:$0xff]
    %v3057 = vld [vmem:[%s2761 + $0x1a0] sm:$0xff]
    %v3058 = vld [vmem:[%s2761 + $0x1a8] sm:$0xff]
    %v3059 = vld [vmem:[%s2761 + $0x1b0] sm:$0xff]
    %v3060 = vld [vmem:[%s2761 + $0x1b8] sm:$0xff]
    %v3061 = vld [vmem:[%s2761 + $0x1c0] sm:$0xff]
    %v3062 = vld [vmem:[%s2761 + $0x1c8] sm:$0xff]
    %v3063 = vld [vmem:[%s2761 + $0x1d0] sm:$0xff]
    %v3064 = vld [vmem:[%s2761 + $0x1d8] sm:$0xff]
    %v3065 = vld [vmem:[%s2761 + $0x1e0] sm:$0xff]
    %v3066 = vld [vmem:[%s2761 + $0x1e8] sm:$0xff]
    %v3067 = vld [vmem:[%s2761 + $0x1f0] sm:$0xff]
    %v3068 = vld [vmem:[%s2761 + $0x1f8] sm:$0xff]
    %3069 = vmatprep.subr.mxu0 %v3006
    %3070 = vmatpush1.msra.mxu0 %v3005
    %3071 = vmatprep.subr.mxu0 %v3010
    %3072 = vmatpush1.msra.mxu0 %v3009
    %3073 = vmatprep.subr.mxu0 %v3014
    %3074 = vmatpush1.msra.mxu0 %v3013
    %3075 = vmatprep.subr.mxu0 %v3018
    %3076 = vmatpush1.msra.mxu0 %v3017
    %3077 = vmatprep.subr.mxu0 %v3022
    %3078 = vmatpush1.msra.mxu0 %v3021
    %3079 = vmatprep.subr.mxu0 %v3026
    %3080 = vmatpush1.msra.mxu0 %v3025
    %3081 = vmatprep.subr.mxu0 %v3030
    %3082 = vmatpush1.msra.mxu0 %v3029
    %3083 = vmatprep.subr.mxu0 %v3034
    %3084 = vmatpush1.msra.mxu0 %v3033
    %3085 = vmatprep.subr.mxu0 %v3038
    %3086 = vmatpush1.msra.mxu0 %v3037
    %3087 = vmatprep.subr.mxu0 %v3042
    %3088 = vmatpush1.msra.mxu0 %v3041
    %3089 = vmatprep.subr.mxu0 %v3046
    %3090 = vmatpush1.msra.mxu0 %v3045
    %3091 = vmatprep.subr.mxu0 %v3050
    %3092 = vmatpush1.msra.mxu0 %v3049
    %3093 = vmatprep.subr.mxu0 %v3054
    %3094 = vmatpush1.msra.mxu0 %v3053
    %3095 = vmatprep.subr.mxu0 %v3058
    %3096 = vmatpush1.msra.mxu0 %v3057
    %3097 = vmatprep.subr.mxu0 %v3062
    %3098 = vmatpush1.msra.mxu0 %v3061
    %3099 = vmatprep.subr.mxu0 %v3066
    %3100 = vmatpush1.msra.mxu0 %v3065
    %3101 = vmatprep.subr.mxu0 0.0
    %3102 = vmatpush1.msra.mxu0 0.0
    %3103 = vmatprep.subr.mxu0 0.0
    %3104 = vmatpush1.msra.mxu0 0.0
    %3105 = vmatprep.subr.mxu0 0.0
    %3106 = vmatpush1.msra.mxu0 0.0
    %3107 = vmatprep.subr.mxu0 0.0
    %3108 = vmatpush1.msra.mxu0 0.0
    %3109 = vmatprep.subr.mxu0 0.0
    %3110 = vmatpush1.msra.mxu0 0.0
    %3111 = vmatprep.subr.mxu0 0.0
    %3112 = vmatpush1.msra.mxu0 0.0
    %3113 = vmatprep.subr.mxu0 0.0
    %3114 = vmatpush1.msra.mxu0 0.0
    %3115 = vmatprep.subr.mxu0 0.0
    %3116 = vmatpush1.msra.mxu0 0.0
    %3117 = vmatprep.subr.mxu0 0.0
    %3118 = vmatpush1.msra.mxu0 0.0
    %3119 = vmatprep.subr.mxu0 0.0
    %3120 = vmatpush1.msra.mxu0 0.0
    %3121 = vmatprep.subr.mxu0 0.0
    %3122 = vmatpush1.msra.mxu0 0.0
    %3123 = vmatprep.subr.mxu0 0.0
    %3124 = vmatpush1.msra.mxu0 0.0
    %3125 = vmatprep.subr.mxu0 0.0
    %3126 = vmatpush1.msra.mxu0 0.0
    %3127 = vmatprep.subr.mxu0 0.0
    %3128 = vmatpush1.msra.mxu0 0.0
    %3129 = vmatprep.subr.mxu0 0.0
    %3130 = vmatpush1.msra.mxu0 0.0
    %3131 = vmatprep.subr.mxu0 0.0
    %3132 = vmatpush1.msra.mxu0 0.0
    %3133 = vmatprep.mubr.f32.mxu0 0.0
    %3134 = vmatmul.mubr.f32.gmra.mrb[0].mxu0 %v2999
    %v3135 = vpop.f32.mrb[0].mxu0
    %v3136 = vadd.f32 0.0, %v3135
    %v3137 = vpop.f32.mrb[0].mxu0
    %v3138 = vadd.f32 0.0, %v3137
    %3139 = vdwg.mxu0
    %3140 = vmatprep.subr.mxu0 %v3008
    %3141 = vmatpush1.msra.mxu0 %v3007
    %3142 = vmatprep.subr.mxu0 %v3012
    %3143 = vmatpush1.msra.mxu0 %v3011
    %3144 = vmatprep.subr.mxu0 %v3016
    %3145 = vmatpush1.msra.mxu0 %v3015
    %3146 = vmatprep.subr.mxu0 %v3020
    %3147 = vmatpush1.msra.mxu0 %v3019
    %3148 = vmatprep.subr.mxu0 %v3024
    %3149 = vmatpush1.msra.mxu0 %v3023
    %3150 = vmatprep.subr.mxu0 %v3028
    %3151 = vmatpush1.msra.mxu0 %v3027
    %3152 = vmatprep.subr.mxu0 %v3032
    %3153 = vmatpush1.msra.mxu0 %v3031
    %3154 = vmatprep.subr.mxu0 %v3036
    %3155 = vmatpush1.msra.mxu0 %v3035
    %3156 = vmatprep.subr.mxu0 %v3040
    %3157 = vmatpush1.msra.mxu0 %v3039
    %3158 = vmatprep.subr.mxu0 %v3044
    %3159 = vmatpush1.msra.mxu0 %v3043
    %3160 = vmatprep.subr.mxu0 %v3048
    %3161 = vmatpush1.msra.mxu0 %v3047
    %3162 = vmatprep.subr.mxu0 %v3052
    %3163 = vmatpush1.msra.mxu0 %v3051
    %3164 = vmatprep.subr.mxu0 %v3056
    %3165 = vmatpush1.msra.mxu0 %v3055
    %3166 = vmatprep.subr.mxu0 %v3060
    %3167 = vmatpush1.msra.mxu0 %v3059
    %3168 = vmatprep.subr.mxu0 %v3064
    %3169 = vmatpush1.msra.mxu0 %v3063
    %3170 = vmatprep.subr.mxu0 %v3068
    %3171 = vmatpush1.msra.mxu0 %v3067
    %3172 = vmatprep.subr.mxu0 0.0
    %3173 = vmatpush1.msra.mxu0 0.0
    %3174 = vmatprep.subr.mxu0 0.0
    %3175 = vmatpush1.msra.mxu0 0.0
    %3176 = vmatprep.subr.mxu0 0.0
    %3177 = vmatpush1.msra.mxu0 0.0
    %3178 = vmatprep.subr.mxu0 0.0
    %3179 = vmatpush1.msra.mxu0 0.0
    %3180 = vmatprep.subr.mxu0 0.0
    %3181 = vmatpush1.msra.mxu0 0.0
    %3182 = vmatprep.subr.mxu0 0.0
    %3183 = vmatpush1.msra.mxu0 0.0
    %3184 = vmatprep.subr.mxu0 0.0
    %3185 = vmatpush1.msra.mxu0 0.0
    %3186 = vmatprep.subr.mxu0 0.0
    %3187 = vmatpush1.msra.mxu0 0.0
    %3188 = vmatprep.subr.mxu0 0.0
    %3189 = vmatpush1.msra.mxu0 0.0
    %3190 = vmatprep.subr.mxu0 0.0
    %3191 = vmatpush1.msra.mxu0 0.0
    %3192 = vmatprep.subr.mxu0 0.0
    %3193 = vmatpush1.msra.mxu0 0.0
    %3194 = vmatprep.subr.mxu0 0.0
    %3195 = vmatpush1.msra.mxu0 0.0
    %3196 = vmatprep.subr.mxu0 0.0
    %3197 = vmatpush1.msra.mxu0 0.0
    %3198 = vmatprep.subr.mxu0 0.0
    %3199 = vmatpush1.msra.mxu0 0.0
    %3200 = vmatprep.subr.mxu0 0.0
    %3201 = vmatpush1.msra.mxu0 0.0
    %3202 = vmatprep.subr.mxu0 0.0
    %3203 = vmatpush1.msra.mxu0 0.0
    %3204 = vmatprep.mubr.f32.mxu0 0.0
    %3205 = vmatmul.mubr.f32.gmra.mrb[0].mxu0 %v2999
    %v3206 = vpop.f32.mrb[0].mxu0
    %v3207 = vadd.f32 0.0, %v3206
    %v3208 = vpop.f32.mrb[0].mxu0
    %v3209 = vadd.f32 0.0, %v3208
    %3210 = vdwg.mxu0
    %v3211 = vadd.f32 %v3001, %v3136
    %v3212 = vadd.f32 %v3002, %v3138
    %v3213 = vadd.f32 %v3003, %v3207
    %v3214 = vadd.f32 %v3004, %v3209
    %v3215 = vxor.u32 %v3211, 2147483648
    %v3216 = vmul.f32 %v3215, 1.442695
    %v3217 = vpow.pop %v3216
    %v3218 = vadd.f32 %v3217, 1.0
    %v3219 = vrcp.pop %v3218
    %v3220 = vmul.f32 1.0, %v3219
    %v3221 = vxor.u32 %v3212, 2147483648
    %v3222 = vmul.f32 %v3221, 1.442695
    %v3223 = vpow.pop %v3222
    %v3224 = vadd.f32 %v3223, 1.0
    %v3225 = vrcp.pop %v3224
    %v3226 = vmul.f32 1.0, %v3225
    %v3227 = vtanh.pop %v3213
    %v3228 = vxor.u32 %v3214, 2147483648
    %v3229 = vmul.f32 %v3228, 1.442695
    %v3230 = vpow.pop %v3229
    %v3231 = vadd.f32 %v3230, 1.0
    %v3232 = vrcp.pop %v3231
    %v3233 = vmul.f32 1.0, %v3232
    %v3234 = vmul.f32 %v3226, %v3000
    %v3235 = vmul.f32 %v3220, %v3227
    %v3236 = vadd.f32 %v3234, %v3235
    %v3237 = vtanh.pop %v3236
    %v3238 = vmul.f32 %v3233, %v3237
    %3239 = vst [vmem:[#allocation4] sm:$0xff] %v3238
    %3240 = vst [vmem:[#allocation5] sm:$0xff] %v3236
    %3241 = vst [vmem:[%s907] sm:$0xff] %v3238
    %v3242 = vld [vmem:[#allocation4] sm:$0xff]
    %v3243 = vld [vmem:[#allocation5] sm:$0xff]
    %v3244 = vld [vmem:[%s913] sm:$0xff]
    %v3245 = vld [vmem:[%s913 + $0x8] sm:$0xff]
    %v3246 = vld [vmem:[%s913 + $0x10] sm:$0xff]
    %v3247 = vld [vmem:[%s913 + $0x18] sm:$0xff]
    %v3248 = vld [vmem:[%s2761] sm:$0xff]
    %v3249 = vld [vmem:[%s2761 + $0x8] sm:$0xff]
    %v3250 = vld [vmem:[%s2761 + $0x10] sm:$0xff]
    %v3251 = vld [vmem:[%s2761 + $0x18] sm:$0xff]
    %v3252 = vld [vmem:[%s2761 + $0x20] sm:$0xff]
    %v3253 = vld [vmem:[%s2761 + $0x28] sm:$0xff]
    %v3254 = vld [vmem:[%s2761 + $0x30] sm:$0xff]
    %v3255 = vld [vmem:[%s2761 + $0x38] sm:$0xff]
    %v3256 = vld [vmem:[%s2761 + $0x40] sm:$0xff]
    %v3257 = vld [vmem:[%s2761 + $0x48] sm:$0xff]
    %v3258 = vld [vmem:[%s2761 + $0x50] sm:$0xff]
    %v3259 = vld [vmem:[%s2761 + $0x58] sm:$0xff]
    %v3260 = vld [vmem:[%s2761 + $0x60] sm:$0xff]
    %v3261 = vld [vmem:[%s2761 + $0x68] sm:$0xff]
    %v3262 = vld [vmem:[%s2761 + $0x70] sm:$0xff]
    %v3263 = vld [vmem:[%s2761 + $0x78] sm:$0xff]
    %v3264 = vld [vmem:[%s2761 + $0x80] sm:$0xff]
    %v3265 = vld [vmem:[%s2761 + $0x88] sm:$0xff]
    %v3266 = vld [vmem:[%s2761 + $0x90] sm:$0xff]
    %v3267 = vld [vmem:[%s2761 + $0x98] sm:$0xff]
    %v3268 = vld [vmem:[%s2761 + $0xa0] sm:$0xff]
    %v3269 = vld [vmem:[%s2761 + $0xa8] sm:$0xff]
    %v3270 = vld [vmem:[%s2761 + $0xb0] sm:$0xff]
    %v3271 = vld [vmem:[%s2761 + $0xb8] sm:$0xff]
    %v3272 = vld [vmem:[%s2761 + $0xc0] sm:$0xff]
    %v3273 = vld [vmem:[%s2761 + $0xc8] sm:$0xff]
    %v3274 = vld [vmem:[%s2761 + $0xd0] sm:$0xff]
    %v3275 = vld [vmem:[%s2761 + $0xd8] sm:$0xff]
    %v3276 = vld [vmem:[%s2761 + $0xe0] sm:$0xff]
    %v3277 = vld [vmem:[%s2761 + $0xe8] sm:$0xff]
    %v3278 = vld [vmem:[%s2761 + $0xf0] sm:$0xff]
    %v3279 = vld [vmem:[%s2761 + $0xf8] sm:$0xff]
    %v3280 = vld [vmem:[%s2761 + $0x100] sm:$0xff]
    %v3281 = vld [vmem:[%s2761 + $0x108] sm:$0xff]
    %v3282 = vld [vmem:[%s2761 + $0x110] sm:$0xff]
    %v3283 = vld [vmem:[%s2761 + $0x118] sm:$0xff]
    %v3284 = vld [vmem:[%s2761 + $0x120] sm:$0xff]
    %v3285 = vld [vmem:[%s2761 + $0x128] sm:$0xff]
    %v3286 = vld [vmem:[%s2761 + $0x130] sm:$0xff]
    %v3287 = vld [vmem:[%s2761 + $0x138] sm:$0xff]
    %v3288 = vld [vmem:[%s2761 + $0x140] sm:$0xff]
    %v3289 = vld [vmem:[%s2761 + $0x148] sm:$0xff]
    %v3290 = vld [vmem:[%s2761 + $0x150] sm:$0xff]
    %v3291 = vld [vmem:[%s2761 + $0x158] sm:$0xff]
    %v3292 = vld [vmem:[%s2761 + $0x160] sm:$0xff]
    %v3293 = vld [vmem:[%s2761 + $0x168] sm:$0xff]
    %v3294 = vld [vmem:[%s2761 + $0x170] sm:$0xff]
    %v3295 = vld [vmem:[%s2761 + $0x178] sm:$0xff]
    %v3296 = vld [vmem:[%s2761 + $0x180] sm:$0xff]
    %v3297 = vld [vmem:[%s2761 + $0x188] sm:$0xff]
    %v3298 = vld [vmem:[%s2761 + $0x190] sm:$0xff]
    %v3299 = vld [vmem:[%s2761 + $0x198] sm:$0xff]
    %v3300 = vld [vmem:[%s2761 + $0x1a0] sm:$0xff]
    %v3301 = vld [vmem:[%s2761 + $0x1a8] sm:$0xff]
    %v3302 = vld [vmem:[%s2761 + $0x1b0] sm:$0xff]
    %v3303 = vld [vmem:[%s2761 + $0x1b8] sm:$0xff]
    %v3304 = vld [vmem:[%s2761 + $0x1c0] sm:$0xff]
    %v3305 = vld [vmem:[%s2761 + $0x1c8] sm:$0xff]
    %v3306 = vld [vmem:[%s2761 + $0x1d0] sm:$0xff]
    %v3307 = vld [vmem:[%s2761 + $0x1d8] sm:$0xff]
    %v3308 = vld [vmem:[%s2761 + $0x1e0] sm:$0xff]
    %v3309 = vld [vmem:[%s2761 + $0x1e8] sm:$0xff]
    %v3310 = vld [vmem:[%s2761 + $0x1f0] sm:$0xff]
    %v3311 = vld [vmem:[%s2761 + $0x1f8] sm:$0xff]
    %3312 = vmatprep.subr.mxu0 %v3249
    %3313 = vmatpush1.msra.mxu0 %v3248
    %3314 = vmatprep.subr.mxu0 %v3253
    %3315 = vmatpush1.msra.mxu0 %v3252
    %3316 = vmatprep.subr.mxu0 %v3257
    %3317 = vmatpush1.msra.mxu0 %v3256
    %3318 = vmatprep.subr.mxu0 %v3261
    %3319 = vmatpush1.msra.mxu0 %v3260
    %3320 = vmatprep.subr.mxu0 %v3265
    %3321 = vmatpush1.msra.mxu0 %v3264
    %3322 = vmatprep.subr.mxu0 %v3269
    %3323 = vmatpush1.msra.mxu0 %v3268
    %3324 = vmatprep.subr.mxu0 %v3273
    %3325 = vmatpush1.msra.mxu0 %v3272
    %3326 = vmatprep.subr.mxu0 %v3277
    %3327 = vmatpush1.msra.mxu0 %v3276
    %3328 = vmatprep.subr.mxu0 %v3281
    %3329 = vmatpush1.msra.mxu0 %v3280
    %3330 = vmatprep.subr.mxu0 %v3285
    %3331 = vmatpush1.msra.mxu0 %v3284
    %3332 = vmatprep.subr.mxu0 %v3289
    %3333 = vmatpush1.msra.mxu0 %v3288
    %3334 = vmatprep.subr.mxu0 %v3293
    %3335 = vmatpush1.msra.mxu0 %v3292
    %3336 = vmatprep.subr.mxu0 %v3297
    %3337 = vmatpush1.msra.mxu0 %v3296
    %3338 = vmatprep.subr.mxu0 %v3301
    %3339 = vmatpush1.msra.mxu0 %v3300
    %3340 = vmatprep.subr.mxu0 %v3305
    %3341 = vmatpush1.msra.mxu0 %v3304
    %3342 = vmatprep.subr.mxu0 %v3309
    %3343 = vmatpush1.msra.mxu0 %v3308
    %3344 = vmatprep.subr.mxu0 0.0
    %3345 = vmatpush1.msra.mxu0 0.0
    %3346 = vmatprep.subr.mxu0 0.0
    %3347 = vmatpush1.msra.mxu0 0.0
    %3348 = vmatprep.subr.mxu0 0.0
    %3349 = vmatpush1.msra.mxu0 0.0
    %3350 = vmatprep.subr.mxu0 0.0
    %3351 = vmatpush1.msra.mxu0 0.0
    %3352 = vmatprep.subr.mxu0 0.0
    %3353 = vmatpush1.msra.mxu0 0.0
    %3354 = vmatprep.subr.mxu0 0.0
    %3355 = vmatpush1.msra.mxu0 0.0
    %3356 = vmatprep.subr.mxu0 0.0
    %3357 = vmatpush1.msra.mxu0 0.0
    %3358 = vmatprep.subr.mxu0 0.0
    %3359 = vmatpush1.msra.mxu0 0.0
    %3360 = vmatprep.subr.mxu0 0.0
    %3361 = vmatpush1.msra.mxu0 0.0
    %3362 = vmatprep.subr.mxu0 0.0
    %3363 = vmatpush1.msra.mxu0 0.0
    %3364 = vmatprep.subr.mxu0 0.0
    %3365 = vmatpush1.msra.mxu0 0.0
    %3366 = vmatprep.subr.mxu0 0.0
    %3367 = vmatpush1.msra.mxu0 0.0
    %3368 = vmatprep.subr.mxu0 0.0
    %3369 = vmatpush1.msra.mxu0 0.0
    %3370 = vmatprep.subr.mxu0 0.0
    %3371 = vmatpush1.msra.mxu0 0.0
    %3372 = vmatprep.subr.mxu0 0.0
    %3373 = vmatpush1.msra.mxu0 0.0
    %3374 = vmatprep.subr.mxu0 0.0
    %3375 = vmatpush1.msra.mxu0 0.0
    %3376 = vmatprep.mubr.f32.mxu0 0.0
    %3377 = vmatmul.mubr.f32.gmra.mrb[0].mxu0 %v3242
    %v3378 = vpop.f32.mrb[0].mxu0
    %v3379 = vadd.f32 0.0, %v3378
    %v3380 = vpop.f32.mrb[0].mxu0
    %v3381 = vadd.f32 0.0, %v3380
    %3382 = vdwg.mxu0
    %3383 = vmatprep.subr.mxu0 %v3251
    %3384 = vmatpush1.msra.mxu0 %v3250
    %3385 = vmatprep.subr.mxu0 %v3255
    %3386 = vmatpush1.msra.mxu0 %v3254
    %3387 = vmatprep.subr.mxu0 %v3259
    %3388 = vmatpush1.msra.mxu0 %v3258
    %3389 = vmatprep.subr.mxu0 %v3263
    %3390 = vmatpush1.msra.mxu0 %v3262
    %3391 = vmatprep.subr.mxu0 %v3267
    %3392 = vmatpush1.msra.mxu0 %v3266
    %3393 = vmatprep.subr.mxu0 %v3271
    %3394 = vmatpush1.msra.mxu0 %v3270
    %3395 = vmatprep.subr.mxu0 %v3275
    %3396 = vmatpush1.msra.mxu0 %v3274
    %3397 = vmatprep.subr.mxu0 %v3279
    %3398 = vmatpush1.msra.mxu0 %v3278
    %3399 = vmatprep.subr.mxu0 %v3283
    %3400 = vmatpush1.msra.mxu0 %v3282
    %3401 = vmatprep.subr.mxu0 %v3287
    %3402 = vmatpush1.msra.mxu0 %v3286
    %3403 = vmatprep.subr.mxu0 %v3291
    %3404 = vmatpush1.msra.mxu0 %v3290
    %3405 = vmatprep.subr.mxu0 %v3295
    %3406 = vmatpush1.msra.mxu0 %v3294
    %3407 = vmatprep.subr.mxu0 %v3299
    %3408 = vmatpush1.msra.mxu0 %v3298
    %3409 = vmatprep.subr.mxu0 %v3303
    %3410 = vmatpush1.msra.mxu0 %v3302
    %3411 = vmatprep.subr.mxu0 %v3307
    %3412 = vmatpush1.msra.mxu0 %v3306
    %3413 = vmatprep.subr.mxu0 %v3311
    %3414 = vmatpush1.msra.mxu0 %v3310
    %3415 = vmatprep.subr.mxu0 0.0
    %3416 = vmatpush1.msra.mxu0 0.0
    %3417 = vmatprep.subr.mxu0 0.0
    %3418 = vmatpush1.msra.mxu0 0.0
    %3419 = vmatprep.subr.mxu0 0.0
    %3420 = vmatpush1.msra.mxu0 0.0
    %3421 = vmatprep.subr.mxu0 0.0
    %3422 = vmatpush1.msra.mxu0 0.0
    %3423 = vmatprep.subr.mxu0 0.0
    %3424 = vmatpush1.msra.mxu0 0.0
    %3425 = vmatprep.subr.mxu0 0.0
    %3426 = vmatpush1.msra.mxu0 0.0
    %3427 = vmatprep.subr.mxu0 0.0
    %3428 = vmatpush1.msra.mxu0 0.0
    %3429 = vmatprep.subr.mxu0 0.0
    %3430 = vmatpush1.msra.mxu0 0.0
    %3431 = vmatprep.subr.mxu0 0.0
    %3432 = vmatpush1.msra.mxu0 0.0
    %3433 = vmatprep.subr.mxu0 0.0
    %3434 = vmatpush1.msra.mxu0 0.0
    %3435 = vmatprep.subr.mxu0 0.0
    %3436 = vmatpush1.msra.mxu0 0.0
    %3437 = vmatprep.subr.mxu0 0.0
    %3438 = vmatpush1.msra.mxu0 0.0
    %3439 = vmatprep.subr.mxu0 0.0
    %3440 = vmatpush1.msra.mxu0 0.0
    %3441 = vmatprep.subr.mxu0 0.0
    %3442 = vmatpush1.msra.mxu0 0.0
    %3443 = vmatprep.subr.mxu0 0.0
    %3444 = vmatpush1.msra.mxu0 0.0
    %3445 = vmatprep.subr.mxu0 0.0
    %3446 = vmatpush1.msra.mxu0 0.0
    %3447 = vmatprep.mubr.f32.mxu0 0.0
    %3448 = vmatmul.mubr.f32.gmra.mrb[0].mxu0 %v3242
    %v3449 = vpop.f32.mrb[0].mxu0
    %v3450 = vadd.f32 0.0, %v3449
    %v3451 = vpop.f32.mrb[0].mxu0
    %v3452 = vadd.f32 0.0, %v3451
    %3453 = vdwg.mxu0
    %v3454 = vadd.f32 %v3244, %v3379
    %v3455 = vadd.f32 %v3245, %v3381
    %v3456 = vadd.f32 %v3246, %v3450
    %v3457 = vadd.f32 %v3247, %v3452
    %v3458 = vxor.u32 %v3454, 2147483648
    %v3459 = vmul.f32 %v3458, 1.442695
    %v3460 = vpow.pop %v3459
    %v3461 = vadd.f32 %v3460, 1.0
    %v3462 = vrcp.pop %v3461
    %v3463 = vmul.f32 1.0, %v3462
    %v3464 = vxor.u32 %v3455, 2147483648
    %v3465 = vmul.f32 %v3464, 1.442695
    %v3466 = vpow.pop %v3465
    %v3467 = vadd.f32 %v3466, 1.0
    %v3468 = vrcp.pop %v3467
    %v3469 = vmul.f32 1.0, %v3468
    %v3470 = vtanh.pop %v3456
    %v3471 = vxor.u32 %v3457, 2147483648
    %v3472 = vmul.f32 %v3471, 1.442695
    %v3473 = vpow.pop %v3472
    %v3474 = vadd.f32 %v3473, 1.0
    %v3475 = vrcp.pop %v3474
    %v3476 = vmul.f32 1.0, %v3475
    %v3477 = vmul.f32 %v3469, %v3243
    %v3478 = vmul.f32 %v3463, %v3470
    %v3479 = vadd.f32 %v3477, %v3478
    %v3480 = vtanh.pop %v3479
    %v3481 = vmul.f32 %v3476, %v3480
    %3482 = vst [vmem:[#allocation4] sm:$0xff] %v3481
    %3483 = vst [vmem:[#allocation5] sm:$0xff] %v3479
    %3484 = vst [vmem:[%s1154] sm:$0xff] %v3481
    %v3485 = vld [vmem:[#allocation4] sm:$0xff]
    %v3486 = vld [vmem:[#allocation5] sm:$0xff]
    %v3487 = vld [vmem:[%s1160] sm:$0xff]
    %v3488 = vld [vmem:[%s1160 + $0x8] sm:$0xff]
    %v3489 = vld [vmem:[%s1160 + $0x10] sm:$0xff]
    %v3490 = vld [vmem:[%s1160 + $0x18] sm:$0xff]
    %v3491 = vld [vmem:[%s2761] sm:$0xff]
    %v3492 = vld [vmem:[%s2761 + $0x8] sm:$0xff]
    %v3493 = vld [vmem:[%s2761 + $0x10] sm:$0xff]
    %v3494 = vld [vmem:[%s2761 + $0x18] sm:$0xff]
    %v3495 = vld [vmem:[%s2761 + $0x20] sm:$0xff]
    %v3496 = vld [vmem:[%s2761 + $0x28] sm:$0xff]
    %v3497 = vld [vmem:[%s2761 + $0x30] sm:$0xff]
    %v3498 = vld [vmem:[%s2761 + $0x38] sm:$0xff]
    %v3499 = vld [vmem:[%s2761 + $0x40] sm:$0xff]
    %v3500 = vld [vmem:[%s2761 + $0x48] sm:$0xff]
    %v3501 = vld [vmem:[%s2761 + $0x50] sm:$0xff]
    %v3502 = vld [vmem:[%s2761 + $0x58] sm:$0xff]
    %v3503 = vld [vmem:[%s2761 + $0x60] sm:$0xff]
    %v3504 = vld [vmem:[%s2761 + $0x68] sm:$0xff]
    %v3505 = vld [vmem:[%s2761 + $0x70] sm:$0xff]
    %v3506 = vld [vmem:[%s2761 + $0x78] sm:$0xff]
    %v3507 = vld [vmem:[%s2761 + $0x80] sm:$0xff]
    %v3508 = vld [vmem:[%s2761 + $0x88] sm:$0xff]
    %v3509 = vld [vmem:[%s2761 + $0x90] sm:$0xff]
    %v3510 = vld [vmem:[%s2761 + $0x98] sm:$0xff]
    %v3511 = vld [vmem:[%s2761 + $0xa0] sm:$0xff]
    %v3512 = vld [vmem:[%s2761 + $0xa8] sm:$0xff]
    %v3513 = vld [vmem:[%s2761 + $0xb0] sm:$0xff]
    %v3514 = vld [vmem:[%s2761 + $0xb8] sm:$0xff]
    %v3515 = vld [vmem:[%s2761 + $0xc0] sm:$0xff]
    %v3516 = vld [vmem:[%s2761 + $0xc8] sm:$0xff]
    %v3517 = vld [vmem:[%s2761 + $0xd0] sm:$0xff]
    %v3518 = vld [vmem:[%s2761 + $0xd8] sm:$0xff]
    %v3519 = vld [vmem:[%s2761 + $0xe0] sm:$0xff]
    %v3520 = vld [vmem:[%s2761 + $0xe8] sm:$0xff]
    %v3521 = vld [vmem:[%s2761 + $0xf0] sm:$0xff]
    %v3522 = vld [vmem:[%s2761 + $0xf8] sm:$0xff]
    %v3523 = vld [vmem:[%s2761 + $0x100] sm:$0xff]
    %v3524 = vld [vmem:[%s2761 + $0x108] sm:$0xff]
    %v3525 = vld [vmem:[%s2761 + $0x110] sm:$0xff]
    %v3526 = vld [vmem:[%s2761 + $0x118] sm:$0xff]
    %v3527 = vld [vmem:[%s2761 + $0x120] sm:$0xff]
    %v3528 = vld [vmem:[%s2761 + $0x128] sm:$0xff]
    %v3529 = vld [vmem:[%s2761 + $0x130] sm:$0xff]
    %v3530 = vld [vmem:[%s2761 + $0x138] sm:$0xff]
    %v3531 = vld [vmem:[%s2761 + $0x140] sm:$0xff]
    %v3532 = vld [vmem:[%s2761 + $0x148] sm:$0xff]
    %v3533 = vld [vmem:[%s2761 + $0x150] sm:$0xff]
    %v3534 = vld [vmem:[%s2761 + $0x158] sm:$0xff]
    %v3535 = vld [vmem:[%s2761 + $0x160] sm:$0xff]
    %v3536 = vld [vmem:[%s2761 + $0x168] sm:$0xff]
    %v3537 = vld [vmem:[%s2761 + $0x170] sm:$0xff]
    %v3538 = vld [vmem:[%s2761 + $0x178] sm:$0xff]
    %v3539 = vld [vmem:[%s2761 + $0x180] sm:$0xff]
    %v3540 = vld [vmem:[%s2761 + $0x188] sm:$0xff]
    %v3541 = vld [vmem:[%s2761 + $0x190] sm:$0xff]
    %v3542 = vld [vmem:[%s2761 + $0x198] sm:$0xff]
    %v3543 = vld [vmem:[%s2761 + $0x1a0] sm:$0xff]
    %v3544 = vld [vmem:[%s2761 + $0x1a8] sm:$0xff]
    %v3545 = vld [vmem:[%s2761 + $0x1b0] sm:$0xff]
    %v3546 = vld [vmem:[%s2761 + $0x1b8] sm:$0xff]
    %v3547 = vld [vmem:[%s2761 + $0x1c0] sm:$0xff]
    %v3548 = vld [vmem:[%s2761 + $0x1c8] sm:$0xff]
    %v3549 = vld [vmem:[%s2761 + $0x1d0] sm:$0xff]
    %v3550 = vld [vmem:[%s2761 + $0x1d8] sm:$0xff]
    %v3551 = vld [vmem:[%s2761 + $0x1e0] sm:$0xff]
    %v3552 = vld [vmem:[%s2761 + $0x1e8] sm:$0xff]
    %v3553 = vld [vmem:[%s2761 + $0x1f0] sm:$0xff]
    %v3554 = vld [vmem:[%s2761 + $0x1f8] sm:$0xff]
    %3555 = vmatprep.subr.mxu0 %v3492
    %3556 = vmatpush1.msra.mxu0 %v3491
    %3557 = vmatprep.subr.mxu0 %v3496
    %3558 = vmatpush1.msra.mxu0 %v3495
    %3559 = vmatprep.subr.mxu0 %v3500
    %3560 = vmatpush1.msra.mxu0 %v3499
    %3561 = vmatprep.subr.mxu0 %v3504
    %3562 = vmatpush1.msra.mxu0 %v3503
    %3563 = vmatprep.subr.mxu0 %v3508
    %3564 = vmatpush1.msra.mxu0 %v3507
    %3565 = vmatprep.subr.mxu0 %v3512
    %3566 = vmatpush1.msra.mxu0 %v3511
    %3567 = vmatprep.subr.mxu0 %v3516
    %3568 = vmatpush1.msra.mxu0 %v3515
    %3569 = vmatprep.subr.mxu0 %v3520
    %3570 = vmatpush1.msra.mxu0 %v3519
    %3571 = vmatprep.subr.mxu0 %v3524
    %3572 = vmatpush1.msra.mxu0 %v3523
    %3573 = vmatprep.subr.mxu0 %v3528
    %3574 = vmatpush1.msra.mxu0 %v3527
    %3575 = vmatprep.subr.mxu0 %v3532
    %3576 = vmatpush1.msra.mxu0 %v3531
    %3577 = vmatprep.subr.mxu0 %v3536
    %3578 = vmatpush1.msra.mxu0 %v3535
    %3579 = vmatprep.subr.mxu0 %v3540
    %3580 = vmatpush1.msra.mxu0 %v3539
    %3581 = vmatprep.subr.mxu0 %v3544
    %3582 = vmatpush1.msra.mxu0 %v3543
    %3583 = vmatprep.subr.mxu0 %v3548
    %3584 = vmatpush1.msra.mxu0 %v3547
    %3585 = vmatprep.subr.mxu0 %v3552
    %3586 = vmatpush1.msra.mxu0 %v3551
    %3587 = vmatprep.subr.mxu0 0.0
    %3588 = vmatpush1.msra.mxu0 0.0
    %3589 = vmatprep.subr.mxu0 0.0
    %3590 = vmatpush1.msra.mxu0 0.0
    %3591 = vmatprep.subr.mxu0 0.0
    %3592 = vmatpush1.msra.mxu0 0.0
    %3593 = vmatprep.subr.mxu0 0.0
    %3594 = vmatpush1.msra.mxu0 0.0
    %3595 = vmatprep.subr.mxu0 0.0
    %3596 = vmatpush1.msra.mxu0 0.0
    %3597 = vmatprep.subr.mxu0 0.0
    %3598 = vmatpush1.msra.mxu0 0.0
    %3599 = vmatprep.subr.mxu0 0.0
    %3600 = vmatpush1.msra.mxu0 0.0
    %3601 = vmatprep.subr.mxu0 0.0
    %3602 = vmatpush1.msra.mxu0 0.0
    %3603 = vmatprep.subr.mxu0 0.0
    %3604 = vmatpush1.msra.mxu0 0.0
    %3605 = vmatprep.subr.mxu0 0.0
    %3606 = vmatpush1.msra.mxu0 0.0
    %3607 = vmatprep.subr.mxu0 0.0
    %3608 = vmatpush1.msra.mxu0 0.0
    %3609 = vmatprep.subr.mxu0 0.0
    %3610 = vmatpush1.msra.mxu0 0.0
    %3611 = vmatprep.subr.mxu0 0.0
    %3612 = vmatpush1.msra.mxu0 0.0
    %3613 = vmatprep.subr.mxu0 0.0
    %3614 = vmatpush1.msra.mxu0 0.0
    %3615 = vmatprep.subr.mxu0 0.0
    %3616 = vmatpush1.msra.mxu0 0.0
    %3617 = vmatprep.subr.mxu0 0.0
    %3618 = vmatpush1.msra.mxu0 0.0
    %3619 = vmatprep.mubr.f32.mxu0 0.0
    %3620 = vmatmul.mubr.f32.gmra.mrb[0].mxu0 %v3485
    %v3621 = vpop.f32.mrb[0].mxu0
    %v3622 = vadd.f32 0.0, %v3621
    %v3623 = vpop.f32.mrb[0].mxu0
    %v3624 = vadd.f32 0.0, %v3623
    %3625 = vdwg.mxu0
    %3626 = vmatprep.subr.mxu0 %v3494
    %3627 = vmatpush1.msra.mxu0 %v3493
    %3628 = vmatprep.subr.mxu0 %v3498
    %3629 = vmatpush1.msra.mxu0 %v3497
    %3630 = vmatprep.subr.mxu0 %v3502
    %3631 = vmatpush1.msra.mxu0 %v3501
    %3632 = vmatprep.subr.mxu0 %v3506
    %3633 = vmatpush1.msra.mxu0 %v3505
    %3634 = vmatprep.subr.mxu0 %v3510
    %3635 = vmatpush1.msra.mxu0 %v3509
    %3636 = vmatprep.subr.mxu0 %v3514
    %3637 = vmatpush1.msra.mxu0 %v3513
    %3638 = vmatprep.subr.mxu0 %v3518
    %3639 = vmatpush1.msra.mxu0 %v3517
    %3640 = vmatprep.subr.mxu0 %v3522
    %3641 = vmatpush1.msra.mxu0 %v3521
    %3642 = vmatprep.subr.mxu0 %v3526
    %3643 = vmatpush1.msra.mxu0 %v3525
    %3644 = vmatprep.subr.mxu0 %v3530
    %3645 = vmatpush1.msra.mxu0 %v3529
    %3646 = vmatprep.subr.mxu0 %v3534
    %3647 = vmatpush1.msra.mxu0 %v3533
    %3648 = vmatprep.subr.mxu0 %v3538
    %3649 = vmatpush1.msra.mxu0 %v3537
    %3650 = vmatprep.subr.mxu0 %v3542
    %3651 = vmatpush1.msra.mxu0 %v3541
    %3652 = vmatprep.subr.mxu0 %v3546
    %3653 = vmatpush1.msra.mxu0 %v3545
    %3654 = vmatprep.subr.mxu0 %v3550
    %3655 = vmatpush1.msra.mxu0 %v3549
    %3656 = vmatprep.subr.mxu0 %v3554
    %3657 = vmatpush1.msra.mxu0 %v3553
    %3658 = vmatprep.subr.mxu0 0.0
    %3659 = vmatpush1.msra.mxu0 0.0
    %3660 = vmatprep.subr.mxu0 0.0
    %3661 = vmatpush1.msra.mxu0 0.0
    %3662 = vmatprep.subr.mxu0 0.0
    %3663 = vmatpush1.msra.mxu0 0.0
    %3664 = vmatprep.subr.mxu0 0.0
    %3665 = vmatpush1.msra.mxu0 0.0
    %3666 = vmatprep.subr.mxu0 0.0
    %3667 = vmatpush1.msra.mxu0 0.0
    %3668 = vmatprep.subr.mxu0 0.0
    %3669 = vmatpush1.msra.mxu0 0.0
    %3670 = vmatprep.subr.mxu0 0.0
    %3671 = vmatpush1.msra.mxu0 0.0
    %3672 = vmatprep.subr.mxu0 0.0
    %3673 = vmatpush1.msra.mxu0 0.0
    %3674 = vmatprep.subr.mxu0 0.0
    %3675 = vmatpush1.msra.mxu0 0.0
    %3676 = vmatprep.subr.mxu0 0.0
    %3677 = vmatpush1.msra.mxu0 0.0
    %3678 = vmatprep.subr.mxu0 0.0
    %3679 = vmatpush1.msra.mxu0 0.0
    %3680 = vmatprep.subr.mxu0 0.0
    %3681 = vmatpush1.msra.mxu0 0.0
    %3682 = vmatprep.subr.mxu0 0.0
    %3683 = vmatpush1.msra.mxu0 0.0
    %3684 = vmatprep.subr.mxu0 0.0
    %3685 = vmatpush1.msra.mxu0 0.0
    %3686 = vmatprep.subr.mxu0 0.0
    %3687 = vmatpush1.msra.mxu0 0.0
    %3688 = vmatprep.subr.mxu0 0.0
    %3689 = vmatpush1.msra.mxu0 0.0
    %3690 = vmatprep.mubr.f32.mxu0 0.0
    %3691 = vmatmul.mubr.f32.gmra.mrb[0].mxu0 %v3485
    %v3692 = vpop.f32.mrb[0].mxu0
    %v3693 = vadd.f32 0.0, %v3692
    %v3694 = vpop.f32.mrb[0].mxu0
    %v3695 = vadd.f32 0.0, %v3694
    %3696 = vdwg.mxu0
    %v3697 = vadd.f32 %v3487, %v3622
    %v3698 = vadd.f32 %v3488, %v3624
    %v3699 = vadd.f32 %v3489, %v3693
    %v3700 = vadd.f32 %v3490, %v3695
    %v3701 = vxor.u32 %v3697, 2147483648
    %v3702 = vmul.f32 %v3701, 1.442695
    %v3703 = vpow.pop %v3702
    %v3704 = vadd.f32 %v3703, 1.0
    %v3705 = vrcp.pop %v3704
    %v3706 = vmul.f32 1.0, %v3705
    %v3707 = vxor.u32 %v3698, 2147483648
    %v3708 = vmul.f32 %v3707, 1.442695
    %v3709 = vpow.pop %v3708
    %v3710 = vadd.f32 %v3709, 1.0
    %v3711 = vrcp.pop %v3710
    %v3712 = vmul.f32 1.0, %v3711
    %v3713 = vtanh.pop %v3699
    %v3714 = vxor.u32 %v3700, 2147483648
    %v3715 = vmul.f32 %v3714, 1.442695
    %v3716 = vpow.pop %v3715
    %v3717 = vadd.f32 %v3716, 1.0
    %v3718 = vrcp.pop %v3717
    %v3719 = vmul.f32 1.0, %v3718
    %v3720 = vmul.f32 %v3712, %v3486
    %v3721 = vmul.f32 %v3706, %v3713
    %v3722 = vadd.f32 %v3720, %v3721
    %v3723 = vtanh.pop %v3722
    %v3724 = vmul.f32 %v3719, %v3723
    %3725 = vst [vmem:[#allocation4] sm:$0xff] %v3724
    %3726 = vst [vmem:[#allocation5] sm:$0xff] %v3722
    %3727 = vst [vmem:[%s1401] sm:$0xff] %v3724
    %v3728 = vld [vmem:[#allocation4] sm:$0xff]
    %v3729 = vld [vmem:[#allocation5] sm:$0xff]
    %v3730 = vld [vmem:[%s1407] sm:$0xff]
    %v3731 = vld [vmem:[%s1407 + $0x8] sm:$0xff]
    %v3732 = vld [vmem:[%s1407 + $0x10] sm:$0xff]
    %v3733 = vld [vmem:[%s1407 + $0x18] sm:$0xff]
    %v3734 = vld [vmem:[%s2761] sm:$0xff]
    %v3735 = vld [vmem:[%s2761 + $0x8] sm:$0xff]
    %v3736 = vld [vmem:[%s2761 + $0x10] sm:$0xff]
    %v3737 = vld [vmem:[%s2761 + $0x18] sm:$0xff]
    %v3738 = vld [vmem:[%s2761 + $0x20] sm:$0xff]
    %v3739 = vld [vmem:[%s2761 + $0x28] sm:$0xff]
    %v3740 = vld [vmem:[%s2761 + $0x30] sm:$0xff]
    %v3741 = vld [vmem:[%s2761 + $0x38] sm:$0xff]
    %v3742 = vld [vmem:[%s2761 + $0x40] sm:$0xff]
    %v3743 = vld [vmem:[%s2761 + $0x48] sm:$0xff]
    %v3744 = vld [vmem:[%s2761 + $0x50] sm:$0xff]
    %v3745 = vld [vmem:[%s2761 + $0x58] sm:$0xff]
    %v3746 = vld [vmem:[%s2761 + $0x60] sm:$0xff]
    %v3747 = vld [vmem:[%s2761 + $0x68] sm:$0xff]
    %v3748 = vld [vmem:[%s2761 + $0x70] sm:$0xff]
    %v3749 = vld [vmem:[%s2761 + $0x78] sm:$0xff]
    %v3750 = vld [vmem:[%s2761 + $0x80] sm:$0xff]
    %v3751 = vld [vmem:[%s2761 + $0x88] sm:$0xff]
    %v3752 = vld [vmem:[%s2761 + $0x90] sm:$0xff]
    %v3753 = vld [vmem:[%s2761 + $0x98] sm:$0xff]
    %v3754 = vld [vmem:[%s2761 + $0xa0] sm:$0xff]
    %v3755 = vld [vmem:[%s2761 + $0xa8] sm:$0xff]
    %v3756 = vld [vmem:[%s2761 + $0xb0] sm:$0xff]
    %v3757 = vld [vmem:[%s2761 + $0xb8] sm:$0xff]
    %v3758 = vld [vmem:[%s2761 + $0xc0] sm:$0xff]
    %v3759 = vld [vmem:[%s2761 + $0xc8] sm:$0xff]
    %v3760 = vld [vmem:[%s2761 + $0xd0] sm:$0xff]
    %v3761 = vld [vmem:[%s2761 + $0xd8] sm:$0xff]
    %v3762 = vld [vmem:[%s2761 + $0xe0] sm:$0xff]
    %v3763 = vld [vmem:[%s2761 + $0xe8] sm:$0xff]
    %v3764 = vld [vmem:[%s2761 + $0xf0] sm:$0xff]
    %v3765 = vld [vmem:[%s2761 + $0xf8] sm:$0xff]
    %v3766 = vld [vmem:[%s2761 + $0x100] sm:$0xff]
    %v3767 = vld [vmem:[%s2761 + $0x108] sm:$0xff]
    %v3768 = vld [vmem:[%s2761 + $0x110] sm:$0xff]
    %v3769 = vld [vmem:[%s2761 + $0x118] sm:$0xff]
    %v3770 = vld [vmem:[%s2761 + $0x120] sm:$0xff]
    %v3771 = vld [vmem:[%s2761 + $0x128] sm:$0xff]
    %v3772 = vld [vmem:[%s2761 + $0x130] sm:$0xff]
    %v3773 = vld [vmem:[%s2761 + $0x138] sm:$0xff]
    %v3774 = vld [vmem:[%s2761 + $0x140] sm:$0xff]
    %v3775 = vld [vmem:[%s2761 + $0x148] sm:$0xff]
    %v3776 = vld [vmem:[%s2761 + $0x150] sm:$0xff]
    %v3777 = vld [vmem:[%s2761 + $0x158] sm:$0xff]
    %v3778 = vld [vmem:[%s2761 + $0x160] sm:$0xff]
    %v3779 = vld [vmem:[%s2761 + $0x168] sm:$0xff]
    %v3780 = vld [vmem:[%s2761 + $0x170] sm:$0xff]
    %v3781 = vld [vmem:[%s2761 + $0x178] sm:$0xff]
    %v3782 = vld [vmem:[%s2761 + $0x180] sm:$0xff]
    %v3783 = vld [vmem:[%s2761 + $0x188] sm:$0xff]
    %v3784 = vld [vmem:[%s2761 + $0x190] sm:$0xff]
    %v3785 = vld [vmem:[%s2761 + $0x198] sm:$0xff]
    %v3786 = vld [vmem:[%s2761 + $0x1a0] sm:$0xff]
    %v3787 = vld [vmem:[%s2761 + $0x1a8] sm:$0xff]
    %v3788 = vld [vmem:[%s2761 + $0x1b0] sm:$0xff]
    %v3789 = vld [vmem:[%s2761 + $0x1b8] sm:$0xff]
    %v3790 = vld [vmem:[%s2761 + $0x1c0] sm:$0xff]
    %v3791 = vld [vmem:[%s2761 + $0x1c8] sm:$0xff]
    %v3792 = vld [vmem:[%s2761 + $0x1d0] sm:$0xff]
    %v3793 = vld [vmem:[%s2761 + $0x1d8] sm:$0xff]
    %v3794 = vld [vmem:[%s2761 + $0x1e0] sm:$0xff]
    %v3795 = vld [vmem:[%s2761 + $0x1e8] sm:$0xff]
    %v3796 = vld [vmem:[%s2761 + $0x1f0] sm:$0xff]
    %v3797 = vld [vmem:[%s2761 + $0x1f8] sm:$0xff]
    %3798 = vmatprep.subr.mxu0 %v3735
    %3799 = vmatpush1.msra.mxu0 %v3734
    %3800 = vmatprep.subr.mxu0 %v3739
    %3801 = vmatpush1.msra.mxu0 %v3738
    %3802 = vmatprep.subr.mxu0 %v3743
    %3803 = vmatpush1.msra.mxu0 %v3742
    %3804 = vmatprep.subr.mxu0 %v3747
    %3805 = vmatpush1.msra.mxu0 %v3746
    %3806 = vmatprep.subr.mxu0 %v3751
    %3807 = vmatpush1.msra.mxu0 %v3750
    %3808 = vmatprep.subr.mxu0 %v3755
    %3809 = vmatpush1.msra.mxu0 %v3754
    %3810 = vmatprep.subr.mxu0 %v3759
    %3811 = vmatpush1.msra.mxu0 %v3758
    %3812 = vmatprep.subr.mxu0 %v3763
    %3813 = vmatpush1.msra.mxu0 %v3762
    %3814 = vmatprep.subr.mxu0 %v3767
    %3815 = vmatpush1.msra.mxu0 %v3766
    %3816 = vmatprep.subr.mxu0 %v3771
    %3817 = vmatpush1.msra.mxu0 %v3770
    %3818 = vmatprep.subr.mxu0 %v3775
    %3819 = vmatpush1.msra.mxu0 %v3774
    %3820 = vmatprep.subr.mxu0 %v3779
    %3821 = vmatpush1.msra.mxu0 %v3778
    %3822 = vmatprep.subr.mxu0 %v3783
    %3823 = vmatpush1.msra.mxu0 %v3782
    %3824 = vmatprep.subr.mxu0 %v3787
    %3825 = vmatpush1.msra.mxu0 %v3786
    %3826 = vmatprep.subr.mxu0 %v3791
    %3827 = vmatpush1.msra.mxu0 %v3790
    %3828 = vmatprep.subr.mxu0 %v3795
    %3829 = vmatpush1.msra.mxu0 %v3794
    %3830 = vmatprep.subr.mxu0 0.0
    %3831 = vmatpush1.msra.mxu0 0.0
    %3832 = vmatprep.subr.mxu0 0.0
    %3833 = vmatpush1.msra.mxu0 0.0
    %3834 = vmatprep.subr.mxu0 0.0
    %3835 = vmatpush1.msra.mxu0 0.0
    %3836 = vmatprep.subr.mxu0 0.0
    %3837 = vmatpush1.msra.mxu0 0.0
    %3838 = vmatprep.subr.mxu0 0.0
    %3839 = vmatpush1.msra.mxu0 0.0
    %3840 = vmatprep.subr.mxu0 0.0
    %3841 = vmatpush1.msra.mxu0 0.0
    %3842 = vmatprep.subr.mxu0 0.0
    %3843 = vmatpush1.msra.mxu0 0.0
    %3844 = vmatprep.subr.mxu0 0.0
    %3845 = vmatpush1.msra.mxu0 0.0
    %3846 = vmatprep.subr.mxu0 0.0
    %3847 = vmatpush1.msra.mxu0 0.0
    %3848 = vmatprep.subr.mxu0 0.0
    %3849 = vmatpush1.msra.mxu0 0.0
    %3850 = vmatprep.subr.mxu0 0.0
    %3851 = vmatpush1.msra.mxu0 0.0
    %3852 = vmatprep.subr.mxu0 0.0
    %3853 = vmatpush1.msra.mxu0 0.0
    %3854 = vmatprep.subr.mxu0 0.0
    %3855 = vmatpush1.msra.mxu0 0.0
    %3856 = vmatprep.subr.mxu0 0.0
    %3857 = vmatpush1.msra.mxu0 0.0
    %3858 = vmatprep.subr.mxu0 0.0
    %3859 = vmatpush1.msra.mxu0 0.0
    %3860 = vmatprep.subr.mxu0 0.0
    %3861 = vmatpush1.msra.mxu0 0.0
    %3862 = vmatprep.mubr.f32.mxu0 0.0
    %3863 = vmatmul.mubr.f32.gmra.mrb[0].mxu0 %v3728
    %v3864 = vpop.f32.mrb[0].mxu0
    %v3865 = vadd.f32 0.0, %v3864
    %v3866 = vpop.f32.mrb[0].mxu0
    %v3867 = vadd.f32 0.0, %v3866
    %3868 = vdwg.mxu0
    %3869 = vmatprep.subr.mxu0 %v3737
    %3870 = vmatpush1.msra.mxu0 %v3736
    %3871 = vmatprep.subr.mxu0 %v3741
    %3872 = vmatpush1.msra.mxu0 %v3740
    %3873 = vmatprep.subr.mxu0 %v3745
    %3874 = vmatpush1.msra.mxu0 %v3744
    %3875 = vmatprep.subr.mxu0 %v3749
    %3876 = vmatpush1.msra.mxu0 %v3748
    %3877 = vmatprep.subr.mxu0 %v3753
    %3878 = vmatpush1.msra.mxu0 %v3752
    %3879 = vmatprep.subr.mxu0 %v3757
    %3880 = vmatpush1.msra.mxu0 %v3756
    %3881 = vmatprep.subr.mxu0 %v3761
    %3882 = vmatpush1.msra.mxu0 %v3760
    %3883 = vmatprep.subr.mxu0 %v3765
    %3884 = vmatpush1.msra.mxu0 %v3764
    %3885 = vmatprep.subr.mxu0 %v3769
    %3886 = vmatpush1.msra.mxu0 %v3768
    %3887 = vmatprep.subr.mxu0 %v3773
    %3888 = vmatpush1.msra.mxu0 %v3772
    %3889 = vmatprep.subr.mxu0 %v3777
    %3890 = vmatpush1.msra.mxu0 %v3776
    %3891 = vmatprep.subr.mxu0 %v3781
    %3892 = vmatpush1.msra.mxu0 %v3780
    %3893 = vmatprep.subr.mxu0 %v3785
    %3894 = vmatpush1.msra.mxu0 %v3784
    %3895 = vmatprep.subr.mxu0 %v3789
    %3896 = vmatpush1.msra.mxu0 %v3788
    %3897 = vmatprep.subr.mxu0 %v3793
    %3898 = vmatpush1.msra.mxu0 %v3792
    %3899 = vmatprep.subr.mxu0 %v3797
    %3900 = vmatpush1.msra.mxu0 %v3796
    %3901 = vmatprep.subr.mxu0 0.0
    %3902 = vmatpush1.msra.mxu0 0.0
    %3903 = vmatprep.subr.mxu0 0.0
    %3904 = vmatpush1.msra.mxu0 0.0
    %3905 = vmatprep.subr.mxu0 0.0
    %3906 = vmatpush1.msra.mxu0 0.0
    %3907 = vmatprep.subr.mxu0 0.0
    %3908 = vmatpush1.msra.mxu0 0.0
    %3909 = vmatprep.subr.mxu0 0.0
    %3910 = vmatpush1.msra.mxu0 0.0
    %3911 = vmatprep.subr.mxu0 0.0
    %3912 = vmatpush1.msra.mxu0 0.0
    %3913 = vmatprep.subr.mxu0 0.0
    %3914 = vmatpush1.msra.mxu0 0.0
    %3915 = vmatprep.subr.mxu0 0.0
    %3916 = vmatpush1.msra.mxu0 0.0
    %3917 = vmatprep.subr.mxu0 0.0
    %3918 = vmatpush1.msra.mxu0 0.0
    %3919 = vmatprep.subr.mxu0 0.0
    %3920 = vmatpush1.msra.mxu0 0.0
    %3921 = vmatprep.subr.mxu0 0.0
    %3922 = vmatpush1.msra.mxu0 0.0
    %3923 = vmatprep.subr.mxu0 0.0
    %3924 = vmatpush1.msra.mxu0 0.0
    %3925 = vmatprep.subr.mxu0 0.0
    %3926 = vmatpush1.msra.mxu0 0.0
    %3927 = vmatprep.subr.mxu0 0.0
    %3928 = vmatpush1.msra.mxu0 0.0
    %3929 = vmatprep.subr.mxu0 0.0
    %3930 = vmatpush1.msra.mxu0 0.0
    %3931 = vmatprep.subr.mxu0 0.0
    %3932 = vmatpush1.msra.mxu0 0.0
    %3933 = vmatprep.mubr.f32.mxu0 0.0
    %3934 = vmatmul.mubr.f32.gmra.mrb[0].mxu0 %v3728
    %v3935 = vpop.f32.mrb[0].mxu0
    %v3936 = vadd.f32 0.0, %v3935
    %v3937 = vpop.f32.mrb[0].mxu0
    %v3938 = vadd.f32 0.0, %v3937
    %3939 = vdwg.mxu0
    %v3940 = vadd.f32 %v3730, %v3865
    %v3941 = vadd.f32 %v3731, %v3867
    %v3942 = vadd.f32 %v3732, %v3936
    %v3943 = vadd.f32 %v3733, %v3938
    %v3944 = vxor.u32 %v3940, 2147483648
    %v3945 = vmul.f32 %v3944, 1.442695
    %v3946 = vpow.pop %v3945
    %v3947 = vadd.f32 %v3946, 1.0
    %v3948 = vrcp.pop %v3947
    %v3949 = vmul.f32 1.0, %v3948
    %v3950 = vxor.u32 %v3941, 2147483648
    %v3951 = vmul.f32 %v3950, 1.442695
    %v3952 = vpow.pop %v3951
    %v3953 = vadd.f32 %v3952, 1.0
    %v3954 = vrcp.pop %v3953
    %v3955 = vmul.f32 1.0, %v3954
    %v3956 = vtanh.pop %v3942
    %v3957 = vxor.u32 %v3943, 2147483648
    %v3958 = vmul.f32 %v3957, 1.442695
    %v3959 = vpow.pop %v3958
    %v3960 = vadd.f32 %v3959, 1.0
    %v3961 = vrcp.pop %v3960
    %v3962 = vmul.f32 1.0, %v3961
    %v3963 = vmul.f32 %v3955, %v3729
    %v3964 = vmul.f32 %v3949, %v3956
    %v3965 = vadd.f32 %v3963, %v3964
    %v3966 = vtanh.pop %v3965
    %v3967 = vmul.f32 %v3962, %v3966
    %3968 = vst [vmem:[#allocation4] sm:$0xff] %v3967
    %3969 = vst [vmem:[#allocation5] sm:$0xff] %v3965
    %3970 = vst [vmem:[%s1648] sm:$0xff] %v3967
    %v3971 = vld [vmem:[#allocation4] sm:$0xff]
    %v3972 = vld [vmem:[#allocation5] sm:$0xff]
    %v3973 = vld [vmem:[%s1654] sm:$0xff]
    %v3974 = vld [vmem:[%s1654 + $0x8] sm:$0xff]
    %v3975 = vld [vmem:[%s1654 + $0x10] sm:$0xff]
    %v3976 = vld [vmem:[%s1654 + $0x18] sm:$0xff]
    %v3977 = vld [vmem:[%s2761] sm:$0xff]
    %v3978 = vld [vmem:[%s2761 + $0x8] sm:$0xff]
    %v3979 = vld [vmem:[%s2761 + $0x10] sm:$0xff]
    %v3980 = vld [vmem:[%s2761 + $0x18] sm:$0xff]
    %v3981 = vld [vmem:[%s2761 + $0x20] sm:$0xff]
    %v3982 = vld [vmem:[%s2761 + $0x28] sm:$0xff]
    %v3983 = vld [vmem:[%s2761 + $0x30] sm:$0xff]
    %v3984 = vld [vmem:[%s2761 + $0x38] sm:$0xff]
    %v3985 = vld [vmem:[%s2761 + $0x40] sm:$0xff]
    %v3986 = vld [vmem:[%s2761 + $0x48] sm:$0xff]
    %v3987 = vld [vmem:[%s2761 + $0x50] sm:$0xff]
    %v3988 = vld [vmem:[%s2761 + $0x58] sm:$0xff]
    %v3989 = vld [vmem:[%s2761 + $0x60] sm:$0xff]
    %v3990 = vld [vmem:[%s2761 + $0x68] sm:$0xff]
    %v3991 = vld [vmem:[%s2761 + $0x70] sm:$0xff]
    %v3992 = vld [vmem:[%s2761 + $0x78] sm:$0xff]
    %v3993 = vld [vmem:[%s2761 + $0x80] sm:$0xff]
    %v3994 = vld [vmem:[%s2761 + $0x88] sm:$0xff]
    %v3995 = vld [vmem:[%s2761 + $0x90] sm:$0xff]
    %v3996 = vld [vmem:[%s2761 + $0x98] sm:$0xff]
    %v3997 = vld [vmem:[%s2761 + $0xa0] sm:$0xff]
    %v3998 = vld [vmem:[%s2761 + $0xa8] sm:$0xff]
    %v3999 = vld [vmem:[%s2761 + $0xb0] sm:$0xff]
    %v4000 = vld [vmem:[%s2761 + $0xb8] sm:$0xff]
    %v4001 = vld [vmem:[%s2761 + $0xc0] sm:$0xff]
    %v4002 = vld [vmem:[%s2761 + $0xc8] sm:$0xff]
    %v4003 = vld [vmem:[%s2761 + $0xd0] sm:$0xff]
    %v4004 = vld [vmem:[%s2761 + $0xd8] sm:$0xff]
    %v4005 = vld [vmem:[%s2761 + $0xe0] sm:$0xff]
    %v4006 = vld [vmem:[%s2761 + $0xe8] sm:$0xff]
    %v4007 = vld [vmem:[%s2761 + $0xf0] sm:$0xff]
    %v4008 = vld [vmem:[%s2761 + $0xf8] sm:$0xff]
    %v4009 = vld [vmem:[%s2761 + $0x100] sm:$0xff]
    %v4010 = vld [vmem:[%s2761 + $0x108] sm:$0xff]
    %v4011 = vld [vmem:[%s2761 + $0x110] sm:$0xff]
    %v4012 = vld [vmem:[%s2761 + $0x118] sm:$0xff]
    %v4013 = vld [vmem:[%s2761 + $0x120] sm:$0xff]
    %v4014 = vld [vmem:[%s2761 + $0x128] sm:$0xff]
    %v4015 = vld [vmem:[%s2761 + $0x130] sm:$0xff]
    %v4016 = vld [vmem:[%s2761 + $0x138] sm:$0xff]
    %v4017 = vld [vmem:[%s2761 + $0x140] sm:$0xff]
    %v4018 = vld [vmem:[%s2761 + $0x148] sm:$0xff]
    %v4019 = vld [vmem:[%s2761 + $0x150] sm:$0xff]
    %v4020 = vld [vmem:[%s2761 + $0x158] sm:$0xff]
    %v4021 = vld [vmem:[%s2761 + $0x160] sm:$0xff]
    %v4022 = vld [vmem:[%s2761 + $0x168] sm:$0xff]
    %v4023 = vld [vmem:[%s2761 + $0x170] sm:$0xff]
    %v4024 = vld [vmem:[%s2761 + $0x178] sm:$0xff]
    %v4025 = vld [vmem:[%s2761 + $0x180] sm:$0xff]
    %v4026 = vld [vmem:[%s2761 + $0x188] sm:$0xff]
    %v4027 = vld [vmem:[%s2761 + $0x190] sm:$0xff]
    %v4028 = vld [vmem:[%s2761 + $0x198] sm:$0xff]
    %v4029 = vld [vmem:[%s2761 + $0x1a0] sm:$0xff]
    %v4030 = vld [vmem:[%s2761 + $0x1a8] sm:$0xff]
    %v4031 = vld [vmem:[%s2761 + $0x1b0] sm:$0xff]
    %v4032 = vld [vmem:[%s2761 + $0x1b8] sm:$0xff]
    %v4033 = vld [vmem:[%s2761 + $0x1c0] sm:$0xff]
    %v4034 = vld [vmem:[%s2761 + $0x1c8] sm:$0xff]
    %v4035 = vld [vmem:[%s2761 + $0x1d0] sm:$0xff]
    %v4036 = vld [vmem:[%s2761 + $0x1d8] sm:$0xff]
    %v4037 = vld [vmem:[%s2761 + $0x1e0] sm:$0xff]
    %v4038 = vld [vmem:[%s2761 + $0x1e8] sm:$0xff]
    %v4039 = vld [vmem:[%s2761 + $0x1f0] sm:$0xff]
    %v4040 = vld [vmem:[%s2761 + $0x1f8] sm:$0xff]
    %4041 = vmatprep.subr.mxu0 %v3978
    %4042 = vmatpush1.msra.mxu0 %v3977
    %4043 = vmatprep.subr.mxu0 %v3982
    %4044 = vmatpush1.msra.mxu0 %v3981
    %4045 = vmatprep.subr.mxu0 %v3986
    %4046 = vmatpush1.msra.mxu0 %v3985
    %4047 = vmatprep.subr.mxu0 %v3990
    %4048 = vmatpush1.msra.mxu0 %v3989
    %4049 = vmatprep.subr.mxu0 %v3994
    %4050 = vmatpush1.msra.mxu0 %v3993
    %4051 = vmatprep.subr.mxu0 %v3998
    %4052 = vmatpush1.msra.mxu0 %v3997
    %4053 = vmatprep.subr.mxu0 %v4002
    %4054 = vmatpush1.msra.mxu0 %v4001
    %4055 = vmatprep.subr.mxu0 %v4006
    %4056 = vmatpush1.msra.mxu0 %v4005
    %4057 = vmatprep.subr.mxu0 %v4010
    %4058 = vmatpush1.msra.mxu0 %v4009
    %4059 = vmatprep.subr.mxu0 %v4014
    %4060 = vmatpush1.msra.mxu0 %v4013
    %4061 = vmatprep.subr.mxu0 %v4018
    %4062 = vmatpush1.msra.mxu0 %v4017
    %4063 = vmatprep.subr.mxu0 %v4022
    %4064 = vmatpush1.msra.mxu0 %v4021
    %4065 = vmatprep.subr.mxu0 %v4026
    %4066 = vmatpush1.msra.mxu0 %v4025
    %4067 = vmatprep.subr.mxu0 %v4030
    %4068 = vmatpush1.msra.mxu0 %v4029
    %4069 = vmatprep.subr.mxu0 %v4034
    %4070 = vmatpush1.msra.mxu0 %v4033
    %4071 = vmatprep.subr.mxu0 %v4038
    %4072 = vmatpush1.msra.mxu0 %v4037
    %4073 = vmatprep.subr.mxu0 0.0
    %4074 = vmatpush1.msra.mxu0 0.0
    %4075 = vmatprep.subr.mxu0 0.0
    %4076 = vmatpush1.msra.mxu0 0.0
    %4077 = vmatprep.subr.mxu0 0.0
    %4078 = vmatpush1.msra.mxu0 0.0
    %4079 = vmatprep.subr.mxu0 0.0
    %4080 = vmatpush1.msra.mxu0 0.0
    %4081 = vmatprep.subr.mxu0 0.0
    %4082 = vmatpush1.msra.mxu0 0.0
    %4083 = vmatprep.subr.mxu0 0.0
    %4084 = vmatpush1.msra.mxu0 0.0
    %4085 = vmatprep.subr.mxu0 0.0
    %4086 = vmatpush1.msra.mxu0 0.0
    %4087 = vmatprep.subr.mxu0 0.0
    %4088 = vmatpush1.msra.mxu0 0.0
    %4089 = vmatprep.subr.mxu0 0.0
    %4090 = vmatpush1.msra.mxu0 0.0
    %4091 = vmatprep.subr.mxu0 0.0
    %4092 = vmatpush1.msra.mxu0 0.0
    %4093 = vmatprep.subr.mxu0 0.0
    %4094 = vmatpush1.msra.mxu0 0.0
    %4095 = vmatprep.subr.mxu0 0.0
    %4096 = vmatpush1.msra.mxu0 0.0
    %4097 = vmatprep.subr.mxu0 0.0
    %4098 = vmatpush1.msra.mxu0 0.0
    %4099 = vmatprep.subr.mxu0 0.0
    %4100 = vmatpush1.msra.mxu0 0.0
    %4101 = vmatprep.subr.mxu0 0.0
    %4102 = vmatpush1.msra.mxu0 0.0
    %4103 = vmatprep.subr.mxu0 0.0
    %4104 = vmatpush1.msra.mxu0 0.0
    %4105 = vmatprep.mubr.f32.mxu0 0.0
    %4106 = vmatmul.mubr.f32.gmra.mrb[0].mxu0 %v3971
    %v4107 = vpop.f32.mrb[0].mxu0
    %v4108 = vadd.f32 0.0, %v4107
    %v4109 = vpop.f32.mrb[0].mxu0
    %v4110 = vadd.f32 0.0, %v4109
    %4111 = vdwg.mxu0
    %4112 = vmatprep.subr.mxu0 %v3980
    %4113 = vmatpush1.msra.mxu0 %v3979
    %4114 = vmatprep.subr.mxu0 %v3984
    %4115 = vmatpush1.msra.mxu0 %v3983
    %4116 = vmatprep.subr.mxu0 %v3988
    %4117 = vmatpush1.msra.mxu0 %v3987
    %4118 = vmatprep.subr.mxu0 %v3992
    %4119 = vmatpush1.msra.mxu0 %v3991
    %4120 = vmatprep.subr.mxu0 %v3996
    %4121 = vmatpush1.msra.mxu0 %v3995
    %4122 = vmatprep.subr.mxu0 %v4000
    %4123 = vmatpush1.msra.mxu0 %v3999
    %4124 = vmatprep.subr.mxu0 %v4004
    %4125 = vmatpush1.msra.mxu0 %v4003
    %4126 = vmatprep.subr.mxu0 %v4008
    %4127 = vmatpush1.msra.mxu0 %v4007
    %4128 = vmatprep.subr.mxu0 %v4012
    %4129 = vmatpush1.msra.mxu0 %v4011
    %4130 = vmatprep.subr.mxu0 %v4016
    %4131 = vmatpush1.msra.mxu0 %v4015
    %4132 = vmatprep.subr.mxu0 %v4020
    %4133 = vmatpush1.msra.mxu0 %v4019
    %4134 = vmatprep.subr.mxu0 %v4024
    %4135 = vmatpush1.msra.mxu0 %v4023
    %4136 = vmatprep.subr.mxu0 %v4028
    %4137 = vmatpush1.msra.mxu0 %v4027
    %4138 = vmatprep.subr.mxu0 %v4032
    %4139 = vmatpush1.msra.mxu0 %v4031
    %4140 = vmatprep.subr.mxu0 %v4036
    %4141 = vmatpush1.msra.mxu0 %v4035
    %4142 = vmatprep.subr.mxu0 %v4040
    %4143 = vmatpush1.msra.mxu0 %v4039
    %4144 = vmatprep.subr.mxu0 0.0
    %4145 = vmatpush1.msra.mxu0 0.0
    %4146 = vmatprep.subr.mxu0 0.0
    %4147 = vmatpush1.msra.mxu0 0.0
    %4148 = vmatprep.subr.mxu0 0.0
    %4149 = vmatpush1.msra.mxu0 0.0
    %4150 = vmatprep.subr.mxu0 0.0
    %4151 = vmatpush1.msra.mxu0 0.0
    %4152 = vmatprep.subr.mxu0 0.0
    %4153 = vmatpush1.msra.mxu0 0.0
    %4154 = vmatprep.subr.mxu0 0.0
    %4155 = vmatpush1.msra.mxu0 0.0
    %4156 = vmatprep.subr.mxu0 0.0
    %4157 = vmatpush1.msra.mxu0 0.0
    %4158 = vmatprep.subr.mxu0 0.0
    %4159 = vmatpush1.msra.mxu0 0.0
    %4160 = vmatprep.subr.mxu0 0.0
    %4161 = vmatpush1.msra.mxu0 0.0
    %4162 = vmatprep.subr.mxu0 0.0
    %4163 = vmatpush1.msra.mxu0 0.0
    %4164 = vmatprep.subr.mxu0 0.0
    %4165 = vmatpush1.msra.mxu0 0.0
    %4166 = vmatprep.subr.mxu0 0.0
    %4167 = vmatpush1.msra.mxu0 0.0
    %4168 = vmatprep.subr.mxu0 0.0
    %4169 = vmatpush1.msra.mxu0 0.0
    %4170 = vmatprep.subr.mxu0 0.0
    %4171 = vmatpush1.msra.mxu0 0.0
    %4172 = vmatprep.subr.mxu0 0.0
    %4173 = vmatpush1.msra.mxu0 0.0
    %4174 = vmatprep.subr.mxu0 0.0
    %4175 = vmatpush1.msra.mxu0 0.0
    %4176 = vmatprep.mubr.f32.mxu0 0.0
    %4177 = vmatmul.mubr.f32.gmra.mrb[0].mxu0 %v3971
    %v4178 = vpop.f32.mrb[0].mxu0
    %v4179 = vadd.f32 0.0, %v4178
    %v4180 = vpop.f32.mrb[0].mxu0
    %v4181 = vadd.f32 0.0, %v4180
    %4182 = vdwg.mxu0
    %v4183 = vadd.f32 %v3973, %v4108
    %v4184 = vadd.f32 %v3974, %v4110
    %v4185 = vadd.f32 %v3975, %v4179
    %v4186 = vadd.f32 %v3976, %v4181
    %v4187 = vxor.u32 %v4183, 2147483648
    %v4188 = vmul.f32 %v4187, 1.442695
    %v4189 = vpow.pop %v4188
    %v4190 = vadd.f32 %v4189, 1.0
    %v4191 = vrcp.pop %v4190
    %v4192 = vmul.f32 1.0, %v4191
    %v4193 = vxor.u32 %v4184, 2147483648
    %v4194 = vmul.f32 %v4193, 1.442695
    %v4195 = vpow.pop %v4194
    %v4196 = vadd.f32 %v4195, 1.0
    %v4197 = vrcp.pop %v4196
    %v4198 = vmul.f32 1.0, %v4197
    %v4199 = vtanh.pop %v4185
    %v4200 = vxor.u32 %v4186, 2147483648
    %v4201 = vmul.f32 %v4200, 1.442695
    %v4202 = vpow.pop %v4201
    %v4203 = vadd.f32 %v4202, 1.0
    %v4204 = vrcp.pop %v4203
    %v4205 = vmul.f32 1.0, %v4204
    %v4206 = vmul.f32 %v4198, %v3972
    %v4207 = vmul.f32 %v4192, %v4199
    %v4208 = vadd.f32 %v4206, %v4207
    %v4209 = vtanh.pop %v4208
    %v4210 = vmul.f32 %v4205, %v4209
    %4211 = vst [vmem:[#allocation4] sm:$0xff] %v4210
    %4212 = vst [vmem:[#allocation5] sm:$0xff] %v4208
    %4213 = vst [vmem:[%s1895] sm:$0xff] %v4210
    %v4214 = vld [vmem:[#allocation4] sm:$0xff]
    %v4215 = vld [vmem:[#allocation5] sm:$0xff]
    %v4216 = vld [vmem:[%s1901] sm:$0xff]
    %v4217 = vld [vmem:[%s1901 + $0x8] sm:$0xff]
    %v4218 = vld [vmem:[%s1901 + $0x10] sm:$0xff]
    %v4219 = vld [vmem:[%s1901 + $0x18] sm:$0xff]
    %v4220 = vld [vmem:[%s2761] sm:$0xff]
    %v4221 = vld [vmem:[%s2761 + $0x8] sm:$0xff]
    %v4222 = vld [vmem:[%s2761 + $0x10] sm:$0xff]
    %v4223 = vld [vmem:[%s2761 + $0x18] sm:$0xff]
    %v4224 = vld [vmem:[%s2761 + $0x20] sm:$0xff]
    %v4225 = vld [vmem:[%s2761 + $0x28] sm:$0xff]
    %v4226 = vld [vmem:[%s2761 + $0x30] sm:$0xff]
    %v4227 = vld [vmem:[%s2761 + $0x38] sm:$0xff]
    %v4228 = vld [vmem:[%s2761 + $0x40] sm:$0xff]
    %v4229 = vld [vmem:[%s2761 + $0x48] sm:$0xff]
    %v4230 = vld [vmem:[%s2761 + $0x50] sm:$0xff]
    %v4231 = vld [vmem:[%s2761 + $0x58] sm:$0xff]
    %v4232 = vld [vmem:[%s2761 + $0x60] sm:$0xff]
    %v4233 = vld [vmem:[%s2761 + $0x68] sm:$0xff]
    %v4234 = vld [vmem:[%s2761 + $0x70] sm:$0xff]
    %v4235 = vld [vmem:[%s2761 + $0x78] sm:$0xff]
    %v4236 = vld [vmem:[%s2761 + $0x80] sm:$0xff]
    %v4237 = vld [vmem:[%s2761 + $0x88] sm:$0xff]
    %v4238 = vld [vmem:[%s2761 + $0x90] sm:$0xff]
    %v4239 = vld [vmem:[%s2761 + $0x98] sm:$0xff]
    %v4240 = vld [vmem:[%s2761 + $0xa0] sm:$0xff]
    %v4241 = vld [vmem:[%s2761 + $0xa8] sm:$0xff]
    %v4242 = vld [vmem:[%s2761 + $0xb0] sm:$0xff]
    %v4243 = vld [vmem:[%s2761 + $0xb8] sm:$0xff]
    %v4244 = vld [vmem:[%s2761 + $0xc0] sm:$0xff]
    %v4245 = vld [vmem:[%s2761 + $0xc8] sm:$0xff]
    %v4246 = vld [vmem:[%s2761 + $0xd0] sm:$0xff]
    %v4247 = vld [vmem:[%s2761 + $0xd8] sm:$0xff]
    %v4248 = vld [vmem:[%s2761 + $0xe0] sm:$0xff]
    %v4249 = vld [vmem:[%s2761 + $0xe8] sm:$0xff]
    %v4250 = vld [vmem:[%s2761 + $0xf0] sm:$0xff]
    %v4251 = vld [vmem:[%s2761 + $0xf8] sm:$0xff]
    %v4252 = vld [vmem:[%s2761 + $0x100] sm:$0xff]
    %v4253 = vld [vmem:[%s2761 + $0x108] sm:$0xff]
    %v4254 = vld [vmem:[%s2761 + $0x110] sm:$0xff]
    %v4255 = vld [vmem:[%s2761 + $0x118] sm:$0xff]
    %v4256 = vld [vmem:[%s2761 + $0x120] sm:$0xff]
    %v4257 = vld [vmem:[%s2761 + $0x128] sm:$0xff]
    %v4258 = vld [vmem:[%s2761 + $0x130] sm:$0xff]
    %v4259 = vld [vmem:[%s2761 + $0x138] sm:$0xff]
    %v4260 = vld [vmem:[%s2761 + $0x140] sm:$0xff]
    %v4261 = vld [vmem:[%s2761 + $0x148] sm:$0xff]
    %v4262 = vld [vmem:[%s2761 + $0x150] sm:$0xff]
    %v4263 = vld [vmem:[%s2761 + $0x158] sm:$0xff]
    %v4264 = vld [vmem:[%s2761 + $0x160] sm:$0xff]
    %v4265 = vld [vmem:[%s2761 + $0x168] sm:$0xff]
    %v4266 = vld [vmem:[%s2761 + $0x170] sm:$0xff]
    %v4267 = vld [vmem:[%s2761 + $0x178] sm:$0xff]
    %v4268 = vld [vmem:[%s2761 + $0x180] sm:$0xff]
    %v4269 = vld [vmem:[%s2761 + $0x188] sm:$0xff]
    %v4270 = vld [vmem:[%s2761 + $0x190] sm:$0xff]
    %v4271 = vld [vmem:[%s2761 + $0x198] sm:$0xff]
    %v4272 = vld [vmem:[%s2761 + $0x1a0] sm:$0xff]
    %v4273 = vld [vmem:[%s2761 + $0x1a8] sm:$0xff]
    %v4274 = vld [vmem:[%s2761 + $0x1b0] sm:$0xff]
    %v4275 = vld [vmem:[%s2761 + $0x1b8] sm:$0xff]
    %v4276 = vld [vmem:[%s2761 + $0x1c0] sm:$0xff]
    %v4277 = vld [vmem:[%s2761 + $0x1c8] sm:$0xff]
    %v4278 = vld [vmem:[%s2761 + $0x1d0] sm:$0xff]
    %v4279 = vld [vmem:[%s2761 + $0x1d8] sm:$0xff]
    %v4280 = vld [vmem:[%s2761 + $0x1e0] sm:$0xff]
    %v4281 = vld [vmem:[%s2761 + $0x1e8] sm:$0xff]
    %v4282 = vld [vmem:[%s2761 + $0x1f0] sm:$0xff]
    %v4283 = vld [vmem:[%s2761 + $0x1f8] sm:$0xff]
    %4284 = vmatprep.subr.mxu0 %v4221
    %4285 = vmatpush1.msra.mxu0 %v4220
    %4286 = vmatprep.subr.mxu0 %v4225
    %4287 = vmatpush1.msra.mxu0 %v4224
    %4288 = vmatprep.subr.mxu0 %v4229
    %4289 = vmatpush1.msra.mxu0 %v4228
    %4290 = vmatprep.subr.mxu0 %v4233
    %4291 = vmatpush1.msra.mxu0 %v4232
    %4292 = vmatprep.subr.mxu0 %v4237
    %4293 = vmatpush1.msra.mxu0 %v4236
    %4294 = vmatprep.subr.mxu0 %v4241
    %4295 = vmatpush1.msra.mxu0 %v4240
    %4296 = vmatprep.subr.mxu0 %v4245
    %4297 = vmatpush1.msra.mxu0 %v4244
    %4298 = vmatprep.subr.mxu0 %v4249
    %4299 = vmatpush1.msra.mxu0 %v4248
    %4300 = vmatprep.subr.mxu0 %v4253
    %4301 = vmatpush1.msra.mxu0 %v4252
    %4302 = vmatprep.subr.mxu0 %v4257
    %4303 = vmatpush1.msra.mxu0 %v4256
    %4304 = vmatprep.subr.mxu0 %v4261
    %4305 = vmatpush1.msra.mxu0 %v4260
    %4306 = vmatprep.subr.mxu0 %v4265
    %4307 = vmatpush1.msra.mxu0 %v4264
    %4308 = vmatprep.subr.mxu0 %v4269
    %4309 = vmatpush1.msra.mxu0 %v4268
    %4310 = vmatprep.subr.mxu0 %v4273
    %4311 = vmatpush1.msra.mxu0 %v4272
    %4312 = vmatprep.subr.mxu0 %v4277
    %4313 = vmatpush1.msra.mxu0 %v4276
    %4314 = vmatprep.subr.mxu0 %v4281
    %4315 = vmatpush1.msra.mxu0 %v4280
    %4316 = vmatprep.subr.mxu0 0.0
    %4317 = vmatpush1.msra.mxu0 0.0
    %4318 = vmatprep.subr.mxu0 0.0
    %4319 = vmatpush1.msra.mxu0 0.0
    %4320 = vmatprep.subr.mxu0 0.0
    %4321 = vmatpush1.msra.mxu0 0.0
    %4322 = vmatprep.subr.mxu0 0.0
    %4323 = vmatpush1.msra.mxu0 0.0
    %4324 = vmatprep.subr.mxu0 0.0
    %4325 = vmatpush1.msra.mxu0 0.0
    %4326 = vmatprep.subr.mxu0 0.0
    %4327 = vmatpush1.msra.mxu0 0.0
    %4328 = vmatprep.subr.mxu0 0.0
    %4329 = vmatpush1.msra.mxu0 0.0
    %4330 = vmatprep.subr.mxu0 0.0
    %4331 = vmatpush1.msra.mxu0 0.0
    %4332 = vmatprep.subr.mxu0 0.0
    %4333 = vmatpush1.msra.mxu0 0.0
    %4334 = vmatprep.subr.mxu0 0.0
    %4335 = vmatpush1.msra.mxu0 0.0
    %4336 = vmatprep.subr.mxu0 0.0
    %4337 = vmatpush1.msra.mxu0 0.0
    %4338 = vmatprep.subr.mxu0 0.0
    %4339 = vmatpush1.msra.mxu0 0.0
    %4340 = vmatprep.subr.mxu0 0.0
    %4341 = vmatpush1.msra.mxu0 0.0
    %4342 = vmatprep.subr.mxu0 0.0
    %4343 = vmatpush1.msra.mxu0 0.0
    %4344 = vmatprep.subr.mxu0 0.0
    %4345 = vmatpush1.msra.mxu0 0.0
    %4346 = vmatprep.subr.mxu0 0.0
    %4347 = vmatpush1.msra.mxu0 0.0
    %4348 = vmatprep.mubr.f32.mxu0 0.0
    %4349 = vmatmul.mubr.f32.gmra.mrb[0].mxu0 %v4214
    %v4350 = vpop.f32.mrb[0].mxu0
    %v4351 = vadd.f32 0.0, %v4350
    %v4352 = vpop.f32.mrb[0].mxu0
    %v4353 = vadd.f32 0.0, %v4352
    %4354 = vdwg.mxu0
    %4355 = vmatprep.subr.mxu0 %v4223
    %4356 = vmatpush1.msra.mxu0 %v4222
    %4357 = vmatprep.subr.mxu0 %v4227
    %4358 = vmatpush1.msra.mxu0 %v4226
    %4359 = vmatprep.subr.mxu0 %v4231
    %4360 = vmatpush1.msra.mxu0 %v4230
    %4361 = vmatprep.subr.mxu0 %v4235
    %4362 = vmatpush1.msra.mxu0 %v4234
    %4363 = vmatprep.subr.mxu0 %v4239
    %4364 = vmatpush1.msra.mxu0 %v4238
    %4365 = vmatprep.subr.mxu0 %v4243
    %4366 = vmatpush1.msra.mxu0 %v4242
    %4367 = vmatprep.subr.mxu0 %v4247
    %4368 = vmatpush1.msra.mxu0 %v4246
    %4369 = vmatprep.subr.mxu0 %v4251
    %4370 = vmatpush1.msra.mxu0 %v4250
    %4371 = vmatprep.subr.mxu0 %v4255
    %4372 = vmatpush1.msra.mxu0 %v4254
    %4373 = vmatprep.subr.mxu0 %v4259
    %4374 = vmatpush1.msra.mxu0 %v4258
    %4375 = vmatprep.subr.mxu0 %v4263
    %4376 = vmatpush1.msra.mxu0 %v4262
    %4377 = vmatprep.subr.mxu0 %v4267
    %4378 = vmatpush1.msra.mxu0 %v4266
    %4379 = vmatprep.subr.mxu0 %v4271
    %4380 = vmatpush1.msra.mxu0 %v4270
    %4381 = vmatprep.subr.mxu0 %v4275
    %4382 = vmatpush1.msra.mxu0 %v4274
    %4383 = vmatprep.subr.mxu0 %v4279
    %4384 = vmatpush1.msra.mxu0 %v4278
    %4385 = vmatprep.subr.mxu0 %v4283
    %4386 = vmatpush1.msra.mxu0 %v4282
    %4387 = vmatprep.subr.mxu0 0.0
    %4388 = vmatpush1.msra.mxu0 0.0
    %4389 = vmatprep.subr.mxu0 0.0
    %4390 = vmatpush1.msra.mxu0 0.0
    %4391 = vmatprep.subr.mxu0 0.0
    %4392 = vmatpush1.msra.mxu0 0.0
    %4393 = vmatprep.subr.mxu0 0.0
    %4394 = vmatpush1.msra.mxu0 0.0
    %4395 = vmatprep.subr.mxu0 0.0
    %4396 = vmatpush1.msra.mxu0 0.0
    %4397 = vmatprep.subr.mxu0 0.0
    %4398 = vmatpush1.msra.mxu0 0.0
    %4399 = vmatprep.subr.mxu0 0.0
    %4400 = vmatpush1.msra.mxu0 0.0
    %4401 = vmatprep.subr.mxu0 0.0
    %4402 = vmatpush1.msra.mxu0 0.0
    %4403 = vmatprep.subr.mxu0 0.0
    %4404 = vmatpush1.msra.mxu0 0.0
    %4405 = vmatprep.subr.mxu0 0.0
    %4406 = vmatpush1.msra.mxu0 0.0
    %4407 = vmatprep.subr.mxu0 0.0
    %4408 = vmatpush1.msra.mxu0 0.0
    %4409 = vmatprep.subr.mxu0 0.0
    %4410 = vmatpush1.msra.mxu0 0.0
    %4411 = vmatprep.subr.mxu0 0.0
    %4412 = vmatpush1.msra.mxu0 0.0
    %4413 = vmatprep.subr.mxu0 0.0
    %4414 = vmatpush1.msra.mxu0 0.0
    %4415 = vmatprep.subr.mxu0 0.0
    %4416 = vmatpush1.msra.mxu0 0.0
    %4417 = vmatprep.subr.mxu0 0.0
    %4418 = vmatpush1.msra.mxu0 0.0
    %4419 = vmatprep.mubr.f32.mxu0 0.0
    %4420 = vmatmul.mubr.f32.gmra.mrb[0].mxu0 %v4214
    %v4421 = vpop.f32.mrb[0].mxu0
    %v4422 = vadd.f32 0.0, %v4421
    %v4423 = vpop.f32.mrb[0].mxu0
    %v4424 = vadd.f32 0.0, %v4423
    %4425 = vdwg.mxu0
    %v4426 = vadd.f32 %v4216, %v4351
    %v4427 = vadd.f32 %v4217, %v4353
    %v4428 = vadd.f32 %v4218, %v4422
    %v4429 = vadd.f32 %v4219, %v4424
    %v4430 = vxor.u32 %v4426, 2147483648
    %v4431 = vmul.f32 %v4430, 1.442695
    %v4432 = vpow.pop %v4431
    %v4433 = vadd.f32 %v4432, 1.0
    %v4434 = vrcp.pop %v4433
    %v4435 = vmul.f32 1.0, %v4434
    %v4436 = vxor.u32 %v4427, 2147483648
    %v4437 = vmul.f32 %v4436, 1.442695
    %v4438 = vpow.pop %v4437
    %v4439 = vadd.f32 %v4438, 1.0
    %v4440 = vrcp.pop %v4439
    %v4441 = vmul.f32 1.0, %v4440
    %v4442 = vtanh.pop %v4428
    %v4443 = vxor.u32 %v4429, 2147483648
    %v4444 = vmul.f32 %v4443, 1.442695
    %v4445 = vpow.pop %v4444
    %v4446 = vadd.f32 %v4445, 1.0
    %v4447 = vrcp.pop %v4446
    %v4448 = vmul.f32 1.0, %v4447
    %v4449 = vmul.f32 %v4441, %v4215
    %v4450 = vmul.f32 %v4435, %v4442
    %v4451 = vadd.f32 %v4449, %v4450
    %v4452 = vtanh.pop %v4451
    %v4453 = vmul.f32 %v4448, %v4452
    %4454 = vst [vmem:[#allocation4] sm:$0xff] %v4453
    %4455 = vst [vmem:[#allocation5] sm:$0xff] %v4451
    %4456 = vst [vmem:[%s2142] sm:$0xff] %v4453
    %v4457 = vld [vmem:[#allocation4] sm:$0xff]
    %v4458 = vld [vmem:[#allocation5] sm:$0xff]
    %v4459 = vld [vmem:[%s2148] sm:$0xff]
    %v4460 = vld [vmem:[%s2148 + $0x8] sm:$0xff]
    %v4461 = vld [vmem:[%s2148 + $0x10] sm:$0xff]
    %v4462 = vld [vmem:[%s2148 + $0x18] sm:$0xff]
    %v4463 = vld [vmem:[%s2761] sm:$0xff]
    %v4464 = vld [vmem:[%s2761 + $0x8] sm:$0xff]
    %v4465 = vld [vmem:[%s2761 + $0x10] sm:$0xff]
    %v4466 = vld [vmem:[%s2761 + $0x18] sm:$0xff]
    %v4467 = vld [vmem:[%s2761 + $0x20] sm:$0xff]
    %v4468 = vld [vmem:[%s2761 + $0x28] sm:$0xff]
    %v4469 = vld [vmem:[%s2761 + $0x30] sm:$0xff]
    %v4470 = vld [vmem:[%s2761 + $0x38] sm:$0xff]
    %v4471 = vld [vmem:[%s2761 + $0x40] sm:$0xff]
    %v4472 = vld [vmem:[%s2761 + $0x48] sm:$0xff]
    %v4473 = vld [vmem:[%s2761 + $0x50] sm:$0xff]
    %v4474 = vld [vmem:[%s2761 + $0x58] sm:$0xff]
    %v4475 = vld [vmem:[%s2761 + $0x60] sm:$0xff]
    %v4476 = vld [vmem:[%s2761 + $0x68] sm:$0xff]
    %v4477 = vld [vmem:[%s2761 + $0x70] sm:$0xff]
    %v4478 = vld [vmem:[%s2761 + $0x78] sm:$0xff]
    %v4479 = vld [vmem:[%s2761 + $0x80] sm:$0xff]
    %v4480 = vld [vmem:[%s2761 + $0x88] sm:$0xff]
    %v4481 = vld [vmem:[%s2761 + $0x90] sm:$0xff]
    %v4482 = vld [vmem:[%s2761 + $0x98] sm:$0xff]
    %v4483 = vld [vmem:[%s2761 + $0xa0] sm:$0xff]
    %v4484 = vld [vmem:[%s2761 + $0xa8] sm:$0xff]
    %v4485 = vld [vmem:[%s2761 + $0xb0] sm:$0xff]
    %v4486 = vld [vmem:[%s2761 + $0xb8] sm:$0xff]
    %v4487 = vld [vmem:[%s2761 + $0xc0] sm:$0xff]
    %v4488 = vld [vmem:[%s2761 + $0xc8] sm:$0xff]
    %v4489 = vld [vmem:[%s2761 + $0xd0] sm:$0xff]
    %v4490 = vld [vmem:[%s2761 + $0xd8] sm:$0xff]
    %v4491 = vld [vmem:[%s2761 + $0xe0] sm:$0xff]
    %v4492 = vld [vmem:[%s2761 + $0xe8] sm:$0xff]
    %v4493 = vld [vmem:[%s2761 + $0xf0] sm:$0xff]
    %v4494 = vld [vmem:[%s2761 + $0xf8] sm:$0xff]
    %v4495 = vld [vmem:[%s2761 + $0x100] sm:$0xff]
    %v4496 = vld [vmem:[%s2761 + $0x108] sm:$0xff]
    %v4497 = vld [vmem:[%s2761 + $0x110] sm:$0xff]
    %v4498 = vld [vmem:[%s2761 + $0x118] sm:$0xff]
    %v4499 = vld [vmem:[%s2761 + $0x120] sm:$0xff]
    %v4500 = vld [vmem:[%s2761 + $0x128] sm:$0xff]
    %v4501 = vld [vmem:[%s2761 + $0x130] sm:$0xff]
    %v4502 = vld [vmem:[%s2761 + $0x138] sm:$0xff]
    %v4503 = vld [vmem:[%s2761 + $0x140] sm:$0xff]
    %v4504 = vld [vmem:[%s2761 + $0x148] sm:$0xff]
    %v4505 = vld [vmem:[%s2761 + $0x150] sm:$0xff]
    %v4506 = vld [vmem:[%s2761 + $0x158] sm:$0xff]
    %v4507 = vld [vmem:[%s2761 + $0x160] sm:$0xff]
    %v4508 = vld [vmem:[%s2761 + $0x168] sm:$0xff]
    %v4509 = vld [vmem:[%s2761 + $0x170] sm:$0xff]
    %v4510 = vld [vmem:[%s2761 + $0x178] sm:$0xff]
    %v4511 = vld [vmem:[%s2761 + $0x180] sm:$0xff]
    %v4512 = vld [vmem:[%s2761 + $0x188] sm:$0xff]
    %v4513 = vld [vmem:[%s2761 + $0x190] sm:$0xff]
    %v4514 = vld [vmem:[%s2761 + $0x198] sm:$0xff]
    %v4515 = vld [vmem:[%s2761 + $0x1a0] sm:$0xff]
    %v4516 = vld [vmem:[%s2761 + $0x1a8] sm:$0xff]
    %v4517 = vld [vmem:[%s2761 + $0x1b0] sm:$0xff]
    %v4518 = vld [vmem:[%s2761 + $0x1b8] sm:$0xff]
    %v4519 = vld [vmem:[%s2761 + $0x1c0] sm:$0xff]
    %v4520 = vld [vmem:[%s2761 + $0x1c8] sm:$0xff]
    %v4521 = vld [vmem:[%s2761 + $0x1d0] sm:$0xff]
    %v4522 = vld [vmem:[%s2761 + $0x1d8] sm:$0xff]
    %v4523 = vld [vmem:[%s2761 + $0x1e0] sm:$0xff]
    %v4524 = vld [vmem:[%s2761 + $0x1e8] sm:$0xff]
    %v4525 = vld [vmem:[%s2761 + $0x1f0] sm:$0xff]
    %v4526 = vld [vmem:[%s2761 + $0x1f8] sm:$0xff]
    %4527 = vmatprep.subr.mxu0 %v4464
    %4528 = vmatpush1.msra.mxu0 %v4463
    %4529 = vmatprep.subr.mxu0 %v4468
    %4530 = vmatpush1.msra.mxu0 %v4467
    %4531 = vmatprep.subr.mxu0 %v4472
    %4532 = vmatpush1.msra.mxu0 %v4471
    %4533 = vmatprep.subr.mxu0 %v4476
    %4534 = vmatpush1.msra.mxu0 %v4475
    %4535 = vmatprep.subr.mxu0 %v4480
    %4536 = vmatpush1.msra.mxu0 %v4479
    %4537 = vmatprep.subr.mxu0 %v4484
    %4538 = vmatpush1.msra.mxu0 %v4483
    %4539 = vmatprep.subr.mxu0 %v4488
    %4540 = vmatpush1.msra.mxu0 %v4487
    %4541 = vmatprep.subr.mxu0 %v4492
    %4542 = vmatpush1.msra.mxu0 %v4491
    %4543 = vmatprep.subr.mxu0 %v4496
    %4544 = vmatpush1.msra.mxu0 %v4495
    %4545 = vmatprep.subr.mxu0 %v4500
    %4546 = vmatpush1.msra.mxu0 %v4499
    %4547 = vmatprep.subr.mxu0 %v4504
    %4548 = vmatpush1.msra.mxu0 %v4503
    %4549 = vmatprep.subr.mxu0 %v4508
    %4550 = vmatpush1.msra.mxu0 %v4507
    %4551 = vmatprep.subr.mxu0 %v4512
    %4552 = vmatpush1.msra.mxu0 %v4511
    %4553 = vmatprep.subr.mxu0 %v4516
    %4554 = vmatpush1.msra.mxu0 %v4515
    %4555 = vmatprep.subr.mxu0 %v4520
    %4556 = vmatpush1.msra.mxu0 %v4519
    %4557 = vmatprep.subr.mxu0 %v4524
    %4558 = vmatpush1.msra.mxu0 %v4523
    %4559 = vmatprep.subr.mxu0 0.0
    %4560 = vmatpush1.msra.mxu0 0.0
    %4561 = vmatprep.subr.mxu0 0.0
    %4562 = vmatpush1.msra.mxu0 0.0
    %4563 = vmatprep.subr.mxu0 0.0
    %4564 = vmatpush1.msra.mxu0 0.0
    %4565 = vmatprep.subr.mxu0 0.0
    %4566 = vmatpush1.msra.mxu0 0.0
    %4567 = vmatprep.subr.mxu0 0.0
    %4568 = vmatpush1.msra.mxu0 0.0
    %4569 = vmatprep.subr.mxu0 0.0
    %4570 = vmatpush1.msra.mxu0 0.0
    %4571 = vmatprep.subr.mxu0 0.0
    %4572 = vmatpush1.msra.mxu0 0.0
    %4573 = vmatprep.subr.mxu0 0.0
    %4574 = vmatpush1.msra.mxu0 0.0
    %4575 = vmatprep.subr.mxu0 0.0
    %4576 = vmatpush1.msra.mxu0 0.0
    %4577 = vmatprep.subr.mxu0 0.0
    %4578 = vmatpush1.msra.mxu0 0.0
    %4579 = vmatprep.subr.mxu0 0.0
    %4580 = vmatpush1.msra.mxu0 0.0
    %4581 = vmatprep.subr.mxu0 0.0
    %4582 = vmatpush1.msra.mxu0 0.0
    %4583 = vmatprep.subr.mxu0 0.0
    %4584 = vmatpush1.msra.mxu0 0.0
    %4585 = vmatprep.subr.mxu0 0.0
    %4586 = vmatpush1.msra.mxu0 0.0
    %4587 = vmatprep.subr.mxu0 0.0
    %4588 = vmatpush1.msra.mxu0 0.0
    %4589 = vmatprep.subr.mxu0 0.0
    %4590 = vmatpush1.msra.mxu0 0.0
    %4591 = vmatprep.mubr.f32.mxu0 0.0
    %4592 = vmatmul.mubr.f32.gmra.mrb[0].mxu0 %v4457
    %v4593 = vpop.f32.mrb[0].mxu0
    %v4594 = vadd.f32 0.0, %v4593
    %v4595 = vpop.f32.mrb[0].mxu0
    %v4596 = vadd.f32 0.0, %v4595
    %4597 = vdwg.mxu0
    %4598 = vmatprep.subr.mxu0 %v4466
    %4599 = vmatpush1.msra.mxu0 %v4465
    %4600 = vmatprep.subr.mxu0 %v4470
    %4601 = vmatpush1.msra.mxu0 %v4469
    %4602 = vmatprep.subr.mxu0 %v4474
    %4603 = vmatpush1.msra.mxu0 %v4473
    %4604 = vmatprep.subr.mxu0 %v4478
    %4605 = vmatpush1.msra.mxu0 %v4477
    %4606 = vmatprep.subr.mxu0 %v4482
    %4607 = vmatpush1.msra.mxu0 %v4481
    %4608 = vmatprep.subr.mxu0 %v4486
    %4609 = vmatpush1.msra.mxu0 %v4485
    %4610 = vmatprep.subr.mxu0 %v4490
    %4611 = vmatpush1.msra.mxu0 %v4489
    %4612 = vmatprep.subr.mxu0 %v4494
    %4613 = vmatpush1.msra.mxu0 %v4493
    %4614 = vmatprep.subr.mxu0 %v4498
    %4615 = vmatpush1.msra.mxu0 %v4497
    %4616 = vmatprep.subr.mxu0 %v4502
    %4617 = vmatpush1.msra.mxu0 %v4501
    %4618 = vmatprep.subr.mxu0 %v4506
    %4619 = vmatpush1.msra.mxu0 %v4505
    %4620 = vmatprep.subr.mxu0 %v4510
    %4621 = vmatpush1.msra.mxu0 %v4509
    %4622 = vmatprep.subr.mxu0 %v4514
    %4623 = vmatpush1.msra.mxu0 %v4513
    %4624 = vmatprep.subr.mxu0 %v4518
    %4625 = vmatpush1.msra.mxu0 %v4517
    %4626 = vmatprep.subr.mxu0 %v4522
    %4627 = vmatpush1.msra.mxu0 %v4521
    %4628 = vmatprep.subr.mxu0 %v4526
    %4629 = vmatpush1.msra.mxu0 %v4525
    %4630 = vmatprep.subr.mxu0 0.0
    %4631 = vmatpush1.msra.mxu0 0.0
    %4632 = vmatprep.subr.mxu0 0.0
    %4633 = vmatpush1.msra.mxu0 0.0
    %4634 = vmatprep.subr.mxu0 0.0
    %4635 = vmatpush1.msra.mxu0 0.0
    %4636 = vmatprep.subr.mxu0 0.0
    %4637 = vmatpush1.msra.mxu0 0.0
    %4638 = vmatprep.subr.mxu0 0.0
    %4639 = vmatpush1.msra.mxu0 0.0
    %4640 = vmatprep.subr.mxu0 0.0
    %4641 = vmatpush1.msra.mxu0 0.0
    %4642 = vmatprep.subr.mxu0 0.0
    %4643 = vmatpush1.msra.mxu0 0.0
    %4644 = vmatprep.subr.mxu0 0.0
    %4645 = vmatpush1.msra.mxu0 0.0
    %4646 = vmatprep.subr.mxu0 0.0
    %4647 = vmatpush1.msra.mxu0 0.0
    %4648 = vmatprep.subr.mxu0 0.0
    %4649 = vmatpush1.msra.mxu0 0.0
    %4650 = vmatprep.subr.mxu0 0.0
    %4651 = vmatpush1.msra.mxu0 0.0
    %4652 = vmatprep.subr.mxu0 0.0
    %4653 = vmatpush1.msra.mxu0 0.0
    %4654 = vmatprep.subr.mxu0 0.0
    %4655 = vmatpush1.msra.mxu0 0.0
    %4656 = vmatprep.subr.mxu0 0.0
    %4657 = vmatpush1.msra.mxu0 0.0
    %4658 = vmatprep.subr.mxu0 0.0
    %4659 = vmatpush1.msra.mxu0 0.0
    %4660 = vmatprep.subr.mxu0 0.0
    %4661 = vmatpush1.msra.mxu0 0.0
    %4662 = vmatprep.mubr.f32.mxu0 0.0
    %4663 = vmatmul.mubr.f32.gmra.mrb[0].mxu0 %v4457
    %v4664 = vpop.f32.mrb[0].mxu0
    %v4665 = vadd.f32 0.0, %v4664
    %v4666 = vpop.f32.mrb[0].mxu0
    %v4667 = vadd.f32 0.0, %v4666
    %4668 = vdwg.mxu0
    %v4669 = vadd.f32 %v4459, %v4594
    %v4670 = vadd.f32 %v4460, %v4596
    %v4671 = vadd.f32 %v4461, %v4665
    %v4672 = vadd.f32 %v4462, %v4667
    %v4673 = vxor.u32 %v4669, 2147483648
    %v4674 = vmul.f32 %v4673, 1.442695
    %v4675 = vpow.pop %v4674
    %v4676 = vadd.f32 %v4675, 1.0
    %v4677 = vrcp.pop %v4676
    %v4678 = vmul.f32 1.0, %v4677
    %v4679 = vxor.u32 %v4670, 2147483648
    %v4680 = vmul.f32 %v4679, 1.442695
    %v4681 = vpow.pop %v4680
    %v4682 = vadd.f32 %v4681, 1.0
    %v4683 = vrcp.pop %v4682
    %v4684 = vmul.f32 1.0, %v4683
    %v4685 = vtanh.pop %v4671
    %v4686 = vxor.u32 %v4672, 2147483648
    %v4687 = vmul.f32 %v4686, 1.442695
    %v4688 = vpow.pop %v4687
    %v4689 = vadd.f32 %v4688, 1.0
    %v4690 = vrcp.pop %v4689
    %v4691 = vmul.f32 1.0, %v4690
    %v4692 = vmul.f32 %v4684, %v4458
    %v4693 = vmul.f32 %v4678, %v4685
    %v4694 = vadd.f32 %v4692, %v4693
    %v4695 = vtanh.pop %v4694
    %v4696 = vmul.f32 %v4691, %v4695
    %4697 = vst [vmem:[#allocation4] sm:$0xff] %v4696
    %4698 = vst [vmem:[#allocation5] sm:$0xff] %v4694
    %4699 = vst [vmem:[%s2389] sm:$0xff] %v4696
    %v4700 = vld [vmem:[#allocation4] sm:$0xff]
    %s4701 = scalar_lea.vmem %s9, 8
    %4702 = vst [vmem:[%s4701] sm:$0xff] %v4700
    %v4703 = vld [vmem:[#allocation5] sm:$0xff]
    %s4704 = scalar_lea.vmem %s10, 8
    %4705 = vst [vmem:[%s4704] sm:$0xff] %v4703
    %v4706 = vld [vmem:[#allocation2] sm:$0xff]
    %v4707 = vld [vmem:[#allocation2 + $0x8] sm:$0xff]
    %v4708 = vld [vmem:[#allocation2 + $0x10] sm:$0xff]
    %v4709 = vld [vmem:[#allocation2 + $0x18] sm:$0xff]
    %v4710 = vld [vmem:[#allocation2 + $0x20] sm:$0xff]
    %v4711 = vld [vmem:[#allocation2 + $0x28] sm:$0xff]
    %v4712 = vld [vmem:[#allocation2 + $0x30] sm:$0xff]
    %v4713 = vld [vmem:[#allocation2 + $0x38] sm:$0xff]
    %s4714 = scalar_lea.vmem [#allocation6], 1024
    %v4715 = vld [vmem:[%s4714] sm:$0xff]
    %v4716 = vld [vmem:[%s4714 + $0x8] sm:$0xff]
    %v4717 = vld [vmem:[%s4714 + $0x10] sm:$0xff]
    %v4718 = vld [vmem:[%s4714 + $0x18] sm:$0xff]
    %v4719 = vld [vmem:[%s4714 + $0x20] sm:$0xff]
    %v4720 = vld [vmem:[%s4714 + $0x28] sm:$0xff]
    %v4721 = vld [vmem:[%s4714 + $0x30] sm:$0xff]
    %v4722 = vld [vmem:[%s4714 + $0x38] sm:$0xff]
    %v4723 = vld [vmem:[%s4714 + $0x40] sm:$0xff]
    %v4724 = vld [vmem:[%s4714 + $0x48] sm:$0xff]
    %v4725 = vld [vmem:[%s4714 + $0x50] sm:$0xff]
    %v4726 = vld [vmem:[%s4714 + $0x58] sm:$0xff]
    %v4727 = vld [vmem:[%s4714 + $0x60] sm:$0xff]
    %v4728 = vld [vmem:[%s4714 + $0x68] sm:$0xff]
    %v4729 = vld [vmem:[%s4714 + $0x70] sm:$0xff]
    %v4730 = vld [vmem:[%s4714 + $0x78] sm:$0xff]
    %v4731 = vld [vmem:[%s4714 + $0x80] sm:$0xff]
    %v4732 = vld [vmem:[%s4714 + $0x88] sm:$0xff]
    %v4733 = vld [vmem:[%s4714 + $0x90] sm:$0xff]
    %v4734 = vld [vmem:[%s4714 + $0x98] sm:$0xff]
    %v4735 = vld [vmem:[%s4714 + $0xa0] sm:$0xff]
    %v4736 = vld [vmem:[%s4714 + $0xa8] sm:$0xff]
    %v4737 = vld [vmem:[%s4714 + $0xb0] sm:$0xff]
    %v4738 = vld [vmem:[%s4714 + $0xb8] sm:$0xff]
    %v4739 = vld [vmem:[%s4714 + $0xc0] sm:$0xff]
    %v4740 = vld [vmem:[%s4714 + $0xc8] sm:$0xff]
    %v4741 = vld [vmem:[%s4714 + $0xd0] sm:$0xff]
    %v4742 = vld [vmem:[%s4714 + $0xd8] sm:$0xff]
    %v4743 = vld [vmem:[%s4714 + $0xe0] sm:$0xff]
    %v4744 = vld [vmem:[%s4714 + $0xe8] sm:$0xff]
    %v4745 = vld [vmem:[%s4714 + $0xf0] sm:$0xff]
    %v4746 = vld [vmem:[%s4714 + $0xf8] sm:$0xff]
    %v4747 = vld [vmem:[%s4714 + $0x100] sm:$0xff]
    %v4748 = vld [vmem:[%s4714 + $0x108] sm:$0xff]
    %v4749 = vld [vmem:[%s4714 + $0x110] sm:$0xff]
    %v4750 = vld [vmem:[%s4714 + $0x118] sm:$0xff]
    %v4751 = vld [vmem:[%s4714 + $0x120] sm:$0xff]
    %v4752 = vld [vmem:[%s4714 + $0x128] sm:$0xff]
    %v4753 = vld [vmem:[%s4714 + $0x130] sm:$0xff]
    %v4754 = vld [vmem:[%s4714 + $0x138] sm:$0xff]
    %v4755 = vld [vmem:[%s4714 + $0x140] sm:$0xff]
    %v4756 = vld [vmem:[%s4714 + $0x148] sm:$0xff]
    %v4757 = vld [vmem:[%s4714 + $0x150] sm:$0xff]
    %v4758 = vld [vmem:[%s4714 + $0x158] sm:$0xff]
    %v4759 = vld [vmem:[%s4714 + $0x160] sm:$0xff]
    %v4760 = vld [vmem:[%s4714 + $0x168] sm:$0xff]
    %v4761 = vld [vmem:[%s4714 + $0x170] sm:$0xff]
    %v4762 = vld [vmem:[%s4714 + $0x178] sm:$0xff]
    %v4763 = vld [vmem:[%s4714 + $0x180] sm:$0xff]
    %v4764 = vld [vmem:[%s4714 + $0x188] sm:$0xff]
    %v4765 = vld [vmem:[%s4714 + $0x190] sm:$0xff]
    %v4766 = vld [vmem:[%s4714 + $0x198] sm:$0xff]
    %v4767 = vld [vmem:[%s4714 + $0x1a0] sm:$0xff]
    %v4768 = vld [vmem:[%s4714 + $0x1a8] sm:$0xff]
    %v4769 = vld [vmem:[%s4714 + $0x1b0] sm:$0xff]
    %v4770 = vld [vmem:[%s4714 + $0x1b8] sm:$0xff]
    %v4771 = vld [vmem:[%s4714 + $0x1c0] sm:$0xff]
    %v4772 = vld [vmem:[%s4714 + $0x1c8] sm:$0xff]
    %v4773 = vld [vmem:[%s4714 + $0x1d0] sm:$0xff]
    %v4774 = vld [vmem:[%s4714 + $0x1d8] sm:$0xff]
    %v4775 = vld [vmem:[%s4714 + $0x1e0] sm:$0xff]
    %v4776 = vld [vmem:[%s4714 + $0x1e8] sm:$0xff]
    %v4777 = vld [vmem:[%s4714 + $0x1f0] sm:$0xff]
    %v4778 = vld [vmem:[%s4714 + $0x1f8] sm:$0xff]
    %s4779 = scalar_lea.vmem %s3, 8
    %v4780 = vld [vmem:[%s4779] sm:$0xf]
    %v4782 = vlaneseq
    %v4783 = vshrl.u32 %v4782, 7
    %v4784 = vsub.s32 0, %v4783
    %v4785 = vrot.slane %v4780, %v4784
    %v4786 = vlaneseq
    %v4787 = vshrl.u32 %v4786, 7
    %v4788 = vsub.s32 1, %v4787
    %v4789 = vrot.slane %v4780, %v4788
    %v4790 = vlaneseq
    %v4791 = vshrl.u32 %v4790, 7
    %v4792 = vsub.s32 2, %v4791
    %v4793 = vrot.slane %v4780, %v4792
    %v4794 = vlaneseq
    %v4795 = vshrl.u32 %v4794, 7
    %v4796 = vsub.s32 3, %v4795
    %v4797 = vrot.slane %v4780, %v4796
    %4802 = vmatprep.subr.mxu0 %v4716
    %4803 = vmatpush1.msra.mxu0 %v4715
    %4804 = vmatprep.subr.mxu0 %v4720
    %4805 = vmatpush1.msra.mxu0 %v4719
    %4806 = vmatprep.subr.mxu0 %v4724
    %4807 = vmatpush1.msra.mxu0 %v4723
    %4808 = vmatprep.subr.mxu0 %v4728
    %4809 = vmatpush1.msra.mxu0 %v4727
    %4810 = vmatprep.subr.mxu0 %v4732
    %4811 = vmatpush1.msra.mxu0 %v4731
    %4812 = vmatprep.subr.mxu0 %v4736
    %4813 = vmatpush1.msra.mxu0 %v4735
    %4814 = vmatprep.subr.mxu0 %v4740
    %4815 = vmatpush1.msra.mxu0 %v4739
    %4816 = vmatprep.subr.mxu0 %v4744
    %4817 = vmatpush1.msra.mxu0 %v4743
    %4818 = vmatprep.subr.mxu0 %v4748
    %4819 = vmatpush1.msra.mxu0 %v4747
    %4820 = vmatprep.subr.mxu0 %v4752
    %4821 = vmatpush1.msra.mxu0 %v4751
    %4822 = vmatprep.subr.mxu0 %v4756
    %4823 = vmatpush1.msra.mxu0 %v4755
    %4824 = vmatprep.subr.mxu0 %v4760
    %4825 = vmatpush1.msra.mxu0 %v4759
    %4826 = vmatprep.subr.mxu0 %v4764
    %4827 = vmatpush1.msra.mxu0 %v4763
    %4828 = vmatprep.subr.mxu0 %v4768
    %4829 = vmatpush1.msra.mxu0 %v4767
    %4830 = vmatprep.subr.mxu0 %v4772
    %4831 = vmatpush1.msra.mxu0 %v4771
    %4832 = vmatprep.subr.mxu0 %v4776
    %4833 = vmatpush1.msra.mxu0 %v4775
    %4834 = vmatprep.subr.mxu0 0.0
    %4835 = vmatpush1.msra.mxu0 0.0
    %4836 = vmatprep.subr.mxu0 0.0
    %4837 = vmatpush1.msra.mxu0 0.0
    %4838 = vmatprep.subr.mxu0 0.0
    %4839 = vmatpush1.msra.mxu0 0.0
    %4840 = vmatprep.subr.mxu0 0.0
    %4841 = vmatpush1.msra.mxu0 0.0
    %4842 = vmatprep.subr.mxu0 0.0
    %4843 = vmatpush1.msra.mxu0 0.0
    %4844 = vmatprep.subr.mxu0 0.0
    %4845 = vmatpush1.msra.mxu0 0.0
    %4846 = vmatprep.subr.mxu0 0.0
    %4847 = vmatpush1.msra.mxu0 0.0
    %4848 = vmatprep.subr.mxu0 0.0
    %4849 = vmatpush1.msra.mxu0 0.0
    %4850 = vmatprep.subr.mxu0 0.0
    %4851 = vmatpush1.msra.mxu0 0.0
    %4852 = vmatprep.subr.mxu0 0.0
    %4853 = vmatpush1.msra.mxu0 0.0
    %4854 = vmatprep.subr.mxu0 0.0
    %4855 = vmatpush1.msra.mxu0 0.0
    %4856 = vmatprep.subr.mxu0 0.0
    %4857 = vmatpush1.msra.mxu0 0.0
    %4858 = vmatprep.subr.mxu0 0.0
    %4859 = vmatpush1.msra.mxu0 0.0
    %4860 = vmatprep.subr.mxu0 0.0
    %4861 = vmatpush1.msra.mxu0 0.0
    %4862 = vmatprep.subr.mxu0 0.0
    %4863 = vmatpush1.msra.mxu0 0.0
    %4864 = vmatprep.subr.mxu0 0.0
    %4865 = vmatpush1.msra.mxu0 0.0
    %4866 = vmatprep.mubr.f32.mxu0 0.0
    %4867 = vmatmul.mubr.f32.gmra.mrb[0].mxu0 %v4706
    %v4868 = vpop.f32.mrb[0].mxu0
    %v4869 = vadd.f32 %v4785, %v4868
    %v4870 = vpop.f32.mrb[0].mxu0
    %v4871 = vadd.f32 %v4789, %v4870
    %4872 = vmatprep.mubr.f32.mxu0 0.0
    %4873 = vmatmul.mubr.f32.gmra.mrb[0].mxu0 %v4707
    %v4874 = vpop.f32.mrb[0].mxu0
    %v4875 = vadd.f32 %v4785, %v4874
    %v4876 = vpop.f32.mrb[0].mxu0
    %v4877 = vadd.f32 %v4789, %v4876
    %4878 = vmatprep.mubr.f32.mxu0 0.0
    %4879 = vmatmul.mubr.f32.gmra.mrb[0].mxu0 %v4708
    %v4880 = vpop.f32.mrb[0].mxu0
    %v4881 = vadd.f32 %v4785, %v4880
    %v4882 = vpop.f32.mrb[0].mxu0
    %v4883 = vadd.f32 %v4789, %v4882
    %4884 = vmatprep.mubr.f32.mxu0 0.0
    %4885 = vmatmul.mubr.f32.gmra.mrb[0].mxu0 %v4709
    %v4886 = vpop.f32.mrb[0].mxu0
    %v4887 = vadd.f32 %v4785, %v4886
    %v4888 = vpop.f32.mrb[0].mxu0
    %v4889 = vadd.f32 %v4789, %v4888
    %4890 = vmatprep.mubr.f32.mxu0 0.0
    %4891 = vmatmul.mubr.f32.gmra.mrb[0].mxu0 %v4710
    %v4892 = vpop.f32.mrb[0].mxu0
    %v4893 = vadd.f32 %v4785, %v4892
    %v4894 = vpop.f32.mrb[0].mxu0
    %v4895 = vadd.f32 %v4789, %v4894
    %4896 = vmatprep.mubr.f32.mxu0 0.0
    %4897 = vmatmul.mubr.f32.gmra.mrb[0].mxu0 %v4711
    %v4898 = vpop.f32.mrb[0].mxu0
    %v4899 = vadd.f32 %v4785, %v4898
    %v4900 = vpop.f32.mrb[0].mxu0
    %v4901 = vadd.f32 %v4789, %v4900
    %4902 = vmatprep.mubr.f32.mxu0 0.0
    %4903 = vmatmul.mubr.f32.gmra.mrb[0].mxu0 %v4712
    %v4904 = vpop.f32.mrb[0].mxu0
    %v4905 = vadd.f32 %v4785, %v4904
    %v4906 = vpop.f32.mrb[0].mxu0
    %v4907 = vadd.f32 %v4789, %v4906
    %4908 = vmatprep.mubr.f32.mxu0 0.0
    %4909 = vmatmul.mubr.f32.gmra.mrb[0].mxu0 %v4713
    %v4910 = vpop.f32.mrb[0].mxu0
    %v4911 = vadd.f32 %v4785, %v4910
    %v4912 = vpop.f32.mrb[0].mxu0
    %v4913 = vadd.f32 %v4789, %v4912
    %4914 = vdwg.mxu0
    %4915 = vmatprep.subr.mxu0 %v4718
    %4916 = vmatpush1.msra.mxu0 %v4717
    %4917 = vmatprep.subr.mxu0 %v4722
    %4918 = vmatpush1.msra.mxu0 %v4721
    %4919 = vmatprep.subr.mxu0 %v4726
    %4920 = vmatpush1.msra.mxu0 %v4725
    %4921 = vmatprep.subr.mxu0 %v4730
    %4922 = vmatpush1.msra.mxu0 %v4729
    %4923 = vmatprep.subr.mxu0 %v4734
    %4924 = vmatpush1.msra.mxu0 %v4733
    %4925 = vmatprep.subr.mxu0 %v4738
    %4926 = vmatpush1.msra.mxu0 %v4737
    %4927 = vmatprep.subr.mxu0 %v4742
    %4928 = vmatpush1.msra.mxu0 %v4741
    %4929 = vmatprep.subr.mxu0 %v4746
    %4930 = vmatpush1.msra.mxu0 %v4745
    %4931 = vmatprep.subr.mxu0 %v4750
    %4932 = vmatpush1.msra.mxu0 %v4749
    %4933 = vmatprep.subr.mxu0 %v4754
    %4934 = vmatpush1.msra.mxu0 %v4753
    %4935 = vmatprep.subr.mxu0 %v4758
    %4936 = vmatpush1.msra.mxu0 %v4757
    %4937 = vmatprep.subr.mxu0 %v4762
    %4938 = vmatpush1.msra.mxu0 %v4761
    %4939 = vmatprep.subr.mxu0 %v4766
    %4940 = vmatpush1.msra.mxu0 %v4765
    %4941 = vmatprep.subr.mxu0 %v4770
    %4942 = vmatpush1.msra.mxu0 %v4769
    %4943 = vmatprep.subr.mxu0 %v4774
    %4944 = vmatpush1.msra.mxu0 %v4773
    %4945 = vmatprep.subr.mxu0 %v4778
    %4946 = vmatpush1.msra.mxu0 %v4777
    %4947 = vmatprep.subr.mxu0 0.0
    %4948 = vmatpush1.msra.mxu0 0.0
    %4949 = vmatprep.subr.mxu0 0.0
    %4950 = vmatpush1.msra.mxu0 0.0
    %4951 = vmatprep.subr.mxu0 0.0
    %4952 = vmatpush1.msra.mxu0 0.0
    %4953 = vmatprep.subr.mxu0 0.0
    %4954 = vmatpush1.msra.mxu0 0.0
    %4955 = vmatprep.subr.mxu0 0.0
    %4956 = vmatpush1.msra.mxu0 0.0
    %4957 = vmatprep.subr.mxu0 0.0
    %4958 = vmatpush1.msra.mxu0 0.0
    %4959 = vmatprep.subr.mxu0 0.0
    %4960 = vmatpush1.msra.mxu0 0.0
    %4961 = vmatprep.subr.mxu0 0.0
    %4962 = vmatpush1.msra.mxu0 0.0
    %4963 = vmatprep.subr.mxu0 0.0
    %4964 = vmatpush1.msra.mxu0 0.0
    %4965 = vmatprep.subr.mxu0 0.0
    %4966 = vmatpush1.msra.mxu0 0.0
    %4967 = vmatprep.subr.mxu0 0.0
    %4968 = vmatpush1.msra.mxu0 0.0
    %4969 = vmatprep.subr.mxu0 0.0
    %4970 = vmatpush1.msra.mxu0 0.0
    %4971 = vmatprep.subr.mxu0 0.0
    %4972 = vmatpush1.msra.mxu0 0.0
    %4973 = vmatprep.subr.mxu0 0.0
    %4974 = vmatpush1.msra.mxu0 0.0
    %4975 = vmatprep.subr.mxu0 0.0
    %4976 = vmatpush1.msra.mxu0 0.0
    %4977 = vmatprep.subr.mxu0 0.0
    %4978 = vmatpush1.msra.mxu0 0.0
    %4979 = vmatprep.mubr.f32.mxu0 0.0
    %4980 = vmatmul.mubr.f32.gmra.mrb[0].mxu0 %v4706
    %v4981 = vpop.f32.mrb[0].mxu0
    %v4982 = vadd.f32 %v4793, %v4981
    %v4983 = vpop.f32.mrb[0].mxu0
    %v4984 = vadd.f32 %v4797, %v4983
    %4985 = vmatprep.mubr.f32.mxu0 0.0
    %4986 = vmatmul.mubr.f32.gmra.mrb[0].mxu0 %v4707
    %v4987 = vpop.f32.mrb[0].mxu0
    %v4988 = vadd.f32 %v4793, %v4987
    %v4989 = vpop.f32.mrb[0].mxu0
    %v4990 = vadd.f32 %v4797, %v4989
    %4991 = vmatprep.mubr.f32.mxu0 0.0
    %4992 = vmatmul.mubr.f32.gmra.mrb[0].mxu0 %v4708
    %v4993 = vpop.f32.mrb[0].mxu0
    %v4994 = vadd.f32 %v4793, %v4993
    %v4995 = vpop.f32.mrb[0].mxu0
    %v4996 = vadd.f32 %v4797, %v4995
    %4997 = vmatprep.mubr.f32.mxu0 0.0
    %4998 = vmatmul.mubr.f32.gmra.mrb[0].mxu0 %v4709
    %v4999 = vpop.f32.mrb[0].mxu0
    %v5000 = vadd.f32 %v4793, %v4999
    %v5001 = vpop.f32.mrb[0].mxu0
    %v5002 = vadd.f32 %v4797, %v5001
    %5003 = vmatprep.mubr.f32.mxu0 0.0
    %5004 = vmatmul.mubr.f32.gmra.mrb[0].mxu0 %v4710
    %v5005 = vpop.f32.mrb[0].mxu0
    %v5006 = vadd.f32 %v4793, %v5005
    %v5007 = vpop.f32.mrb[0].mxu0
    %v5008 = vadd.f32 %v4797, %v5007
    %5009 = vmatprep.mubr.f32.mxu0 0.0
    %5010 = vmatmul.mubr.f32.gmra.mrb[0].mxu0 %v4711
    %v5011 = vpop.f32.mrb[0].mxu0
    %v5012 = vadd.f32 %v4793, %v5011
    %v5013 = vpop.f32.mrb[0].mxu0
    %v5014 = vadd.f32 %v4797, %v5013
    %5015 = vmatprep.mubr.f32.mxu0 0.0
    %5016 = vmatmul.mubr.f32.gmra.mrb[0].mxu0 %v4712
    %v5017 = vpop.f32.mrb[0].mxu0
    %v5018 = vadd.f32 %v4793, %v5017
    %v5019 = vpop.f32.mrb[0].mxu0
    %v5020 = vadd.f32 %v4797, %v5019
    %5021 = vmatprep.mubr.f32.mxu0 0.0
    %5022 = vmatmul.mubr.f32.gmra.mrb[0].mxu0 %v4713
    %v5023 = vpop.f32.mrb[0].mxu0
    %v5024 = vadd.f32 %v4793, %v5023
    %v5025 = vpop.f32.mrb[0].mxu0
    %v5026 = vadd.f32 %v4797, %v5025
    %5027 = vdwg.mxu0
    %5028 = vst [vmem:[#allocation3] sm:$0xff] %v4869
    %5029 = vst [vmem:[#allocation3 + $0x8] sm:$0xff] %v4871
    %5030 = vst [vmem:[#allocation3 + $0x10] sm:$0xff] %v4982
    %5031 = vst [vmem:[#allocation3 + $0x18] sm:$0xff] %v4984
    %5032 = vst [vmem:[#allocation3 + $0x20] sm:$0xff] %v4875
    %5033 = vst [vmem:[#allocation3 + $0x28] sm:$0xff] %v4877
    %5034 = vst [vmem:[#allocation3 + $0x30] sm:$0xff] %v4988
    %5035 = vst [vmem:[#allocation3 + $0x38] sm:$0xff] %v4990
    %5036 = vst [vmem:[#allocation3 + $0x40] sm:$0xff] %v4881
    %5037 = vst [vmem:[#allocation3 + $0x48] sm:$0xff] %v4883
    %5038 = vst [vmem:[#allocation3 + $0x50] sm:$0xff] %v4994
    %5039 = vst [vmem:[#allocation3 + $0x58] sm:$0xff] %v4996
    %5040 = vst [vmem:[#allocation3 + $0x60] sm:$0xff] %v4887
    %5041 = vst [vmem:[#allocation3 + $0x68] sm:$0xff] %v4889
    %5042 = vst [vmem:[#allocation3 + $0x70] sm:$0xff] %v5000
    %5043 = vst [vmem:[#allocation3 + $0x78] sm:$0xff] %v5002
    %5044 = vst [vmem:[#allocation3 + $0x80] sm:$0xff] %v4893
    %5045 = vst [vmem:[#allocation3 + $0x88] sm:$0xff] %v4895
    %5046 = vst [vmem:[#allocation3 + $0x90] sm:$0xff] %v5006
    %5047 = vst [vmem:[#allocation3 + $0x98] sm:$0xff] %v5008
    %5048 = vst [vmem:[#allocation3 + $0xa0] sm:$0xff] %v4899
    %5049 = vst [vmem:[#allocation3 + $0xa8] sm:$0xff] %v4901
    %5050 = vst [vmem:[#allocation3 + $0xb0] sm:$0xff] %v5012
    %5051 = vst [vmem:[#allocation3 + $0xb8] sm:$0xff] %v5014
    %5052 = vst [vmem:[#allocation3 + $0xc0] sm:$0xff] %v4905
    %5053 = vst [vmem:[#allocation3 + $0xc8] sm:$0xff] %v4907
    %5054 = vst [vmem:[#allocation3 + $0xd0] sm:$0xff] %v5018
    %5055 = vst [vmem:[#allocation3 + $0xd8] sm:$0xff] %v5020
    %5056 = vst [vmem:[#allocation3 + $0xe0] sm:$0xff] %v4911
    %5057 = vst [vmem:[#allocation3 + $0xe8] sm:$0xff] %v4913
    %5058 = vst [vmem:[#allocation3 + $0xf0] sm:$0xff] %v5024
    %5059 = vst [vmem:[#allocation3 + $0xf8] sm:$0xff] %v5026
    %s5060 = scalar_lea.vmem %s4, 16
    %v5061 = vld [vmem:[%s5060] sm:$0xff]
    %5062 = vst [vmem:[#allocation4] sm:$0xff] %v5061
    %s5063 = scalar_lea.vmem %s5, 16
    %v5064 = vld [vmem:[%s5063] sm:$0xff]
    %5065 = vst [vmem:[#allocation5] sm:$0xff] %v5064
    %v5066 = vld [vmem:[#allocation4] sm:$0xff]
    %v5067 = vld [vmem:[#allocation5] sm:$0xff]
    %v5068 = vld [vmem:[%s420] sm:$0xff]
    %v5069 = vld [vmem:[%s420 + $0x8] sm:$0xff]
    %v5070 = vld [vmem:[%s420 + $0x10] sm:$0xff]
    %v5071 = vld [vmem:[%s420 + $0x18] sm:$0xff]
    %s5072 = scalar_lea.vmem [#allocation8], 1024
    %v5073 = vld [vmem:[%s5072] sm:$0xff]
    %v5074 = vld [vmem:[%s5072 + $0x8] sm:$0xff]
    %v5075 = vld [vmem:[%s5072 + $0x10] sm:$0xff]
    %v5076 = vld [vmem:[%s5072 + $0x18] sm:$0xff]
    %v5077 = vld [vmem:[%s5072 + $0x20] sm:$0xff]
    %v5078 = vld [vmem:[%s5072 + $0x28] sm:$0xff]
    %v5079 = vld [vmem:[%s5072 + $0x30] sm:$0xff]
    %v5080 = vld [vmem:[%s5072 + $0x38] sm:$0xff]
    %v5081 = vld [vmem:[%s5072 + $0x40] sm:$0xff]
    %v5082 = vld [vmem:[%s5072 + $0x48] sm:$0xff]
    %v5083 = vld [vmem:[%s5072 + $0x50] sm:$0xff]
    %v5084 = vld [vmem:[%s5072 + $0x58] sm:$0xff]
    %v5085 = vld [vmem:[%s5072 + $0x60] sm:$0xff]
    %v5086 = vld [vmem:[%s5072 + $0x68] sm:$0xff]
    %v5087 = vld [vmem:[%s5072 + $0x70] sm:$0xff]
    %v5088 = vld [vmem:[%s5072 + $0x78] sm:$0xff]
    %v5089 = vld [vmem:[%s5072 + $0x80] sm:$0xff]
    %v5090 = vld [vmem:[%s5072 + $0x88] sm:$0xff]
    %v5091 = vld [vmem:[%s5072 + $0x90] sm:$0xff]
    %v5092 = vld [vmem:[%s5072 + $0x98] sm:$0xff]
    %v5093 = vld [vmem:[%s5072 + $0xa0] sm:$0xff]
    %v5094 = vld [vmem:[%s5072 + $0xa8] sm:$0xff]
    %v5095 = vld [vmem:[%s5072 + $0xb0] sm:$0xff]
    %v5096 = vld [vmem:[%s5072 + $0xb8] sm:$0xff]
    %v5097 = vld [vmem:[%s5072 + $0xc0] sm:$0xff]
    %v5098 = vld [vmem:[%s5072 + $0xc8] sm:$0xff]
    %v5099 = vld [vmem:[%s5072 + $0xd0] sm:$0xff]
    %v5100 = vld [vmem:[%s5072 + $0xd8] sm:$0xff]
    %v5101 = vld [vmem:[%s5072 + $0xe0] sm:$0xff]
    %v5102 = vld [vmem:[%s5072 + $0xe8] sm:$0xff]
    %v5103 = vld [vmem:[%s5072 + $0xf0] sm:$0xff]
    %v5104 = vld [vmem:[%s5072 + $0xf8] sm:$0xff]
    %v5105 = vld [vmem:[%s5072 + $0x100] sm:$0xff]
    %v5106 = vld [vmem:[%s5072 + $0x108] sm:$0xff]
    %v5107 = vld [vmem:[%s5072 + $0x110] sm:$0xff]
    %v5108 = vld [vmem:[%s5072 + $0x118] sm:$0xff]
    %v5109 = vld [vmem:[%s5072 + $0x120] sm:$0xff]
    %v5110 = vld [vmem:[%s5072 + $0x128] sm:$0xff]
    %v5111 = vld [vmem:[%s5072 + $0x130] sm:$0xff]
    %v5112 = vld [vmem:[%s5072 + $0x138] sm:$0xff]
    %v5113 = vld [vmem:[%s5072 + $0x140] sm:$0xff]
    %v5114 = vld [vmem:[%s5072 + $0x148] sm:$0xff]
    %v5115 = vld [vmem:[%s5072 + $0x150] sm:$0xff]
    %v5116 = vld [vmem:[%s5072 + $0x158] sm:$0xff]
    %v5117 = vld [vmem:[%s5072 + $0x160] sm:$0xff]
    %v5118 = vld [vmem:[%s5072 + $0x168] sm:$0xff]
    %v5119 = vld [vmem:[%s5072 + $0x170] sm:$0xff]
    %v5120 = vld [vmem:[%s5072 + $0x178] sm:$0xff]
    %v5121 = vld [vmem:[%s5072 + $0x180] sm:$0xff]
    %v5122 = vld [vmem:[%s5072 + $0x188] sm:$0xff]
    %v5123 = vld [vmem:[%s5072 + $0x190] sm:$0xff]
    %v5124 = vld [vmem:[%s5072 + $0x198] sm:$0xff]
    %v5125 = vld [vmem:[%s5072 + $0x1a0] sm:$0xff]
    %v5126 = vld [vmem:[%s5072 + $0x1a8] sm:$0xff]
    %v5127 = vld [vmem:[%s5072 + $0x1b0] sm:$0xff]
    %v5128 = vld [vmem:[%s5072 + $0x1b8] sm:$0xff]
    %v5129 = vld [vmem:[%s5072 + $0x1c0] sm:$0xff]
    %v5130 = vld [vmem:[%s5072 + $0x1c8] sm:$0xff]
    %v5131 = vld [vmem:[%s5072 + $0x1d0] sm:$0xff]
    %v5132 = vld [vmem:[%s5072 + $0x1d8] sm:$0xff]
    %v5133 = vld [vmem:[%s5072 + $0x1e0] sm:$0xff]
    %v5134 = vld [vmem:[%s5072 + $0x1e8] sm:$0xff]
    %v5135 = vld [vmem:[%s5072 + $0x1f0] sm:$0xff]
    %v5136 = vld [vmem:[%s5072 + $0x1f8] sm:$0xff]
    %5137 = vmatprep.subr.mxu0 %v5074
    %5138 = vmatpush1.msra.mxu0 %v5073
    %5139 = vmatprep.subr.mxu0 %v5078
    %5140 = vmatpush1.msra.mxu0 %v5077
    %5141 = vmatprep.subr.mxu0 %v5082
    %5142 = vmatpush1.msra.mxu0 %v5081
    %5143 = vmatprep.subr.mxu0 %v5086
    %5144 = vmatpush1.msra.mxu0 %v5085
    %5145 = vmatprep.subr.mxu0 %v5090
    %5146 = vmatpush1.msra.mxu0 %v5089
    %5147 = vmatprep.subr.mxu0 %v5094
    %5148 = vmatpush1.msra.mxu0 %v5093
    %5149 = vmatprep.subr.mxu0 %v5098
    %5150 = vmatpush1.msra.mxu0 %v5097
    %5151 = vmatprep.subr.mxu0 %v5102
    %5152 = vmatpush1.msra.mxu0 %v5101
    %5153 = vmatprep.subr.mxu0 %v5106
    %5154 = vmatpush1.msra.mxu0 %v5105
    %5155 = vmatprep.subr.mxu0 %v5110
    %5156 = vmatpush1.msra.mxu0 %v5109
    %5157 = vmatprep.subr.mxu0 %v5114
    %5158 = vmatpush1.msra.mxu0 %v5113
    %5159 = vmatprep.subr.mxu0 %v5118
    %5160 = vmatpush1.msra.mxu0 %v5117
    %5161 = vmatprep.subr.mxu0 %v5122
    %5162 = vmatpush1.msra.mxu0 %v5121
    %5163 = vmatprep.subr.mxu0 %v5126
    %5164 = vmatpush1.msra.mxu0 %v5125
    %5165 = vmatprep.subr.mxu0 %v5130
    %5166 = vmatpush1.msra.mxu0 %v5129
    %5167 = vmatprep.subr.mxu0 %v5134
    %5168 = vmatpush1.msra.mxu0 %v5133
    %5169 = vmatprep.subr.mxu0 0.0
    %5170 = vmatpush1.msra.mxu0 0.0
    %5171 = vmatprep.subr.mxu0 0.0
    %5172 = vmatpush1.msra.mxu0 0.0
    %5173 = vmatprep.subr.mxu0 0.0
    %5174 = vmatpush1.msra.mxu0 0.0
    %5175 = vmatprep.subr.mxu0 0.0
    %5176 = vmatpush1.msra.mxu0 0.0
    %5177 = vmatprep.subr.mxu0 0.0
    %5178 = vmatpush1.msra.mxu0 0.0
    %5179 = vmatprep.subr.mxu0 0.0
    %5180 = vmatpush1.msra.mxu0 0.0
    %5181 = vmatprep.subr.mxu0 0.0
    %5182 = vmatpush1.msra.mxu0 0.0
    %5183 = vmatprep.subr.mxu0 0.0
    %5184 = vmatpush1.msra.mxu0 0.0
    %5185 = vmatprep.subr.mxu0 0.0
    %5186 = vmatpush1.msra.mxu0 0.0
    %5187 = vmatprep.subr.mxu0 0.0
    %5188 = vmatpush1.msra.mxu0 0.0
    %5189 = vmatprep.subr.mxu0 0.0
    %5190 = vmatpush1.msra.mxu0 0.0
    %5191 = vmatprep.subr.mxu0 0.0
    %5192 = vmatpush1.msra.mxu0 0.0
    %5193 = vmatprep.subr.mxu0 0.0
    %5194 = vmatpush1.msra.mxu0 0.0
    %5195 = vmatprep.subr.mxu0 0.0
    %5196 = vmatpush1.msra.mxu0 0.0
    %5197 = vmatprep.subr.mxu0 0.0
    %5198 = vmatpush1.msra.mxu0 0.0
    %5199 = vmatprep.subr.mxu0 0.0
    %5200 = vmatpush1.msra.mxu0 0.0
    %5201 = vmatprep.mubr.f32.mxu0 0.0
    %5202 = vmatmul.mubr.f32.gmra.mrb[0].mxu0 %v5066
    %v5203 = vpop.f32.mrb[0].mxu0
    %v5204 = vadd.f32 0.0, %v5203
    %v5205 = vpop.f32.mrb[0].mxu0
    %v5206 = vadd.f32 0.0, %v5205
    %5207 = vdwg.mxu0
    %5208 = vmatprep.subr.mxu0 %v5076
    %5209 = vmatpush1.msra.mxu0 %v5075
    %5210 = vmatprep.subr.mxu0 %v5080
    %5211 = vmatpush1.msra.mxu0 %v5079
    %5212 = vmatprep.subr.mxu0 %v5084
    %5213 = vmatpush1.msra.mxu0 %v5083
    %5214 = vmatprep.subr.mxu0 %v5088
    %5215 = vmatpush1.msra.mxu0 %v5087
    %5216 = vmatprep.subr.mxu0 %v5092
    %5217 = vmatpush1.msra.mxu0 %v5091
    %5218 = vmatprep.subr.mxu0 %v5096
    %5219 = vmatpush1.msra.mxu0 %v5095
    %5220 = vmatprep.subr.mxu0 %v5100
    %5221 = vmatpush1.msra.mxu0 %v5099
    %5222 = vmatprep.subr.mxu0 %v5104
    %5223 = vmatpush1.msra.mxu0 %v5103
    %5224 = vmatprep.subr.mxu0 %v5108
    %5225 = vmatpush1.msra.mxu0 %v5107
    %5226 = vmatprep.subr.mxu0 %v5112
    %5227 = vmatpush1.msra.mxu0 %v5111
    %5228 = vmatprep.subr.mxu0 %v5116
    %5229 = vmatpush1.msra.mxu0 %v5115
    %5230 = vmatprep.subr.mxu0 %v5120
    %5231 = vmatpush1.msra.mxu0 %v5119
    %5232 = vmatprep.subr.mxu0 %v5124
    %5233 = vmatpush1.msra.mxu0 %v5123
    %5234 = vmatprep.subr.mxu0 %v5128
    %5235 = vmatpush1.msra.mxu0 %v5127
    %5236 = vmatprep.subr.mxu0 %v5132
    %5237 = vmatpush1.msra.mxu0 %v5131
    %5238 = vmatprep.subr.mxu0 %v5136
    %5239 = vmatpush1.msra.mxu0 %v5135
    %5240 = vmatprep.subr.mxu0 0.0
    %5241 = vmatpush1.msra.mxu0 0.0
    %5242 = vmatprep.subr.mxu0 0.0
    %5243 = vmatpush1.msra.mxu0 0.0
    %5244 = vmatprep.subr.mxu0 0.0
    %5245 = vmatpush1.msra.mxu0 0.0
    %5246 = vmatprep.subr.mxu0 0.0
    %5247 = vmatpush1.msra.mxu0 0.0
    %5248 = vmatprep.subr.mxu0 0.0
    %5249 = vmatpush1.msra.mxu0 0.0
    %5250 = vmatprep.subr.mxu0 0.0
    %5251 = vmatpush1.msra.mxu0 0.0
    %5252 = vmatprep.subr.mxu0 0.0
    %5253 = vmatpush1.msra.mxu0 0.0
    %5254 = vmatprep.subr.mxu0 0.0
    %5255 = vmatpush1.msra.mxu0 0.0
    %5256 = vmatprep.subr.mxu0 0.0
    %5257 = vmatpush1.msra.mxu0 0.0
    %5258 = vmatprep.subr.mxu0 0.0
    %5259 = vmatpush1.msra.mxu0 0.0
    %5260 = vmatprep.subr.mxu0 0.0
    %5261 = vmatpush1.msra.mxu0 0.0
    %5262 = vmatprep.subr.mxu0 0.0
    %5263 = vmatpush1.msra.mxu0 0.0
    %5264 = vmatprep.subr.mxu0 0.0
    %5265 = vmatpush1.msra.mxu0 0.0
    %5266 = vmatprep.subr.mxu0 0.0
    %5267 = vmatpush1.msra.mxu0 0.0
    %5268 = vmatprep.subr.mxu0 0.0
    %5269 = vmatpush1.msra.mxu0 0.0
    %5270 = vmatprep.subr.mxu0 0.0
    %5271 = vmatpush1.msra.mxu0 0.0
    %5272 = vmatprep.mubr.f32.mxu0 0.0
    %5273 = vmatmul.mubr.f32.gmra.mrb[0].mxu0 %v5066
    %v5274 = vpop.f32.mrb[0].mxu0
    %v5275 = vadd.f32 0.0, %v5274
    %v5276 = vpop.f32.mrb[0].mxu0
    %v5277 = vadd.f32 0.0, %v5276
    %5278 = vdwg.mxu0
    %v5279 = vadd.f32 %v5068, %v5204
    %v5280 = vadd.f32 %v5069, %v5206
    %v5281 = vadd.f32 %v5070, %v5275
    %v5282 = vadd.f32 %v5071, %v5277
    %v5283 = vxor.u32 %v5279, 2147483648
    %v5284 = vmul.f32 %v5283, 1.442695
    %v5285 = vpow.pop %v5284
    %v5286 = vadd.f32 %v5285, 1.0
    %v5287 = vrcp.pop %v5286
    %v5288 = vmul.f32 1.0, %v5287
    %v5289 = vxor.u32 %v5280, 2147483648
    %v5290 = vmul.f32 %v5289, 1.442695
    %v5291 = vpow.pop %v5290
    %v5292 = vadd.f32 %v5291, 1.0
    %v5293 = vrcp.pop %v5292
    %v5294 = vmul.f32 1.0, %v5293
    %v5295 = vtanh.pop %v5281
    %v5296 = vxor.u32 %v5282, 2147483648
    %v5297 = vmul.f32 %v5296, 1.442695
    %v5298 = vpow.pop %v5297
    %v5299 = vadd.f32 %v5298, 1.0
    %v5300 = vrcp.pop %v5299
    %v5301 = vmul.f32 1.0, %v5300
    %v5302 = vmul.f32 %v5294, %v5067
    %v5303 = vmul.f32 %v5288, %v5295
    %v5304 = vadd.f32 %v5302, %v5303
    %v5305 = vtanh.pop %v5304
    %v5306 = vmul.f32 %v5301, %v5305
    %5307 = vst [vmem:[#allocation4] sm:$0xff] %v5306
    %5308 = vst [vmem:[#allocation5] sm:$0xff] %v5304
    %5309 = vst [vmem:[#allocation2] sm:$0xff] %v5306
    %v5310 = vld [vmem:[#allocation4] sm:$0xff]
    %v5311 = vld [vmem:[#allocation5] sm:$0xff]
    %v5312 = vld [vmem:[%s666] sm:$0xff]
    %v5313 = vld [vmem:[%s666 + $0x8] sm:$0xff]
    %v5314 = vld [vmem:[%s666 + $0x10] sm:$0xff]
    %v5315 = vld [vmem:[%s666 + $0x18] sm:$0xff]
    %v5316 = vld [vmem:[%s5072] sm:$0xff]
    %v5317 = vld [vmem:[%s5072 + $0x8] sm:$0xff]
    %v5318 = vld [vmem:[%s5072 + $0x10] sm:$0xff]
    %v5319 = vld [vmem:[%s5072 + $0x18] sm:$0xff]
    %v5320 = vld [vmem:[%s5072 + $0x20] sm:$0xff]
    %v5321 = vld [vmem:[%s5072 + $0x28] sm:$0xff]
    %v5322 = vld [vmem:[%s5072 + $0x30] sm:$0xff]
    %v5323 = vld [vmem:[%s5072 + $0x38] sm:$0xff]
    %v5324 = vld [vmem:[%s5072 + $0x40] sm:$0xff]
    %v5325 = vld [vmem:[%s5072 + $0x48] sm:$0xff]
    %v5326 = vld [vmem:[%s5072 + $0x50] sm:$0xff]
    %v5327 = vld [vmem:[%s5072 + $0x58] sm:$0xff]
    %v5328 = vld [vmem:[%s5072 + $0x60] sm:$0xff]
    %v5329 = vld [vmem:[%s5072 + $0x68] sm:$0xff]
    %v5330 = vld [vmem:[%s5072 + $0x70] sm:$0xff]
    %v5331 = vld [vmem:[%s5072 + $0x78] sm:$0xff]
    %v5332 = vld [vmem:[%s5072 + $0x80] sm:$0xff]
    %v5333 = vld [vmem:[%s5072 + $0x88] sm:$0xff]
    %v5334 = vld [vmem:[%s5072 + $0x90] sm:$0xff]
    %v5335 = vld [vmem:[%s5072 + $0x98] sm:$0xff]
    %v5336 = vld [vmem:[%s5072 + $0xa0] sm:$0xff]
    %v5337 = vld [vmem:[%s5072 + $0xa8] sm:$0xff]
    %v5338 = vld [vmem:[%s5072 + $0xb0] sm:$0xff]
    %v5339 = vld [vmem:[%s5072 + $0xb8] sm:$0xff]
    %v5340 = vld [vmem:[%s5072 + $0xc0] sm:$0xff]
    %v5341 = vld [vmem:[%s5072 + $0xc8] sm:$0xff]
    %v5342 = vld [vmem:[%s5072 + $0xd0] sm:$0xff]
    %v5343 = vld [vmem:[%s5072 + $0xd8] sm:$0xff]
    %v5344 = vld [vmem:[%s5072 + $0xe0] sm:$0xff]
    %v5345 = vld [vmem:[%s5072 + $0xe8] sm:$0xff]
    %v5346 = vld [vmem:[%s5072 + $0xf0] sm:$0xff]
    %v5347 = vld [vmem:[%s5072 + $0xf8] sm:$0xff]
    %v5348 = vld [vmem:[%s5072 + $0x100] sm:$0xff]
    %v5349 = vld [vmem:[%s5072 + $0x108] sm:$0xff]
    %v5350 = vld [vmem:[%s5072 + $0x110] sm:$0xff]
    %v5351 = vld [vmem:[%s5072 + $0x118] sm:$0xff]
    %v5352 = vld [vmem:[%s5072 + $0x120] sm:$0xff]
    %v5353 = vld [vmem:[%s5072 + $0x128] sm:$0xff]
    %v5354 = vld [vmem:[%s5072 + $0x130] sm:$0xff]
    %v5355 = vld [vmem:[%s5072 + $0x138] sm:$0xff]
    %v5356 = vld [vmem:[%s5072 + $0x140] sm:$0xff]
    %v5357 = vld [vmem:[%s5072 + $0x148] sm:$0xff]
    %v5358 = vld [vmem:[%s5072 + $0x150] sm:$0xff]
    %v5359 = vld [vmem:[%s5072 + $0x158] sm:$0xff]
    %v5360 = vld [vmem:[%s5072 + $0x160] sm:$0xff]
    %v5361 = vld [vmem:[%s5072 + $0x168] sm:$0xff]
    %v5362 = vld [vmem:[%s5072 + $0x170] sm:$0xff]
    %v5363 = vld [vmem:[%s5072 + $0x178] sm:$0xff]
    %v5364 = vld [vmem:[%s5072 + $0x180] sm:$0xff]
    %v5365 = vld [vmem:[%s5072 + $0x188] sm:$0xff]
    %v5366 = vld [vmem:[%s5072 + $0x190] sm:$0xff]
    %v5367 = vld [vmem:[%s5072 + $0x198] sm:$0xff]
    %v5368 = vld [vmem:[%s5072 + $0x1a0] sm:$0xff]
    %v5369 = vld [vmem:[%s5072 + $0x1a8] sm:$0xff]
    %v5370 = vld [vmem:[%s5072 + $0x1b0] sm:$0xff]
    %v5371 = vld [vmem:[%s5072 + $0x1b8] sm:$0xff]
    %v5372 = vld [vmem:[%s5072 + $0x1c0] sm:$0xff]
    %v5373 = vld [vmem:[%s5072 + $0x1c8] sm:$0xff]
    %v5374 = vld [vmem:[%s5072 + $0x1d0] sm:$0xff]
    %v5375 = vld [vmem:[%s5072 + $0x1d8] sm:$0xff]
    %v5376 = vld [vmem:[%s5072 + $0x1e0] sm:$0xff]
    %v5377 = vld [vmem:[%s5072 + $0x1e8] sm:$0xff]
    %v5378 = vld [vmem:[%s5072 + $0x1f0] sm:$0xff]
    %v5379 = vld [vmem:[%s5072 + $0x1f8] sm:$0xff]
    %5380 = vmatprep.subr.mxu0 %v5317
    %5381 = vmatpush1.msra.mxu0 %v5316
    %5382 = vmatprep.subr.mxu0 %v5321
    %5383 = vmatpush1.msra.mxu0 %v5320
    %5384 = vmatprep.subr.mxu0 %v5325
    %5385 = vmatpush1.msra.mxu0 %v5324
    %5386 = vmatprep.subr.mxu0 %v5329
    %5387 = vmatpush1.msra.mxu0 %v5328
    %5388 = vmatprep.subr.mxu0 %v5333
    %5389 = vmatpush1.msra.mxu0 %v5332
    %5390 = vmatprep.subr.mxu0 %v5337
    %5391 = vmatpush1.msra.mxu0 %v5336
    %5392 = vmatprep.subr.mxu0 %v5341
    %5393 = vmatpush1.msra.mxu0 %v5340
    %5394 = vmatprep.subr.mxu0 %v5345
    %5395 = vmatpush1.msra.mxu0 %v5344
    %5396 = vmatprep.subr.mxu0 %v5349
    %5397 = vmatpush1.msra.mxu0 %v5348
    %5398 = vmatprep.subr.mxu0 %v5353
    %5399 = vmatpush1.msra.mxu0 %v5352
    %5400 = vmatprep.subr.mxu0 %v5357
    %5401 = vmatpush1.msra.mxu0 %v5356
    %5402 = vmatprep.subr.mxu0 %v5361
    %5403 = vmatpush1.msra.mxu0 %v5360
    %5404 = vmatprep.subr.mxu0 %v5365
    %5405 = vmatpush1.msra.mxu0 %v5364
    %5406 = vmatprep.subr.mxu0 %v5369
    %5407 = vmatpush1.msra.mxu0 %v5368
    %5408 = vmatprep.subr.mxu0 %v5373
    %5409 = vmatpush1.msra.mxu0 %v5372
    %5410 = vmatprep.subr.mxu0 %v5377
    %5411 = vmatpush1.msra.mxu0 %v5376
    %5412 = vmatprep.subr.mxu0 0.0
    %5413 = vmatpush1.msra.mxu0 0.0
    %5414 = vmatprep.subr.mxu0 0.0
    %5415 = vmatpush1.msra.mxu0 0.0
    %5416 = vmatprep.subr.mxu0 0.0
    %5417 = vmatpush1.msra.mxu0 0.0
    %5418 = vmatprep.subr.mxu0 0.0
    %5419 = vmatpush1.msra.mxu0 0.0
    %5420 = vmatprep.subr.mxu0 0.0
    %5421 = vmatpush1.msra.mxu0 0.0
    %5422 = vmatprep.subr.mxu0 0.0
    %5423 = vmatpush1.msra.mxu0 0.0
    %5424 = vmatprep.subr.mxu0 0.0
    %5425 = vmatpush1.msra.mxu0 0.0
    %5426 = vmatprep.subr.mxu0 0.0
    %5427 = vmatpush1.msra.mxu0 0.0
    %5428 = vmatprep.subr.mxu0 0.0
    %5429 = vmatpush1.msra.mxu0 0.0
    %5430 = vmatprep.subr.mxu0 0.0
    %5431 = vmatpush1.msra.mxu0 0.0
    %5432 = vmatprep.subr.mxu0 0.0
    %5433 = vmatpush1.msra.mxu0 0.0
    %5434 = vmatprep.subr.mxu0 0.0
    %5435 = vmatpush1.msra.mxu0 0.0
    %5436 = vmatprep.subr.mxu0 0.0
    %5437 = vmatpush1.msra.mxu0 0.0
    %5438 = vmatprep.subr.mxu0 0.0
    %5439 = vmatpush1.msra.mxu0 0.0
    %5440 = vmatprep.subr.mxu0 0.0
    %5441 = vmatpush1.msra.mxu0 0.0
    %5442 = vmatprep.subr.mxu0 0.0
    %5443 = vmatpush1.msra.mxu0 0.0
    %5444 = vmatprep.mubr.f32.mxu0 0.0
    %5445 = vmatmul.mubr.f32.gmra.mrb[0].mxu0 %v5310
    %v5446 = vpop.f32.mrb[0].mxu0
    %v5447 = vadd.f32 0.0, %v5446
    %v5448 = vpop.f32.mrb[0].mxu0
    %v5449 = vadd.f32 0.0, %v5448
    %5450 = vdwg.mxu0
    %5451 = vmatprep.subr.mxu0 %v5319
    %5452 = vmatpush1.msra.mxu0 %v5318
    %5453 = vmatprep.subr.mxu0 %v5323
    %5454 = vmatpush1.msra.mxu0 %v5322
    %5455 = vmatprep.subr.mxu0 %v5327
    %5456 = vmatpush1.msra.mxu0 %v5326
    %5457 = vmatprep.subr.mxu0 %v5331
    %5458 = vmatpush1.msra.mxu0 %v5330
    %5459 = vmatprep.subr.mxu0 %v5335
    %5460 = vmatpush1.msra.mxu0 %v5334
    %5461 = vmatprep.subr.mxu0 %v5339
    %5462 = vmatpush1.msra.mxu0 %v5338
    %5463 = vmatprep.subr.mxu0 %v5343
    %5464 = vmatpush1.msra.mxu0 %v5342
    %5465 = vmatprep.subr.mxu0 %v5347
    %5466 = vmatpush1.msra.mxu0 %v5346
    %5467 = vmatprep.subr.mxu0 %v5351
    %5468 = vmatpush1.msra.mxu0 %v5350
    %5469 = vmatprep.subr.mxu0 %v5355
    %5470 = vmatpush1.msra.mxu0 %v5354
    %5471 = vmatprep.subr.mxu0 %v5359
    %5472 = vmatpush1.msra.mxu0 %v5358
    %5473 = vmatprep.subr.mxu0 %v5363
    %5474 = vmatpush1.msra.mxu0 %v5362
    %5475 = vmatprep.subr.mxu0 %v5367
    %5476 = vmatpush1.msra.mxu0 %v5366
    %5477 = vmatprep.subr.mxu0 %v5371
    %5478 = vmatpush1.msra.mxu0 %v5370
    %5479 = vmatprep.subr.mxu0 %v5375
    %5480 = vmatpush1.msra.mxu0 %v5374
    %5481 = vmatprep.subr.mxu0 %v5379
    %5482 = vmatpush1.msra.mxu0 %v5378
    %5483 = vmatprep.subr.mxu0 0.0
    %5484 = vmatpush1.msra.mxu0 0.0
    %5485 = vmatprep.subr.mxu0 0.0
    %5486 = vmatpush1.msra.mxu0 0.0
    %5487 = vmatprep.subr.mxu0 0.0
    %5488 = vmatpush1.msra.mxu0 0.0
    %5489 = vmatprep.subr.mxu0 0.0
    %5490 = vmatpush1.msra.mxu0 0.0
    %5491 = vmatprep.subr.mxu0 0.0
    %5492 = vmatpush1.msra.mxu0 0.0
    %5493 = vmatprep.subr.mxu0 0.0
    %5494 = vmatpush1.msra.mxu0 0.0
    %5495 = vmatprep.subr.mxu0 0.0
    %5496 = vmatpush1.msra.mxu0 0.0
    %5497 = vmatprep.subr.mxu0 0.0
    %5498 = vmatpush1.msra.mxu0 0.0
    %5499 = vmatprep.subr.mxu0 0.0
    %5500 = vmatpush1.msra.mxu0 0.0
    %5501 = vmatprep.subr.mxu0 0.0
    %5502 = vmatpush1.msra.mxu0 0.0
    %5503 = vmatprep.subr.mxu0 0.0
    %5504 = vmatpush1.msra.mxu0 0.0
    %5505 = vmatprep.subr.mxu0 0.0
    %5506 = vmatpush1.msra.mxu0 0.0
    %5507 = vmatprep.subr.mxu0 0.0
    %5508 = vmatpush1.msra.mxu0 0.0
    %5509 = vmatprep.subr.mxu0 0.0
    %5510 = vmatpush1.msra.mxu0 0.0
    %5511 = vmatprep.subr.mxu0 0.0
    %5512 = vmatpush1.msra.mxu0 0.0
    %5513 = vmatprep.subr.mxu0 0.0
    %5514 = vmatpush1.msra.mxu0 0.0
    %5515 = vmatprep.mubr.f32.mxu0 0.0
    %5516 = vmatmul.mubr.f32.gmra.mrb[0].mxu0 %v5310
    %v5517 = vpop.f32.mrb[0].mxu0
    %v5518 = vadd.f32 0.0, %v5517
    %v5519 = vpop.f32.mrb[0].mxu0
    %v5520 = vadd.f32 0.0, %v5519
    %5521 = vdwg.mxu0
    %v5522 = vadd.f32 %v5312, %v5447
    %v5523 = vadd.f32 %v5313, %v5449
    %v5524 = vadd.f32 %v5314, %v5518
    %v5525 = vadd.f32 %v5315, %v5520
    %v5526 = vxor.u32 %v5522, 2147483648
    %v5527 = vmul.f32 %v5526, 1.442695
    %v5528 = vpow.pop %v5527
    %v5529 = vadd.f32 %v5528, 1.0
    %v5530 = vrcp.pop %v5529
    %v5531 = vmul.f32 1.0, %v5530
    %v5532 = vxor.u32 %v5523, 2147483648
    %v5533 = vmul.f32 %v5532, 1.442695
    %v5534 = vpow.pop %v5533
    %v5535 = vadd.f32 %v5534, 1.0
    %v5536 = vrcp.pop %v5535
    %v5537 = vmul.f32 1.0, %v5536
    %v5538 = vtanh.pop %v5524
    %v5539 = vxor.u32 %v5525, 2147483648
    %v5540 = vmul.f32 %v5539, 1.442695
    %v5541 = vpow.pop %v5540
    %v5542 = vadd.f32 %v5541, 1.0
    %v5543 = vrcp.pop %v5542
    %v5544 = vmul.f32 1.0, %v5543
    %v5545 = vmul.f32 %v5537, %v5311
    %v5546 = vmul.f32 %v5531, %v5538
    %v5547 = vadd.f32 %v5545, %v5546
    %v5548 = vtanh.pop %v5547
    %v5549 = vmul.f32 %v5544, %v5548
    %5550 = vst [vmem:[#allocation4] sm:$0xff] %v5549
    %5551 = vst [vmem:[#allocation5] sm:$0xff] %v5547
    %5552 = vst [vmem:[%s907] sm:$0xff] %v5549
    %v5553 = vld [vmem:[#allocation4] sm:$0xff]
    %v5554 = vld [vmem:[#allocation5] sm:$0xff]
    %v5555 = vld [vmem:[%s913] sm:$0xff]
    %v5556 = vld [vmem:[%s913 + $0x8] sm:$0xff]
    %v5557 = vld [vmem:[%s913 + $0x10] sm:$0xff]
    %v5558 = vld [vmem:[%s913 + $0x18] sm:$0xff]
    %v5559 = vld [vmem:[%s5072] sm:$0xff]
    %v5560 = vld [vmem:[%s5072 + $0x8] sm:$0xff]
    %v5561 = vld [vmem:[%s5072 + $0x10] sm:$0xff]
    %v5562 = vld [vmem:[%s5072 + $0x18] sm:$0xff]
    %v5563 = vld [vmem:[%s5072 + $0x20] sm:$0xff]
    %v5564 = vld [vmem:[%s5072 + $0x28] sm:$0xff]
    %v5565 = vld [vmem:[%s5072 + $0x30] sm:$0xff]
    %v5566 = vld [vmem:[%s5072 + $0x38] sm:$0xff]
    %v5567 = vld [vmem:[%s5072 + $0x40] sm:$0xff]
    %v5568 = vld [vmem:[%s5072 + $0x48] sm:$0xff]
    %v5569 = vld [vmem:[%s5072 + $0x50] sm:$0xff]
    %v5570 = vld [vmem:[%s5072 + $0x58] sm:$0xff]
    %v5571 = vld [vmem:[%s5072 + $0x60] sm:$0xff]
    %v5572 = vld [vmem:[%s5072 + $0x68] sm:$0xff]
    %v5573 = vld [vmem:[%s5072 + $0x70] sm:$0xff]
    %v5574 = vld [vmem:[%s5072 + $0x78] sm:$0xff]
    %v5575 = vld [vmem:[%s5072 + $0x80] sm:$0xff]
    %v5576 = vld [vmem:[%s5072 + $0x88] sm:$0xff]
    %v5577 = vld [vmem:[%s5072 + $0x90] sm:$0xff]
    %v5578 = vld [vmem:[%s5072 + $0x98] sm:$0xff]
    %v5579 = vld [vmem:[%s5072 + $0xa0] sm:$0xff]
    %v5580 = vld [vmem:[%s5072 + $0xa8] sm:$0xff]
    %v5581 = vld [vmem:[%s5072 + $0xb0] sm:$0xff]
    %v5582 = vld [vmem:[%s5072 + $0xb8] sm:$0xff]
    %v5583 = vld [vmem:[%s5072 + $0xc0] sm:$0xff]
    %v5584 = vld [vmem:[%s5072 + $0xc8] sm:$0xff]
    %v5585 = vld [vmem:[%s5072 + $0xd0] sm:$0xff]
    %v5586 = vld [vmem:[%s5072 + $0xd8] sm:$0xff]
    %v5587 = vld [vmem:[%s5072 + $0xe0] sm:$0xff]
    %v5588 = vld [vmem:[%s5072 + $0xe8] sm:$0xff]
    %v5589 = vld [vmem:[%s5072 + $0xf0] sm:$0xff]
    %v5590 = vld [vmem:[%s5072 + $0xf8] sm:$0xff]
    %v5591 = vld [vmem:[%s5072 + $0x100] sm:$0xff]
    %v5592 = vld [vmem:[%s5072 + $0x108] sm:$0xff]
    %v5593 = vld [vmem:[%s5072 + $0x110] sm:$0xff]
    %v5594 = vld [vmem:[%s5072 + $0x118] sm:$0xff]
    %v5595 = vld [vmem:[%s5072 + $0x120] sm:$0xff]
    %v5596 = vld [vmem:[%s5072 + $0x128] sm:$0xff]
    %v5597 = vld [vmem:[%s5072 + $0x130] sm:$0xff]
    %v5598 = vld [vmem:[%s5072 + $0x138] sm:$0xff]
    %v5599 = vld [vmem:[%s5072 + $0x140] sm:$0xff]
    %v5600 = vld [vmem:[%s5072 + $0x148] sm:$0xff]
    %v5601 = vld [vmem:[%s5072 + $0x150] sm:$0xff]
    %v5602 = vld [vmem:[%s5072 + $0x158] sm:$0xff]
    %v5603 = vld [vmem:[%s5072 + $0x160] sm:$0xff]
    %v5604 = vld [vmem:[%s5072 + $0x168] sm:$0xff]
    %v5605 = vld [vmem:[%s5072 + $0x170] sm:$0xff]
    %v5606 = vld [vmem:[%s5072 + $0x178] sm:$0xff]
    %v5607 = vld [vmem:[%s5072 + $0x180] sm:$0xff]
    %v5608 = vld [vmem:[%s5072 + $0x188] sm:$0xff]
    %v5609 = vld [vmem:[%s5072 + $0x190] sm:$0xff]
    %v5610 = vld [vmem:[%s5072 + $0x198] sm:$0xff]
    %v5611 = vld [vmem:[%s5072 + $0x1a0] sm:$0xff]
    %v5612 = vld [vmem:[%s5072 + $0x1a8] sm:$0xff]
    %v5613 = vld [vmem:[%s5072 + $0x1b0] sm:$0xff]
    %v5614 = vld [vmem:[%s5072 + $0x1b8] sm:$0xff]
    %v5615 = vld [vmem:[%s5072 + $0x1c0] sm:$0xff]
    %v5616 = vld [vmem:[%s5072 + $0x1c8] sm:$0xff]
    %v5617 = vld [vmem:[%s5072 + $0x1d0] sm:$0xff]
    %v5618 = vld [vmem:[%s5072 + $0x1d8] sm:$0xff]
    %v5619 = vld [vmem:[%s5072 + $0x1e0] sm:$0xff]
    %v5620 = vld [vmem:[%s5072 + $0x1e8] sm:$0xff]
    %v5621 = vld [vmem:[%s5072 + $0x1f0] sm:$0xff]
    %v5622 = vld [vmem:[%s5072 + $0x1f8] sm:$0xff]
    %5623 = vmatprep.subr.mxu0 %v5560
    %5624 = vmatpush1.msra.mxu0 %v5559
    %5625 = vmatprep.subr.mxu0 %v5564
    %5626 = vmatpush1.msra.mxu0 %v5563
    %5627 = vmatprep.subr.mxu0 %v5568
    %5628 = vmatpush1.msra.mxu0 %v5567
    %5629 = vmatprep.subr.mxu0 %v5572
    %5630 = vmatpush1.msra.mxu0 %v5571
    %5631 = vmatprep.subr.mxu0 %v5576
    %5632 = vmatpush1.msra.mxu0 %v5575
    %5633 = vmatprep.subr.mxu0 %v5580
    %5634 = vmatpush1.msra.mxu0 %v5579
    %5635 = vmatprep.subr.mxu0 %v5584
    %5636 = vmatpush1.msra.mxu0 %v5583
    %5637 = vmatprep.subr.mxu0 %v5588
    %5638 = vmatpush1.msra.mxu0 %v5587
    %5639 = vmatprep.subr.mxu0 %v5592
    %5640 = vmatpush1.msra.mxu0 %v5591
    %5641 = vmatprep.subr.mxu0 %v5596
    %5642 = vmatpush1.msra.mxu0 %v5595
    %5643 = vmatprep.subr.mxu0 %v5600
    %5644 = vmatpush1.msra.mxu0 %v5599
    %5645 = vmatprep.subr.mxu0 %v5604
    %5646 = vmatpush1.msra.mxu0 %v5603
    %5647 = vmatprep.subr.mxu0 %v5608
    %5648 = vmatpush1.msra.mxu0 %v5607
    %5649 = vmatprep.subr.mxu0 %v5612
    %5650 = vmatpush1.msra.mxu0 %v5611
    %5651 = vmatprep.subr.mxu0 %v5616
    %5652 = vmatpush1.msra.mxu0 %v5615
    %5653 = vmatprep.subr.mxu0 %v5620
    %5654 = vmatpush1.msra.mxu0 %v5619
    %5655 = vmatprep.subr.mxu0 0.0
    %5656 = vmatpush1.msra.mxu0 0.0
    %5657 = vmatprep.subr.mxu0 0.0
    %5658 = vmatpush1.msra.mxu0 0.0
    %5659 = vmatprep.subr.mxu0 0.0
    %5660 = vmatpush1.msra.mxu0 0.0
    %5661 = vmatprep.subr.mxu0 0.0
    %5662 = vmatpush1.msra.mxu0 0.0
    %5663 = vmatprep.subr.mxu0 0.0
    %5664 = vmatpush1.msra.mxu0 0.0
    %5665 = vmatprep.subr.mxu0 0.0
    %5666 = vmatpush1.msra.mxu0 0.0
    %5667 = vmatprep.subr.mxu0 0.0
    %5668 = vmatpush1.msra.mxu0 0.0
    %5669 = vmatprep.subr.mxu0 0.0
    %5670 = vmatpush1.msra.mxu0 0.0
    %5671 = vmatprep.subr.mxu0 0.0
    %5672 = vmatpush1.msra.mxu0 0.0
    %5673 = vmatprep.subr.mxu0 0.0
    %5674 = vmatpush1.msra.mxu0 0.0
    %5675 = vmatprep.subr.mxu0 0.0
    %5676 = vmatpush1.msra.mxu0 0.0
    %5677 = vmatprep.subr.mxu0 0.0
    %5678 = vmatpush1.msra.mxu0 0.0
    %5679 = vmatprep.subr.mxu0 0.0
    %5680 = vmatpush1.msra.mxu0 0.0
    %5681 = vmatprep.subr.mxu0 0.0
    %5682 = vmatpush1.msra.mxu0 0.0
    %5683 = vmatprep.subr.mxu0 0.0
    %5684 = vmatpush1.msra.mxu0 0.0
    %5685 = vmatprep.subr.mxu0 0.0
    %5686 = vmatpush1.msra.mxu0 0.0
    %5687 = vmatprep.mubr.f32.mxu0 0.0
    %5688 = vmatmul.mubr.f32.gmra.mrb[0].mxu0 %v5553
    %v5689 = vpop.f32.mrb[0].mxu0
    %v5690 = vadd.f32 0.0, %v5689
    %v5691 = vpop.f32.mrb[0].mxu0
    %v5692 = vadd.f32 0.0, %v5691
    %5693 = vdwg.mxu0
    %5694 = vmatprep.subr.mxu0 %v5562
    %5695 = vmatpush1.msra.mxu0 %v5561
    %5696 = vmatprep.subr.mxu0 %v5566
    %5697 = vmatpush1.msra.mxu0 %v5565
    %5698 = vmatprep.subr.mxu0 %v5570
    %5699 = vmatpush1.msra.mxu0 %v5569
    %5700 = vmatprep.subr.mxu0 %v5574
    %5701 = vmatpush1.msra.mxu0 %v5573
    %5702 = vmatprep.subr.mxu0 %v5578
    %5703 = vmatpush1.msra.mxu0 %v5577
    %5704 = vmatprep.subr.mxu0 %v5582
    %5705 = vmatpush1.msra.mxu0 %v5581
    %5706 = vmatprep.subr.mxu0 %v5586
    %5707 = vmatpush1.msra.mxu0 %v5585
    %5708 = vmatprep.subr.mxu0 %v5590
    %5709 = vmatpush1.msra.mxu0 %v5589
    %5710 = vmatprep.subr.mxu0 %v5594
    %5711 = vmatpush1.msra.mxu0 %v5593
    %5712 = vmatprep.subr.mxu0 %v5598
    %5713 = vmatpush1.msra.mxu0 %v5597
    %5714 = vmatprep.subr.mxu0 %v5602
    %5715 = vmatpush1.msra.mxu0 %v5601
    %5716 = vmatprep.subr.mxu0 %v5606
    %5717 = vmatpush1.msra.mxu0 %v5605
    %5718 = vmatprep.subr.mxu0 %v5610
    %5719 = vmatpush1.msra.mxu0 %v5609
    %5720 = vmatprep.subr.mxu0 %v5614
    %5721 = vmatpush1.msra.mxu0 %v5613
    %5722 = vmatprep.subr.mxu0 %v5618
    %5723 = vmatpush1.msra.mxu0 %v5617
    %5724 = vmatprep.subr.mxu0 %v5622
    %5725 = vmatpush1.msra.mxu0 %v5621
    %5726 = vmatprep.subr.mxu0 0.0
    %5727 = vmatpush1.msra.mxu0 0.0
    %5728 = vmatprep.subr.mxu0 0.0
    %5729 = vmatpush1.msra.mxu0 0.0
    %5730 = vmatprep.subr.mxu0 0.0
    %5731 = vmatpush1.msra.mxu0 0.0
    %5732 = vmatprep.subr.mxu0 0.0
    %5733 = vmatpush1.msra.mxu0 0.0
    %5734 = vmatprep.subr.mxu0 0.0
    %5735 = vmatpush1.msra.mxu0 0.0
    %5736 = vmatprep.subr.mxu0 0.0
    %5737 = vmatpush1.msra.mxu0 0.0
    %5738 = vmatprep.subr.mxu0 0.0
    %5739 = vmatpush1.msra.mxu0 0.0
    %5740 = vmatprep.subr.mxu0 0.0
    %5741 = vmatpush1.msra.mxu0 0.0
    %5742 = vmatprep.subr.mxu0 0.0
    %5743 = vmatpush1.msra.mxu0 0.0
    %5744 = vmatprep.subr.mxu0 0.0
    %5745 = vmatpush1.msra.mxu0 0.0
    %5746 = vmatprep.subr.mxu0 0.0
    %5747 = vmatpush1.msra.mxu0 0.0
    %5748 = vmatprep.subr.mxu0 0.0
    %5749 = vmatpush1.msra.mxu0 0.0
    %5750 = vmatprep.subr.mxu0 0.0
    %5751 = vmatpush1.msra.mxu0 0.0
    %5752 = vmatprep.subr.mxu0 0.0
    %5753 = vmatpush1.msra.mxu0 0.0
    %5754 = vmatprep.subr.mxu0 0.0
    %5755 = vmatpush1.msra.mxu0 0.0
    %5756 = vmatprep.subr.mxu0 0.0
    %5757 = vmatpush1.msra.mxu0 0.0
    %5758 = vmatprep.mubr.f32.mxu0 0.0
    %5759 = vmatmul.mubr.f32.gmra.mrb[0].mxu0 %v5553
    %v5760 = vpop.f32.mrb[0].mxu0
    %v5761 = vadd.f32 0.0, %v5760
    %v5762 = vpop.f32.mrb[0].mxu0
    %v5763 = vadd.f32 0.0, %v5762
    %5764 = vdwg.mxu0
    %v5765 = vadd.f32 %v5555, %v5690
    %v5766 = vadd.f32 %v5556, %v5692
    %v5767 = vadd.f32 %v5557, %v5761
    %v5768 = vadd.f32 %v5558, %v5763
    %v5769 = vxor.u32 %v5765, 2147483648
    %v5770 = vmul.f32 %v5769, 1.442695
    %v5771 = vpow.pop %v5770
    %v5772 = vadd.f32 %v5771, 1.0
    %v5773 = vrcp.pop %v5772
    %v5774 = vmul.f32 1.0, %v5773
    %v5775 = vxor.u32 %v5766, 2147483648
    %v5776 = vmul.f32 %v5775, 1.442695
    %v5777 = vpow.pop %v5776
    %v5778 = vadd.f32 %v5777, 1.0
    %v5779 = vrcp.pop %v5778
    %v5780 = vmul.f32 1.0, %v5779
    %v5781 = vtanh.pop %v5767
    %v5782 = vxor.u32 %v5768, 2147483648
    %v5783 = vmul.f32 %v5782, 1.442695
    %v5784 = vpow.pop %v5783
    %v5785 = vadd.f32 %v5784, 1.0
    %v5786 = vrcp.pop %v5785
    %v5787 = vmul.f32 1.0, %v5786
    %v5788 = vmul.f32 %v5780, %v5554
    %v5789 = vmul.f32 %v5774, %v5781
    %v5790 = vadd.f32 %v5788, %v5789
    %v5791 = vtanh.pop %v5790
    %v5792 = vmul.f32 %v5787, %v5791
    %5793 = vst [vmem:[#allocation4] sm:$0xff] %v5792
    %5794 = vst [vmem:[#allocation5] sm:$0xff] %v5790
    %5795 = vst [vmem:[%s1154] sm:$0xff] %v5792
    %v5796 = vld [vmem:[#allocation4] sm:$0xff]
    %v5797 = vld [vmem:[#allocation5] sm:$0xff]
    %v5798 = vld [vmem:[%s1160] sm:$0xff]
    %v5799 = vld [vmem:[%s1160 + $0x8] sm:$0xff]
    %v5800 = vld [vmem:[%s1160 + $0x10] sm:$0xff]
    %v5801 = vld [vmem:[%s1160 + $0x18] sm:$0xff]
    %v5802 = vld [vmem:[%s5072] sm:$0xff]
    %v5803 = vld [vmem:[%s5072 + $0x8] sm:$0xff]
    %v5804 = vld [vmem:[%s5072 + $0x10] sm:$0xff]
    %v5805 = vld [vmem:[%s5072 + $0x18] sm:$0xff]
    %v5806 = vld [vmem:[%s5072 + $0x20] sm:$0xff]
    %v5807 = vld [vmem:[%s5072 + $0x28] sm:$0xff]
    %v5808 = vld [vmem:[%s5072 + $0x30] sm:$0xff]
    %v5809 = vld [vmem:[%s5072 + $0x38] sm:$0xff]
    %v5810 = vld [vmem:[%s5072 + $0x40] sm:$0xff]
    %v5811 = vld [vmem:[%s5072 + $0x48] sm:$0xff]
    %v5812 = vld [vmem:[%s5072 + $0x50] sm:$0xff]
    %v5813 = vld [vmem:[%s5072 + $0x58] sm:$0xff]
    %v5814 = vld [vmem:[%s5072 + $0x60] sm:$0xff]
    %v5815 = vld [vmem:[%s5072 + $0x68] sm:$0xff]
    %v5816 = vld [vmem:[%s5072 + $0x70] sm:$0xff]
    %v5817 = vld [vmem:[%s5072 + $0x78] sm:$0xff]
    %v5818 = vld [vmem:[%s5072 + $0x80] sm:$0xff]
    %v5819 = vld [vmem:[%s5072 + $0x88] sm:$0xff]
    %v5820 = vld [vmem:[%s5072 + $0x90] sm:$0xff]
    %v5821 = vld [vmem:[%s5072 + $0x98] sm:$0xff]
    %v5822 = vld [vmem:[%s5072 + $0xa0] sm:$0xff]
    %v5823 = vld [vmem:[%s5072 + $0xa8] sm:$0xff]
    %v5824 = vld [vmem:[%s5072 + $0xb0] sm:$0xff]
    %v5825 = vld [vmem:[%s5072 + $0xb8] sm:$0xff]
    %v5826 = vld [vmem:[%s5072 + $0xc0] sm:$0xff]
    %v5827 = vld [vmem:[%s5072 + $0xc8] sm:$0xff]
    %v5828 = vld [vmem:[%s5072 + $0xd0] sm:$0xff]
    %v5829 = vld [vmem:[%s5072 + $0xd8] sm:$0xff]
    %v5830 = vld [vmem:[%s5072 + $0xe0] sm:$0xff]
    %v5831 = vld [vmem:[%s5072 + $0xe8] sm:$0xff]
    %v5832 = vld [vmem:[%s5072 + $0xf0] sm:$0xff]
    %v5833 = vld [vmem:[%s5072 + $0xf8] sm:$0xff]
    %v5834 = vld [vmem:[%s5072 + $0x100] sm:$0xff]
    %v5835 = vld [vmem:[%s5072 + $0x108] sm:$0xff]
    %v5836 = vld [vmem:[%s5072 + $0x110] sm:$0xff]
    %v5837 = vld [vmem:[%s5072 + $0x118] sm:$0xff]
    %v5838 = vld [vmem:[%s5072 + $0x120] sm:$0xff]
    %v5839 = vld [vmem:[%s5072 + $0x128] sm:$0xff]
    %v5840 = vld [vmem:[%s5072 + $0x130] sm:$0xff]
    %v5841 = vld [vmem:[%s5072 + $0x138] sm:$0xff]
    %v5842 = vld [vmem:[%s5072 + $0x140] sm:$0xff]
    %v5843 = vld [vmem:[%s5072 + $0x148] sm:$0xff]
    %v5844 = vld [vmem:[%s5072 + $0x150] sm:$0xff]
    %v5845 = vld [vmem:[%s5072 + $0x158] sm:$0xff]
    %v5846 = vld [vmem:[%s5072 + $0x160] sm:$0xff]
    %v5847 = vld [vmem:[%s5072 + $0x168] sm:$0xff]
    %v5848 = vld [vmem:[%s5072 + $0x170] sm:$0xff]
    %v5849 = vld [vmem:[%s5072 + $0x178] sm:$0xff]
    %v5850 = vld [vmem:[%s5072 + $0x180] sm:$0xff]
    %v5851 = vld [vmem:[%s5072 + $0x188] sm:$0xff]
    %v5852 = vld [vmem:[%s5072 + $0x190] sm:$0xff]
    %v5853 = vld [vmem:[%s5072 + $0x198] sm:$0xff]
    %v5854 = vld [vmem:[%s5072 + $0x1a0] sm:$0xff]
    %v5855 = vld [vmem:[%s5072 + $0x1a8] sm:$0xff]
    %v5856 = vld [vmem:[%s5072 + $0x1b0] sm:$0xff]
    %v5857 = vld [vmem:[%s5072 + $0x1b8] sm:$0xff]
    %v5858 = vld [vmem:[%s5072 + $0x1c0] sm:$0xff]
    %v5859 = vld [vmem:[%s5072 + $0x1c8] sm:$0xff]
    %v5860 = vld [vmem:[%s5072 + $0x1d0] sm:$0xff]
    %v5861 = vld [vmem:[%s5072 + $0x1d8] sm:$0xff]
    %v5862 = vld [vmem:[%s5072 + $0x1e0] sm:$0xff]
    %v5863 = vld [vmem:[%s5072 + $0x1e8] sm:$0xff]
    %v5864 = vld [vmem:[%s5072 + $0x1f0] sm:$0xff]
    %v5865 = vld [vmem:[%s5072 + $0x1f8] sm:$0xff]
    %5866 = vmatprep.subr.mxu0 %v5803
    %5867 = vmatpush1.msra.mxu0 %v5802
    %5868 = vmatprep.subr.mxu0 %v5807
    %5869 = vmatpush1.msra.mxu0 %v5806
    %5870 = vmatprep.subr.mxu0 %v5811
    %5871 = vmatpush1.msra.mxu0 %v5810
    %5872 = vmatprep.subr.mxu0 %v5815
    %5873 = vmatpush1.msra.mxu0 %v5814
    %5874 = vmatprep.subr.mxu0 %v5819
    %5875 = vmatpush1.msra.mxu0 %v5818
    %5876 = vmatprep.subr.mxu0 %v5823
    %5877 = vmatpush1.msra.mxu0 %v5822
    %5878 = vmatprep.subr.mxu0 %v5827
    %5879 = vmatpush1.msra.mxu0 %v5826
    %5880 = vmatprep.subr.mxu0 %v5831
    %5881 = vmatpush1.msra.mxu0 %v5830
    %5882 = vmatprep.subr.mxu0 %v5835
    %5883 = vmatpush1.msra.mxu0 %v5834
    %5884 = vmatprep.subr.mxu0 %v5839
    %5885 = vmatpush1.msra.mxu0 %v5838
    %5886 = vmatprep.subr.mxu0 %v5843
    %5887 = vmatpush1.msra.mxu0 %v5842
    %5888 = vmatprep.subr.mxu0 %v5847
    %5889 = vmatpush1.msra.mxu0 %v5846
    %5890 = vmatprep.subr.mxu0 %v5851
    %5891 = vmatpush1.msra.mxu0 %v5850
    %5892 = vmatprep.subr.mxu0 %v5855
    %5893 = vmatpush1.msra.mxu0 %v5854
    %5894 = vmatprep.subr.mxu0 %v5859
    %5895 = vmatpush1.msra.mxu0 %v5858
    %5896 = vmatprep.subr.mxu0 %v5863
    %5897 = vmatpush1.msra.mxu0 %v5862
    %5898 = vmatprep.subr.mxu0 0.0
    %5899 = vmatpush1.msra.mxu0 0.0
    %5900 = vmatprep.subr.mxu0 0.0
    %5901 = vmatpush1.msra.mxu0 0.0
    %5902 = vmatprep.subr.mxu0 0.0
    %5903 = vmatpush1.msra.mxu0 0.0
    %5904 = vmatprep.subr.mxu0 0.0
    %5905 = vmatpush1.msra.mxu0 0.0
    %5906 = vmatprep.subr.mxu0 0.0
    %5907 = vmatpush1.msra.mxu0 0.0
    %5908 = vmatprep.subr.mxu0 0.0
    %5909 = vmatpush1.msra.mxu0 0.0
    %5910 = vmatprep.subr.mxu0 0.0
    %5911 = vmatpush1.msra.mxu0 0.0
    %5912 = vmatprep.subr.mxu0 0.0
    %5913 = vmatpush1.msra.mxu0 0.0
    %5914 = vmatprep.subr.mxu0 0.0
    %5915 = vmatpush1.msra.mxu0 0.0
    %5916 = vmatprep.subr.mxu0 0.0
    %5917 = vmatpush1.msra.mxu0 0.0
    %5918 = vmatprep.subr.mxu0 0.0
    %5919 = vmatpush1.msra.mxu0 0.0
    %5920 = vmatprep.subr.mxu0 0.0
    %5921 = vmatpush1.msra.mxu0 0.0
    %5922 = vmatprep.subr.mxu0 0.0
    %5923 = vmatpush1.msra.mxu0 0.0
    %5924 = vmatprep.subr.mxu0 0.0
    %5925 = vmatpush1.msra.mxu0 0.0
    %5926 = vmatprep.subr.mxu0 0.0
    %5927 = vmatpush1.msra.mxu0 0.0
    %5928 = vmatprep.subr.mxu0 0.0
    %5929 = vmatpush1.msra.mxu0 0.0
    %5930 = vmatprep.mubr.f32.mxu0 0.0
    %5931 = vmatmul.mubr.f32.gmra.mrb[0].mxu0 %v5796
    %v5932 = vpop.f32.mrb[0].mxu0
    %v5933 = vadd.f32 0.0, %v5932
    %v5934 = vpop.f32.mrb[0].mxu0
    %v5935 = vadd.f32 0.0, %v5934
    %5936 = vdwg.mxu0
    %5937 = vmatprep.subr.mxu0 %v5805
    %5938 = vmatpush1.msra.mxu0 %v5804
    %5939 = vmatprep.subr.mxu0 %v5809
    %5940 = vmatpush1.msra.mxu0 %v5808
    %5941 = vmatprep.subr.mxu0 %v5813
    %5942 = vmatpush1.msra.mxu0 %v5812
    %5943 = vmatprep.subr.mxu0 %v5817
    %5944 = vmatpush1.msra.mxu0 %v5816
    %5945 = vmatprep.subr.mxu0 %v5821
    %5946 = vmatpush1.msra.mxu0 %v5820
    %5947 = vmatprep.subr.mxu0 %v5825
    %5948 = vmatpush1.msra.mxu0 %v5824
    %5949 = vmatprep.subr.mxu0 %v5829
    %5950 = vmatpush1.msra.mxu0 %v5828
    %5951 = vmatprep.subr.mxu0 %v5833
    %5952 = vmatpush1.msra.mxu0 %v5832
    %5953 = vmatprep.subr.mxu0 %v5837
    %5954 = vmatpush1.msra.mxu0 %v5836
    %5955 = vmatprep.subr.mxu0 %v5841
    %5956 = vmatpush1.msra.mxu0 %v5840
    %5957 = vmatprep.subr.mxu0 %v5845
    %5958 = vmatpush1.msra.mxu0 %v5844
    %5959 = vmatprep.subr.mxu0 %v5849
    %5960 = vmatpush1.msra.mxu0 %v5848
    %5961 = vmatprep.subr.mxu0 %v5853
    %5962 = vmatpush1.msra.mxu0 %v5852
    %5963 = vmatprep.subr.mxu0 %v5857
    %5964 = vmatpush1.msra.mxu0 %v5856
    %5965 = vmatprep.subr.mxu0 %v5861
    %5966 = vmatpush1.msra.mxu0 %v5860
    %5967 = vmatprep.subr.mxu0 %v5865
    %5968 = vmatpush1.msra.mxu0 %v5864
    %5969 = vmatprep.subr.mxu0 0.0
    %5970 = vmatpush1.msra.mxu0 0.0
    %5971 = vmatprep.subr.mxu0 0.0
    %5972 = vmatpush1.msra.mxu0 0.0
    %5973 = vmatprep.subr.mxu0 0.0
    %5974 = vmatpush1.msra.mxu0 0.0
    %5975 = vmatprep.subr.mxu0 0.0
    %5976 = vmatpush1.msra.mxu0 0.0
    %5977 = vmatprep.subr.mxu0 0.0
    %5978 = vmatpush1.msra.mxu0 0.0
    %5979 = vmatprep.subr.mxu0 0.0
    %5980 = vmatpush1.msra.mxu0 0.0
    %5981 = vmatprep.subr.mxu0 0.0
    %5982 = vmatpush1.msra.mxu0 0.0
    %5983 = vmatprep.subr.mxu0 0.0
    %5984 = vmatpush1.msra.mxu0 0.0
    %5985 = vmatprep.subr.mxu0 0.0
    %5986 = vmatpush1.msra.mxu0 0.0
    %5987 = vmatprep.subr.mxu0 0.0
    %5988 = vmatpush1.msra.mxu0 0.0
    %5989 = vmatprep.subr.mxu0 0.0
    %5990 = vmatpush1.msra.mxu0 0.0
    %5991 = vmatprep.subr.mxu0 0.0
    %5992 = vmatpush1.msra.mxu0 0.0
    %5993 = vmatprep.subr.mxu0 0.0
    %5994 = vmatpush1.msra.mxu0 0.0
    %5995 = vmatprep.subr.mxu0 0.0
    %5996 = vmatpush1.msra.mxu0 0.0
    %5997 = vmatprep.subr.mxu0 0.0
    %5998 = vmatpush1.msra.mxu0 0.0
    %5999 = vmatprep.subr.mxu0 0.0
    %6000 = vmatpush1.msra.mxu0 0.0
    %6001 = vmatprep.mubr.f32.mxu0 0.0
    %6002 = vmatmul.mubr.f32.gmra.mrb[0].mxu0 %v5796
    %v6003 = vpop.f32.mrb[0].mxu0
    %v6004 = vadd.f32 0.0, %v6003
    %v6005 = vpop.f32.mrb[0].mxu0
    %v6006 = vadd.f32 0.0, %v6005
    %6007 = vdwg.mxu0
    %v6008 = vadd.f32 %v5798, %v5933
    %v6009 = vadd.f32 %v5799, %v5935
    %v6010 = vadd.f32 %v5800, %v6004
    %v6011 = vadd.f32 %v5801, %v6006
    %v6012 = vxor.u32 %v6008, 2147483648
    %v6013 = vmul.f32 %v6012, 1.442695
    %v6014 = vpow.pop %v6013
    %v6015 = vadd.f32 %v6014, 1.0
    %v6016 = vrcp.pop %v6015
    %v6017 = vmul.f32 1.0, %v6016
    %v6018 = vxor.u32 %v6009, 2147483648
    %v6019 = vmul.f32 %v6018, 1.442695
    %v6020 = vpow.pop %v6019
    %v6021 = vadd.f32 %v6020, 1.0
    %v6022 = vrcp.pop %v6021
    %v6023 = vmul.f32 1.0, %v6022
    %v6024 = vtanh.pop %v6010
    %v6025 = vxor.u32 %v6011, 2147483648
    %v6026 = vmul.f32 %v6025, 1.442695
    %v6027 = vpow.pop %v6026
    %v6028 = vadd.f32 %v6027, 1.0
    %v6029 = vrcp.pop %v6028
    %v6030 = vmul.f32 1.0, %v6029
    %v6031 = vmul.f32 %v6023, %v5797
    %v6032 = vmul.f32 %v6017, %v6024
    %v6033 = vadd.f32 %v6031, %v6032
    %v6034 = vtanh.pop %v6033
    %v6035 = vmul.f32 %v6030, %v6034
    %6036 = vst [vmem:[#allocation4] sm:$0xff] %v6035
    %6037 = vst [vmem:[#allocation5] sm:$0xff] %v6033
    %6038 = vst [vmem:[%s1401] sm:$0xff] %v6035
    %v6039 = vld [vmem:[#allocation4] sm:$0xff]
    %v6040 = vld [vmem:[#allocation5] sm:$0xff]
    %v6041 = vld [vmem:[%s1407] sm:$0xff]
    %v6042 = vld [vmem:[%s1407 + $0x8] sm:$0xff]
    %v6043 = vld [vmem:[%s1407 + $0x10] sm:$0xff]
    %v6044 = vld [vmem:[%s1407 + $0x18] sm:$0xff]
    %v6045 = vld [vmem:[%s5072] sm:$0xff]
    %v6046 = vld [vmem:[%s5072 + $0x8] sm:$0xff]
    %v6047 = vld [vmem:[%s5072 + $0x10] sm:$0xff]
    %v6048 = vld [vmem:[%s5072 + $0x18] sm:$0xff]
    %v6049 = vld [vmem:[%s5072 + $0x20] sm:$0xff]
    %v6050 = vld [vmem:[%s5072 + $0x28] sm:$0xff]
    %v6051 = vld [vmem:[%s5072 + $0x30] sm:$0xff]
    %v6052 = vld [vmem:[%s5072 + $0x38] sm:$0xff]
    %v6053 = vld [vmem:[%s5072 + $0x40] sm:$0xff]
    %v6054 = vld [vmem:[%s5072 + $0x48] sm:$0xff]
    %v6055 = vld [vmem:[%s5072 + $0x50] sm:$0xff]
    %v6056 = vld [vmem:[%s5072 + $0x58] sm:$0xff]
    %v6057 = vld [vmem:[%s5072 + $0x60] sm:$0xff]
    %v6058 = vld [vmem:[%s5072 + $0x68] sm:$0xff]
    %v6059 = vld [vmem:[%s5072 + $0x70] sm:$0xff]
    %v6060 = vld [vmem:[%s5072 + $0x78] sm:$0xff]
    %v6061 = vld [vmem:[%s5072 + $0x80] sm:$0xff]
    %v6062 = vld [vmem:[%s5072 + $0x88] sm:$0xff]
    %v6063 = vld [vmem:[%s5072 + $0x90] sm:$0xff]
    %v6064 = vld [vmem:[%s5072 + $0x98] sm:$0xff]
    %v6065 = vld [vmem:[%s5072 + $0xa0] sm:$0xff]
    %v6066 = vld [vmem:[%s5072 + $0xa8] sm:$0xff]
    %v6067 = vld [vmem:[%s5072 + $0xb0] sm:$0xff]
    %v6068 = vld [vmem:[%s5072 + $0xb8] sm:$0xff]
    %v6069 = vld [vmem:[%s5072 + $0xc0] sm:$0xff]
    %v6070 = vld [vmem:[%s5072 + $0xc8] sm:$0xff]
    %v6071 = vld [vmem:[%s5072 + $0xd0] sm:$0xff]
    %v6072 = vld [vmem:[%s5072 + $0xd8] sm:$0xff]
    %v6073 = vld [vmem:[%s5072 + $0xe0] sm:$0xff]
    %v6074 = vld [vmem:[%s5072 + $0xe8] sm:$0xff]
    %v6075 = vld [vmem:[%s5072 + $0xf0] sm:$0xff]
    %v6076 = vld [vmem:[%s5072 + $0xf8] sm:$0xff]
    %v6077 = vld [vmem:[%s5072 + $0x100] sm:$0xff]
    %v6078 = vld [vmem:[%s5072 + $0x108] sm:$0xff]
    %v6079 = vld [vmem:[%s5072 + $0x110] sm:$0xff]
    %v6080 = vld [vmem:[%s5072 + $0x118] sm:$0xff]
    %v6081 = vld [vmem:[%s5072 + $0x120] sm:$0xff]
    %v6082 = vld [vmem:[%s5072 + $0x128] sm:$0xff]
    %v6083 = vld [vmem:[%s5072 + $0x130] sm:$0xff]
    %v6084 = vld [vmem:[%s5072 + $0x138] sm:$0xff]
    %v6085 = vld [vmem:[%s5072 + $0x140] sm:$0xff]
    %v6086 = vld [vmem:[%s5072 + $0x148] sm:$0xff]
    %v6087 = vld [vmem:[%s5072 + $0x150] sm:$0xff]
    %v6088 = vld [vmem:[%s5072 + $0x158] sm:$0xff]
    %v6089 = vld [vmem:[%s5072 + $0x160] sm:$0xff]
    %v6090 = vld [vmem:[%s5072 + $0x168] sm:$0xff]
    %v6091 = vld [vmem:[%s5072 + $0x170] sm:$0xff]
    %v6092 = vld [vmem:[%s5072 + $0x178] sm:$0xff]
    %v6093 = vld [vmem:[%s5072 + $0x180] sm:$0xff]
    %v6094 = vld [vmem:[%s5072 + $0x188] sm:$0xff]
    %v6095 = vld [vmem:[%s5072 + $0x190] sm:$0xff]
    %v6096 = vld [vmem:[%s5072 + $0x198] sm:$0xff]
    %v6097 = vld [vmem:[%s5072 + $0x1a0] sm:$0xff]
    %v6098 = vld [vmem:[%s5072 + $0x1a8] sm:$0xff]
    %v6099 = vld [vmem:[%s5072 + $0x1b0] sm:$0xff]
    %v6100 = vld [vmem:[%s5072 + $0x1b8] sm:$0xff]
    %v6101 = vld [vmem:[%s5072 + $0x1c0] sm:$0xff]
    %v6102 = vld [vmem:[%s5072 + $0x1c8] sm:$0xff]
    %v6103 = vld [vmem:[%s5072 + $0x1d0] sm:$0xff]
    %v6104 = vld [vmem:[%s5072 + $0x1d8] sm:$0xff]
    %v6105 = vld [vmem:[%s5072 + $0x1e0] sm:$0xff]
    %v6106 = vld [vmem:[%s5072 + $0x1e8] sm:$0xff]
    %v6107 = vld [vmem:[%s5072 + $0x1f0] sm:$0xff]
    %v6108 = vld [vmem:[%s5072 + $0x1f8] sm:$0xff]
    %6109 = vmatprep.subr.mxu0 %v6046
    %6110 = vmatpush1.msra.mxu0 %v6045
    %6111 = vmatprep.subr.mxu0 %v6050
    %6112 = vmatpush1.msra.mxu0 %v6049
    %6113 = vmatprep.subr.mxu0 %v6054
    %6114 = vmatpush1.msra.mxu0 %v6053
    %6115 = vmatprep.subr.mxu0 %v6058
    %6116 = vmatpush1.msra.mxu0 %v6057
    %6117 = vmatprep.subr.mxu0 %v6062
    %6118 = vmatpush1.msra.mxu0 %v6061
    %6119 = vmatprep.subr.mxu0 %v6066
    %6120 = vmatpush1.msra.mxu0 %v6065
    %6121 = vmatprep.subr.mxu0 %v6070
    %6122 = vmatpush1.msra.mxu0 %v6069
    %6123 = vmatprep.subr.mxu0 %v6074
    %6124 = vmatpush1.msra.mxu0 %v6073
    %6125 = vmatprep.subr.mxu0 %v6078
    %6126 = vmatpush1.msra.mxu0 %v6077
    %6127 = vmatprep.subr.mxu0 %v6082
    %6128 = vmatpush1.msra.mxu0 %v6081
    %6129 = vmatprep.subr.mxu0 %v6086
    %6130 = vmatpush1.msra.mxu0 %v6085
    %6131 = vmatprep.subr.mxu0 %v6090
    %6132 = vmatpush1.msra.mxu0 %v6089
    %6133 = vmatprep.subr.mxu0 %v6094
    %6134 = vmatpush1.msra.mxu0 %v6093
    %6135 = vmatprep.subr.mxu0 %v6098
    %6136 = vmatpush1.msra.mxu0 %v6097
    %6137 = vmatprep.subr.mxu0 %v6102
    %6138 = vmatpush1.msra.mxu0 %v6101
    %6139 = vmatprep.subr.mxu0 %v6106
    %6140 = vmatpush1.msra.mxu0 %v6105
    %6141 = vmatprep.subr.mxu0 0.0
    %6142 = vmatpush1.msra.mxu0 0.0
    %6143 = vmatprep.subr.mxu0 0.0
    %6144 = vmatpush1.msra.mxu0 0.0
    %6145 = vmatprep.subr.mxu0 0.0
    %6146 = vmatpush1.msra.mxu0 0.0
    %6147 = vmatprep.subr.mxu0 0.0
    %6148 = vmatpush1.msra.mxu0 0.0
    %6149 = vmatprep.subr.mxu0 0.0
    %6150 = vmatpush1.msra.mxu0 0.0
    %6151 = vmatprep.subr.mxu0 0.0
    %6152 = vmatpush1.msra.mxu0 0.0
    %6153 = vmatprep.subr.mxu0 0.0
    %6154 = vmatpush1.msra.mxu0 0.0
    %6155 = vmatprep.subr.mxu0 0.0
    %6156 = vmatpush1.msra.mxu0 0.0
    %6157 = vmatprep.subr.mxu0 0.0
    %6158 = vmatpush1.msra.mxu0 0.0
    %6159 = vmatprep.subr.mxu0 0.0
    %6160 = vmatpush1.msra.mxu0 0.0
    %6161 = vmatprep.subr.mxu0 0.0
    %6162 = vmatpush1.msra.mxu0 0.0
    %6163 = vmatprep.subr.mxu0 0.0
    %6164 = vmatpush1.msra.mxu0 0.0
    %6165 = vmatprep.subr.mxu0 0.0
    %6166 = vmatpush1.msra.mxu0 0.0
    %6167 = vmatprep.subr.mxu0 0.0
    %6168 = vmatpush1.msra.mxu0 0.0
    %6169 = vmatprep.subr.mxu0 0.0
    %6170 = vmatpush1.msra.mxu0 0.0
    %6171 = vmatprep.subr.mxu0 0.0
    %6172 = vmatpush1.msra.mxu0 0.0
    %6173 = vmatprep.mubr.f32.mxu0 0.0
    %6174 = vmatmul.mubr.f32.gmra.mrb[0].mxu0 %v6039
    %v6175 = vpop.f32.mrb[0].mxu0
    %v6176 = vadd.f32 0.0, %v6175
    %v6177 = vpop.f32.mrb[0].mxu0
    %v6178 = vadd.f32 0.0, %v6177
    %6179 = vdwg.mxu0
    %6180 = vmatprep.subr.mxu0 %v6048
    %6181 = vmatpush1.msra.mxu0 %v6047
    %6182 = vmatprep.subr.mxu0 %v6052
    %6183 = vmatpush1.msra.mxu0 %v6051
    %6184 = vmatprep.subr.mxu0 %v6056
    %6185 = vmatpush1.msra.mxu0 %v6055
    %6186 = vmatprep.subr.mxu0 %v6060
    %6187 = vmatpush1.msra.mxu0 %v6059
    %6188 = vmatprep.subr.mxu0 %v6064
    %6189 = vmatpush1.msra.mxu0 %v6063
    %6190 = vmatprep.subr.mxu0 %v6068
    %6191 = vmatpush1.msra.mxu0 %v6067
    %6192 = vmatprep.subr.mxu0 %v6072
    %6193 = vmatpush1.msra.mxu0 %v6071
    %6194 = vmatprep.subr.mxu0 %v6076
    %6195 = vmatpush1.msra.mxu0 %v6075
    %6196 = vmatprep.subr.mxu0 %v6080
    %6197 = vmatpush1.msra.mxu0 %v6079
    %6198 = vmatprep.subr.mxu0 %v6084
    %6199 = vmatpush1.msra.mxu0 %v6083
    %6200 = vmatprep.subr.mxu0 %v6088
    %6201 = vmatpush1.msra.mxu0 %v6087
    %6202 = vmatprep.subr.mxu0 %v6092
    %6203 = vmatpush1.msra.mxu0 %v6091
    %6204 = vmatprep.subr.mxu0 %v6096
    %6205 = vmatpush1.msra.mxu0 %v6095
    %6206 = vmatprep.subr.mxu0 %v6100
    %6207 = vmatpush1.msra.mxu0 %v6099
    %6208 = vmatprep.subr.mxu0 %v6104
    %6209 = vmatpush1.msra.mxu0 %v6103
    %6210 = vmatprep.subr.mxu0 %v6108
    %6211 = vmatpush1.msra.mxu0 %v6107
    %6212 = vmatprep.subr.mxu0 0.0
    %6213 = vmatpush1.msra.mxu0 0.0
    %6214 = vmatprep.subr.mxu0 0.0
    %6215 = vmatpush1.msra.mxu0 0.0
    %6216 = vmatprep.subr.mxu0 0.0
    %6217 = vmatpush1.msra.mxu0 0.0
    %6218 = vmatprep.subr.mxu0 0.0
    %6219 = vmatpush1.msra.mxu0 0.0
    %6220 = vmatprep.subr.mxu0 0.0
    %6221 = vmatpush1.msra.mxu0 0.0
    %6222 = vmatprep.subr.mxu0 0.0
    %6223 = vmatpush1.msra.mxu0 0.0
    %6224 = vmatprep.subr.mxu0 0.0
    %6225 = vmatpush1.msra.mxu0 0.0
    %6226 = vmatprep.subr.mxu0 0.0
    %6227 = vmatpush1.msra.mxu0 0.0
    %6228 = vmatprep.subr.mxu0 0.0
    %6229 = vmatpush1.msra.mxu0 0.0
    %6230 = vmatprep.subr.mxu0 0.0
    %6231 = vmatpush1.msra.mxu0 0.0
    %6232 = vmatprep.subr.mxu0 0.0
    %6233 = vmatpush1.msra.mxu0 0.0
    %6234 = vmatprep.subr.mxu0 0.0
    %6235 = vmatpush1.msra.mxu0 0.0
    %6236 = vmatprep.subr.mxu0 0.0
    %6237 = vmatpush1.msra.mxu0 0.0
    %6238 = vmatprep.subr.mxu0 0.0
    %6239 = vmatpush1.msra.mxu0 0.0
    %6240 = vmatprep.subr.mxu0 0.0
    %6241 = vmatpush1.msra.mxu0 0.0
    %6242 = vmatprep.subr.mxu0 0.0
    %6243 = vmatpush1.msra.mxu0 0.0
    %6244 = vmatprep.mubr.f32.mxu0 0.0
    %6245 = vmatmul.mubr.f32.gmra.mrb[0].mxu0 %v6039
    %v6246 = vpop.f32.mrb[0].mxu0
    %v6247 = vadd.f32 0.0, %v6246
    %v6248 = vpop.f32.mrb[0].mxu0
    %v6249 = vadd.f32 0.0, %v6248
    %6250 = vdwg.mxu0
    %v6251 = vadd.f32 %v6041, %v6176
    %v6252 = vadd.f32 %v6042, %v6178
    %v6253 = vadd.f32 %v6043, %v6247
    %v6254 = vadd.f32 %v6044, %v6249
    %v6255 = vxor.u32 %v6251, 2147483648
    %v6256 = vmul.f32 %v6255, 1.442695
    %v6257 = vpow.pop %v6256
    %v6258 = vadd.f32 %v6257, 1.0
    %v6259 = vrcp.pop %v6258
    %v6260 = vmul.f32 1.0, %v6259
    %v6261 = vxor.u32 %v6252, 2147483648
    %v6262 = vmul.f32 %v6261, 1.442695
    %v6263 = vpow.pop %v6262
    %v6264 = vadd.f32 %v6263, 1.0
    %v6265 = vrcp.pop %v6264
    %v6266 = vmul.f32 1.0, %v6265
    %v6267 = vtanh.pop %v6253
    %v6268 = vxor.u32 %v6254, 2147483648
    %v6269 = vmul.f32 %v6268, 1.442695
    %v6270 = vpow.pop %v6269
    %v6271 = vadd.f32 %v6270, 1.0
    %v6272 = vrcp.pop %v6271
    %v6273 = vmul.f32 1.0, %v6272
    %v6274 = vmul.f32 %v6266, %v6040
    %v6275 = vmul.f32 %v6260, %v6267
    %v6276 = vadd.f32 %v6274, %v6275
    %v6277 = vtanh.pop %v6276
    %v6278 = vmul.f32 %v6273, %v6277
    %6279 = vst [vmem:[#allocation4] sm:$0xff] %v6278
    %6280 = vst [vmem:[#allocation5] sm:$0xff] %v6276
    %6281 = vst [vmem:[%s1648] sm:$0xff] %v6278
    %v6282 = vld [vmem:[#allocation4] sm:$0xff]
    %v6283 = vld [vmem:[#allocation5] sm:$0xff]
    %v6284 = vld [vmem:[%s1654] sm:$0xff]
    %v6285 = vld [vmem:[%s1654 + $0x8] sm:$0xff]
    %v6286 = vld [vmem:[%s1654 + $0x10] sm:$0xff]
    %v6287 = vld [vmem:[%s1654 + $0x18] sm:$0xff]
    %v6288 = vld [vmem:[%s5072] sm:$0xff]
    %v6289 = vld [vmem:[%s5072 + $0x8] sm:$0xff]
    %v6290 = vld [vmem:[%s5072 + $0x10] sm:$0xff]
    %v6291 = vld [vmem:[%s5072 + $0x18] sm:$0xff]
    %v6292 = vld [vmem:[%s5072 + $0x20] sm:$0xff]
    %v6293 = vld [vmem:[%s5072 + $0x28] sm:$0xff]
    %v6294 = vld [vmem:[%s5072 + $0x30] sm:$0xff]
    %v6295 = vld [vmem:[%s5072 + $0x38] sm:$0xff]
    %v6296 = vld [vmem:[%s5072 + $0x40] sm:$0xff]
    %v6297 = vld [vmem:[%s5072 + $0x48] sm:$0xff]
    %v6298 = vld [vmem:[%s5072 + $0x50] sm:$0xff]
    %v6299 = vld [vmem:[%s5072 + $0x58] sm:$0xff]
    %v6300 = vld [vmem:[%s5072 + $0x60] sm:$0xff]
    %v6301 = vld [vmem:[%s5072 + $0x68] sm:$0xff]
    %v6302 = vld [vmem:[%s5072 + $0x70] sm:$0xff]
    %v6303 = vld [vmem:[%s5072 + $0x78] sm:$0xff]
    %v6304 = vld [vmem:[%s5072 + $0x80] sm:$0xff]
    %v6305 = vld [vmem:[%s5072 + $0x88] sm:$0xff]
    %v6306 = vld [vmem:[%s5072 + $0x90] sm:$0xff]
    %v6307 = vld [vmem:[%s5072 + $0x98] sm:$0xff]
    %v6308 = vld [vmem:[%s5072 + $0xa0] sm:$0xff]
    %v6309 = vld [vmem:[%s5072 + $0xa8] sm:$0xff]
    %v6310 = vld [vmem:[%s5072 + $0xb0] sm:$0xff]
    %v6311 = vld [vmem:[%s5072 + $0xb8] sm:$0xff]
    %v6312 = vld [vmem:[%s5072 + $0xc0] sm:$0xff]
    %v6313 = vld [vmem:[%s5072 + $0xc8] sm:$0xff]
    %v6314 = vld [vmem:[%s5072 + $0xd0] sm:$0xff]
    %v6315 = vld [vmem:[%s5072 + $0xd8] sm:$0xff]
    %v6316 = vld [vmem:[%s5072 + $0xe0] sm:$0xff]
    %v6317 = vld [vmem:[%s5072 + $0xe8] sm:$0xff]
    %v6318 = vld [vmem:[%s5072 + $0xf0] sm:$0xff]
    %v6319 = vld [vmem:[%s5072 + $0xf8] sm:$0xff]
    %v6320 = vld [vmem:[%s5072 + $0x100] sm:$0xff]
    %v6321 = vld [vmem:[%s5072 + $0x108] sm:$0xff]
    %v6322 = vld [vmem:[%s5072 + $0x110] sm:$0xff]
    %v6323 = vld [vmem:[%s5072 + $0x118] sm:$0xff]
    %v6324 = vld [vmem:[%s5072 + $0x120] sm:$0xff]
    %v6325 = vld [vmem:[%s5072 + $0x128] sm:$0xff]
    %v6326 = vld [vmem:[%s5072 + $0x130] sm:$0xff]
    %v6327 = vld [vmem:[%s5072 + $0x138] sm:$0xff]
    %v6328 = vld [vmem:[%s5072 + $0x140] sm:$0xff]
    %v6329 = vld [vmem:[%s5072 + $0x148] sm:$0xff]
    %v6330 = vld [vmem:[%s5072 + $0x150] sm:$0xff]
    %v6331 = vld [vmem:[%s5072 + $0x158] sm:$0xff]
    %v6332 = vld [vmem:[%s5072 + $0x160] sm:$0xff]
    %v6333 = vld [vmem:[%s5072 + $0x168] sm:$0xff]
    %v6334 = vld [vmem:[%s5072 + $0x170] sm:$0xff]
    %v6335 = vld [vmem:[%s5072 + $0x178] sm:$0xff]
    %v6336 = vld [vmem:[%s5072 + $0x180] sm:$0xff]
    %v6337 = vld [vmem:[%s5072 + $0x188] sm:$0xff]
    %v6338 = vld [vmem:[%s5072 + $0x190] sm:$0xff]
    %v6339 = vld [vmem:[%s5072 + $0x198] sm:$0xff]
    %v6340 = vld [vmem:[%s5072 + $0x1a0] sm:$0xff]
    %v6341 = vld [vmem:[%s5072 + $0x1a8] sm:$0xff]
    %v6342 = vld [vmem:[%s5072 + $0x1b0] sm:$0xff]
    %v6343 = vld [vmem:[%s5072 + $0x1b8] sm:$0xff]
    %v6344 = vld [vmem:[%s5072 + $0x1c0] sm:$0xff]
    %v6345 = vld [vmem:[%s5072 + $0x1c8] sm:$0xff]
    %v6346 = vld [vmem:[%s5072 + $0x1d0] sm:$0xff]
    %v6347 = vld [vmem:[%s5072 + $0x1d8] sm:$0xff]
    %v6348 = vld [vmem:[%s5072 + $0x1e0] sm:$0xff]
    %v6349 = vld [vmem:[%s5072 + $0x1e8] sm:$0xff]
    %v6350 = vld [vmem:[%s5072 + $0x1f0] sm:$0xff]
    %v6351 = vld [vmem:[%s5072 + $0x1f8] sm:$0xff]
    %6352 = vmatprep.subr.mxu0 %v6289
    %6353 = vmatpush1.msra.mxu0 %v6288
    %6354 = vmatprep.subr.mxu0 %v6293
    %6355 = vmatpush1.msra.mxu0 %v6292
    %6356 = vmatprep.subr.mxu0 %v6297
    %6357 = vmatpush1.msra.mxu0 %v6296
    %6358 = vmatprep.subr.mxu0 %v6301
    %6359 = vmatpush1.msra.mxu0 %v6300
    %6360 = vmatprep.subr.mxu0 %v6305
    %6361 = vmatpush1.msra.mxu0 %v6304
    %6362 = vmatprep.subr.mxu0 %v6309
    %6363 = vmatpush1.msra.mxu0 %v6308
    %6364 = vmatprep.subr.mxu0 %v6313
    %6365 = vmatpush1.msra.mxu0 %v6312
    %6366 = vmatprep.subr.mxu0 %v6317
    %6367 = vmatpush1.msra.mxu0 %v6316
    %6368 = vmatprep.subr.mxu0 %v6321
    %6369 = vmatpush1.msra.mxu0 %v6320
    %6370 = vmatprep.subr.mxu0 %v6325
    %6371 = vmatpush1.msra.mxu0 %v6324
    %6372 = vmatprep.subr.mxu0 %v6329
    %6373 = vmatpush1.msra.mxu0 %v6328
    %6374 = vmatprep.subr.mxu0 %v6333
    %6375 = vmatpush1.msra.mxu0 %v6332
    %6376 = vmatprep.subr.mxu0 %v6337
    %6377 = vmatpush1.msra.mxu0 %v6336
    %6378 = vmatprep.subr.mxu0 %v6341
    %6379 = vmatpush1.msra.mxu0 %v6340
    %6380 = vmatprep.subr.mxu0 %v6345
    %6381 = vmatpush1.msra.mxu0 %v6344
    %6382 = vmatprep.subr.mxu0 %v6349
    %6383 = vmatpush1.msra.mxu0 %v6348
    %6384 = vmatprep.subr.mxu0 0.0
    %6385 = vmatpush1.msra.mxu0 0.0
    %6386 = vmatprep.subr.mxu0 0.0
    %6387 = vmatpush1.msra.mxu0 0.0
    %6388 = vmatprep.subr.mxu0 0.0
    %6389 = vmatpush1.msra.mxu0 0.0
    %6390 = vmatprep.subr.mxu0 0.0
    %6391 = vmatpush1.msra.mxu0 0.0
    %6392 = vmatprep.subr.mxu0 0.0
    %6393 = vmatpush1.msra.mxu0 0.0
    %6394 = vmatprep.subr.mxu0 0.0
    %6395 = vmatpush1.msra.mxu0 0.0
    %6396 = vmatprep.subr.mxu0 0.0
    %6397 = vmatpush1.msra.mxu0 0.0
    %6398 = vmatprep.subr.mxu0 0.0
    %6399 = vmatpush1.msra.mxu0 0.0
    %6400 = vmatprep.subr.mxu0 0.0
    %6401 = vmatpush1.msra.mxu0 0.0
    %6402 = vmatprep.subr.mxu0 0.0
    %6403 = vmatpush1.msra.mxu0 0.0
    %6404 = vmatprep.subr.mxu0 0.0
    %6405 = vmatpush1.msra.mxu0 0.0
    %6406 = vmatprep.subr.mxu0 0.0
    %6407 = vmatpush1.msra.mxu0 0.0
    %6408 = vmatprep.subr.mxu0 0.0
    %6409 = vmatpush1.msra.mxu0 0.0
    %6410 = vmatprep.subr.mxu0 0.0
    %6411 = vmatpush1.msra.mxu0 0.0
    %6412 = vmatprep.subr.mxu0 0.0
    %6413 = vmatpush1.msra.mxu0 0.0
    %6414 = vmatprep.subr.mxu0 0.0
    %6415 = vmatpush1.msra.mxu0 0.0
    %6416 = vmatprep.mubr.f32.mxu0 0.0
    %6417 = vmatmul.mubr.f32.gmra.mrb[0].mxu0 %v6282
    %v6418 = vpop.f32.mrb[0].mxu0
    %v6419 = vadd.f32 0.0, %v6418
    %v6420 = vpop.f32.mrb[0].mxu0
    %v6421 = vadd.f32 0.0, %v6420
    %6422 = vdwg.mxu0
    %6423 = vmatprep.subr.mxu0 %v6291
    %6424 = vmatpush1.msra.mxu0 %v6290
    %6425 = vmatprep.subr.mxu0 %v6295
    %6426 = vmatpush1.msra.mxu0 %v6294
    %6427 = vmatprep.subr.mxu0 %v6299
    %6428 = vmatpush1.msra.mxu0 %v6298
    %6429 = vmatprep.subr.mxu0 %v6303
    %6430 = vmatpush1.msra.mxu0 %v6302
    %6431 = vmatprep.subr.mxu0 %v6307
    %6432 = vmatpush1.msra.mxu0 %v6306
    %6433 = vmatprep.subr.mxu0 %v6311
    %6434 = vmatpush1.msra.mxu0 %v6310
    %6435 = vmatprep.subr.mxu0 %v6315
    %6436 = vmatpush1.msra.mxu0 %v6314
    %6437 = vmatprep.subr.mxu0 %v6319
    %6438 = vmatpush1.msra.mxu0 %v6318
    %6439 = vmatprep.subr.mxu0 %v6323
    %6440 = vmatpush1.msra.mxu0 %v6322
    %6441 = vmatprep.subr.mxu0 %v6327
    %6442 = vmatpush1.msra.mxu0 %v6326
    %6443 = vmatprep.subr.mxu0 %v6331
    %6444 = vmatpush1.msra.mxu0 %v6330
    %6445 = vmatprep.subr.mxu0 %v6335
    %6446 = vmatpush1.msra.mxu0 %v6334
    %6447 = vmatprep.subr.mxu0 %v6339
    %6448 = vmatpush1.msra.mxu0 %v6338
    %6449 = vmatprep.subr.mxu0 %v6343
    %6450 = vmatpush1.msra.mxu0 %v6342
    %6451 = vmatprep.subr.mxu0 %v6347
    %6452 = vmatpush1.msra.mxu0 %v6346
    %6453 = vmatprep.subr.mxu0 %v6351
    %6454 = vmatpush1.msra.mxu0 %v6350
    %6455 = vmatprep.subr.mxu0 0.0
    %6456 = vmatpush1.msra.mxu0 0.0
    %6457 = vmatprep.subr.mxu0 0.0
    %6458 = vmatpush1.msra.mxu0 0.0
    %6459 = vmatprep.subr.mxu0 0.0
    %6460 = vmatpush1.msra.mxu0 0.0
    %6461 = vmatprep.subr.mxu0 0.0
    %6462 = vmatpush1.msra.mxu0 0.0
    %6463 = vmatprep.subr.mxu0 0.0
    %6464 = vmatpush1.msra.mxu0 0.0
    %6465 = vmatprep.subr.mxu0 0.0
    %6466 = vmatpush1.msra.mxu0 0.0
    %6467 = vmatprep.subr.mxu0 0.0
    %6468 = vmatpush1.msra.mxu0 0.0
    %6469 = vmatprep.subr.mxu0 0.0
    %6470 = vmatpush1.msra.mxu0 0.0
    %6471 = vmatprep.subr.mxu0 0.0
    %6472 = vmatpush1.msra.mxu0 0.0
    %6473 = vmatprep.subr.mxu0 0.0
    %6474 = vmatpush1.msra.mxu0 0.0
    %6475 = vmatprep.subr.mxu0 0.0
    %6476 = vmatpush1.msra.mxu0 0.0
    %6477 = vmatprep.subr.mxu0 0.0
    %6478 = vmatpush1.msra.mxu0 0.0
    %6479 = vmatprep.subr.mxu0 0.0
    %6480 = vmatpush1.msra.mxu0 0.0
    %6481 = vmatprep.subr.mxu0 0.0
    %6482 = vmatpush1.msra.mxu0 0.0
    %6483 = vmatprep.subr.mxu0 0.0
    %6484 = vmatpush1.msra.mxu0 0.0
    %6485 = vmatprep.subr.mxu0 0.0
    %6486 = vmatpush1.msra.mxu0 0.0
    %6487 = vmatprep.mubr.f32.mxu0 0.0
    %6488 = vmatmul.mubr.f32.gmra.mrb[0].mxu0 %v6282
    %v6489 = vpop.f32.mrb[0].mxu0
    %v6490 = vadd.f32 0.0, %v6489
    %v6491 = vpop.f32.mrb[0].mxu0
    %v6492 = vadd.f32 0.0, %v6491
    %6493 = vdwg.mxu0
    %v6494 = vadd.f32 %v6284, %v6419
    %v6495 = vadd.f32 %v6285, %v6421
    %v6496 = vadd.f32 %v6286, %v6490
    %v6497 = vadd.f32 %v6287, %v6492
    %v6498 = vxor.u32 %v6494, 2147483648
    %v6499 = vmul.f32 %v6498, 1.442695
    %v6500 = vpow.pop %v6499
    %v6501 = vadd.f32 %v6500, 1.0
    %v6502 = vrcp.pop %v6501
    %v6503 = vmul.f32 1.0, %v6502
    %v6504 = vxor.u32 %v6495, 2147483648
    %v6505 = vmul.f32 %v6504, 1.442695
    %v6506 = vpow.pop %v6505
    %v6507 = vadd.f32 %v6506, 1.0
    %v6508 = vrcp.pop %v6507
    %v6509 = vmul.f32 1.0, %v6508
    %v6510 = vtanh.pop %v6496
    %v6511 = vxor.u32 %v6497, 2147483648
    %v6512 = vmul.f32 %v6511, 1.442695
    %v6513 = vpow.pop %v6512
    %v6514 = vadd.f32 %v6513, 1.0
    %v6515 = vrcp.pop %v6514
    %v6516 = vmul.f32 1.0, %v6515
    %v6517 = vmul.f32 %v6509, %v6283
    %v6518 = vmul.f32 %v6503, %v6510
    %v6519 = vadd.f32 %v6517, %v6518
    %v6520 = vtanh.pop %v6519
    %v6521 = vmul.f32 %v6516, %v6520
    %6522 = vst [vmem:[#allocation4] sm:$0xff] %v6521
    %6523 = vst [vmem:[#allocation5] sm:$0xff] %v6519
    %6524 = vst [vmem:[%s1895] sm:$0xff] %v6521
    %v6525 = vld [vmem:[#allocation4] sm:$0xff]
    %v6526 = vld [vmem:[#allocation5] sm:$0xff]
    %v6527 = vld [vmem:[%s1901] sm:$0xff]
    %v6528 = vld [vmem:[%s1901 + $0x8] sm:$0xff]
    %v6529 = vld [vmem:[%s1901 + $0x10] sm:$0xff]
    %v6530 = vld [vmem:[%s1901 + $0x18] sm:$0xff]
    %v6531 = vld [vmem:[%s5072] sm:$0xff]
    %v6532 = vld [vmem:[%s5072 + $0x8] sm:$0xff]
    %v6533 = vld [vmem:[%s5072 + $0x10] sm:$0xff]
    %v6534 = vld [vmem:[%s5072 + $0x18] sm:$0xff]
    %v6535 = vld [vmem:[%s5072 + $0x20] sm:$0xff]
    %v6536 = vld [vmem:[%s5072 + $0x28] sm:$0xff]
    %v6537 = vld [vmem:[%s5072 + $0x30] sm:$0xff]
    %v6538 = vld [vmem:[%s5072 + $0x38] sm:$0xff]
    %v6539 = vld [vmem:[%s5072 + $0x40] sm:$0xff]
    %v6540 = vld [vmem:[%s5072 + $0x48] sm:$0xff]
    %v6541 = vld [vmem:[%s5072 + $0x50] sm:$0xff]
    %v6542 = vld [vmem:[%s5072 + $0x58] sm:$0xff]
    %v6543 = vld [vmem:[%s5072 + $0x60] sm:$0xff]
    %v6544 = vld [vmem:[%s5072 + $0x68] sm:$0xff]
    %v6545 = vld [vmem:[%s5072 + $0x70] sm:$0xff]
    %v6546 = vld [vmem:[%s5072 + $0x78] sm:$0xff]
    %v6547 = vld [vmem:[%s5072 + $0x80] sm:$0xff]
    %v6548 = vld [vmem:[%s5072 + $0x88] sm:$0xff]
    %v6549 = vld [vmem:[%s5072 + $0x90] sm:$0xff]
    %v6550 = vld [vmem:[%s5072 + $0x98] sm:$0xff]
    %v6551 = vld [vmem:[%s5072 + $0xa0] sm:$0xff]
    %v6552 = vld [vmem:[%s5072 + $0xa8] sm:$0xff]
    %v6553 = vld [vmem:[%s5072 + $0xb0] sm:$0xff]
    %v6554 = vld [vmem:[%s5072 + $0xb8] sm:$0xff]
    %v6555 = vld [vmem:[%s5072 + $0xc0] sm:$0xff]
    %v6556 = vld [vmem:[%s5072 + $0xc8] sm:$0xff]
    %v6557 = vld [vmem:[%s5072 + $0xd0] sm:$0xff]
    %v6558 = vld [vmem:[%s5072 + $0xd8] sm:$0xff]
    %v6559 = vld [vmem:[%s5072 + $0xe0] sm:$0xff]
    %v6560 = vld [vmem:[%s5072 + $0xe8] sm:$0xff]
    %v6561 = vld [vmem:[%s5072 + $0xf0] sm:$0xff]
    %v6562 = vld [vmem:[%s5072 + $0xf8] sm:$0xff]
    %v6563 = vld [vmem:[%s5072 + $0x100] sm:$0xff]
    %v6564 = vld [vmem:[%s5072 + $0x108] sm:$0xff]
    %v6565 = vld [vmem:[%s5072 + $0x110] sm:$0xff]
    %v6566 = vld [vmem:[%s5072 + $0x118] sm:$0xff]
    %v6567 = vld [vmem:[%s5072 + $0x120] sm:$0xff]
    %v6568 = vld [vmem:[%s5072 + $0x128] sm:$0xff]
    %v6569 = vld [vmem:[%s5072 + $0x130] sm:$0xff]
    %v6570 = vld [vmem:[%s5072 + $0x138] sm:$0xff]
    %v6571 = vld [vmem:[%s5072 + $0x140] sm:$0xff]
    %v6572 = vld [vmem:[%s5072 + $0x148] sm:$0xff]
    %v6573 = vld [vmem:[%s5072 + $0x150] sm:$0xff]
    %v6574 = vld [vmem:[%s5072 + $0x158] sm:$0xff]
    %v6575 = vld [vmem:[%s5072 + $0x160] sm:$0xff]
    %v6576 = vld [vmem:[%s5072 + $0x168] sm:$0xff]
    %v6577 = vld [vmem:[%s5072 + $0x170] sm:$0xff]
    %v6578 = vld [vmem:[%s5072 + $0x178] sm:$0xff]
    %v6579 = vld [vmem:[%s5072 + $0x180] sm:$0xff]
    %v6580 = vld [vmem:[%s5072 + $0x188] sm:$0xff]
    %v6581 = vld [vmem:[%s5072 + $0x190] sm:$0xff]
    %v6582 = vld [vmem:[%s5072 + $0x198] sm:$0xff]
    %v6583 = vld [vmem:[%s5072 + $0x1a0] sm:$0xff]
    %v6584 = vld [vmem:[%s5072 + $0x1a8] sm:$0xff]
    %v6585 = vld [vmem:[%s5072 + $0x1b0] sm:$0xff]
    %v6586 = vld [vmem:[%s5072 + $0x1b8] sm:$0xff]
    %v6587 = vld [vmem:[%s5072 + $0x1c0] sm:$0xff]
    %v6588 = vld [vmem:[%s5072 + $0x1c8] sm:$0xff]
    %v6589 = vld [vmem:[%s5072 + $0x1d0] sm:$0xff]
    %v6590 = vld [vmem:[%s5072 + $0x1d8] sm:$0xff]
    %v6591 = vld [vmem:[%s5072 + $0x1e0] sm:$0xff]
    %v6592 = vld [vmem:[%s5072 + $0x1e8] sm:$0xff]
    %v6593 = vld [vmem:[%s5072 + $0x1f0] sm:$0xff]
    %v6594 = vld [vmem:[%s5072 + $0x1f8] sm:$0xff]
    %6595 = vmatprep.subr.mxu0 %v6532
    %6596 = vmatpush1.msra.mxu0 %v6531
    %6597 = vmatprep.subr.mxu0 %v6536
    %6598 = vmatpush1.msra.mxu0 %v6535
    %6599 = vmatprep.subr.mxu0 %v6540
    %6600 = vmatpush1.msra.mxu0 %v6539
    %6601 = vmatprep.subr.mxu0 %v6544
    %6602 = vmatpush1.msra.mxu0 %v6543
    %6603 = vmatprep.subr.mxu0 %v6548
    %6604 = vmatpush1.msra.mxu0 %v6547
    %6605 = vmatprep.subr.mxu0 %v6552
    %6606 = vmatpush1.msra.mxu0 %v6551
    %6607 = vmatprep.subr.mxu0 %v6556
    %6608 = vmatpush1.msra.mxu0 %v6555
    %6609 = vmatprep.subr.mxu0 %v6560
    %6610 = vmatpush1.msra.mxu0 %v6559
    %6611 = vmatprep.subr.mxu0 %v6564
    %6612 = vmatpush1.msra.mxu0 %v6563
    %6613 = vmatprep.subr.mxu0 %v6568
    %6614 = vmatpush1.msra.mxu0 %v6567
    %6615 = vmatprep.subr.mxu0 %v6572
    %6616 = vmatpush1.msra.mxu0 %v6571
    %6617 = vmatprep.subr.mxu0 %v6576
    %6618 = vmatpush1.msra.mxu0 %v6575
    %6619 = vmatprep.subr.mxu0 %v6580
    %6620 = vmatpush1.msra.mxu0 %v6579
    %6621 = vmatprep.subr.mxu0 %v6584
    %6622 = vmatpush1.msra.mxu0 %v6583
    %6623 = vmatprep.subr.mxu0 %v6588
    %6624 = vmatpush1.msra.mxu0 %v6587
    %6625 = vmatprep.subr.mxu0 %v6592
    %6626 = vmatpush1.msra.mxu0 %v6591
    %6627 = vmatprep.subr.mxu0 0.0
    %6628 = vmatpush1.msra.mxu0 0.0
    %6629 = vmatprep.subr.mxu0 0.0
    %6630 = vmatpush1.msra.mxu0 0.0
    %6631 = vmatprep.subr.mxu0 0.0
    %6632 = vmatpush1.msra.mxu0 0.0
    %6633 = vmatprep.subr.mxu0 0.0
    %6634 = vmatpush1.msra.mxu0 0.0
    %6635 = vmatprep.subr.mxu0 0.0
    %6636 = vmatpush1.msra.mxu0 0.0
    %6637 = vmatprep.subr.mxu0 0.0
    %6638 = vmatpush1.msra.mxu0 0.0
    %6639 = vmatprep.subr.mxu0 0.0
    %6640 = vmatpush1.msra.mxu0 0.0
    %6641 = vmatprep.subr.mxu0 0.0
    %6642 = vmatpush1.msra.mxu0 0.0
    %6643 = vmatprep.subr.mxu0 0.0
    %6644 = vmatpush1.msra.mxu0 0.0
    %6645 = vmatprep.subr.mxu0 0.0
    %6646 = vmatpush1.msra.mxu0 0.0
    %6647 = vmatprep.subr.mxu0 0.0
    %6648 = vmatpush1.msra.mxu0 0.0
    %6649 = vmatprep.subr.mxu0 0.0
    %6650 = vmatpush1.msra.mxu0 0.0
    %6651 = vmatprep.subr.mxu0 0.0
    %6652 = vmatpush1.msra.mxu0 0.0
    %6653 = vmatprep.subr.mxu0 0.0
    %6654 = vmatpush1.msra.mxu0 0.0
    %6655 = vmatprep.subr.mxu0 0.0
    %6656 = vmatpush1.msra.mxu0 0.0
    %6657 = vmatprep.subr.mxu0 0.0
    %6658 = vmatpush1.msra.mxu0 0.0
    %6659 = vmatprep.mubr.f32.mxu0 0.0
    %6660 = vmatmul.mubr.f32.gmra.mrb[0].mxu0 %v6525
    %v6661 = vpop.f32.mrb[0].mxu0
    %v6662 = vadd.f32 0.0, %v6661
    %v6663 = vpop.f32.mrb[0].mxu0
    %v6664 = vadd.f32 0.0, %v6663
    %6665 = vdwg.mxu0
    %6666 = vmatprep.subr.mxu0 %v6534
    %6667 = vmatpush1.msra.mxu0 %v6533
    %6668 = vmatprep.subr.mxu0 %v6538
    %6669 = vmatpush1.msra.mxu0 %v6537
    %6670 = vmatprep.subr.mxu0 %v6542
    %6671 = vmatpush1.msra.mxu0 %v6541
    %6672 = vmatprep.subr.mxu0 %v6546
    %6673 = vmatpush1.msra.mxu0 %v6545
    %6674 = vmatprep.subr.mxu0 %v6550
    %6675 = vmatpush1.msra.mxu0 %v6549
    %6676 = vmatprep.subr.mxu0 %v6554
    %6677 = vmatpush1.msra.mxu0 %v6553
    %6678 = vmatprep.subr.mxu0 %v6558
    %6679 = vmatpush1.msra.mxu0 %v6557
    %6680 = vmatprep.subr.mxu0 %v6562
    %6681 = vmatpush1.msra.mxu0 %v6561
    %6682 = vmatprep.subr.mxu0 %v6566
    %6683 = vmatpush1.msra.mxu0 %v6565
    %6684 = vmatprep.subr.mxu0 %v6570
    %6685 = vmatpush1.msra.mxu0 %v6569
    %6686 = vmatprep.subr.mxu0 %v6574
    %6687 = vmatpush1.msra.mxu0 %v6573
    %6688 = vmatprep.subr.mxu0 %v6578
    %6689 = vmatpush1.msra.mxu0 %v6577
    %6690 = vmatprep.subr.mxu0 %v6582
    %6691 = vmatpush1.msra.mxu0 %v6581
    %6692 = vmatprep.subr.mxu0 %v6586
    %6693 = vmatpush1.msra.mxu0 %v6585
    %6694 = vmatprep.subr.mxu0 %v6590
    %6695 = vmatpush1.msra.mxu0 %v6589
    %6696 = vmatprep.subr.mxu0 %v6594
    %6697 = vmatpush1.msra.mxu0 %v6593
    %6698 = vmatprep.subr.mxu0 0.0
    %6699 = vmatpush1.msra.mxu0 0.0
    %6700 = vmatprep.subr.mxu0 0.0
    %6701 = vmatpush1.msra.mxu0 0.0
    %6702 = vmatprep.subr.mxu0 0.0
    %6703 = vmatpush1.msra.mxu0 0.0
    %6704 = vmatprep.subr.mxu0 0.0
    %6705 = vmatpush1.msra.mxu0 0.0
    %6706 = vmatprep.subr.mxu0 0.0
    %6707 = vmatpush1.msra.mxu0 0.0
    %6708 = vmatprep.subr.mxu0 0.0
    %6709 = vmatpush1.msra.mxu0 0.0
    %6710 = vmatprep.subr.mxu0 0.0
    %6711 = vmatpush1.msra.mxu0 0.0
    %6712 = vmatprep.subr.mxu0 0.0
    %6713 = vmatpush1.msra.mxu0 0.0
    %6714 = vmatprep.subr.mxu0 0.0
    %6715 = vmatpush1.msra.mxu0 0.0
    %6716 = vmatprep.subr.mxu0 0.0
    %6717 = vmatpush1.msra.mxu0 0.0
    %6718 = vmatprep.subr.mxu0 0.0
    %6719 = vmatpush1.msra.mxu0 0.0
    %6720 = vmatprep.subr.mxu0 0.0
    %6721 = vmatpush1.msra.mxu0 0.0
    %6722 = vmatprep.subr.mxu0 0.0
    %6723 = vmatpush1.msra.mxu0 0.0
    %6724 = vmatprep.subr.mxu0 0.0
    %6725 = vmatpush1.msra.mxu0 0.0
    %6726 = vmatprep.subr.mxu0 0.0
    %6727 = vmatpush1.msra.mxu0 0.0
    %6728 = vmatprep.subr.mxu0 0.0
    %6729 = vmatpush1.msra.mxu0 0.0
    %6730 = vmatprep.mubr.f32.mxu0 0.0
    %6731 = vmatmul.mubr.f32.gmra.mrb[0].mxu0 %v6525
    %v6732 = vpop.f32.mrb[0].mxu0
    %v6733 = vadd.f32 0.0, %v6732
    %v6734 = vpop.f32.mrb[0].mxu0
    %v6735 = vadd.f32 0.0, %v6734
    %6736 = vdwg.mxu0
    %v6737 = vadd.f32 %v6527, %v6662
    %v6738 = vadd.f32 %v6528, %v6664
    %v6739 = vadd.f32 %v6529, %v6733
    %v6740 = vadd.f32 %v6530, %v6735
    %v6741 = vxor.u32 %v6737, 2147483648
    %v6742 = vmul.f32 %v6741, 1.442695
    %v6743 = vpow.pop %v6742
    %v6744 = vadd.f32 %v6743, 1.0
    %v6745 = vrcp.pop %v6744
    %v6746 = vmul.f32 1.0, %v6745
    %v6747 = vxor.u32 %v6738, 2147483648
    %v6748 = vmul.f32 %v6747, 1.442695
    %v6749 = vpow.pop %v6748
    %v6750 = vadd.f32 %v6749, 1.0
    %v6751 = vrcp.pop %v6750
    %v6752 = vmul.f32 1.0, %v6751
    %v6753 = vtanh.pop %v6739
    %v6754 = vxor.u32 %v6740, 2147483648
    %v6755 = vmul.f32 %v6754, 1.442695
    %v6756 = vpow.pop %v6755
    %v6757 = vadd.f32 %v6756, 1.0
    %v6758 = vrcp.pop %v6757
    %v6759 = vmul.f32 1.0, %v6758
    %v6760 = vmul.f32 %v6752, %v6526
    %v6761 = vmul.f32 %v6746, %v6753
    %v6762 = vadd.f32 %v6760, %v6761
    %v6763 = vtanh.pop %v6762
    %v6764 = vmul.f32 %v6759, %v6763
    %6765 = vst [vmem:[#allocation4] sm:$0xff] %v6764
    %6766 = vst [vmem:[#allocation5] sm:$0xff] %v6762
    %6767 = vst [vmem:[%s2142] sm:$0xff] %v6764
    %v6768 = vld [vmem:[#allocation4] sm:$0xff]
    %v6769 = vld [vmem:[#allocation5] sm:$0xff]
    %v6770 = vld [vmem:[%s2148] sm:$0xff]
    %v6771 = vld [vmem:[%s2148 + $0x8] sm:$0xff]
    %v6772 = vld [vmem:[%s2148 + $0x10] sm:$0xff]
    %v6773 = vld [vmem:[%s2148 + $0x18] sm:$0xff]
    %v6774 = vld [vmem:[%s5072] sm:$0xff]
    %v6775 = vld [vmem:[%s5072 + $0x8] sm:$0xff]
    %v6776 = vld [vmem:[%s5072 + $0x10] sm:$0xff]
    %v6777 = vld [vmem:[%s5072 + $0x18] sm:$0xff]
    %v6778 = vld [vmem:[%s5072 + $0x20] sm:$0xff]
    %v6779 = vld [vmem:[%s5072 + $0x28] sm:$0xff]
    %v6780 = vld [vmem:[%s5072 + $0x30] sm:$0xff]
    %v6781 = vld [vmem:[%s5072 + $0x38] sm:$0xff]
    %v6782 = vld [vmem:[%s5072 + $0x40] sm:$0xff]
    %v6783 = vld [vmem:[%s5072 + $0x48] sm:$0xff]
    %v6784 = vld [vmem:[%s5072 + $0x50] sm:$0xff]
    %v6785 = vld [vmem:[%s5072 + $0x58] sm:$0xff]
    %v6786 = vld [vmem:[%s5072 + $0x60] sm:$0xff]
    %v6787 = vld [vmem:[%s5072 + $0x68] sm:$0xff]
    %v6788 = vld [vmem:[%s5072 + $0x70] sm:$0xff]
    %v6789 = vld [vmem:[%s5072 + $0x78] sm:$0xff]
    %v6790 = vld [vmem:[%s5072 + $0x80] sm:$0xff]
    %v6791 = vld [vmem:[%s5072 + $0x88] sm:$0xff]
    %v6792 = vld [vmem:[%s5072 + $0x90] sm:$0xff]
    %v6793 = vld [vmem:[%s5072 + $0x98] sm:$0xff]
    %v6794 = vld [vmem:[%s5072 + $0xa0] sm:$0xff]
    %v6795 = vld [vmem:[%s5072 + $0xa8] sm:$0xff]
    %v6796 = vld [vmem:[%s5072 + $0xb0] sm:$0xff]
    %v6797 = vld [vmem:[%s5072 + $0xb8] sm:$0xff]
    %v6798 = vld [vmem:[%s5072 + $0xc0] sm:$0xff]
    %v6799 = vld [vmem:[%s5072 + $0xc8] sm:$0xff]
    %v6800 = vld [vmem:[%s5072 + $0xd0] sm:$0xff]
    %v6801 = vld [vmem:[%s5072 + $0xd8] sm:$0xff]
    %v6802 = vld [vmem:[%s5072 + $0xe0] sm:$0xff]
    %v6803 = vld [vmem:[%s5072 + $0xe8] sm:$0xff]
    %v6804 = vld [vmem:[%s5072 + $0xf0] sm:$0xff]
    %v6805 = vld [vmem:[%s5072 + $0xf8] sm:$0xff]
    %v6806 = vld [vmem:[%s5072 + $0x100] sm:$0xff]
    %v6807 = vld [vmem:[%s5072 + $0x108] sm:$0xff]
    %v6808 = vld [vmem:[%s5072 + $0x110] sm:$0xff]
    %v6809 = vld [vmem:[%s5072 + $0x118] sm:$0xff]
    %v6810 = vld [vmem:[%s5072 + $0x120] sm:$0xff]
    %v6811 = vld [vmem:[%s5072 + $0x128] sm:$0xff]
    %v6812 = vld [vmem:[%s5072 + $0x130] sm:$0xff]
    %v6813 = vld [vmem:[%s5072 + $0x138] sm:$0xff]
    %v6814 = vld [vmem:[%s5072 + $0x140] sm:$0xff]
    %v6815 = vld [vmem:[%s5072 + $0x148] sm:$0xff]
    %v6816 = vld [vmem:[%s5072 + $0x150] sm:$0xff]
    %v6817 = vld [vmem:[%s5072 + $0x158] sm:$0xff]
    %v6818 = vld [vmem:[%s5072 + $0x160] sm:$0xff]
    %v6819 = vld [vmem:[%s5072 + $0x168] sm:$0xff]
    %v6820 = vld [vmem:[%s5072 + $0x170] sm:$0xff]
    %v6821 = vld [vmem:[%s5072 + $0x178] sm:$0xff]
    %v6822 = vld [vmem:[%s5072 + $0x180] sm:$0xff]
    %v6823 = vld [vmem:[%s5072 + $0x188] sm:$0xff]
    %v6824 = vld [vmem:[%s5072 + $0x190] sm:$0xff]
    %v6825 = vld [vmem:[%s5072 + $0x198] sm:$0xff]
    %v6826 = vld [vmem:[%s5072 + $0x1a0] sm:$0xff]
    %v6827 = vld [vmem:[%s5072 + $0x1a8] sm:$0xff]
    %v6828 = vld [vmem:[%s5072 + $0x1b0] sm:$0xff]
    %v6829 = vld [vmem:[%s5072 + $0x1b8] sm:$0xff]
    %v6830 = vld [vmem:[%s5072 + $0x1c0] sm:$0xff]
    %v6831 = vld [vmem:[%s5072 + $0x1c8] sm:$0xff]
    %v6832 = vld [vmem:[%s5072 + $0x1d0] sm:$0xff]
    %v6833 = vld [vmem:[%s5072 + $0x1d8] sm:$0xff]
    %v6834 = vld [vmem:[%s5072 + $0x1e0] sm:$0xff]
    %v6835 = vld [vmem:[%s5072 + $0x1e8] sm:$0xff]
    %v6836 = vld [vmem:[%s5072 + $0x1f0] sm:$0xff]
    %v6837 = vld [vmem:[%s5072 + $0x1f8] sm:$0xff]
    %6838 = vmatprep.subr.mxu0 %v6775
    %6839 = vmatpush1.msra.mxu0 %v6774
    %6840 = vmatprep.subr.mxu0 %v6779
    %6841 = vmatpush1.msra.mxu0 %v6778
    %6842 = vmatprep.subr.mxu0 %v6783
    %6843 = vmatpush1.msra.mxu0 %v6782
    %6844 = vmatprep.subr.mxu0 %v6787
    %6845 = vmatpush1.msra.mxu0 %v6786
    %6846 = vmatprep.subr.mxu0 %v6791
    %6847 = vmatpush1.msra.mxu0 %v6790
    %6848 = vmatprep.subr.mxu0 %v6795
    %6849 = vmatpush1.msra.mxu0 %v6794
    %6850 = vmatprep.subr.mxu0 %v6799
    %6851 = vmatpush1.msra.mxu0 %v6798
    %6852 = vmatprep.subr.mxu0 %v6803
    %6853 = vmatpush1.msra.mxu0 %v6802
    %6854 = vmatprep.subr.mxu0 %v6807
    %6855 = vmatpush1.msra.mxu0 %v6806
    %6856 = vmatprep.subr.mxu0 %v6811
    %6857 = vmatpush1.msra.mxu0 %v6810
    %6858 = vmatprep.subr.mxu0 %v6815
    %6859 = vmatpush1.msra.mxu0 %v6814
    %6860 = vmatprep.subr.mxu0 %v6819
    %6861 = vmatpush1.msra.mxu0 %v6818
    %6862 = vmatprep.subr.mxu0 %v6823
    %6863 = vmatpush1.msra.mxu0 %v6822
    %6864 = vmatprep.subr.mxu0 %v6827
    %6865 = vmatpush1.msra.mxu0 %v6826
    %6866 = vmatprep.subr.mxu0 %v6831
    %6867 = vmatpush1.msra.mxu0 %v6830
    %6868 = vmatprep.subr.mxu0 %v6835
    %6869 = vmatpush1.msra.mxu0 %v6834
    %6870 = vmatprep.subr.mxu0 0.0
    %6871 = vmatpush1.msra.mxu0 0.0
    %6872 = vmatprep.subr.mxu0 0.0
    %6873 = vmatpush1.msra.mxu0 0.0
    %6874 = vmatprep.subr.mxu0 0.0
    %6875 = vmatpush1.msra.mxu0 0.0
    %6876 = vmatprep.subr.mxu0 0.0
    %6877 = vmatpush1.msra.mxu0 0.0
    %6878 = vmatprep.subr.mxu0 0.0
    %6879 = vmatpush1.msra.mxu0 0.0
    %6880 = vmatprep.subr.mxu0 0.0
    %6881 = vmatpush1.msra.mxu0 0.0
    %6882 = vmatprep.subr.mxu0 0.0
    %6883 = vmatpush1.msra.mxu0 0.0
    %6884 = vmatprep.subr.mxu0 0.0
    %6885 = vmatpush1.msra.mxu0 0.0
    %6886 = vmatprep.subr.mxu0 0.0
    %6887 = vmatpush1.msra.mxu0 0.0
    %6888 = vmatprep.subr.mxu0 0.0
    %6889 = vmatpush1.msra.mxu0 0.0
    %6890 = vmatprep.subr.mxu0 0.0
    %6891 = vmatpush1.msra.mxu0 0.0
    %6892 = vmatprep.subr.mxu0 0.0
    %6893 = vmatpush1.msra.mxu0 0.0
    %6894 = vmatprep.subr.mxu0 0.0
    %6895 = vmatpush1.msra.mxu0 0.0
    %6896 = vmatprep.subr.mxu0 0.0
    %6897 = vmatpush1.msra.mxu0 0.0
    %6898 = vmatprep.subr.mxu0 0.0
    %6899 = vmatpush1.msra.mxu0 0.0
    %6900 = vmatprep.subr.mxu0 0.0
    %6901 = vmatpush1.msra.mxu0 0.0
    %6902 = vmatprep.mubr.f32.mxu0 0.0
    %6903 = vmatmul.mubr.f32.gmra.mrb[0].mxu0 %v6768
    %v6904 = vpop.f32.mrb[0].mxu0
    %v6905 = vadd.f32 0.0, %v6904
    %v6906 = vpop.f32.mrb[0].mxu0
    %v6907 = vadd.f32 0.0, %v6906
    %6908 = vdwg.mxu0
    %6909 = vmatprep.subr.mxu0 %v6777
    %6910 = vmatpush1.msra.mxu0 %v6776
    %6911 = vmatprep.subr.mxu0 %v6781
    %6912 = vmatpush1.msra.mxu0 %v6780
    %6913 = vmatprep.subr.mxu0 %v6785
    %6914 = vmatpush1.msra.mxu0 %v6784
    %6915 = vmatprep.subr.mxu0 %v6789
    %6916 = vmatpush1.msra.mxu0 %v6788
    %6917 = vmatprep.subr.mxu0 %v6793
    %6918 = vmatpush1.msra.mxu0 %v6792
    %6919 = vmatprep.subr.mxu0 %v6797
    %6920 = vmatpush1.msra.mxu0 %v6796
    %6921 = vmatprep.subr.mxu0 %v6801
    %6922 = vmatpush1.msra.mxu0 %v6800
    %6923 = vmatprep.subr.mxu0 %v6805
    %6924 = vmatpush1.msra.mxu0 %v6804
    %6925 = vmatprep.subr.mxu0 %v6809
    %6926 = vmatpush1.msra.mxu0 %v6808
    %6927 = vmatprep.subr.mxu0 %v6813
    %6928 = vmatpush1.msra.mxu0 %v6812
    %6929 = vmatprep.subr.mxu0 %v6817
    %6930 = vmatpush1.msra.mxu0 %v6816
    %6931 = vmatprep.subr.mxu0 %v6821
    %6932 = vmatpush1.msra.mxu0 %v6820
    %6933 = vmatprep.subr.mxu0 %v6825
    %6934 = vmatpush1.msra.mxu0 %v6824
    %6935 = vmatprep.subr.mxu0 %v6829
    %6936 = vmatpush1.msra.mxu0 %v6828
    %6937 = vmatprep.subr.mxu0 %v6833
    %6938 = vmatpush1.msra.mxu0 %v6832
    %6939 = vmatprep.subr.mxu0 %v6837
    %6940 = vmatpush1.msra.mxu0 %v6836
    %6941 = vmatprep.subr.mxu0 0.0
    %6942 = vmatpush1.msra.mxu0 0.0
    %6943 = vmatprep.subr.mxu0 0.0
    %6944 = vmatpush1.msra.mxu0 0.0
    %6945 = vmatprep.subr.mxu0 0.0
    %6946 = vmatpush1.msra.mxu0 0.0
    %6947 = vmatprep.subr.mxu0 0.0
    %6948 = vmatpush1.msra.mxu0 0.0
    %6949 = vmatprep.subr.mxu0 0.0
    %6950 = vmatpush1.msra.mxu0 0.0
    %6951 = vmatprep.subr.mxu0 0.0
    %6952 = vmatpush1.msra.mxu0 0.0
    %6953 = vmatprep.subr.mxu0 0.0
    %6954 = vmatpush1.msra.mxu0 0.0
    %6955 = vmatprep.subr.mxu0 0.0
    %6956 = vmatpush1.msra.mxu0 0.0
    %6957 = vmatprep.subr.mxu0 0.0
    %6958 = vmatpush1.msra.mxu0 0.0
    %6959 = vmatprep.subr.mxu0 0.0
    %6960 = vmatpush1.msra.mxu0 0.0
    %6961 = vmatprep.subr.mxu0 0.0
    %6962 = vmatpush1.msra.mxu0 0.0
    %6963 = vmatprep.subr.mxu0 0.0
    %6964 = vmatpush1.msra.mxu0 0.0
    %6965 = vmatprep.subr.mxu0 0.0
    %6966 = vmatpush1.msra.mxu0 0.0
    %6967 = vmatprep.subr.mxu0 0.0
    %6968 = vmatpush1.msra.mxu0 0.0
    %6969 = vmatprep.subr.mxu0 0.0
    %6970 = vmatpush1.msra.mxu0 0.0
    %6971 = vmatprep.subr.mxu0 0.0
    %6972 = vmatpush1.msra.mxu0 0.0
    %6973 = vmatprep.mubr.f32.mxu0 0.0
    %6974 = vmatmul.mubr.f32.gmra.mrb[0].mxu0 %v6768
    %v6975 = vpop.f32.mrb[0].mxu0
    %v6976 = vadd.f32 0.0, %v6975
    %v6977 = vpop.f32.mrb[0].mxu0
    %v6978 = vadd.f32 0.0, %v6977
    %6979 = vdwg.mxu0
    %v6980 = vadd.f32 %v6770, %v6905
    %v6981 = vadd.f32 %v6771, %v6907
    %v6982 = vadd.f32 %v6772, %v6976
    %v6983 = vadd.f32 %v6773, %v6978
    %v6984 = vxor.u32 %v6980, 2147483648
    %v6985 = vmul.f32 %v6984, 1.442695
    %v6986 = vpow.pop %v6985
    %v6987 = vadd.f32 %v6986, 1.0
    %v6988 = vrcp.pop %v6987
    %v6989 = vmul.f32 1.0, %v6988
    %v6990 = vxor.u32 %v6981, 2147483648
    %v6991 = vmul.f32 %v6990, 1.442695
    %v6992 = vpow.pop %v6991
    %v6993 = vadd.f32 %v6992, 1.0
    %v6994 = vrcp.pop %v6993
    %v6995 = vmul.f32 1.0, %v6994
    %v6996 = vtanh.pop %v6982
    %v6997 = vxor.u32 %v6983, 2147483648
    %v6998 = vmul.f32 %v6997, 1.442695
    %v6999 = vpow.pop %v6998
    %v7000 = vadd.f32 %v6999, 1.0
    %v7001 = vrcp.pop %v7000
    %v7002 = vmul.f32 1.0, %v7001
    %v7003 = vmul.f32 %v6995, %v6769
    %v7004 = vmul.f32 %v6989, %v6996
    %v7005 = vadd.f32 %v7003, %v7004
    %v7006 = vtanh.pop %v7005
    %v7007 = vmul.f32 %v7002, %v7006
    %7008 = vst [vmem:[#allocation4] sm:$0xff] %v7007
    %7009 = vst [vmem:[#allocation5] sm:$0xff] %v7005
    %7010 = vst [vmem:[%s2389] sm:$0xff] %v7007
    %v7011 = vld [vmem:[#allocation4] sm:$0xff]
    %s7012 = scalar_lea.vmem %s9, 16
    %7013 = vst [vmem:[%s7012] sm:$0xff] %v7011
    %v7014 = vld [vmem:[#allocation5] sm:$0xff]
    %s7015 = scalar_lea.vmem %s10, 16
    %7016 = vst [vmem:[%s7015] sm:$0xff] %v7014
    %v7017 = vld [vmem:[#allocation2] sm:$0xff]
    %v7018 = vld [vmem:[#allocation2 + $0x8] sm:$0xff]
    %v7019 = vld [vmem:[#allocation2 + $0x10] sm:$0xff]
    %v7020 = vld [vmem:[#allocation2 + $0x18] sm:$0xff]
    %v7021 = vld [vmem:[#allocation2 + $0x20] sm:$0xff]
    %v7022 = vld [vmem:[#allocation2 + $0x28] sm:$0xff]
    %v7023 = vld [vmem:[#allocation2 + $0x30] sm:$0xff]
    %v7024 = vld [vmem:[#allocation2 + $0x38] sm:$0xff]
    %v7025 = vld [vmem:[%s6] sm:$0xff]
    %v7026 = vld [vmem:[%s6 + $0x8] sm:$0xff]
    %v7027 = vld [vmem:[%s6 + $0x10] sm:$0xff]
    %v7028 = vld [vmem:[%s6 + $0x18] sm:$0xff]
    %v7029 = vld [vmem:[%s6 + $0x20] sm:$0xff]
    %v7030 = vld [vmem:[%s6 + $0x28] sm:$0xff]
    %v7031 = vld [vmem:[%s6 + $0x30] sm:$0xff]
    %v7032 = vld [vmem:[%s6 + $0x38] sm:$0xff]
    %v7033 = vld [vmem:[%s6 + $0x40] sm:$0xff]
    %v7034 = vld [vmem:[%s6 + $0x48] sm:$0xff]
    %v7035 = vld [vmem:[%s6 + $0x50] sm:$0xff]
    %v7036 = vld [vmem:[%s6 + $0x58] sm:$0xff]
    %v7037 = vld [vmem:[%s6 + $0x60] sm:$0xff]
    %v7038 = vld [vmem:[%s6 + $0x68] sm:$0xff]
    %v7039 = vld [vmem:[%s6 + $0x70] sm:$0xff]
    %v7040 = vld [vmem:[%s6 + $0x78] sm:$0xff]
    %v7041 = vld [vmem:[%s7] sm:$0x1]
    %v7043 = vlaneseq
    %v7044 = vshrl.u32 %v7043, 7
    %v7045 = vsub.s32 0, %v7044
    %v7046 = vrot.slane %v7041, %v7045
    %7048 = vmatprep.subr.mxu0 0.0
    %7049 = vmatpush1.msra.mxu0 %v7025
    %7050 = vmatprep.subr.mxu0 0.0
    %7051 = vmatpush1.msra.mxu0 %v7026
    %7052 = vmatprep.subr.mxu0 0.0
    %7053 = vmatpush1.msra.mxu0 %v7027
    %7054 = vmatprep.subr.mxu0 0.0
    %7055 = vmatpush1.msra.mxu0 %v7028
    %7056 = vmatprep.subr.mxu0 0.0
    %7057 = vmatpush1.msra.mxu0 %v7029
    %7058 = vmatprep.subr.mxu0 0.0
    %7059 = vmatpush1.msra.mxu0 %v7030
    %7060 = vmatprep.subr.mxu0 0.0
    %7061 = vmatpush1.msra.mxu0 %v7031
    %7062 = vmatprep.subr.mxu0 0.0
    %7063 = vmatpush1.msra.mxu0 %v7032
    %7064 = vmatprep.subr.mxu0 0.0
    %7065 = vmatpush1.msra.mxu0 %v7033
    %7066 = vmatprep.subr.mxu0 0.0
    %7067 = vmatpush1.msra.mxu0 %v7034
    %7068 = vmatprep.subr.mxu0 0.0
    %7069 = vmatpush1.msra.mxu0 %v7035
    %7070 = vmatprep.subr.mxu0 0.0
    %7071 = vmatpush1.msra.mxu0 %v7036
    %7072 = vmatprep.subr.mxu0 0.0
    %7073 = vmatpush1.msra.mxu0 %v7037
    %7074 = vmatprep.subr.mxu0 0.0
    %7075 = vmatpush1.msra.mxu0 %v7038
    %7076 = vmatprep.subr.mxu0 0.0
    %7077 = vmatpush1.msra.mxu0 %v7039
    %7078 = vmatprep.subr.mxu0 0.0
    %7079 = vmatpush1.msra.mxu0 %v7040
    %7080 = vmatprep.subr.mxu0 0.0
    %7081 = vmatpush1.msra.mxu0 0.0
    %7082 = vmatprep.subr.mxu0 0.0
    %7083 = vmatpush1.msra.mxu0 0.0
    %7084 = vmatprep.subr.mxu0 0.0
    %7085 = vmatpush1.msra.mxu0 0.0
    %7086 = vmatprep.subr.mxu0 0.0
    %7087 = vmatpush1.msra.mxu0 0.0
    %7088 = vmatprep.subr.mxu0 0.0
    %7089 = vmatpush1.msra.mxu0 0.0
    %7090 = vmatprep.subr.mxu0 0.0
    %7091 = vmatpush1.msra.mxu0 0.0
    %7092 = vmatprep.subr.mxu0 0.0
    %7093 = vmatpush1.msra.mxu0 0.0
    %7094 = vmatprep.subr.mxu0 0.0
    %7095 = vmatpush1.msra.mxu0 0.0
    %7096 = vmatprep.subr.mxu0 0.0
    %7097 = vmatpush1.msra.mxu0 0.0
    %7098 = vmatprep.subr.mxu0 0.0
    %7099 = vmatpush1.msra.mxu0 0.0
    %7100 = vmatprep.subr.mxu0 0.0
    %7101 = vmatpush1.msra.mxu0 0.0
    %7102 = vmatprep.subr.mxu0 0.0
    %7103 = vmatpush1.msra.mxu0 0.0
    %7104 = vmatprep.subr.mxu0 0.0
    %7105 = vmatpush1.msra.mxu0 0.0
    %7106 = vmatprep.subr.mxu0 0.0
    %7107 = vmatpush1.msra.mxu0 0.0
    %7108 = vmatprep.subr.mxu0 0.0
    %7109 = vmatpush1.msra.mxu0 0.0
    %7110 = vmatprep.subr.mxu0 0.0
    %7111 = vmatpush1.msra.mxu0 0.0
    %7112 = vmatprep.mubr.f32.mxu0 0.0
    %7113 = vmatmul.mubr.f32.gmra.mrb[0].mxu0 %v7017
    %v7114 = vpop.f32.mrb[0].mxu0
    %v7115 = vadd.f32 %v7046, %v7114
    %v7116 = vpop.f32.mrb[0].mxu0
    %7117 = vmatprep.mubr.f32.mxu0 0.0
    %7118 = vmatmul.mubr.f32.gmra.mrb[0].mxu0 %v7018
    %v7119 = vpop.f32.mrb[0].mxu0
    %v7120 = vadd.f32 %v7046, %v7119
    %v7121 = vpop.f32.mrb[0].mxu0
    %7122 = vmatprep.mubr.f32.mxu0 0.0
    %7123 = vmatmul.mubr.f32.gmra.mrb[0].mxu0 %v7019
    %v7124 = vpop.f32.mrb[0].mxu0
    %v7125 = vadd.f32 %v7046, %v7124
    %v7126 = vpop.f32.mrb[0].mxu0
    %7127 = vmatprep.mubr.f32.mxu0 0.0
    %7128 = vmatmul.mubr.f32.gmra.mrb[0].mxu0 %v7020
    %v7129 = vpop.f32.mrb[0].mxu0
    %v7130 = vadd.f32 %v7046, %v7129
    %v7131 = vpop.f32.mrb[0].mxu0
    %7132 = vmatprep.mubr.f32.mxu0 0.0
    %7133 = vmatmul.mubr.f32.gmra.mrb[0].mxu0 %v7021
    %v7134 = vpop.f32.mrb[0].mxu0
    %v7135 = vadd.f32 %v7046, %v7134
    %v7136 = vpop.f32.mrb[0].mxu0
    %7137 = vmatprep.mubr.f32.mxu0 0.0
    %7138 = vmatmul.mubr.f32.gmra.mrb[0].mxu0 %v7022
    %v7139 = vpop.f32.mrb[0].mxu0
    %v7140 = vadd.f32 %v7046, %v7139
    %v7141 = vpop.f32.mrb[0].mxu0
    %7142 = vmatprep.mubr.f32.mxu0 0.0
    %7143 = vmatmul.mubr.f32.gmra.mrb[0].mxu0 %v7023
    %v7144 = vpop.f32.mrb[0].mxu0
    %v7145 = vadd.f32 %v7046, %v7144
    %v7146 = vpop.f32.mrb[0].mxu0
    %7147 = vmatprep.mubr.f32.mxu0 0.0
    %7148 = vmatmul.mubr.f32.gmra.mrb[0].mxu0 %v7024
    %v7149 = vpop.f32.mrb[0].mxu0
    %v7150 = vadd.f32 %v7046, %v7149
    %v7151 = vpop.f32.mrb[0].mxu0
    %7152 = vdwg.mxu0
    %7153 = vst [vmem:[%s8] sm:$0xff] %v7115
    %7154 = vst [vmem:[%s8 + $0x8] sm:$0xff] %v7120
    %7155 = vst [vmem:[%s8 + $0x10] sm:$0xff] %v7125
    %7156 = vst [vmem:[%s8 + $0x18] sm:$0xff] %v7130
    %7157 = vst [vmem:[%s8 + $0x20] sm:$0xff] %v7135
    %7158 = vst [vmem:[%s8 + $0x28] sm:$0xff] %v7140
    %7159 = vst [vmem:[%s8 + $0x30] sm:$0xff] %v7145
    %7160 = vst [vmem:[%s8 + $0x38] sm:$0xff] %v7150
    // Predicated region
    $region42: #{_lambda_.1} parent=1 // pred_check
      _
    $region43: #{_lambda_.1} parent=1 // pred_check_branch
      %7162 = sbr.rel (0) target = $region45
    $region44: #{_lambda_.1} parent=1 // pred_region
      _
    $region45: #{_lambda_.1} parent=1 // pred_fallthru
      _
    // Predicated region
    $region46: #{_lambda_.1} parent=1 // pred_check
      _
    $region47: #{_lambda_.1} parent=1 // pred_check_branch
      %7164 = sbr.rel (0) target = $region49
    $region48: #{_lambda_.1} parent=1 // pred_region
      _
    $region49: #{_lambda_.1} parent=1 // pred_fallthru
      _
    // Predicated region
    $region50: #{_lambda_.1} parent=1 // pred_check
      _
    $region51: #{_lambda_.1} parent=1 // pred_check_branch
      %7166 = sbr.rel (0) target = $region53
    $region52: #{_lambda_.1} parent=1 // pred_region
      _
    $region53: #{_lambda_.1} parent=1 // pred_fallthru
      _
    // Predicated region
    $region54: #{_lambda_.1} parent=1 // pred_check
      _
    $region55: #{_lambda_.1} parent=1 // pred_check_branch
      %7168 = sbr.rel (0) target = $region57
    $region56: #{_lambda_.1} parent=1 // pred_region
      _
    $region57: #{_lambda_.1} parent=1 // pred_fallthru
      _
    // Predicated region
    $region58: #{_lambda_.1} parent=1 // pred_check
      _
    $region59: #{_lambda_.1} parent=1 // pred_check_branch
      %7170 = sbr.rel (0) target = $region61
    $region60: #{_lambda_.1} parent=1 // pred_region
      _
    $region61: #{_lambda_.1} parent=1 // pred_fallthru
      _
    // Predicated region
    $region62: #{_lambda_.1} parent=1 // pred_check
      _
    $region63: #{_lambda_.1} parent=1 // pred_check_branch
      %7172 = sbr.rel (0) target = $region65
    $region64: #{_lambda_.1} parent=1 // pred_region
      _
    $region65: #{_lambda_.1} parent=1 // pred_fallthru
      _
    %7173 = vsyncpa [#allocation7], 1
    %7174 = vsyncpa [#allocation9], 1

</llo_original>
